<compile_context>
chip_gen: v5e
topology: v5e:2x2
jax: 0.10.0
libtpu: 0.0.40
codegen_flags: <defaults>
</compile_context>

<pallas_src>
import functools

import jax
import jax.numpy as jnp
from jax.experimental import pallas as pl
from jax.experimental.pallas import tpu as pltpu

NUM_FEATURES = 720   # hrnet_w48 concat-head channel count
HIDDEN = 1024
NUM_CLASSES = 2

_LANE = 128
# Per-pipeline-buffer budget for one (1, C, tile_hw) feature tile (see header).
_DEFAULT_TILE_BUDGET = 3 * 1024 * 1024 + 512 * 1024   # 3.5 MiB


def _flnet_head_kernel(feat_ref, w1_ref, b1_ref, w3_ref, b3_ref,
                       xc_ref, xf_ref, acc_ref, *,
                       hw_total, tile_hw, needs_mask):
    """Grid = (batch, hw_tiles). Each inner step accumulates one (1, C, tile_hw)
    feature tile into a lane-dense (1, C, 128) f32 running sum (plain VPU adds);
    the last inner step does the single 128->1 lane reduce, the mean, and
    fc1 -> (dropout = eval-mode identity) -> fc3."""
    k = pl.program_id(1)
    last_k = pl.num_programs(1) - 1
    lane_aligned = (tile_hw % _LANE == 0)
    n_chunks = tile_hw // _LANE if lane_aligned else 0

    @pl.when(k == 0)
    def _init():
        acc_ref[...] = jnp.zeros_like(acc_ref)

    def _accumulate(get_chunk):
        # Sum 128-lane chunks with plain vreg adds; keep the accumulator
        # lane-dense so no per-step XLU reduce / masked store is emitted.
        partial = get_chunk(0)
        for c in range(1, n_chunks):
            partial = partial + get_chunk(c)
        acc_ref[...] += partial

    def _plain_chunk(c):
        return feat_ref[:, :, c * _LANE:(c + 1) * _LANE].astype(jnp.float32)

    if not lane_aligned:
        # Single full-extent (small, ragged H*W) block: one exact reduce total.
        acc_ref[:, :, 0:1] += jnp.sum(feat_ref[...].astype(jnp.float32),
                                      axis=-1, keepdims=True)
    elif needs_mask:
        # Only the final (partial) tile pays for the tail mask.
        @pl.when(k != last_k)
        def _full_tiles():
            _accumulate(_plain_chunk)

        @pl.when(k == last_k)
        def _tail_tile():
            base = k * tile_hw

            def masked_chunk(c):
                x = _plain_chunk(c)
                lane = jax.lax.broadcasted_iota(jnp.int32, x.shape, 2)
                return jnp.where(base + c * _LANE + lane < hw_total, x, 0.0)

            _accumulate(masked_chunk)
    else:
        _accumulate(_plain_chunk)

    @pl.when(k == last_k)
    def _finalize():
        # One cross-lane reduce for the whole reduction, then the mean.
        total = jnp.sum(acc_ref[...], axis=-1)                 # (1, C)
        xf = total * (1.0 / float(hw_total))                   # avgpool + view
        xf_ref[...] = xf.reshape(xf_ref.shape).astype(xf_ref.dtype)
        # fc1
        h = jnp.dot(xf, w1_ref[...], preferred_element_type=jnp.float32)
        h = h + b1_ref[...]
        # drop2: nn.Dropout in eval mode == identity (no masking, no scaling)
        # fc3
        xc = jnp.dot(h, w3_ref[...], preferred_element_type=jnp.float32)
        xc = xc + b3_ref[...]
        xc_ref[...] = xc.reshape(xc_ref.shape).astype(xc_ref.dtype)


def _pick_hw_tiling(hw, bytes_per_hw_col, budget):
    """Pick the H*W reduction tile: a single full-extent block when it fits the
    per-buffer budget, otherwise the largest 128-aligned tile within budget."""
    if hw * bytes_per_hw_col <= budget:
        return hw, 1, False                       # one full-extent block
    if hw % _LANE == 0:
        tile = _LANE
        for t in (2048, 1024, 512, 256):
            if hw % t == 0 and t * bytes_per_hw_col <= budget:
                tile = t
                break
        return tile, hw // tile, False
    # Large ragged H*W: 128-aligned tiles within budget, masked tail tile.
    max_tile = max(_LANE, (budget // bytes_per_hw_col) // _LANE * _LANE)
    tile = min(2048, max_tile)
    return tile, pl.cdiv(hw, tile), True


def flnet_head(features_nchw, w1, b1, w3, b3, *,
               tile_budget_bytes=_DEFAULT_TILE_BUDGET):
    """features_nchw: (B, 720, H, W) backbone output (f32 or bf16 -- consumed in
    its producer dtype); w1: (1024, 720); b1: (1024,); w3: (2, 1024); b3: (2,).
    Returns (xc, xf) like FLNet.forward."""
    B, C, H, W = features_nchw.shape
    assert C == NUM_FEATURES
    hw = H * W

    # Free reshape only -- NO NCHW->NHWC transpose (no extra HBM round trip).
    feat = features_nchw.reshape(B, C, hw)
    w1_t = jnp.transpose(w1).astype(jnp.float32)      # (720, 1024)  (in, out)
    w3_t = jnp.transpose(w3).astype(jnp.float32)      # (1024, 2)
    b1_2d = b1.reshape(1, HIDDEN).astype(jnp.float32)
    b3_2d = b3.reshape(1, NUM_CLASSES).astype(jnp.float32)

    tile_hw, grid_hw, needs_mask = _pick_hw_tiling(
        hw, C * feat.dtype.itemsize, tile_budget_bytes)

    kernel = functools.partial(
        _flnet_head_kernel, hw_total=hw, tile_hw=tile_hw, needs_mask=needs_mask)

    # Weights / biases / outputs: constant over the reduction axis -> DMA'd once.
    resident = lambda b, k: (0, 0)

    feat_bytes = feat.size * feat.dtype.itemsize
    param_bytes = 4 * (w1_t.size + b1_2d.size + w3_t.size + b3_2d.size)
    out_bytes = 4 * (B * NUM_CLASSES + B * C)
    cost = pl.CostEstimate(
        flops=B * C * hw + 2 * B * (C * HIDDEN + HIDDEN * NUM_CLASSES),
        transcendentals=0,
        bytes_accessed=feat_bytes + param_bytes + out_bytes,
    )

    # Outputs carry a singleton middle dim so each per-batch block's last two
    # dims equal the full array extents (keeps Mosaic's (8,128) block-shape rule
    # trivially satisfied); squeezed away after the call (free reshape).
    out_shapes = (
        jax.ShapeDtypeStruct((B, 1, NUM_CLASSES), jnp.float32),   # xc
        jax.ShapeDtypeStruct((B, 1, C), jnp.float32),             # xf
    )
    xc3, xf3 = pl.pallas_call(
        kernel,
        out_shape=out_shapes,
        grid=(B, grid_hw),
        in_specs=[
            pl.BlockSpec((1, C, tile_hw), lambda b, k: (b, 0, k)),  # feature tiles
            pl.BlockSpec((C, HIDDEN), resident),                    # fc1 weight
            pl.BlockSpec((1, HIDDEN), resident),                    # fc1 bias
            pl.BlockSpec((HIDDEN, NUM_CLASSES), resident),          # fc3 weight
            pl.BlockSpec((1, NUM_CLASSES), resident),               # fc3 bias
        ],
        out_specs=(
            pl.BlockSpec((1, 1, NUM_CLASSES), lambda b, k: (b, 0, 0)),
            pl.BlockSpec((1, 1, C), lambda b, k: (b, 0, 0)),
        ),
        scratch_shapes=[pltpu.VMEM((1, C, _LANE), jnp.float32)],    # running sum
        compiler_params=pltpu.CompilerParams(
            # Batch axis is parallel (shards across v7x's 2 TensorCores);
            # the H*W reduction axis is sequential.
            dimension_semantics=("parallel", "arbitrary"),
        ),
        cost_estimate=cost,
    )(feat, w1_t, b1_2d, w3_t, b3_2d)
    return xc3.reshape(B, NUM_CLASSES), xf3.reshape(B, C)


# ---------- deterministic parameter init (mirrors FLNet.__init__) ----------

def _kaiming_uniform_linear(key, out_f, in_f):
    # PyTorch nn.Linear default: kaiming_uniform(a=sqrt(5)) -> U(-1/sqrt(in), 1/sqrt(in))
    kw, kb = jax.random.split(key)
    bound = 1.0 / jnp.sqrt(jnp.float32(in_f))
    w = jax.random.uniform(kw, (out_f, in_f), jnp.float32, -bound, bound)
    b = jax.random.uniform(kb, (out_f,), jnp.float32, -bound, bound)
    return w, b


def _xavier_uniform(key, out_f, in_f, gain):
    bound = gain * jnp.sqrt(6.0 / jnp.float32(in_f + out_f))
    return jax.random.uniform(key, (out_f, in_f), jnp.float32, -bound, bound)


def _reference_head(features, w1, b1, w3, b3):
    xf = jnp.mean(features.astype(jnp.float32), axis=(2, 3))
    xc = (xf @ w1.T + b1) @ w3.T + b3
    return xc, xf


if __name__ == "__main__":
    key = jax.random.PRNGKey(0)
    k_feat, k_fc1, k_fc2, k_fc3w, k_fc3b = jax.random.split(key, 5)

    B = 2
    w1, b1 = _kaiming_uniform_linear(k_fc1, HIDDEN, NUM_FEATURES)   # fc1
    w2, b2 = _kaiming_uniform_linear(k_fc2, HIDDEN, HIDDEN)         # fc2 (unused in forward)
    w3 = _xavier_uniform(k_fc3w, NUM_CLASSES, HIDDEN, gain=0.1)     # fc3 (xavier, gain=0.1)
    bound3 = 1.0 / jnp.sqrt(jnp.float32(HIDDEN))
    b3 = jax.random.uniform(k_fc3b, (NUM_CLASSES,), jnp.float32, -bound3, bound3)

    def check(h, w, dtype, budget, atol):
        feats = jax.random.normal(
            jax.random.fold_in(k_feat, h * w), (B, NUM_FEATURES, h, w),
            jnp.float32).astype(dtype)
        xc, xf = flnet_head(feats, w1, b1, w3, b3, tile_budget_bytes=budget)
        jax.block_until_ready((xc, xf))
        xc_ref, xf_ref = _reference_head(feats, w1, b1, w3, b3)
        assert xc.shape == (B, NUM_CLASSES) and xf.shape == (B, NUM_FEATURES)
        assert jnp.allclose(xf, xf_ref, atol=atol, rtol=atol), "xf mismatch"
        assert jnp.allclose(xc, xc_ref, atol=10 * atol, rtol=10 * atol), "xc mismatch"

    # 16x16 feature map, f32, single full-extent block.
    check(16, 16, jnp.float32, _DEFAULT_TILE_BUDGET, 1e-4)
    # Same map with a tiny budget -> exercises the multi-step pipelined reduction.
    check(16, 16, jnp.float32, 400 * 1024, 1e-4)
    # Ragged spatial extent + tiny budget -> exercises the masked tail-tile path.
    check(18, 18, jnp.float32, 400 * 1024, 1e-4)
    # bf16 producer dtype (feature map is NOT upcast before the call).
    check(16, 16, jnp.bfloat16, _DEFAULT_TILE_BUDGET, 2e-2)

    print("KERNEL_OK")
</pallas_src>

<mosaic_0001>
module attributes {stable_mosaic.version = 11 : i64} {
  func.func @_flnet_head_kernel(%arg0: i32, %arg1: i32, %arg2: memref<1x720x256xf32, #tpu.memory_space<vmem>>, %arg3: memref<720x1024xf32, #tpu.memory_space<vmem>>, %arg4: memref<1x1024xf32, #tpu.memory_space<vmem>>, %arg5: memref<1024x2xf32, #tpu.memory_space<vmem>>, %arg6: memref<1x2xf32, #tpu.memory_space<vmem>>, %arg7: memref<1x1x2xf32, #tpu.memory_space<vmem>>, %arg8: memref<1x1x720xf32, #tpu.memory_space<vmem>>, %arg9: memref<1x720x128xf32, #tpu.memory_space<vmem>>) attributes {dimension_semantics = [#tpu.dimension_semantics<parallel>, #tpu.dimension_semantics<arbitrary>], iteration_bounds = array<i64: 2, 1>, scalar_prefetch = 0 : i64, scratch_operands = 1 : i64, tpu.core_type = #tpu.core_type<tc>, window_params = [{transform_indices = @transform_0, window_bounds = array<i64: 1, 720, 256>}, {pipeline_mode = #tpu.pipeline_mode<synchronous>, transform_indices = @transform_1, window_bounds = array<i64: 720, 1024>}, {pipeline_mode = #tpu.pipeline_mode<synchronous>, transform_indices = @transform_2, window_bounds = array<i64: 1, 1024>}, {pipeline_mode = #tpu.pipeline_mode<synchronous>, transform_indices = @transform_3, window_bounds = array<i64: 1024, 2>}, {pipeline_mode = #tpu.pipeline_mode<synchronous>, transform_indices = @transform_4, window_bounds = array<i64: 1, 2>}, {transform_indices = @transform_5, window_bounds = array<i64: 1, 1, 2>}, {transform_indices = @transform_6, window_bounds = array<i64: 1, 1, 720>}]} {
    %c0_i32 = arith.constant 0 : i32
    %0 = arith.cmpi eq, %arg1, %c0_i32 : i32
    %1 = arith.extui %0 : i1 to i32
    %c0_i32_0 = arith.constant 0 : i32
    %2 = arith.cmpi ne, %1, %c0_i32_0 : i32
    scf.if %2 {
      %cst = arith.constant 0.000000e+00 : f32
      %12 = vector.broadcast %cst : f32 to vector<1x720x128xf32>
      %c0_13 = arith.constant 0 : index
      %c0_14 = arith.constant 0 : index
      %c0_15 = arith.constant 0 : index
      %13 = vector.load %arg9[%c0_13, %c0_14, %c0_15] : memref<1x720x128xf32, #tpu.memory_space<vmem>>, vector<1x720x128xf32>
      tpu.vector_store %arg9[%c0_13, %c0_14, %c0_15], %12 {strides = array<i32>} : memref<1x720x128xf32, #tpu.memory_space<vmem>>, vector<1x720x128xf32>,
    } else {
    }
    %c0 = arith.constant 0 : index
    %c0_1 = arith.constant 0 : index
    %c0_2 = arith.constant 0 : index
    %3 = vector.load %arg2[%c0, %c0_1, %c0_2] : memref<1x720x256xf32, #tpu.memory_space<vmem>>, vector<1x720x128xf32>
    %c0_3 = arith.constant 0 : index
    %c0_4 = arith.constant 0 : index
    %c128 = arith.constant 128 : index
    %4 = vector.load %arg2[%c0_3, %c0_4, %c128] : memref<1x720x256xf32, #tpu.memory_space<vmem>>, vector<1x720x128xf32>
    %5 = arith.addf %3, %4 : vector<1x720x128xf32>
    %c0_5 = arith.constant 0 : index
    %c0_6 = arith.constant 0 : index
    %c0_7 = arith.constant 0 : index
    %6 = vector.load %arg9[%c0_5, %c0_6, %c0_7] : memref<1x720x128xf32, #tpu.memory_space<vmem>>, vector<1x720x128xf32>
    %7 = arith.addf %6, %5 : vector<1x720x128xf32>
    %c0_8 = arith.constant 0 : index
    %c0_9 = arith.constant 0 : index
    %c0_10 = arith.constant 0 : index
    %8 = vector.load %arg9[%c0_8, %c0_9, %c0_10] : memref<1x720x128xf32, #tpu.memory_space<vmem>>, vector<1x720x128xf32>
    tpu.vector_store %arg9[%c0_8, %c0_9, %c0_10], %7 {strides = array<i32>} : memref<1x720x128xf32, #tpu.memory_space<vmem>>, vector<1x720x128xf32>,
    %c0_i32_11 = arith.constant 0 : i32
    %9 = arith.cmpi eq, %arg1, %c0_i32_11 : i32
    %10 = arith.extui %9 : i1 to i32
    %c0_i32_12 = arith.constant 0 : i32
    %11 = arith.cmpi ne, %10, %c0_i32_12 : i32
    scf.if %11 {
      %c0_13 = arith.constant 0 : index
      %c0_14 = arith.constant 0 : index
      %c0_15 = arith.constant 0 : index
      %12 = vector.load %arg9[%c0_13, %c0_14, %c0_15] : memref<1x720x128xf32, #tpu.memory_space<vmem>>, vector<1x720x128xf32>
      %cst = arith.constant dense<0.000000e+00> : vector<1x720xf32>
      %13 = vector.multi_reduction <add>, %12, %cst [2] : vector<1x720x128xf32> to vector<1x720xf32>
      %cst_16 = arith.constant 3.906250e-03 : f32
      %14 = vector.broadcast %cst_16 : f32 to vector<1x720xf32>
      %15 = arith.mulf %13, %14 : vector<1x720xf32>
      %16 = vector.shape_cast %15 : vector<1x720xf32> to vector<1x1x720xf32>
      %c0_17 = arith.constant 0 : index
      %c0_18 = arith.constant 0 : index
      %c0_19 = arith.constant 0 : index
      %17 = vector.load %arg8[%c0_17, %c0_18, %c0_19] : memref<1x1x720xf32, #tpu.memory_space<vmem>>, vector<1x1x720xf32>
      tpu.vector_store %arg8[%c0_17, %c0_18, %c0_19], %16 {strides = array<i32>} : memref<1x1x720xf32, #tpu.memory_space<vmem>>, vector<1x1x720xf32>,
      %c0_20 = arith.constant 0 : index
      %c0_21 = arith.constant 0 : index
      %18 = vector.load %arg3[%c0_20, %c0_21] : memref<720x1024xf32, #tpu.memory_space<vmem>>, vector<720x1024xf32>
      %cst_22 = arith.constant dense<0.000000e+00> : vector<1x1024xf32>
      %19 = tpu.matmul %15, %18, %cst_22 {dimension_numbers = #tpu.dot_dimension_numbers<[1], [0], [0], [1], [0, 0, 1, 1], [], []>} : vector<1x720xf32>, vector<720x1024xf32>, vector<1x1024xf32> -> vector<1x1024xf32>
      %c0_23 = arith.constant 0 : index
      %c0_24 = arith.constant 0 : index
      %20 = vector.load %arg4[%c0_23, %c0_24] : memref<1x1024xf32, #tpu.memory_space<vmem>>, vector<1x1024xf32>
      %21 = arith.addf %19, %20 : vector<1x1024xf32>
      %c0_25 = arith.constant 0 : index
      %c0_26 = arith.constant 0 : index
      %22 = vector.load %arg5[%c0_25, %c0_26] : memref<1024x2xf32, #tpu.memory_space<vmem>>, vector<1024x2xf32>
      %cst_27 = arith.constant dense<0.000000e+00> : vector<1x2xf32>
      %23 = tpu.matmul %21, %22, %cst_27 {dimension_numbers = #tpu.dot_dimension_numbers<[1], [0], [0], [1], [0, 0, 1, 1], [], []>} : vector<1x1024xf32>, vector<1024x2xf32>, vector<1x2xf32> -> vector<1x2xf32>
      %c0_28 = arith.constant 0 : index
      %c0_29 = arith.constant 0 : index
      %24 = vector.load %arg6[%c0_28, %c0_29] : memref<1x2xf32, #tpu.memory_space<vmem>>, vector<1x2xf32>
      %25 = arith.addf %23, %24 : vector<1x2xf32>
      %26 = vector.shape_cast %25 : vector<1x2xf32> to vector<1x1x2xf32>
      %c0_30 = arith.constant 0 : index
      %c0_31 = arith.constant 0 : index
      %c0_32 = arith.constant 0 : index
      %27 = vector.load %arg7[%c0_30, %c0_31, %c0_32] : memref<1x1x2xf32, #tpu.memory_space<vmem>>, vector<1x1x2xf32>
      tpu.vector_store %arg7[%c0_30, %c0_31, %c0_32], %26 {strides = array<i32>} : memref<1x1x2xf32, #tpu.memory_space<vmem>>, vector<1x1x2xf32>,
    } else {
    }
    return
  }
  func.func @transform_0(%arg0: i32, %arg1: i32) -> (i32, i32, i32) {
    %c0_i32 = arith.constant 0 : i32
    %c0_i32_0 = arith.constant 0 : i32
    return %arg0, %c0_i32, %arg1 : i32, i32, i32
  }
  func.func @transform_1(%arg0: i32, %arg1: i32) -> (i32, i32) {
    %c0_i32 = arith.constant 0 : i32
    %c0_i32_0 = arith.constant 0 : i32
    %c0_i32_1 = arith.constant 0 : i32
    return %c0_i32, %c0_i32_0 : i32, i32
  }
  func.func @transform_2(%arg0: i32, %arg1: i32) -> (i32, i32) {
    %c0_i32 = arith.constant 0 : i32
    %c0_i32_0 = arith.constant 0 : i32
    %c0_i32_1 = arith.constant 0 : i32
    return %c0_i32, %c0_i32_0 : i32, i32
  }
  func.func @transform_3(%arg0: i32, %arg1: i32) -> (i32, i32) {
    %c0_i32 = arith.constant 0 : i32
    %c0_i32_0 = arith.constant 0 : i32
    %c0_i32_1 = arith.constant 0 : i32
    return %c0_i32, %c0_i32_0 : i32, i32
  }
  func.func @transform_4(%arg0: i32, %arg1: i32) -> (i32, i32) {
    %c0_i32 = arith.constant 0 : i32
    %c0_i32_0 = arith.constant 0 : i32
    %c0_i32_1 = arith.constant 0 : i32
    return %c0_i32, %c0_i32_0 : i32, i32
  }
  func.func @transform_5(%arg0: i32, %arg1: i32) -> (i32, i32, i32) {
    %c0_i32 = arith.constant 0 : i32
    %c0_i32_0 = arith.constant 0 : i32
    %c0_i32_1 = arith.constant 0 : i32
    return %arg0, %c0_i32, %c0_i32_0 : i32, i32, i32
  }
  func.func @transform_6(%arg0: i32, %arg1: i32) -> (i32, i32, i32) {
    %c0_i32 = arith.constant 0 : i32
    %c0_i32_0 = arith.constant 0 : i32
    %c0_i32_1 = arith.constant 0 : i32
    return %arg0, %c0_i32, %c0_i32_0 : i32, i32, i32
  }
}

</mosaic_0001>

<llo_original>
// kernel: tpu_custom_call.1
$region0: #{tpu_custom_call.1}
  #allocation0 [shape = 'u32[]', space=smem, size = 0x4, offset = 0x4, fixed_abs, tag = 'smem constant byte address 0x4 - core index']
  #allocation1 [shape = 'u32[72,128]{1,0:T(1,128)}', space=vmem, size = 0x9000, scoped, tag = 'internal scratch']
  #allocation2 [shape = 'f32[1,720,128]{2,1,0:T(8,128)}', space=vmem, size = 0x5a000, scoped, tag = 'scratch operand']
  %s0 = inlined_call_operand.hbm [shape: f32[2,720,256], index: 0, kind: input, shape index: {}]
  %s1 = inlined_call_operand.hbm [shape: f32[720,1024], index: 1, kind: input, shape index: {}]
  %s2 = inlined_call_operand.hbm [shape: f32[1,1024], index: 2, kind: input, shape index: {}]
  %s3 = inlined_call_operand.vmem [shape: f32[1024,2], index: 3, kind: input, shape index: {}]
  %s4 = inlined_call_operand.hbm [shape: f32[1,2], index: 4, kind: input, shape index: {}]
  %s5 = inlined_call_operand.hbm [shape: f32[2,1,2], index: 5, kind: output, shape index: {0}]
  %s6 = inlined_call_operand.hbm [shape: f32[2,1,720], index: 6, kind: output, shape index: {1}]
  %7 = xla_tuple %s5, %s6
  %s8 = sld [smem:[#allocation0]]
  $region85: #{tpu_custom_call.1} parent=0
    _
  %s10 = ssub.s32 1, %s8
  %s11 = scalar_select 0, %s10, %s8
  $region1: #{tpu_custom_call.1} parent=0
    #allocation3 [shape = 'u8[1474560]{0}', space=vmem, size = 0x168000, scoped, tag = 'input window, operand 0']
    #allocation4 [shape = 's32[2]{0}', space=sflag, size = 0x8, scoped, tag = 'scoped memory for tpu_custom_call.1']
    #allocation5 [shape = 's32[2]{0}', space=sflag, size = 0x8, scoped, tag = 'scoped memory for tpu_custom_call.1']
    #allocation6 [shape = 'u8[2949120]{0}', space=vmem, size = 0x2d0000, scoped, tag = 'input window, operand 1, single buffered']
    #allocation7 [shape = 's32[1]{0}', space=sflag, size = 0x4, scoped, tag = 'scoped memory for tpu_custom_call.1']
    #allocation8 [shape = 'u8[4096]{0}', space=vmem, size = 0x1000, scoped, tag = 'input window, operand 2, single buffered']
    #allocation9 [shape = 'u8[512]{0}', space=vmem, size = 0x400, scoped, tag = 'input window, operand 4, single buffered']
    #allocation10 [shape = 's32[1]{0}', space=sflag, size = 0x4, scoped, tag = 'scoped memory for tpu_custom_call.1']
    #allocation11 [shape = 'u8[1024]{0}', space=vmem, size = 0x400, scoped, tag = 'output window, operand 0']
    #allocation12 [shape = 'u8[6144]{0}', space=vmem, size = 0x1800, scoped, tag = 'output window, operand 1']
    #allocation13 [shape = 's32[2]{0}', space=sflag, size = 0x8, scoped, tag = 'scoped memory for tpu_custom_call.1']
    %12 = vsyncpa [#allocation4], 0
    %s13 = scalar_lea.sflag [#allocation4], 1
    %14 = vsyncpa %s13, 0
    %15 = vsyncpa [#allocation7], 0
    %16 = vsyncpa [#allocation10], 0
    %17 = vsyncpa [#allocation5], 0
    %s18 = scalar_lea.sflag [#allocation5], 1
    %19 = vsyncpa %s18, 0
    %20 = vsyncpa [#allocation13], 0
    %s21 = scalar_lea.sflag [#allocation13], 1
    %22 = vsyncpa %s21, 0
    loop: start=0, step=1, limit=4
    $region2: #{tpu_custom_call.1} parent=1 // loop_pre_header
      _
    $region3: #{tpu_custom_call.1} parent=1 // loop_header
      %s24 = sphi 0, %s28
      %p25 = scmp.ge.s32.totalorder %s24, 4
      %s31 = sphi 0, %s43
      %s32 = sphi 0, %s39
      %s33 = sphi 0, %s31
      %s34 = sphi 0, %s32
      %s35 = sphi 0, %s33
      %s36 = sphi 0, %s34
      %s48 = sphi 0, %s50
      %s51 = sphi 0, %s48
      %s52 = sphi 0, %s51
      %s68 = sphi 0, %s52
      %s72 = sphi 0, %s72
      %s74 = sphi 0, %s72
      %s75 = sphi 0, %s74
      %s89 = sphi 0, %s75
      %s93 = sphi 0, %s93
      %s95 = sphi 0, %s93
      %s96 = sphi 0, %s95
      %s110 = sphi 0, %s96
      %s114 = sphi 0, %s114
      %s116 = sphi 0, %s114
      %s117 = sphi 0, %s116
      %s131 = sphi 0, %s117
      %s135 = sphi 0, %s135
      %s137 = sphi 0, %s135
      %s138 = sphi 0, %s137
      %s152 = sphi 0, %s138
      %s158 = sphi 0, %s160
      %s161 = sphi 0, %s158
      %s162 = sphi 0, %s161
      %s178 = sphi 0, %s162
      %s184 = sphi 0, %s186
      %s187 = sphi 0, %s184
      %s188 = sphi 0, %s187
      %s204 = sphi 0, %s188
    $region4: #{tpu_custom_call.1} parent=1 // loop_header_branch
      %27 = sbr.rel (%p25) target = $region8
    $region5: #{tpu_custom_call.1} parent=1 // loop_body
      %s29 = ssub.s32 %s24, 1
      %s30 = ssub.s32 %s24, 2
      %s37 = sadd.s32 1, %s32
      %p38 = scmp.ge.s32.totalorder %s37, 1
      %s39 = scalar_select %p38, 0, %s37
      %s40 = sadd.s32 1, %s31
      %s41 = scalar_select %p38, %s40, %s31
      %p42 = scmp.ge.s32.totalorder %s41, 2
      %s43 = scalar_select %p42, 0, %s41
      %s44 = ssub.s32 %s31, %s43
      %s45 = ssub.s32 %s32, %s39
      %s46 = sor.u32 %s44, %s45
      %p47 = scmp.eq.s32.totalorder %s46, 0
      %s49 = sadd.s32 %s48, 1
      %s50 = scalar_select %p47, %s48, %s49
      %p53 = pneg %p47
      %p54 = scmp.eq.s32.totalorder %s24, 1
      %p55 = por %p53, %p54
      %p56 = scmp.ne.s32.totalorder %s48, %s51
      %p57 = scmp.eq.s32.totalorder %s24, 0
      %p58 = por %p56, %p57
      %p59 = scmp.ne.s32.totalorder %s48, %s51
      %p60 = scmp.eq.s32.totalorder %s29, 1
      %p61 = por %p59, %p60
      %p62 = scmp.ne.s32.totalorder %s51, %s52
      %p63 = scmp.eq.s32.totalorder %s29, 0
      %p64 = por %p62, %p63
      %p65 = scmp.ne.s32.totalorder %s51, %s52
      %p66 = scmp.eq.s32.totalorder %s30, 1
      %p67 = por %p65, %p66
      %p69 = scmp.ne.s32.totalorder %s52, %s68
      %p70 = scmp.eq.s32.totalorder %s30, 0
      %p71 = por %p69, %p70
      %s73 = sadd.s32 %s72, 1
      %p76 = scmp.eq.s32.totalorder %s24, 1
      %p77 = scmp.ne.s32.totalorder %s72, %s74
      %p78 = scmp.eq.s32.totalorder %s24, 0
      %p79 = por %p77, %p78
      %p80 = scmp.ne.s32.totalorder %s72, %s74
      %p81 = scmp.eq.s32.totalorder %s29, 1
      %p82 = por %p80, %p81
      %p83 = scmp.ne.s32.totalorder %s74, %s75
      %p84 = scmp.eq.s32.totalorder %s29, 0
      %p85 = por %p83, %p84
      %p86 = scmp.ne.s32.totalorder %s74, %s75
      %p87 = scmp.eq.s32.totalorder %s30, 1
      %p88 = por %p86, %p87
      %p90 = scmp.ne.s32.totalorder %s75, %s89
      %p91 = scmp.eq.s32.totalorder %s30, 0
      %p92 = por %p90, %p91
      %s94 = sadd.s32 %s93, 1
      %p97 = scmp.eq.s32.totalorder %s24, 1
      %p98 = scmp.ne.s32.totalorder %s93, %s95
      %p99 = scmp.eq.s32.totalorder %s24, 0
      %p100 = por %p98, %p99
      %p101 = scmp.ne.s32.totalorder %s93, %s95
      %p102 = scmp.eq.s32.totalorder %s29, 1
      %p103 = por %p101, %p102
      %p104 = scmp.ne.s32.totalorder %s95, %s96
      %p105 = scmp.eq.s32.totalorder %s29, 0
      %p106 = por %p104, %p105
      %p107 = scmp.ne.s32.totalorder %s95, %s96
      %p108 = scmp.eq.s32.totalorder %s30, 1
      %p109 = por %p107, %p108
      %p111 = scmp.ne.s32.totalorder %s96, %s110
      %p112 = scmp.eq.s32.totalorder %s30, 0
      %p113 = por %p111, %p112
      %s115 = sadd.s32 %s114, 1
      %p118 = scmp.eq.s32.totalorder %s24, 1
      %p119 = scmp.ne.s32.totalorder %s114, %s116
      %p120 = scmp.eq.s32.totalorder %s24, 0
      %p121 = por %p119, %p120
      %p122 = scmp.ne.s32.totalorder %s114, %s116
      %p123 = scmp.eq.s32.totalorder %s29, 1
      %p124 = por %p122, %p123
      %p125 = scmp.ne.s32.totalorder %s116, %s117
      %p126 = scmp.eq.s32.totalorder %s29, 0
      %p127 = por %p125, %p126
      %p128 = scmp.ne.s32.totalorder %s116, %s117
      %p129 = scmp.eq.s32.totalorder %s30, 1
      %p130 = por %p128, %p129
      %p132 = scmp.ne.s32.totalorder %s117, %s131
      %p133 = scmp.eq.s32.totalorder %s30, 0
      %p134 = por %p132, %p133
      %s136 = sadd.s32 %s135, 1
      %p139 = scmp.eq.s32.totalorder %s24, 1
      %p140 = scmp.ne.s32.totalorder %s135, %s137
      %p141 = scmp.eq.s32.totalorder %s24, 0
      %p142 = por %p140, %p141
      %p143 = scmp.ne.s32.totalorder %s135, %s137
      %p144 = scmp.eq.s32.totalorder %s29, 1
      %p145 = por %p143, %p144
      %p146 = scmp.ne.s32.totalorder %s137, %s138
      %p147 = scmp.eq.s32.totalorder %s29, 0
      %p148 = por %p146, %p147
      %p149 = scmp.ne.s32.totalorder %s137, %s138
      %p150 = scmp.eq.s32.totalorder %s30, 1
      %p151 = por %p149, %p150
      %p153 = scmp.ne.s32.totalorder %s138, %s152
      %p154 = scmp.eq.s32.totalorder %s30, 0
      %p155 = por %p153, %p154
      %s156 = ssub.s32 %s31, %s43
      %p157 = scmp.eq.s32.totalorder %s156, 0
      %s159 = sadd.s32 %s158, 1
      %s160 = scalar_select %p157, %s158, %s159
      %p163 = pneg %p157
      %p164 = scmp.eq.s32.totalorder %s24, 1
      %p165 = por %p163, %p164
      %p166 = scmp.ne.s32.totalorder %s158, %s161
      %p167 = scmp.eq.s32.totalorder %s24, 0
      %p168 = por %p166, %p167
      %p169 = scmp.ne.s32.totalorder %s158, %s161
      %p170 = scmp.eq.s32.totalorder %s29, 1
      %p171 = por %p169, %p170
      %p172 = scmp.ne.s32.totalorder %s161, %s162
      %p173 = scmp.eq.s32.totalorder %s29, 0
      %p174 = por %p172, %p173
      %p175 = scmp.ne.s32.totalorder %s161, %s162
      %p176 = scmp.eq.s32.totalorder %s30, 1
      %p177 = por %p175, %p176
      %p179 = scmp.ne.s32.totalorder %s162, %s178
      %p180 = scmp.eq.s32.totalorder %s30, 0
      %p181 = por %p179, %p180
      %s182 = ssub.s32 %s31, %s43
      %p183 = scmp.eq.s32.totalorder %s182, 0
      %s185 = sadd.s32 %s184, 1
      %s186 = scalar_select %p183, %s184, %s185
      %p189 = pneg %p183
      %p190 = scmp.eq.s32.totalorder %s24, 1
      %p191 = por %p189, %p190
      %p192 = scmp.ne.s32.totalorder %s184, %s187
      %p193 = scmp.eq.s32.totalorder %s24, 0
      %p194 = por %p192, %p193
      %p195 = scmp.ne.s32.totalorder %s184, %s187
      %p196 = scmp.eq.s32.totalorder %s29, 1
      %p197 = por %p195, %p196
      %p198 = scmp.ne.s32.totalorder %s187, %s188
      %p199 = scmp.eq.s32.totalorder %s29, 0
      %p200 = por %p198, %p199
      %p201 = scmp.ne.s32.totalorder %s187, %s188
      %p202 = scmp.eq.s32.totalorder %s30, 1
      %p203 = por %p201, %p202
      %p205 = scmp.ne.s32.totalorder %s188, %s204
      %p206 = scmp.eq.s32.totalorder %s30, 0
      %p207 = por %p205, %p206
      %p208 = scmp.le.s32.totalorder 1, %s24
      %p209 = scmp.lt.s32.totalorder %s24, 3
      %p210 = pnand %p208, %p209
      %p211 = pneg %p210
      // Predicated region
      $region9: #{tpu_custom_call.1} parent=5 // pred_check
        _
      $region10: #{tpu_custom_call.1} parent=5 // pred_check_branch
        %213 = sbr.rel (%p210) target = $region12
      $region11: #{tpu_custom_call.1} parent=5 // pred_region
        %s214 = ssub.s32 %s24, 1
        // Predicated region
        $region13: #{tpu_custom_call.1} parent=11 // pred_check
          %p215 = pneg %p85
        $region14: #{tpu_custom_call.1} parent=11 // pred_check_branch
          %217 = sbr.rel (%p215) target = $region16
        $region15: #{tpu_custom_call.1} parent=11 // pred_region
          %219 = vsyncadd [#allocation7], 0
          %s220 = sshll.u32 %s1, 4
          %s221 = int_to_ptr.hbm [resolvable:$true] %s220
          %s222 = sshll.u32 [#allocation6], 4
          %s223 = int_to_ptr.vmem [resolvable:$true] %s222
          %228 = dma.hbm_to_vmem [thread:$0]  %s221, 92160, %s223, [#allocation7], 1024, 1024, 64
        $region16: #{tpu_custom_call.1} parent=11 // pred_fallthru
          _
        // Predicated region
        $region17: #{tpu_custom_call.1} parent=11 // pred_check
          %p229 = pneg %p106
        $region18: #{tpu_custom_call.1} parent=11 // pred_check_branch
          %231 = sbr.rel (%p229) target = $region20
        $region19: #{tpu_custom_call.1} parent=11 // pred_region
          %233 = vsyncadd [#allocation7], 0
          %s235 = sshll.u32 %s2, 4
          %s236 = int_to_ptr.hbm [resolvable:$true] %s235
          %s237 = sshll.u32 [#allocation8], 4
          %s238 = int_to_ptr.vmem [resolvable:$true] %s237
          %240 = dma.hbm_to_vmem [thread:$0]  %s236, 128, %s238, [#allocation7]
        $region20: #{tpu_custom_call.1} parent=11 // pred_fallthru
          _
        // Predicated region
        $region21: #{tpu_custom_call.1} parent=11 // pred_check
          %p241 = pneg %p127
        $region22: #{tpu_custom_call.1} parent=11 // pred_check_branch
          %243 = sbr.rel (%p241) target = $region24
        $region23: #{tpu_custom_call.1} parent=11 // pred_region
          _
        $region24: #{tpu_custom_call.1} parent=11 // pred_fallthru
          _
        // Predicated region
        $region25: #{tpu_custom_call.1} parent=11 // pred_check
          %p244 = pneg %p148
        $region26: #{tpu_custom_call.1} parent=11 // pred_check_branch
          %246 = sbr.rel (%p244) target = $region28
        $region27: #{tpu_custom_call.1} parent=11 // pred_region
          %248 = vsyncadd [#allocation10], 0
          %s250 = sshll.u32 %s4, 4
          %s251 = int_to_ptr.hbm [resolvable:$true] %s250
          %s252 = sshll.u32 [#allocation9], 4
          %s253 = int_to_ptr.vmem [resolvable:$true] %s252
          %255 = dma.hbm_to_vmem [thread:$0]  %s251, 16, %s253, [#allocation10]
        $region28: #{tpu_custom_call.1} parent=11 // pred_fallthru
          _
      $region12: #{tpu_custom_call.1} parent=5 // pred_fallthru
        _
      %p256 = scmp.lt.s32.totalorder %s24, 2
      // Predicated region
      $region29: #{tpu_custom_call.1} parent=5 // pred_check
        %p257 = pneg %p256
      $region30: #{tpu_custom_call.1} parent=5 // pred_check_branch
        %259 = sbr.rel (%p257) target = $region32
      $region31: #{tpu_custom_call.1} parent=5 // pred_region
        // Predicated region
        $region33: #{tpu_custom_call.1} parent=31 // pred_check
          %p260 = pneg %p58
        $region34: #{tpu_custom_call.1} parent=31 // pred_check_branch
          %262 = sbr.rel (%p260) target = $region36
        $region35: #{tpu_custom_call.1} parent=31 // pred_region
          %s263 = sand.u32 %s48, 1
          %s264 = scalar_lea.sflag [#allocation4], %s263
          %s265 = sand.u32 %s48, 1
          %s266 = smul.addr %s265, 1440
          %s267 = scalar_lea.vmem [#allocation3], %s266
          %s268 = smul.u32 2, %s32
          %270 = vsyncadd %s264, 0
          %s271 = smul.addr %s31, 180
          %s272 = sadd.s32 %s268, %s271
          %s273 = smul.addr %s272, 8
          %s274 = scalar_lea.hbm %s0, %s273
          %s275 = sshll.u32 %s274, 4
          %s276 = int_to_ptr.hbm [resolvable:$true] %s275
          %s277 = sshll.u32 %s267, 4
          %s278 = int_to_ptr.vmem [resolvable:$true] %s277
          %283 = dma.hbm_to_vmem [thread:$0]  %s276, 23040, %s278, %s264, 256, 256, 16
        $region36: #{tpu_custom_call.1} parent=31 // pred_fallthru
          _
      $region32: #{tpu_custom_call.1} parent=5 // pred_fallthru
        _
      %p284 = scmp.le.s32.totalorder 1, %s24
      %p285 = scmp.lt.s32.totalorder %s24, 3
      %p286 = pnand %p284, %p285
      %p287 = pneg %p286
      // Predicated region
      $region37: #{tpu_custom_call.1} parent=5 // pred_check
        _
      $region38: #{tpu_custom_call.1} parent=5 // pred_check_branch
        %289 = sbr.rel (%p286) target = $region40
      $region39: #{tpu_custom_call.1} parent=5 // pred_region
        %s290 = ssub.s32 %s24, 1
        %s291 = sand.u32 %s51, 1
        %s292 = scalar_lea.sflag [#allocation4], %s291
        %s293 = sand.u32 %s51, 1
        %s294 = smul.addr %s293, 1440
        %s295 = scalar_lea.vmem [#allocation3], %s294
        // Predicated region
        $region41: #{tpu_custom_call.1} parent=39 // pred_check
          %p296 = pneg %p64
        $region42: #{tpu_custom_call.1} parent=39 // pred_check_branch
          %298 = sbr.rel (%p296) target = $region44
        $region43: #{tpu_custom_call.1} parent=39 // pred_region
          %300 = dma.done %s292, 23040
        $region44: #{tpu_custom_call.1} parent=39 // pred_fallthru
          _
        // Predicated region
        $region45: #{tpu_custom_call.1} parent=39 // pred_check
          %p301 = pneg %p85
        $region46: #{tpu_custom_call.1} parent=39 // pred_check_branch
          %303 = sbr.rel (%p301) target = $region48
        $region47: #{tpu_custom_call.1} parent=39 // pred_region
          %305 = dma.done [#allocation7], 92160
        $region48: #{tpu_custom_call.1} parent=39 // pred_fallthru
          _
        // Predicated region
        $region49: #{tpu_custom_call.1} parent=39 // pred_check
          %p306 = pneg %p106
        $region50: #{tpu_custom_call.1} parent=39 // pred_check_branch
          %308 = sbr.rel (%p306) target = $region52
        $region51: #{tpu_custom_call.1} parent=39 // pred_region
          %310 = dma.done [#allocation7], 128
        $region52: #{tpu_custom_call.1} parent=39 // pred_fallthru
          _
        // Predicated region
        $region53: #{tpu_custom_call.1} parent=39 // pred_check
          %p311 = pneg %p148
        $region54: #{tpu_custom_call.1} parent=39 // pred_check_branch
          %313 = sbr.rel (%p311) target = $region56
        $region55: #{tpu_custom_call.1} parent=39 // pred_region
          %315 = dma.done [#allocation10], 16
        $region56: #{tpu_custom_call.1} parent=39 // pred_fallthru
          _
        %s316 = sand.u32 %s51, 1
        %s317 = scalar_lea.sflag [#allocation4], %s316
        %s318 = sand.u32 %s51, 1
        %s319 = smul.addr %s318, 1440
        %s320 = scalar_lea.vmem [#allocation3], %s319
        %p321 = pneg %p64
        %p322 = pneg %p61
        %p323 = pneg %p85
        %p324 = pneg %p82
        %p325 = pneg %p106
        %p326 = pneg %p103
        %p327 = pneg %p127
        %p328 = pneg %p124
        %p329 = pneg %p148
        %p330 = pneg %p145
        %p331 = pneg %p174
        %p332 = pneg %p171
        %s333 = sand.u32 %s161, 1
        %s334 = scalar_lea.sflag [#allocation5], %s333
        %s335 = sand.u32 %s161, 1
        %s336 = scalar_lea.vmem [#allocation11], %s335
        %p337 = pneg %p200
        %p338 = pneg %p197
        %s339 = sand.u32 %s187, 1
        %s340 = scalar_lea.sflag [#allocation13], %s339
        %s341 = sand.u32 %s187, 1
        %s342 = smul.addr %s341, 6
        %s343 = scalar_lea.vmem [#allocation12], %s342
        %s344 = smul.u32 2, %s34
        %p345 = scmp.eq.s32.totalorder %s34, 0
        // Predicated region
        $region57: #{tpu_custom_call.1} parent=39 // pred_check
          %p346 = pneg %p345
        $region58: #{tpu_custom_call.1} parent=39 // pred_check_branch
          %348 = sbr.rel (%p346) target = $region60
        $region59: #{tpu_custom_call.1} parent=39 // pred_region
          %349 = vst [vmem:[#allocation2] sm:$0xff] 0.0
          %350 = vst [vmem:[#allocation2 + $0x8] sm:$0xff] 0.0
          %351 = vst [vmem:[#allocation2 + $0x10] sm:$0xff] 0.0
          %352 = vst [vmem:[#allocation2 + $0x18] sm:$0xff] 0.0
          %353 = vst [vmem:[#allocation2 + $0x20] sm:$0xff] 0.0
          %354 = vst [vmem:[#allocation2 + $0x28] sm:$0xff] 0.0
          %355 = vst [vmem:[#allocation2 + $0x30] sm:$0xff] 0.0
          %356 = vst [vmem:[#allocation2 + $0x38] sm:$0xff] 0.0
          %357 = vst [vmem:[#allocation2 + $0x40] sm:$0xff] 0.0
          %358 = vst [vmem:[#allocation2 + $0x48] sm:$0xff] 0.0
          %359 = vst [vmem:[#allocation2 + $0x50] sm:$0xff] 0.0
          %360 = vst [vmem:[#allocation2 + $0x58] sm:$0xff] 0.0
          %361 = vst [vmem:[#allocation2 + $0x60] sm:$0xff] 0.0
          %362 = vst [vmem:[#allocation2 + $0x68] sm:$0xff] 0.0
          %363 = vst [vmem:[#allocation2 + $0x70] sm:$0xff] 0.0
          %364 = vst [vmem:[#allocation2 + $0x78] sm:$0xff] 0.0
          %365 = vst [vmem:[#allocation2 + $0x80] sm:$0xff] 0.0
          %366 = vst [vmem:[#allocation2 + $0x88] sm:$0xff] 0.0
          %367 = vst [vmem:[#allocation2 + $0x90] sm:$0xff] 0.0
          %368 = vst [vmem:[#allocation2 + $0x98] sm:$0xff] 0.0
          %369 = vst [vmem:[#allocation2 + $0xa0] sm:$0xff] 0.0
          %370 = vst [vmem:[#allocation2 + $0xa8] sm:$0xff] 0.0
          %371 = vst [vmem:[#allocation2 + $0xb0] sm:$0xff] 0.0
          %372 = vst [vmem:[#allocation2 + $0xb8] sm:$0xff] 0.0
          %373 = vst [vmem:[#allocation2 + $0xc0] sm:$0xff] 0.0
          %374 = vst [vmem:[#allocation2 + $0xc8] sm:$0xff] 0.0
          %375 = vst [vmem:[#allocation2 + $0xd0] sm:$0xff] 0.0
          %376 = vst [vmem:[#allocation2 + $0xd8] sm:$0xff] 0.0
          %377 = vst [vmem:[#allocation2 + $0xe0] sm:$0xff] 0.0
          %378 = vst [vmem:[#allocation2 + $0xe8] sm:$0xff] 0.0
          %379 = vst [vmem:[#allocation2 + $0xf0] sm:$0xff] 0.0
          %380 = vst [vmem:[#allocation2 + $0xf8] sm:$0xff] 0.0
          %381 = vst [vmem:[#allocation2 + $0x100] sm:$0xff] 0.0
          %382 = vst [vmem:[#allocation2 + $0x108] sm:$0xff] 0.0
          %383 = vst [vmem:[#allocation2 + $0x110] sm:$0xff] 0.0
          %384 = vst [vmem:[#allocation2 + $0x118] sm:$0xff] 0.0
          %385 = vst [vmem:[#allocation2 + $0x120] sm:$0xff] 0.0
          %386 = vst [vmem:[#allocation2 + $0x128] sm:$0xff] 0.0
          %387 = vst [vmem:[#allocation2 + $0x130] sm:$0xff] 0.0
          %388 = vst [vmem:[#allocation2 + $0x138] sm:$0xff] 0.0
          %389 = vst [vmem:[#allocation2 + $0x140] sm:$0xff] 0.0
          %390 = vst [vmem:[#allocation2 + $0x148] sm:$0xff] 0.0
          %391 = vst [vmem:[#allocation2 + $0x150] sm:$0xff] 0.0
          %392 = vst [vmem:[#allocation2 + $0x158] sm:$0xff] 0.0
          %393 = vst [vmem:[#allocation2 + $0x160] sm:$0xff] 0.0
          %394 = vst [vmem:[#allocation2 + $0x168] sm:$0xff] 0.0
          %395 = vst [vmem:[#allocation2 + $0x170] sm:$0xff] 0.0
          %396 = vst [vmem:[#allocation2 + $0x178] sm:$0xff] 0.0
          %397 = vst [vmem:[#allocation2 + $0x180] sm:$0xff] 0.0
          %398 = vst [vmem:[#allocation2 + $0x188] sm:$0xff] 0.0
          %399 = vst [vmem:[#allocation2 + $0x190] sm:$0xff] 0.0
          %400 = vst [vmem:[#allocation2 + $0x198] sm:$0xff] 0.0
          %401 = vst [vmem:[#allocation2 + $0x1a0] sm:$0xff] 0.0
          %402 = vst [vmem:[#allocation2 + $0x1a8] sm:$0xff] 0.0
          %403 = vst [vmem:[#allocation2 + $0x1b0] sm:$0xff] 0.0
          %404 = vst [vmem:[#allocation2 + $0x1b8] sm:$0xff] 0.0
          %405 = vst [vmem:[#allocation2 + $0x1c0] sm:$0xff] 0.0
          %406 = vst [vmem:[#allocation2 + $0x1c8] sm:$0xff] 0.0
          %407 = vst [vmem:[#allocation2 + $0x1d0] sm:$0xff] 0.0
          %408 = vst [vmem:[#allocation2 + $0x1d8] sm:$0xff] 0.0
          %409 = vst [vmem:[#allocation2 + $0x1e0] sm:$0xff] 0.0
          %410 = vst [vmem:[#allocation2 + $0x1e8] sm:$0xff] 0.0
          %411 = vst [vmem:[#allocation2 + $0x1f0] sm:$0xff] 0.0
          %412 = vst [vmem:[#allocation2 + $0x1f8] sm:$0xff] 0.0
          %413 = vst [vmem:[#allocation2 + $0x200] sm:$0xff] 0.0
          %414 = vst [vmem:[#allocation2 + $0x208] sm:$0xff] 0.0
          %415 = vst [vmem:[#allocation2 + $0x210] sm:$0xff] 0.0
          %416 = vst [vmem:[#allocation2 + $0x218] sm:$0xff] 0.0
          %417 = vst [vmem:[#allocation2 + $0x220] sm:$0xff] 0.0
          %418 = vst [vmem:[#allocation2 + $0x228] sm:$0xff] 0.0
          %419 = vst [vmem:[#allocation2 + $0x230] sm:$0xff] 0.0
          %420 = vst [vmem:[#allocation2 + $0x238] sm:$0xff] 0.0
          %421 = vst [vmem:[#allocation2 + $0x240] sm:$0xff] 0.0
          %422 = vst [vmem:[#allocation2 + $0x248] sm:$0xff] 0.0
          %423 = vst [vmem:[#allocation2 + $0x250] sm:$0xff] 0.0
          %424 = vst [vmem:[#allocation2 + $0x258] sm:$0xff] 0.0
          %425 = vst [vmem:[#allocation2 + $0x260] sm:$0xff] 0.0
          %426 = vst [vmem:[#allocation2 + $0x268] sm:$0xff] 0.0
          %427 = vst [vmem:[#allocation2 + $0x270] sm:$0xff] 0.0
          %428 = vst [vmem:[#allocation2 + $0x278] sm:$0xff] 0.0
          %429 = vst [vmem:[#allocation2 + $0x280] sm:$0xff] 0.0
          %430 = vst [vmem:[#allocation2 + $0x288] sm:$0xff] 0.0
          %431 = vst [vmem:[#allocation2 + $0x290] sm:$0xff] 0.0
          %432 = vst [vmem:[#allocation2 + $0x298] sm:$0xff] 0.0
          %433 = vst [vmem:[#allocation2 + $0x2a0] sm:$0xff] 0.0
          %434 = vst [vmem:[#allocation2 + $0x2a8] sm:$0xff] 0.0
          %435 = vst [vmem:[#allocation2 + $0x2b0] sm:$0xff] 0.0
          %436 = vst [vmem:[#allocation2 + $0x2b8] sm:$0xff] 0.0
          %437 = vst [vmem:[#allocation2 + $0x2c0] sm:$0xff] 0.0
          %438 = vst [vmem:[#allocation2 + $0x2c8] sm:$0xff] 0.0
        $region60: #{tpu_custom_call.1} parent=39 // pred_fallthru
          _
        %v439 = vld [vmem:[%s295] sm:$0xff]
        %v440 = vld [vmem:[%s295 + $0x10] sm:$0xff]
        %v441 = vld [vmem:[%s295 + $0x20] sm:$0xff]
        %v442 = vld [vmem:[%s295 + $0x30] sm:$0xff]
        %v443 = vld [vmem:[%s295 + $0x40] sm:$0xff]
        %v444 = vld [vmem:[%s295 + $0x50] sm:$0xff]
        %v445 = vld [vmem:[%s295 + $0x60] sm:$0xff]
        %v446 = vld [vmem:[%s295 + $0x70] sm:$0xff]
        %v447 = vld [vmem:[%s295 + $0x80] sm:$0xff]
        %v448 = vld [vmem:[%s295 + $0x90] sm:$0xff]
        %v449 = vld [vmem:[%s295 + $0xa0] sm:$0xff]
        %v450 = vld [vmem:[%s295 + $0xb0] sm:$0xff]
        %v451 = vld [vmem:[%s295 + $0xc0] sm:$0xff]
        %v452 = vld [vmem:[%s295 + $0xd0] sm:$0xff]
        %v453 = vld [vmem:[%s295 + $0xe0] sm:$0xff]
        %v454 = vld [vmem:[%s295 + $0xf0] sm:$0xff]
        %v455 = vld [vmem:[%s295 + $0x100] sm:$0xff]
        %v456 = vld [vmem:[%s295 + $0x110] sm:$0xff]
        %v457 = vld [vmem:[%s295 + $0x120] sm:$0xff]
        %v458 = vld [vmem:[%s295 + $0x130] sm:$0xff]
        %v459 = vld [vmem:[%s295 + $0x140] sm:$0xff]
        %v460 = vld [vmem:[%s295 + $0x150] sm:$0xff]
        %v461 = vld [vmem:[%s295 + $0x160] sm:$0xff]
        %v462 = vld [vmem:[%s295 + $0x170] sm:$0xff]
        %v463 = vld [vmem:[%s295 + $0x180] sm:$0xff]
        %v464 = vld [vmem:[%s295 + $0x190] sm:$0xff]
        %v465 = vld [vmem:[%s295 + $0x1a0] sm:$0xff]
        %v466 = vld [vmem:[%s295 + $0x1b0] sm:$0xff]
        %v467 = vld [vmem:[%s295 + $0x1c0] sm:$0xff]
        %v468 = vld [vmem:[%s295 + $0x1d0] sm:$0xff]
        %v469 = vld [vmem:[%s295 + $0x1e0] sm:$0xff]
        %v470 = vld [vmem:[%s295 + $0x1f0] sm:$0xff]
        %v471 = vld [vmem:[%s295 + $0x200] sm:$0xff]
        %v472 = vld [vmem:[%s295 + $0x210] sm:$0xff]
        %v473 = vld [vmem:[%s295 + $0x220] sm:$0xff]
        %v474 = vld [vmem:[%s295 + $0x230] sm:$0xff]
        %v475 = vld [vmem:[%s295 + $0x240] sm:$0xff]
        %v476 = vld [vmem:[%s295 + $0x250] sm:$0xff]
        %v477 = vld [vmem:[%s295 + $0x260] sm:$0xff]
        %v478 = vld [vmem:[%s295 + $0x270] sm:$0xff]
        %v479 = vld [vmem:[%s295 + $0x280] sm:$0xff]
        %v480 = vld [vmem:[%s295 + $0x290] sm:$0xff]
        %v481 = vld [vmem:[%s295 + $0x2a0] sm:$0xff]
        %v482 = vld [vmem:[%s295 + $0x2b0] sm:$0xff]
        %v483 = vld [vmem:[%s295 + $0x2c0] sm:$0xff]
        %v484 = vld [vmem:[%s295 + $0x2d0] sm:$0xff]
        %v485 = vld [vmem:[%s295 + $0x2e0] sm:$0xff]
        %v486 = vld [vmem:[%s295 + $0x2f0] sm:$0xff]
        %v487 = vld [vmem:[%s295 + $0x300] sm:$0xff]
        %v488 = vld [vmem:[%s295 + $0x310] sm:$0xff]
        %v489 = vld [vmem:[%s295 + $0x320] sm:$0xff]
        %v490 = vld [vmem:[%s295 + $0x330] sm:$0xff]
        %v491 = vld [vmem:[%s295 + $0x340] sm:$0xff]
        %v492 = vld [vmem:[%s295 + $0x350] sm:$0xff]
        %v493 = vld [vmem:[%s295 + $0x360] sm:$0xff]
        %v494 = vld [vmem:[%s295 + $0x370] sm:$0xff]
        %v495 = vld [vmem:[%s295 + $0x380] sm:$0xff]
        %v496 = vld [vmem:[%s295 + $0x390] sm:$0xff]
        %v497 = vld [vmem:[%s295 + $0x3a0] sm:$0xff]
        %v498 = vld [vmem:[%s295 + $0x3b0] sm:$0xff]
        %v499 = vld [vmem:[%s295 + $0x3c0] sm:$0xff]
        %v500 = vld [vmem:[%s295 + $0x3d0] sm:$0xff]
        %v501 = vld [vmem:[%s295 + $0x3e0] sm:$0xff]
        %v502 = vld [vmem:[%s295 + $0x3f0] sm:$0xff]
        %v503 = vld [vmem:[%s295 + $0x400] sm:$0xff]
        %v504 = vld [vmem:[%s295 + $0x410] sm:$0xff]
        %v505 = vld [vmem:[%s295 + $0x420] sm:$0xff]
        %v506 = vld [vmem:[%s295 + $0x430] sm:$0xff]
        %v507 = vld [vmem:[%s295 + $0x440] sm:$0xff]
        %v508 = vld [vmem:[%s295 + $0x450] sm:$0xff]
        %v509 = vld [vmem:[%s295 + $0x460] sm:$0xff]
        %v510 = vld [vmem:[%s295 + $0x470] sm:$0xff]
        %v511 = vld [vmem:[%s295 + $0x480] sm:$0xff]
        %v512 = vld [vmem:[%s295 + $0x490] sm:$0xff]
        %v513 = vld [vmem:[%s295 + $0x4a0] sm:$0xff]
        %v514 = vld [vmem:[%s295 + $0x4b0] sm:$0xff]
        %v515 = vld [vmem:[%s295 + $0x4c0] sm:$0xff]
        %v516 = vld [vmem:[%s295 + $0x4d0] sm:$0xff]
        %v517 = vld [vmem:[%s295 + $0x4e0] sm:$0xff]
        %v518 = vld [vmem:[%s295 + $0x4f0] sm:$0xff]
        %v519 = vld [vmem:[%s295 + $0x500] sm:$0xff]
        %v520 = vld [vmem:[%s295 + $0x510] sm:$0xff]
        %v521 = vld [vmem:[%s295 + $0x520] sm:$0xff]
        %v522 = vld [vmem:[%s295 + $0x530] sm:$0xff]
        %v523 = vld [vmem:[%s295 + $0x540] sm:$0xff]
        %v524 = vld [vmem:[%s295 + $0x550] sm:$0xff]
        %v525 = vld [vmem:[%s295 + $0x560] sm:$0xff]
        %v526 = vld [vmem:[%s295 + $0x570] sm:$0xff]
        %v527 = vld [vmem:[%s295 + $0x580] sm:$0xff]
        %v528 = vld [vmem:[%s295 + $0x590] sm:$0xff]
        %v529 = vld [vmem:[%s295 + $0x8] sm:$0xff]
        %v530 = vld [vmem:[%s295 + $0x18] sm:$0xff]
        %v531 = vld [vmem:[%s295 + $0x28] sm:$0xff]
        %v532 = vld [vmem:[%s295 + $0x38] sm:$0xff]
        %v533 = vld [vmem:[%s295 + $0x48] sm:$0xff]
        %v534 = vld [vmem:[%s295 + $0x58] sm:$0xff]
        %v535 = vld [vmem:[%s295 + $0x68] sm:$0xff]
        %v536 = vld [vmem:[%s295 + $0x78] sm:$0xff]
        %v537 = vld [vmem:[%s295 + $0x88] sm:$0xff]
        %v538 = vld [vmem:[%s295 + $0x98] sm:$0xff]
        %v539 = vld [vmem:[%s295 + $0xa8] sm:$0xff]
        %v540 = vld [vmem:[%s295 + $0xb8] sm:$0xff]
        %v541 = vld [vmem:[%s295 + $0xc8] sm:$0xff]
        %v542 = vld [vmem:[%s295 + $0xd8] sm:$0xff]
        %v543 = vld [vmem:[%s295 + $0xe8] sm:$0xff]
        %v544 = vld [vmem:[%s295 + $0xf8] sm:$0xff]
        %v545 = vld [vmem:[%s295 + $0x108] sm:$0xff]
        %v546 = vld [vmem:[%s295 + $0x118] sm:$0xff]
        %v547 = vld [vmem:[%s295 + $0x128] sm:$0xff]
        %v548 = vld [vmem:[%s295 + $0x138] sm:$0xff]
        %v549 = vld [vmem:[%s295 + $0x148] sm:$0xff]
        %v550 = vld [vmem:[%s295 + $0x158] sm:$0xff]
        %v551 = vld [vmem:[%s295 + $0x168] sm:$0xff]
        %v552 = vld [vmem:[%s295 + $0x178] sm:$0xff]
        %v553 = vld [vmem:[%s295 + $0x188] sm:$0xff]
        %v554 = vld [vmem:[%s295 + $0x198] sm:$0xff]
        %v555 = vld [vmem:[%s295 + $0x1a8] sm:$0xff]
        %v556 = vld [vmem:[%s295 + $0x1b8] sm:$0xff]
        %v557 = vld [vmem:[%s295 + $0x1c8] sm:$0xff]
        %v558 = vld [vmem:[%s295 + $0x1d8] sm:$0xff]
        %v559 = vld [vmem:[%s295 + $0x1e8] sm:$0xff]
        %v560 = vld [vmem:[%s295 + $0x1f8] sm:$0xff]
        %v561 = vld [vmem:[%s295 + $0x208] sm:$0xff]
        %v562 = vld [vmem:[%s295 + $0x218] sm:$0xff]
        %v563 = vld [vmem:[%s295 + $0x228] sm:$0xff]
        %v564 = vld [vmem:[%s295 + $0x238] sm:$0xff]
        %v565 = vld [vmem:[%s295 + $0x248] sm:$0xff]
        %v566 = vld [vmem:[%s295 + $0x258] sm:$0xff]
        %v567 = vld [vmem:[%s295 + $0x268] sm:$0xff]
        %v568 = vld [vmem:[%s295 + $0x278] sm:$0xff]
        %v569 = vld [vmem:[%s295 + $0x288] sm:$0xff]
        %v570 = vld [vmem:[%s295 + $0x298] sm:$0xff]
        %v571 = vld [vmem:[%s295 + $0x2a8] sm:$0xff]
        %v572 = vld [vmem:[%s295 + $0x2b8] sm:$0xff]
        %v573 = vld [vmem:[%s295 + $0x2c8] sm:$0xff]
        %v574 = vld [vmem:[%s295 + $0x2d8] sm:$0xff]
        %v575 = vld [vmem:[%s295 + $0x2e8] sm:$0xff]
        %v576 = vld [vmem:[%s295 + $0x2f8] sm:$0xff]
        %v577 = vld [vmem:[%s295 + $0x308] sm:$0xff]
        %v578 = vld [vmem:[%s295 + $0x318] sm:$0xff]
        %v579 = vld [vmem:[%s295 + $0x328] sm:$0xff]
        %v580 = vld [vmem:[%s295 + $0x338] sm:$0xff]
        %v581 = vld [vmem:[%s295 + $0x348] sm:$0xff]
        %v582 = vld [vmem:[%s295 + $0x358] sm:$0xff]
        %v583 = vld [vmem:[%s295 + $0x368] sm:$0xff]
        %v584 = vld [vmem:[%s295 + $0x378] sm:$0xff]
        %v585 = vld [vmem:[%s295 + $0x388] sm:$0xff]
        %v586 = vld [vmem:[%s295 + $0x398] sm:$0xff]
        %v587 = vld [vmem:[%s295 + $0x3a8] sm:$0xff]
        %v588 = vld [vmem:[%s295 + $0x3b8] sm:$0xff]
        %v589 = vld [vmem:[%s295 + $0x3c8] sm:$0xff]
        %v590 = vld [vmem:[%s295 + $0x3d8] sm:$0xff]
        %v591 = vld [vmem:[%s295 + $0x3e8] sm:$0xff]
        %v592 = vld [vmem:[%s295 + $0x3f8] sm:$0xff]
        %v593 = vld [vmem:[%s295 + $0x408] sm:$0xff]
        %v594 = vld [vmem:[%s295 + $0x418] sm:$0xff]
        %v595 = vld [vmem:[%s295 + $0x428] sm:$0xff]
        %v596 = vld [vmem:[%s295 + $0x438] sm:$0xff]
        %v597 = vld [vmem:[%s295 + $0x448] sm:$0xff]
        %v598 = vld [vmem:[%s295 + $0x458] sm:$0xff]
        %v599 = vld [vmem:[%s295 + $0x468] sm:$0xff]
        %v600 = vld [vmem:[%s295 + $0x478] sm:$0xff]
        %v601 = vld [vmem:[%s295 + $0x488] sm:$0xff]
        %v602 = vld [vmem:[%s295 + $0x498] sm:$0xff]
        %v603 = vld [vmem:[%s295 + $0x4a8] sm:$0xff]
        %v604 = vld [vmem:[%s295 + $0x4b8] sm:$0xff]
        %v605 = vld [vmem:[%s295 + $0x4c8] sm:$0xff]
        %v606 = vld [vmem:[%s295 + $0x4d8] sm:$0xff]
        %v607 = vld [vmem:[%s295 + $0x4e8] sm:$0xff]
        %v608 = vld [vmem:[%s295 + $0x4f8] sm:$0xff]
        %v609 = vld [vmem:[%s295 + $0x508] sm:$0xff]
        %v610 = vld [vmem:[%s295 + $0x518] sm:$0xff]
        %v611 = vld [vmem:[%s295 + $0x528] sm:$0xff]
        %v612 = vld [vmem:[%s295 + $0x538] sm:$0xff]
        %v613 = vld [vmem:[%s295 + $0x548] sm:$0xff]
        %v614 = vld [vmem:[%s295 + $0x558] sm:$0xff]
        %v615 = vld [vmem:[%s295 + $0x568] sm:$0xff]
        %v616 = vld [vmem:[%s295 + $0x578] sm:$0xff]
        %v617 = vld [vmem:[%s295 + $0x588] sm:$0xff]
        %v618 = vld [vmem:[%s295 + $0x598] sm:$0xff]
        %v619 = vadd.f32 %v439, %v529
        %v620 = vadd.f32 %v440, %v530
        %v621 = vadd.f32 %v441, %v531
        %v622 = vadd.f32 %v442, %v532
        %v623 = vadd.f32 %v443, %v533
        %v624 = vadd.f32 %v444, %v534
        %v625 = vadd.f32 %v445, %v535
        %v626 = vadd.f32 %v446, %v536
        %v627 = vadd.f32 %v447, %v537
        %v628 = vadd.f32 %v448, %v538
        %v629 = vadd.f32 %v449, %v539
        %v630 = vadd.f32 %v450, %v540
        %v631 = vadd.f32 %v451, %v541
        %v632 = vadd.f32 %v452, %v542
        %v633 = vadd.f32 %v453, %v543
        %v634 = vadd.f32 %v454, %v544
        %v635 = vadd.f32 %v455, %v545
        %v636 = vadd.f32 %v456, %v546
        %v637 = vadd.f32 %v457, %v547
        %v638 = vadd.f32 %v458, %v548
        %v639 = vadd.f32 %v459, %v549
        %v640 = vadd.f32 %v460, %v550
        %v641 = vadd.f32 %v461, %v551
        %v642 = vadd.f32 %v462, %v552
        %v643 = vadd.f32 %v463, %v553
        %v644 = vadd.f32 %v464, %v554
        %v645 = vadd.f32 %v465, %v555
        %v646 = vadd.f32 %v466, %v556
        %v647 = vadd.f32 %v467, %v557
        %v648 = vadd.f32 %v468, %v558
        %v649 = vadd.f32 %v469, %v559
        %v650 = vadd.f32 %v470, %v560
        %v651 = vadd.f32 %v471, %v561
        %v652 = vadd.f32 %v472, %v562
        %v653 = vadd.f32 %v473, %v563
        %v654 = vadd.f32 %v474, %v564
        %v655 = vadd.f32 %v475, %v565
        %v656 = vadd.f32 %v476, %v566
        %v657 = vadd.f32 %v477, %v567
        %v658 = vadd.f32 %v478, %v568
        %v659 = vadd.f32 %v479, %v569
        %v660 = vadd.f32 %v480, %v570
        %v661 = vadd.f32 %v481, %v571
        %v662 = vadd.f32 %v482, %v572
        %v663 = vadd.f32 %v483, %v573
        %v664 = vadd.f32 %v484, %v574
        %v665 = vadd.f32 %v485, %v575
        %v666 = vadd.f32 %v486, %v576
        %v667 = vadd.f32 %v487, %v577
        %v668 = vadd.f32 %v488, %v578
        %v669 = vadd.f32 %v489, %v579
        %v670 = vadd.f32 %v490, %v580
        %v671 = vadd.f32 %v491, %v581
        %v672 = vadd.f32 %v492, %v582
        %v673 = vadd.f32 %v493, %v583
        %v674 = vadd.f32 %v494, %v584
        %v675 = vadd.f32 %v495, %v585
        %v676 = vadd.f32 %v496, %v586
        %v677 = vadd.f32 %v497, %v587
        %v678 = vadd.f32 %v498, %v588
        %v679 = vadd.f32 %v499, %v589
        %v680 = vadd.f32 %v500, %v590
        %v681 = vadd.f32 %v501, %v591
        %v682 = vadd.f32 %v502, %v592
        %v683 = vadd.f32 %v503, %v593
        %v684 = vadd.f32 %v504, %v594
        %v685 = vadd.f32 %v505, %v595
        %v686 = vadd.f32 %v506, %v596
        %v687 = vadd.f32 %v507, %v597
        %v688 = vadd.f32 %v508, %v598
        %v689 = vadd.f32 %v509, %v599
        %v690 = vadd.f32 %v510, %v600
        %v691 = vadd.f32 %v511, %v601
        %v692 = vadd.f32 %v512, %v602
        %v693 = vadd.f32 %v513, %v603
        %v694 = vadd.f32 %v514, %v604
        %v695 = vadd.f32 %v515, %v605
        %v696 = vadd.f32 %v516, %v606
        %v697 = vadd.f32 %v517, %v607
        %v698 = vadd.f32 %v518, %v608
        %v699 = vadd.f32 %v519, %v609
        %v700 = vadd.f32 %v520, %v610
        %v701 = vadd.f32 %v521, %v611
        %v702 = vadd.f32 %v522, %v612
        %v703 = vadd.f32 %v523, %v613
        %v704 = vadd.f32 %v524, %v614
        %v705 = vadd.f32 %v525, %v615
        %v706 = vadd.f32 %v526, %v616
        %v707 = vadd.f32 %v527, %v617
        %v708 = vadd.f32 %v528, %v618
        %v709 = vld [vmem:[#allocation2] sm:$0xff]
        %v710 = vld [vmem:[#allocation2 + $0x8] sm:$0xff]
        %v711 = vld [vmem:[#allocation2 + $0x10] sm:$0xff]
        %v712 = vld [vmem:[#allocation2 + $0x18] sm:$0xff]
        %v713 = vld [vmem:[#allocation2 + $0x20] sm:$0xff]
        %v714 = vld [vmem:[#allocation2 + $0x28] sm:$0xff]
        %v715 = vld [vmem:[#allocation2 + $0x30] sm:$0xff]
        %v716 = vld [vmem:[#allocation2 + $0x38] sm:$0xff]
        %v717 = vld [vmem:[#allocation2 + $0x40] sm:$0xff]
        %v718 = vld [vmem:[#allocation2 + $0x48] sm:$0xff]
        %v719 = vld [vmem:[#allocation2 + $0x50] sm:$0xff]
        %v720 = vld [vmem:[#allocation2 + $0x58] sm:$0xff]
        %v721 = vld [vmem:[#allocation2 + $0x60] sm:$0xff]
        %v722 = vld [vmem:[#allocation2 + $0x68] sm:$0xff]
        %v723 = vld [vmem:[#allocation2 + $0x70] sm:$0xff]
        %v724 = vld [vmem:[#allocation2 + $0x78] sm:$0xff]
        %v725 = vld [vmem:[#allocation2 + $0x80] sm:$0xff]
        %v726 = vld [vmem:[#allocation2 + $0x88] sm:$0xff]
        %v727 = vld [vmem:[#allocation2 + $0x90] sm:$0xff]
        %v728 = vld [vmem:[#allocation2 + $0x98] sm:$0xff]
        %v729 = vld [vmem:[#allocation2 + $0xa0] sm:$0xff]
        %v730 = vld [vmem:[#allocation2 + $0xa8] sm:$0xff]
        %v731 = vld [vmem:[#allocation2 + $0xb0] sm:$0xff]
        %v732 = vld [vmem:[#allocation2 + $0xb8] sm:$0xff]
        %v733 = vld [vmem:[#allocation2 + $0xc0] sm:$0xff]
        %v734 = vld [vmem:[#allocation2 + $0xc8] sm:$0xff]
        %v735 = vld [vmem:[#allocation2 + $0xd0] sm:$0xff]
        %v736 = vld [vmem:[#allocation2 + $0xd8] sm:$0xff]
        %v737 = vld [vmem:[#allocation2 + $0xe0] sm:$0xff]
        %v738 = vld [vmem:[#allocation2 + $0xe8] sm:$0xff]
        %v739 = vld [vmem:[#allocation2 + $0xf0] sm:$0xff]
        %v740 = vld [vmem:[#allocation2 + $0xf8] sm:$0xff]
        %v741 = vld [vmem:[#allocation2 + $0x100] sm:$0xff]
        %v742 = vld [vmem:[#allocation2 + $0x108] sm:$0xff]
        %v743 = vld [vmem:[#allocation2 + $0x110] sm:$0xff]
        %v744 = vld [vmem:[#allocation2 + $0x118] sm:$0xff]
        %v745 = vld [vmem:[#allocation2 + $0x120] sm:$0xff]
        %v746 = vld [vmem:[#allocation2 + $0x128] sm:$0xff]
        %v747 = vld [vmem:[#allocation2 + $0x130] sm:$0xff]
        %v748 = vld [vmem:[#allocation2 + $0x138] sm:$0xff]
        %v749 = vld [vmem:[#allocation2 + $0x140] sm:$0xff]
        %v750 = vld [vmem:[#allocation2 + $0x148] sm:$0xff]
        %v751 = vld [vmem:[#allocation2 + $0x150] sm:$0xff]
        %v752 = vld [vmem:[#allocation2 + $0x158] sm:$0xff]
        %v753 = vld [vmem:[#allocation2 + $0x160] sm:$0xff]
        %v754 = vld [vmem:[#allocation2 + $0x168] sm:$0xff]
        %v755 = vld [vmem:[#allocation2 + $0x170] sm:$0xff]
        %v756 = vld [vmem:[#allocation2 + $0x178] sm:$0xff]
        %v757 = vld [vmem:[#allocation2 + $0x180] sm:$0xff]
        %v758 = vld [vmem:[#allocation2 + $0x188] sm:$0xff]
        %v759 = vld [vmem:[#allocation2 + $0x190] sm:$0xff]
        %v760 = vld [vmem:[#allocation2 + $0x198] sm:$0xff]
        %v761 = vld [vmem:[#allocation2 + $0x1a0] sm:$0xff]
        %v762 = vld [vmem:[#allocation2 + $0x1a8] sm:$0xff]
        %v763 = vld [vmem:[#allocation2 + $0x1b0] sm:$0xff]
        %v764 = vld [vmem:[#allocation2 + $0x1b8] sm:$0xff]
        %v765 = vld [vmem:[#allocation2 + $0x1c0] sm:$0xff]
        %v766 = vld [vmem:[#allocation2 + $0x1c8] sm:$0xff]
        %v767 = vld [vmem:[#allocation2 + $0x1d0] sm:$0xff]
        %v768 = vld [vmem:[#allocation2 + $0x1d8] sm:$0xff]
        %v769 = vld [vmem:[#allocation2 + $0x1e0] sm:$0xff]
        %v770 = vld [vmem:[#allocation2 + $0x1e8] sm:$0xff]
        %v771 = vld [vmem:[#allocation2 + $0x1f0] sm:$0xff]
        %v772 = vld [vmem:[#allocation2 + $0x1f8] sm:$0xff]
        %v773 = vld [vmem:[#allocation2 + $0x200] sm:$0xff]
        %v774 = vld [vmem:[#allocation2 + $0x208] sm:$0xff]
        %v775 = vld [vmem:[#allocation2 + $0x210] sm:$0xff]
        %v776 = vld [vmem:[#allocation2 + $0x218] sm:$0xff]
        %v777 = vld [vmem:[#allocation2 + $0x220] sm:$0xff]
        %v778 = vld [vmem:[#allocation2 + $0x228] sm:$0xff]
        %v779 = vld [vmem:[#allocation2 + $0x230] sm:$0xff]
        %v780 = vld [vmem:[#allocation2 + $0x238] sm:$0xff]
        %v781 = vld [vmem:[#allocation2 + $0x240] sm:$0xff]
        %v782 = vld [vmem:[#allocation2 + $0x248] sm:$0xff]
        %v783 = vld [vmem:[#allocation2 + $0x250] sm:$0xff]
        %v784 = vld [vmem:[#allocation2 + $0x258] sm:$0xff]
        %v785 = vld [vmem:[#allocation2 + $0x260] sm:$0xff]
        %v786 = vld [vmem:[#allocation2 + $0x268] sm:$0xff]
        %v787 = vld [vmem:[#allocation2 + $0x270] sm:$0xff]
        %v788 = vld [vmem:[#allocation2 + $0x278] sm:$0xff]
        %v789 = vld [vmem:[#allocation2 + $0x280] sm:$0xff]
        %v790 = vld [vmem:[#allocation2 + $0x288] sm:$0xff]
        %v791 = vld [vmem:[#allocation2 + $0x290] sm:$0xff]
        %v792 = vld [vmem:[#allocation2 + $0x298] sm:$0xff]
        %v793 = vld [vmem:[#allocation2 + $0x2a0] sm:$0xff]
        %v794 = vld [vmem:[#allocation2 + $0x2a8] sm:$0xff]
        %v795 = vld [vmem:[#allocation2 + $0x2b0] sm:$0xff]
        %v796 = vld [vmem:[#allocation2 + $0x2b8] sm:$0xff]
        %v797 = vld [vmem:[#allocation2 + $0x2c0] sm:$0xff]
        %v798 = vld [vmem:[#allocation2 + $0x2c8] sm:$0xff]
        %v799 = vadd.f32 %v709, %v619
        %v800 = vadd.f32 %v710, %v620
        %v801 = vadd.f32 %v711, %v621
        %v802 = vadd.f32 %v712, %v622
        %v803 = vadd.f32 %v713, %v623
        %v804 = vadd.f32 %v714, %v624
        %v805 = vadd.f32 %v715, %v625
        %v806 = vadd.f32 %v716, %v626
        %v807 = vadd.f32 %v717, %v627
        %v808 = vadd.f32 %v718, %v628
        %v809 = vadd.f32 %v719, %v629
        %v810 = vadd.f32 %v720, %v630
        %v811 = vadd.f32 %v721, %v631
        %v812 = vadd.f32 %v722, %v632
        %v813 = vadd.f32 %v723, %v633
        %v814 = vadd.f32 %v724, %v634
        %v815 = vadd.f32 %v725, %v635
        %v816 = vadd.f32 %v726, %v636
        %v817 = vadd.f32 %v727, %v637
        %v818 = vadd.f32 %v728, %v638
        %v819 = vadd.f32 %v729, %v639
        %v820 = vadd.f32 %v730, %v640
        %v821 = vadd.f32 %v731, %v641
        %v822 = vadd.f32 %v732, %v642
        %v823 = vadd.f32 %v733, %v643
        %v824 = vadd.f32 %v734, %v644
        %v825 = vadd.f32 %v735, %v645
        %v826 = vadd.f32 %v736, %v646
        %v827 = vadd.f32 %v737, %v647
        %v828 = vadd.f32 %v738, %v648
        %v829 = vadd.f32 %v739, %v649
        %v830 = vadd.f32 %v740, %v650
        %v831 = vadd.f32 %v741, %v651
        %v832 = vadd.f32 %v742, %v652
        %v833 = vadd.f32 %v743, %v653
        %v834 = vadd.f32 %v744, %v654
        %v835 = vadd.f32 %v745, %v655
        %v836 = vadd.f32 %v746, %v656
        %v837 = vadd.f32 %v747, %v657
        %v838 = vadd.f32 %v748, %v658
        %v839 = vadd.f32 %v749, %v659
        %v840 = vadd.f32 %v750, %v660
        %v841 = vadd.f32 %v751, %v661
        %v842 = vadd.f32 %v752, %v662
        %v843 = vadd.f32 %v753, %v663
        %v844 = vadd.f32 %v754, %v664
        %v845 = vadd.f32 %v755, %v665
        %v846 = vadd.f32 %v756, %v666
        %v847 = vadd.f32 %v757, %v667
        %v848 = vadd.f32 %v758, %v668
        %v849 = vadd.f32 %v759, %v669
        %v850 = vadd.f32 %v760, %v670
        %v851 = vadd.f32 %v761, %v671
        %v852 = vadd.f32 %v762, %v672
        %v853 = vadd.f32 %v763, %v673
        %v854 = vadd.f32 %v764, %v674
        %v855 = vadd.f32 %v765, %v675
        %v856 = vadd.f32 %v766, %v676
        %v857 = vadd.f32 %v767, %v677
        %v858 = vadd.f32 %v768, %v678
        %v859 = vadd.f32 %v769, %v679
        %v860 = vadd.f32 %v770, %v680
        %v861 = vadd.f32 %v771, %v681
        %v862 = vadd.f32 %v772, %v682
        %v863 = vadd.f32 %v773, %v683
        %v864 = vadd.f32 %v774, %v684
        %v865 = vadd.f32 %v775, %v685
        %v866 = vadd.f32 %v776, %v686
        %v867 = vadd.f32 %v777, %v687
        %v868 = vadd.f32 %v778, %v688
        %v869 = vadd.f32 %v779, %v689
        %v870 = vadd.f32 %v780, %v690
        %v871 = vadd.f32 %v781, %v691
        %v872 = vadd.f32 %v782, %v692
        %v873 = vadd.f32 %v783, %v693
        %v874 = vadd.f32 %v784, %v694
        %v875 = vadd.f32 %v785, %v695
        %v876 = vadd.f32 %v786, %v696
        %v877 = vadd.f32 %v787, %v697
        %v878 = vadd.f32 %v788, %v698
        %v879 = vadd.f32 %v789, %v699
        %v880 = vadd.f32 %v790, %v700
        %v881 = vadd.f32 %v791, %v701
        %v882 = vadd.f32 %v792, %v702
        %v883 = vadd.f32 %v793, %v703
        %v884 = vadd.f32 %v794, %v704
        %v885 = vadd.f32 %v795, %v705
        %v886 = vadd.f32 %v796, %v706
        %v887 = vadd.f32 %v797, %v707
        %v888 = vadd.f32 %v798, %v708
        %889 = vst [vmem:[#allocation2] sm:$0xff] %v799
        %890 = vst [vmem:[#allocation2 + $0x8] sm:$0xff] %v800
        %891 = vst [vmem:[#allocation2 + $0x10] sm:$0xff] %v801
        %892 = vst [vmem:[#allocation2 + $0x18] sm:$0xff] %v802
        %893 = vst [vmem:[#allocation2 + $0x20] sm:$0xff] %v803
        %894 = vst [vmem:[#allocation2 + $0x28] sm:$0xff] %v804
        %895 = vst [vmem:[#allocation2 + $0x30] sm:$0xff] %v805
        %896 = vst [vmem:[#allocation2 + $0x38] sm:$0xff] %v806
        %897 = vst [vmem:[#allocation2 + $0x40] sm:$0xff] %v807
        %898 = vst [vmem:[#allocation2 + $0x48] sm:$0xff] %v808
        %899 = vst [vmem:[#allocation2 + $0x50] sm:$0xff] %v809
        %900 = vst [vmem:[#allocation2 + $0x58] sm:$0xff] %v810
        %901 = vst [vmem:[#allocation2 + $0x60] sm:$0xff] %v811
        %902 = vst [vmem:[#allocation2 + $0x68] sm:$0xff] %v812
        %903 = vst [vmem:[#allocation2 + $0x70] sm:$0xff] %v813
        %904 = vst [vmem:[#allocation2 + $0x78] sm:$0xff] %v814
        %905 = vst [vmem:[#allocation2 + $0x80] sm:$0xff] %v815
        %906 = vst [vmem:[#allocation2 + $0x88] sm:$0xff] %v816
        %907 = vst [vmem:[#allocation2 + $0x90] sm:$0xff] %v817
        %908 = vst [vmem:[#allocation2 + $0x98] sm:$0xff] %v818
        %909 = vst [vmem:[#allocation2 + $0xa0] sm:$0xff] %v819
        %910 = vst [vmem:[#allocation2 + $0xa8] sm:$0xff] %v820
        %911 = vst [vmem:[#allocation2 + $0xb0] sm:$0xff] %v821
        %912 = vst [vmem:[#allocation2 + $0xb8] sm:$0xff] %v822
        %913 = vst [vmem:[#allocation2 + $0xc0] sm:$0xff] %v823
        %914 = vst [vmem:[#allocation2 + $0xc8] sm:$0xff] %v824
        %915 = vst [vmem:[#allocation2 + $0xd0] sm:$0xff] %v825
        %916 = vst [vmem:[#allocation2 + $0xd8] sm:$0xff] %v826
        %917 = vst [vmem:[#allocation2 + $0xe0] sm:$0xff] %v827
        %918 = vst [vmem:[#allocation2 + $0xe8] sm:$0xff] %v828
        %919 = vst [vmem:[#allocation2 + $0xf0] sm:$0xff] %v829
        %920 = vst [vmem:[#allocation2 + $0xf8] sm:$0xff] %v830
        %921 = vst [vmem:[#allocation2 + $0x100] sm:$0xff] %v831
        %922 = vst [vmem:[#allocation2 + $0x108] sm:$0xff] %v832
        %923 = vst [vmem:[#allocation2 + $0x110] sm:$0xff] %v833
        %924 = vst [vmem:[#allocation2 + $0x118] sm:$0xff] %v834
        %925 = vst [vmem:[#allocation2 + $0x120] sm:$0xff] %v835
        %926 = vst [vmem:[#allocation2 + $0x128] sm:$0xff] %v836
        %927 = vst [vmem:[#allocation2 + $0x130] sm:$0xff] %v837
        %928 = vst [vmem:[#allocation2 + $0x138] sm:$0xff] %v838
        %929 = vst [vmem:[#allocation2 + $0x140] sm:$0xff] %v839
        %930 = vst [vmem:[#allocation2 + $0x148] sm:$0xff] %v840
        %931 = vst [vmem:[#allocation2 + $0x150] sm:$0xff] %v841
        %932 = vst [vmem:[#allocation2 + $0x158] sm:$0xff] %v842
        %933 = vst [vmem:[#allocation2 + $0x160] sm:$0xff] %v843
        %934 = vst [vmem:[#allocation2 + $0x168] sm:$0xff] %v844
        %935 = vst [vmem:[#allocation2 + $0x170] sm:$0xff] %v845
        %936 = vst [vmem:[#allocation2 + $0x178] sm:$0xff] %v846
        %937 = vst [vmem:[#allocation2 + $0x180] sm:$0xff] %v847
        %938 = vst [vmem:[#allocation2 + $0x188] sm:$0xff] %v848
        %939 = vst [vmem:[#allocation2 + $0x190] sm:$0xff] %v849
        %940 = vst [vmem:[#allocation2 + $0x198] sm:$0xff] %v850
        %941 = vst [vmem:[#allocation2 + $0x1a0] sm:$0xff] %v851
        %942 = vst [vmem:[#allocation2 + $0x1a8] sm:$0xff] %v852
        %943 = vst [vmem:[#allocation2 + $0x1b0] sm:$0xff] %v853
        %944 = vst [vmem:[#allocation2 + $0x1b8] sm:$0xff] %v854
        %945 = vst [vmem:[#allocation2 + $0x1c0] sm:$0xff] %v855
        %946 = vst [vmem:[#allocation2 + $0x1c8] sm:$0xff] %v856
        %947 = vst [vmem:[#allocation2 + $0x1d0] sm:$0xff] %v857
        %948 = vst [vmem:[#allocation2 + $0x1d8] sm:$0xff] %v858
        %949 = vst [vmem:[#allocation2 + $0x1e0] sm:$0xff] %v859
        %950 = vst [vmem:[#allocation2 + $0x1e8] sm:$0xff] %v860
        %951 = vst [vmem:[#allocation2 + $0x1f0] sm:$0xff] %v861
        %952 = vst [vmem:[#allocation2 + $0x1f8] sm:$0xff] %v862
        %953 = vst [vmem:[#allocation2 + $0x200] sm:$0xff] %v863
        %954 = vst [vmem:[#allocation2 + $0x208] sm:$0xff] %v864
        %955 = vst [vmem:[#allocation2 + $0x210] sm:$0xff] %v865
        %956 = vst [vmem:[#allocation2 + $0x218] sm:$0xff] %v866
        %957 = vst [vmem:[#allocation2 + $0x220] sm:$0xff] %v867
        %958 = vst [vmem:[#allocation2 + $0x228] sm:$0xff] %v868
        %959 = vst [vmem:[#allocation2 + $0x230] sm:$0xff] %v869
        %960 = vst [vmem:[#allocation2 + $0x238] sm:$0xff] %v870
        %961 = vst [vmem:[#allocation2 + $0x240] sm:$0xff] %v871
        %962 = vst [vmem:[#allocation2 + $0x248] sm:$0xff] %v872
        %963 = vst [vmem:[#allocation2 + $0x250] sm:$0xff] %v873
        %964 = vst [vmem:[#allocation2 + $0x258] sm:$0xff] %v874
        %965 = vst [vmem:[#allocation2 + $0x260] sm:$0xff] %v875
        %966 = vst [vmem:[#allocation2 + $0x268] sm:$0xff] %v876
        %967 = vst [vmem:[#allocation2 + $0x270] sm:$0xff] %v877
        %968 = vst [vmem:[#allocation2 + $0x278] sm:$0xff] %v878
        %969 = vst [vmem:[#allocation2 + $0x280] sm:$0xff] %v879
        %970 = vst [vmem:[#allocation2 + $0x288] sm:$0xff] %v880
        %971 = vst [vmem:[#allocation2 + $0x290] sm:$0xff] %v881
        %972 = vst [vmem:[#allocation2 + $0x298] sm:$0xff] %v882
        %973 = vst [vmem:[#allocation2 + $0x2a0] sm:$0xff] %v883
        %974 = vst [vmem:[#allocation2 + $0x2a8] sm:$0xff] %v884
        %975 = vst [vmem:[#allocation2 + $0x2b0] sm:$0xff] %v885
        %976 = vst [vmem:[#allocation2 + $0x2b8] sm:$0xff] %v886
        %977 = vst [vmem:[#allocation2 + $0x2c0] sm:$0xff] %v887
        %978 = vst [vmem:[#allocation2 + $0x2c8] sm:$0xff] %v888
        // Predicated region
        $region61: #{tpu_custom_call.1} parent=39 // pred_check
          %p979 = pneg %p345
        $region62: #{tpu_custom_call.1} parent=39 // pred_check_branch
          %981 = sbr.rel (%p979) target = $region64
        $region63: #{tpu_custom_call.1} parent=39 // pred_region
          %v982 = vld [vmem:[#allocation2] sm:$0xff]
          %v983 = vld [vmem:[#allocation2 + $0x8] sm:$0xff]
          %v984 = vld [vmem:[#allocation2 + $0x10] sm:$0xff]
          %v985 = vld [vmem:[#allocation2 + $0x18] sm:$0xff]
          %v986 = vld [vmem:[#allocation2 + $0x20] sm:$0xff]
          %v987 = vld [vmem:[#allocation2 + $0x28] sm:$0xff]
          %v988 = vld [vmem:[#allocation2 + $0x30] sm:$0xff]
          %v989 = vld [vmem:[#allocation2 + $0x38] sm:$0xff]
          %v990 = vld [vmem:[#allocation2 + $0x40] sm:$0xff]
          %v991 = vld [vmem:[#allocation2 + $0x48] sm:$0xff]
          %v992 = vld [vmem:[#allocation2 + $0x50] sm:$0xff]
          %v993 = vld [vmem:[#allocation2 + $0x58] sm:$0xff]
          %v994 = vld [vmem:[#allocation2 + $0x60] sm:$0xff]
          %v995 = vld [vmem:[#allocation2 + $0x68] sm:$0xff]
          %v996 = vld [vmem:[#allocation2 + $0x70] sm:$0xff]
          %v997 = vld [vmem:[#allocation2 + $0x78] sm:$0xff]
          %v998 = vld [vmem:[#allocation2 + $0x80] sm:$0xff]
          %v999 = vld [vmem:[#allocation2 + $0x88] sm:$0xff]
          %v1000 = vld [vmem:[#allocation2 + $0x90] sm:$0xff]
          %v1001 = vld [vmem:[#allocation2 + $0x98] sm:$0xff]
          %v1002 = vld [vmem:[#allocation2 + $0xa0] sm:$0xff]
          %v1003 = vld [vmem:[#allocation2 + $0xa8] sm:$0xff]
          %v1004 = vld [vmem:[#allocation2 + $0xb0] sm:$0xff]
          %v1005 = vld [vmem:[#allocation2 + $0xb8] sm:$0xff]
          %v1006 = vld [vmem:[#allocation2 + $0xc0] sm:$0xff]
          %v1007 = vld [vmem:[#allocation2 + $0xc8] sm:$0xff]
          %v1008 = vld [vmem:[#allocation2 + $0xd0] sm:$0xff]
          %v1009 = vld [vmem:[#allocation2 + $0xd8] sm:$0xff]
          %v1010 = vld [vmem:[#allocation2 + $0xe0] sm:$0xff]
          %v1011 = vld [vmem:[#allocation2 + $0xe8] sm:$0xff]
          %v1012 = vld [vmem:[#allocation2 + $0xf0] sm:$0xff]
          %v1013 = vld [vmem:[#allocation2 + $0xf8] sm:$0xff]
          %v1014 = vld [vmem:[#allocation2 + $0x100] sm:$0xff]
          %v1015 = vld [vmem:[#allocation2 + $0x108] sm:$0xff]
          %v1016 = vld [vmem:[#allocation2 + $0x110] sm:$0xff]
          %v1017 = vld [vmem:[#allocation2 + $0x118] sm:$0xff]
          %v1018 = vld [vmem:[#allocation2 + $0x120] sm:$0xff]
          %v1019 = vld [vmem:[#allocation2 + $0x128] sm:$0xff]
          %v1020 = vld [vmem:[#allocation2 + $0x130] sm:$0xff]
          %v1021 = vld [vmem:[#allocation2 + $0x138] sm:$0xff]
          %v1022 = vld [vmem:[#allocation2 + $0x140] sm:$0xff]
          %v1023 = vld [vmem:[#allocation2 + $0x148] sm:$0xff]
          %v1024 = vld [vmem:[#allocation2 + $0x150] sm:$0xff]
          %v1025 = vld [vmem:[#allocation2 + $0x158] sm:$0xff]
          %v1026 = vld [vmem:[#allocation2 + $0x160] sm:$0xff]
          %v1027 = vld [vmem:[#allocation2 + $0x168] sm:$0xff]
          %v1028 = vld [vmem:[#allocation2 + $0x170] sm:$0xff]
          %v1029 = vld [vmem:[#allocation2 + $0x178] sm:$0xff]
          %v1030 = vld [vmem:[#allocation2 + $0x180] sm:$0xff]
          %v1031 = vld [vmem:[#allocation2 + $0x188] sm:$0xff]
          %v1032 = vld [vmem:[#allocation2 + $0x190] sm:$0xff]
          %v1033 = vld [vmem:[#allocation2 + $0x198] sm:$0xff]
          %v1034 = vld [vmem:[#allocation2 + $0x1a0] sm:$0xff]
          %v1035 = vld [vmem:[#allocation2 + $0x1a8] sm:$0xff]
          %v1036 = vld [vmem:[#allocation2 + $0x1b0] sm:$0xff]
          %v1037 = vld [vmem:[#allocation2 + $0x1b8] sm:$0xff]
          %v1038 = vld [vmem:[#allocation2 + $0x1c0] sm:$0xff]
          %v1039 = vld [vmem:[#allocation2 + $0x1c8] sm:$0xff]
          %v1040 = vld [vmem:[#allocation2 + $0x1d0] sm:$0xff]
          %v1041 = vld [vmem:[#allocation2 + $0x1d8] sm:$0xff]
          %v1042 = vld [vmem:[#allocation2 + $0x1e0] sm:$0xff]
          %v1043 = vld [vmem:[#allocation2 + $0x1e8] sm:$0xff]
          %v1044 = vld [vmem:[#allocation2 + $0x1f0] sm:$0xff]
          %v1045 = vld [vmem:[#allocation2 + $0x1f8] sm:$0xff]
          %v1046 = vld [vmem:[#allocation2 + $0x200] sm:$0xff]
          %v1047 = vld [vmem:[#allocation2 + $0x208] sm:$0xff]
          %v1048 = vld [vmem:[#allocation2 + $0x210] sm:$0xff]
          %v1049 = vld [vmem:[#allocation2 + $0x218] sm:$0xff]
          %v1050 = vld [vmem:[#allocation2 + $0x220] sm:$0xff]
          %v1051 = vld [vmem:[#allocation2 + $0x228] sm:$0xff]
          %v1052 = vld [vmem:[#allocation2 + $0x230] sm:$0xff]
          %v1053 = vld [vmem:[#allocation2 + $0x238] sm:$0xff]
          %v1054 = vld [vmem:[#allocation2 + $0x240] sm:$0xff]
          %v1055 = vld [vmem:[#allocation2 + $0x248] sm:$0xff]
          %v1056 = vld [vmem:[#allocation2 + $0x250] sm:$0xff]
          %v1057 = vld [vmem:[#allocation2 + $0x258] sm:$0xff]
          %v1058 = vld [vmem:[#allocation2 + $0x260] sm:$0xff]
          %v1059 = vld [vmem:[#allocation2 + $0x268] sm:$0xff]
          %v1060 = vld [vmem:[#allocation2 + $0x270] sm:$0xff]
          %v1061 = vld [vmem:[#allocation2 + $0x278] sm:$0xff]
          %v1062 = vld [vmem:[#allocation2 + $0x280] sm:$0xff]
          %v1063 = vld [vmem:[#allocation2 + $0x288] sm:$0xff]
          %v1064 = vld [vmem:[#allocation2 + $0x290] sm:$0xff]
          %v1065 = vld [vmem:[#allocation2 + $0x298] sm:$0xff]
          %v1066 = vld [vmem:[#allocation2 + $0x2a0] sm:$0xff]
          %v1067 = vld [vmem:[#allocation2 + $0x2a8] sm:$0xff]
          %v1068 = vld [vmem:[#allocation2 + $0x2b0] sm:$0xff]
          %v1069 = vld [vmem:[#allocation2 + $0x2b8] sm:$0xff]
          %v1070 = vld [vmem:[#allocation2 + $0x2c0] sm:$0xff]
          %v1071 = vld [vmem:[#allocation2 + $0x2c8] sm:$0xff]
          %1072 = vadd.xlane.f32.xlu0 %v982
          %v1073 = vpop.xlane.xlu0 %1072
          %1074 = vadd.xlane.f32.xlu0 %v983
          %v1075 = vpop.xlane.xlu0 %1074
          %1076 = vadd.xlane.f32.xlu0 %v984
          %v1077 = vpop.xlane.xlu0 %1076
          %1078 = vadd.xlane.f32.xlu0 %v985
          %v1079 = vpop.xlane.xlu0 %1078
          %1080 = vadd.xlane.f32.xlu0 %v986
          %v1081 = vpop.xlane.xlu0 %1080
          %1082 = vadd.xlane.f32.xlu0 %v987
          %v1083 = vpop.xlane.xlu0 %1082
          %1084 = vadd.xlane.f32.xlu0 %v988
          %v1085 = vpop.xlane.xlu0 %1084
          %1086 = vadd.xlane.f32.xlu0 %v989
          %v1087 = vpop.xlane.xlu0 %1086
          %1088 = vadd.xlane.f32.xlu0 %v990
          %v1089 = vpop.xlane.xlu0 %1088
          %1090 = vadd.xlane.f32.xlu0 %v991
          %v1091 = vpop.xlane.xlu0 %1090
          %1092 = vadd.xlane.f32.xlu0 %v992
          %v1093 = vpop.xlane.xlu0 %1092
          %1094 = vadd.xlane.f32.xlu0 %v993
          %v1095 = vpop.xlane.xlu0 %1094
          %1096 = vadd.xlane.f32.xlu0 %v994
          %v1097 = vpop.xlane.xlu0 %1096
          %1098 = vadd.xlane.f32.xlu0 %v995
          %v1099 = vpop.xlane.xlu0 %1098
          %1100 = vadd.xlane.f32.xlu0 %v996
          %v1101 = vpop.xlane.xlu0 %1100
          %1102 = vadd.xlane.f32.xlu0 %v997
          %v1103 = vpop.xlane.xlu0 %1102
          %1104 = vadd.xlane.f32.xlu0 %v998
          %v1105 = vpop.xlane.xlu0 %1104
          %1106 = vadd.xlane.f32.xlu0 %v999
          %v1107 = vpop.xlane.xlu0 %1106
          %1108 = vadd.xlane.f32.xlu0 %v1000
          %v1109 = vpop.xlane.xlu0 %1108
          %1110 = vadd.xlane.f32.xlu0 %v1001
          %v1111 = vpop.xlane.xlu0 %1110
          %1112 = vadd.xlane.f32.xlu0 %v1002
          %v1113 = vpop.xlane.xlu0 %1112
          %1114 = vadd.xlane.f32.xlu0 %v1003
          %v1115 = vpop.xlane.xlu0 %1114
          %1116 = vadd.xlane.f32.xlu0 %v1004
          %v1117 = vpop.xlane.xlu0 %1116
          %1118 = vadd.xlane.f32.xlu0 %v1005
          %v1119 = vpop.xlane.xlu0 %1118
          %1120 = vadd.xlane.f32.xlu0 %v1006
          %v1121 = vpop.xlane.xlu0 %1120
          %1122 = vadd.xlane.f32.xlu0 %v1007
          %v1123 = vpop.xlane.xlu0 %1122
          %1124 = vadd.xlane.f32.xlu0 %v1008
          %v1125 = vpop.xlane.xlu0 %1124
          %1126 = vadd.xlane.f32.xlu0 %v1009
          %v1127 = vpop.xlane.xlu0 %1126
          %1128 = vadd.xlane.f32.xlu0 %v1010
          %v1129 = vpop.xlane.xlu0 %1128
          %1130 = vadd.xlane.f32.xlu0 %v1011
          %v1131 = vpop.xlane.xlu0 %1130
          %1132 = vadd.xlane.f32.xlu0 %v1012
          %v1133 = vpop.xlane.xlu0 %1132
          %1134 = vadd.xlane.f32.xlu0 %v1013
          %v1135 = vpop.xlane.xlu0 %1134
          %1136 = vadd.xlane.f32.xlu0 %v1014
          %v1137 = vpop.xlane.xlu0 %1136
          %1138 = vadd.xlane.f32.xlu0 %v1015
          %v1139 = vpop.xlane.xlu0 %1138
          %1140 = vadd.xlane.f32.xlu0 %v1016
          %v1141 = vpop.xlane.xlu0 %1140
          %1142 = vadd.xlane.f32.xlu0 %v1017
          %v1143 = vpop.xlane.xlu0 %1142
          %1144 = vadd.xlane.f32.xlu0 %v1018
          %v1145 = vpop.xlane.xlu0 %1144
          %1146 = vadd.xlane.f32.xlu0 %v1019
          %v1147 = vpop.xlane.xlu0 %1146
          %1148 = vadd.xlane.f32.xlu0 %v1020
          %v1149 = vpop.xlane.xlu0 %1148
          %1150 = vadd.xlane.f32.xlu0 %v1021
          %v1151 = vpop.xlane.xlu0 %1150
          %1152 = vadd.xlane.f32.xlu0 %v1022
          %v1153 = vpop.xlane.xlu0 %1152
          %1154 = vadd.xlane.f32.xlu0 %v1023
          %v1155 = vpop.xlane.xlu0 %1154
          %1156 = vadd.xlane.f32.xlu0 %v1024
          %v1157 = vpop.xlane.xlu0 %1156
          %1158 = vadd.xlane.f32.xlu0 %v1025
          %v1159 = vpop.xlane.xlu0 %1158
          %1160 = vadd.xlane.f32.xlu0 %v1026
          %v1161 = vpop.xlane.xlu0 %1160
          %1162 = vadd.xlane.f32.xlu0 %v1027
          %v1163 = vpop.xlane.xlu0 %1162
          %1164 = vadd.xlane.f32.xlu0 %v1028
          %v1165 = vpop.xlane.xlu0 %1164
          %1166 = vadd.xlane.f32.xlu0 %v1029
          %v1167 = vpop.xlane.xlu0 %1166
          %1168 = vadd.xlane.f32.xlu0 %v1030
          %v1169 = vpop.xlane.xlu0 %1168
          %1170 = vadd.xlane.f32.xlu0 %v1031
          %v1171 = vpop.xlane.xlu0 %1170
          %1172 = vadd.xlane.f32.xlu0 %v1032
          %v1173 = vpop.xlane.xlu0 %1172
          %1174 = vadd.xlane.f32.xlu0 %v1033
          %v1175 = vpop.xlane.xlu0 %1174
          %1176 = vadd.xlane.f32.xlu0 %v1034
          %v1177 = vpop.xlane.xlu0 %1176
          %1178 = vadd.xlane.f32.xlu0 %v1035
          %v1179 = vpop.xlane.xlu0 %1178
          %1180 = vadd.xlane.f32.xlu0 %v1036
          %v1181 = vpop.xlane.xlu0 %1180
          %1182 = vadd.xlane.f32.xlu0 %v1037
          %v1183 = vpop.xlane.xlu0 %1182
          %1184 = vadd.xlane.f32.xlu0 %v1038
          %v1185 = vpop.xlane.xlu0 %1184
          %1186 = vadd.xlane.f32.xlu0 %v1039
          %v1187 = vpop.xlane.xlu0 %1186
          %1188 = vadd.xlane.f32.xlu0 %v1040
          %v1189 = vpop.xlane.xlu0 %1188
          %1190 = vadd.xlane.f32.xlu0 %v1041
          %v1191 = vpop.xlane.xlu0 %1190
          %1192 = vadd.xlane.f32.xlu0 %v1042
          %v1193 = vpop.xlane.xlu0 %1192
          %1194 = vadd.xlane.f32.xlu0 %v1043
          %v1195 = vpop.xlane.xlu0 %1194
          %1196 = vadd.xlane.f32.xlu0 %v1044
          %v1197 = vpop.xlane.xlu0 %1196
          %1198 = vadd.xlane.f32.xlu0 %v1045
          %v1199 = vpop.xlane.xlu0 %1198
          %1200 = vadd.xlane.f32.xlu0 %v1046
          %v1201 = vpop.xlane.xlu0 %1200
          %1202 = vadd.xlane.f32.xlu0 %v1047
          %v1203 = vpop.xlane.xlu0 %1202
          %1204 = vadd.xlane.f32.xlu0 %v1048
          %v1205 = vpop.xlane.xlu0 %1204
          %1206 = vadd.xlane.f32.xlu0 %v1049
          %v1207 = vpop.xlane.xlu0 %1206
          %1208 = vadd.xlane.f32.xlu0 %v1050
          %v1209 = vpop.xlane.xlu0 %1208
          %1210 = vadd.xlane.f32.xlu0 %v1051
          %v1211 = vpop.xlane.xlu0 %1210
          %1212 = vadd.xlane.f32.xlu0 %v1052
          %v1213 = vpop.xlane.xlu0 %1212
          %1214 = vadd.xlane.f32.xlu0 %v1053
          %v1215 = vpop.xlane.xlu0 %1214
          %1216 = vadd.xlane.f32.xlu0 %v1054
          %v1217 = vpop.xlane.xlu0 %1216
          %1218 = vadd.xlane.f32.xlu0 %v1055
          %v1219 = vpop.xlane.xlu0 %1218
          %1220 = vadd.xlane.f32.xlu0 %v1056
          %v1221 = vpop.xlane.xlu0 %1220
          %1222 = vadd.xlane.f32.xlu0 %v1057
          %v1223 = vpop.xlane.xlu0 %1222
          %1224 = vadd.xlane.f32.xlu0 %v1058
          %v1225 = vpop.xlane.xlu0 %1224
          %1226 = vadd.xlane.f32.xlu0 %v1059
          %v1227 = vpop.xlane.xlu0 %1226
          %1228 = vadd.xlane.f32.xlu0 %v1060
          %v1229 = vpop.xlane.xlu0 %1228
          %1230 = vadd.xlane.f32.xlu0 %v1061
          %v1231 = vpop.xlane.xlu0 %1230
          %1232 = vadd.xlane.f32.xlu0 %v1062
          %v1233 = vpop.xlane.xlu0 %1232
          %1234 = vadd.xlane.f32.xlu0 %v1063
          %v1235 = vpop.xlane.xlu0 %1234
          %1236 = vadd.xlane.f32.xlu0 %v1064
          %v1237 = vpop.xlane.xlu0 %1236
          %1238 = vadd.xlane.f32.xlu0 %v1065
          %v1239 = vpop.xlane.xlu0 %1238
          %1240 = vadd.xlane.f32.xlu0 %v1066
          %v1241 = vpop.xlane.xlu0 %1240
          %1242 = vadd.xlane.f32.xlu0 %v1067
          %v1243 = vpop.xlane.xlu0 %1242
          %1244 = vadd.xlane.f32.xlu0 %v1068
          %v1245 = vpop.xlane.xlu0 %1244
          %1246 = vadd.xlane.f32.xlu0 %v1069
          %v1247 = vpop.xlane.xlu0 %1246
          %1248 = vadd.xlane.f32.xlu0 %v1070
          %v1249 = vpop.xlane.xlu0 %1248
          %1250 = vadd.xlane.f32.xlu0 %v1071
          %v1251 = vpop.xlane.xlu0 %1250
          %v1252 = vmul.f32 %v1073, 0.00390625
          %v1253 = vmul.f32 %v1075, 0.00390625
          %v1254 = vmul.f32 %v1077, 0.00390625
          %v1255 = vmul.f32 %v1079, 0.00390625
          %v1256 = vmul.f32 %v1081, 0.00390625
          %v1257 = vmul.f32 %v1083, 0.00390625
          %v1258 = vmul.f32 %v1085, 0.00390625
          %v1259 = vmul.f32 %v1087, 0.00390625
          %v1260 = vmul.f32 %v1089, 0.00390625
          %v1261 = vmul.f32 %v1091, 0.00390625
          %v1262 = vmul.f32 %v1093, 0.00390625
          %v1263 = vmul.f32 %v1095, 0.00390625
          %v1264 = vmul.f32 %v1097, 0.00390625
          %v1265 = vmul.f32 %v1099, 0.00390625
          %v1266 = vmul.f32 %v1101, 0.00390625
          %v1267 = vmul.f32 %v1103, 0.00390625
          %v1268 = vmul.f32 %v1105, 0.00390625
          %v1269 = vmul.f32 %v1107, 0.00390625
          %v1270 = vmul.f32 %v1109, 0.00390625
          %v1271 = vmul.f32 %v1111, 0.00390625
          %v1272 = vmul.f32 %v1113, 0.00390625
          %v1273 = vmul.f32 %v1115, 0.00390625
          %v1274 = vmul.f32 %v1117, 0.00390625
          %v1275 = vmul.f32 %v1119, 0.00390625
          %v1276 = vmul.f32 %v1121, 0.00390625
          %v1277 = vmul.f32 %v1123, 0.00390625
          %v1278 = vmul.f32 %v1125, 0.00390625
          %v1279 = vmul.f32 %v1127, 0.00390625
          %v1280 = vmul.f32 %v1129, 0.00390625
          %v1281 = vmul.f32 %v1131, 0.00390625
          %v1282 = vmul.f32 %v1133, 0.00390625
          %v1283 = vmul.f32 %v1135, 0.00390625
          %v1284 = vmul.f32 %v1137, 0.00390625
          %v1285 = vmul.f32 %v1139, 0.00390625
          %v1286 = vmul.f32 %v1141, 0.00390625
          %v1287 = vmul.f32 %v1143, 0.00390625
          %v1288 = vmul.f32 %v1145, 0.00390625
          %v1289 = vmul.f32 %v1147, 0.00390625
          %v1290 = vmul.f32 %v1149, 0.00390625
          %v1291 = vmul.f32 %v1151, 0.00390625
          %v1292 = vmul.f32 %v1153, 0.00390625
          %v1293 = vmul.f32 %v1155, 0.00390625
          %v1294 = vmul.f32 %v1157, 0.00390625
          %v1295 = vmul.f32 %v1159, 0.00390625
          %v1296 = vmul.f32 %v1161, 0.00390625
          %v1297 = vmul.f32 %v1163, 0.00390625
          %v1298 = vmul.f32 %v1165, 0.00390625
          %v1299 = vmul.f32 %v1167, 0.00390625
          %v1300 = vmul.f32 %v1169, 0.00390625
          %v1301 = vmul.f32 %v1171, 0.00390625
          %v1302 = vmul.f32 %v1173, 0.00390625
          %v1303 = vmul.f32 %v1175, 0.00390625
          %v1304 = vmul.f32 %v1177, 0.00390625
          %v1305 = vmul.f32 %v1179, 0.00390625
          %v1306 = vmul.f32 %v1181, 0.00390625
          %v1307 = vmul.f32 %v1183, 0.00390625
          %v1308 = vmul.f32 %v1185, 0.00390625
          %v1309 = vmul.f32 %v1187, 0.00390625
          %v1310 = vmul.f32 %v1189, 0.00390625
          %v1311 = vmul.f32 %v1191, 0.00390625
          %v1312 = vmul.f32 %v1193, 0.00390625
          %v1313 = vmul.f32 %v1195, 0.00390625
          %v1314 = vmul.f32 %v1197, 0.00390625
          %v1315 = vmul.f32 %v1199, 0.00390625
          %v1316 = vmul.f32 %v1201, 0.00390625
          %v1317 = vmul.f32 %v1203, 0.00390625
          %v1318 = vmul.f32 %v1205, 0.00390625
          %v1319 = vmul.f32 %v1207, 0.00390625
          %v1320 = vmul.f32 %v1209, 0.00390625
          %v1321 = vmul.f32 %v1211, 0.00390625
          %v1322 = vmul.f32 %v1213, 0.00390625
          %v1323 = vmul.f32 %v1215, 0.00390625
          %v1324 = vmul.f32 %v1217, 0.00390625
          %v1325 = vmul.f32 %v1219, 0.00390625
          %v1326 = vmul.f32 %v1221, 0.00390625
          %v1327 = vmul.f32 %v1223, 0.00390625
          %v1328 = vmul.f32 %v1225, 0.00390625
          %v1329 = vmul.f32 %v1227, 0.00390625
          %v1330 = vmul.f32 %v1229, 0.00390625
          %v1331 = vmul.f32 %v1231, 0.00390625
          %v1332 = vmul.f32 %v1233, 0.00390625
          %v1333 = vmul.f32 %v1235, 0.00390625
          %v1334 = vmul.f32 %v1237, 0.00390625
          %v1335 = vmul.f32 %v1239, 0.00390625
          %v1336 = vmul.f32 %v1241, 0.00390625
          %v1337 = vmul.f32 %v1243, 0.00390625
          %v1338 = vmul.f32 %v1245, 0.00390625
          %v1339 = vmul.f32 %v1247, 0.00390625
          %v1340 = vmul.f32 %v1249, 0.00390625
          %v1341 = vmul.f32 %v1251, 0.00390625
          %v1432 = vperm.slane %v1252, 0
          %v1433 = vperm.slane %v1252, 1
          %v1434 = vperm.slane %v1252, 2
          %v1435 = vperm.slane %v1252, 3
          %v1436 = vperm.slane %v1252, 4
          %v1437 = vperm.slane %v1252, 5
          %v1438 = vperm.slane %v1252, 6
          %v1439 = vperm.slane %v1252, 7
          %v1440 = vperm.slane %v1253, 0
          %v1441 = vperm.slane %v1253, 1
          %v1442 = vperm.slane %v1253, 2
          %v1443 = vperm.slane %v1253, 3
          %v1444 = vperm.slane %v1253, 4
          %v1445 = vperm.slane %v1253, 5
          %v1446 = vperm.slane %v1253, 6
          %v1447 = vperm.slane %v1253, 7
          %v1448 = vperm.slane %v1254, 0
          %v1449 = vperm.slane %v1254, 1
          %v1450 = vperm.slane %v1254, 2
          %v1451 = vperm.slane %v1254, 3
          %v1452 = vperm.slane %v1254, 4
          %v1453 = vperm.slane %v1254, 5
          %v1454 = vperm.slane %v1254, 6
          %v1455 = vperm.slane %v1254, 7
          %v1456 = vperm.slane %v1255, 0
          %v1457 = vperm.slane %v1255, 1
          %v1458 = vperm.slane %v1255, 2
          %v1459 = vperm.slane %v1255, 3
          %v1460 = vperm.slane %v1255, 4
          %v1461 = vperm.slane %v1255, 5
          %v1462 = vperm.slane %v1255, 6
          %v1463 = vperm.slane %v1255, 7
          %v1464 = vperm.slane %v1256, 0
          %v1465 = vperm.slane %v1256, 1
          %v1466 = vperm.slane %v1256, 2
          %v1467 = vperm.slane %v1256, 3
          %v1468 = vperm.slane %v1256, 4
          %v1469 = vperm.slane %v1256, 5
          %v1470 = vperm.slane %v1256, 6
          %v1471 = vperm.slane %v1256, 7
          %v1472 = vperm.slane %v1257, 0
          %v1473 = vperm.slane %v1257, 1
          %v1474 = vperm.slane %v1257, 2
          %v1475 = vperm.slane %v1257, 3
          %v1476 = vperm.slane %v1257, 4
          %v1477 = vperm.slane %v1257, 5
          %v1478 = vperm.slane %v1257, 6
          %v1479 = vperm.slane %v1257, 7
          %v1480 = vperm.slane %v1258, 0
          %v1481 = vperm.slane %v1258, 1
          %v1482 = vperm.slane %v1258, 2
          %v1483 = vperm.slane %v1258, 3
          %v1484 = vperm.slane %v1258, 4
          %v1485 = vperm.slane %v1258, 5
          %v1486 = vperm.slane %v1258, 6
          %v1487 = vperm.slane %v1258, 7
          %v1488 = vperm.slane %v1259, 0
          %v1489 = vperm.slane %v1259, 1
          %v1490 = vperm.slane %v1259, 2
          %v1491 = vperm.slane %v1259, 3
          %v1492 = vperm.slane %v1259, 4
          %v1493 = vperm.slane %v1259, 5
          %v1494 = vperm.slane %v1259, 6
          %v1495 = vperm.slane %v1259, 7
          %v1496 = vperm.slane %v1260, 0
          %v1497 = vperm.slane %v1260, 1
          %v1498 = vperm.slane %v1260, 2
          %v1499 = vperm.slane %v1260, 3
          %v1500 = vperm.slane %v1260, 4
          %v1501 = vperm.slane %v1260, 5
          %v1502 = vperm.slane %v1260, 6
          %v1503 = vperm.slane %v1260, 7
          %v1504 = vperm.slane %v1261, 0
          %v1505 = vperm.slane %v1261, 1
          %v1506 = vperm.slane %v1261, 2
          %v1507 = vperm.slane %v1261, 3
          %v1508 = vperm.slane %v1261, 4
          %v1509 = vperm.slane %v1261, 5
          %v1510 = vperm.slane %v1261, 6
          %v1511 = vperm.slane %v1261, 7
          %v1512 = vperm.slane %v1262, 0
          %v1513 = vperm.slane %v1262, 1
          %v1514 = vperm.slane %v1262, 2
          %v1515 = vperm.slane %v1262, 3
          %v1516 = vperm.slane %v1262, 4
          %v1517 = vperm.slane %v1262, 5
          %v1518 = vperm.slane %v1262, 6
          %v1519 = vperm.slane %v1262, 7
          %v1520 = vperm.slane %v1263, 0
          %v1521 = vperm.slane %v1263, 1
          %v1522 = vperm.slane %v1263, 2
          %v1523 = vperm.slane %v1263, 3
          %v1524 = vperm.slane %v1263, 4
          %v1525 = vperm.slane %v1263, 5
          %v1526 = vperm.slane %v1263, 6
          %v1527 = vperm.slane %v1263, 7
          %v1528 = vperm.slane %v1264, 0
          %v1529 = vperm.slane %v1264, 1
          %v1530 = vperm.slane %v1264, 2
          %v1531 = vperm.slane %v1264, 3
          %v1532 = vperm.slane %v1264, 4
          %v1533 = vperm.slane %v1264, 5
          %v1534 = vperm.slane %v1264, 6
          %v1535 = vperm.slane %v1264, 7
          %v1536 = vperm.slane %v1265, 0
          %v1537 = vperm.slane %v1265, 1
          %v1538 = vperm.slane %v1265, 2
          %v1539 = vperm.slane %v1265, 3
          %v1540 = vperm.slane %v1265, 4
          %v1541 = vperm.slane %v1265, 5
          %v1542 = vperm.slane %v1265, 6
          %v1543 = vperm.slane %v1265, 7
          %v1544 = vperm.slane %v1266, 0
          %v1545 = vperm.slane %v1266, 1
          %v1546 = vperm.slane %v1266, 2
          %v1547 = vperm.slane %v1266, 3
          %v1548 = vperm.slane %v1266, 4
          %v1549 = vperm.slane %v1266, 5
          %v1550 = vperm.slane %v1266, 6
          %v1551 = vperm.slane %v1266, 7
          %v1552 = vperm.slane %v1267, 0
          %v1553 = vperm.slane %v1267, 1
          %v1554 = vperm.slane %v1267, 2
          %v1555 = vperm.slane %v1267, 3
          %v1556 = vperm.slane %v1267, 4
          %v1557 = vperm.slane %v1267, 5
          %v1558 = vperm.slane %v1267, 6
          %v1559 = vperm.slane %v1267, 7
          %v1560 = vperm.slane %v1268, 0
          %v1561 = vperm.slane %v1268, 1
          %v1562 = vperm.slane %v1268, 2
          %v1563 = vperm.slane %v1268, 3
          %v1564 = vperm.slane %v1268, 4
          %v1565 = vperm.slane %v1268, 5
          %v1566 = vperm.slane %v1268, 6
          %v1567 = vperm.slane %v1268, 7
          %v1568 = vperm.slane %v1269, 0
          %v1569 = vperm.slane %v1269, 1
          %v1570 = vperm.slane %v1269, 2
          %v1571 = vperm.slane %v1269, 3
          %v1572 = vperm.slane %v1269, 4
          %v1573 = vperm.slane %v1269, 5
          %v1574 = vperm.slane %v1269, 6
          %v1575 = vperm.slane %v1269, 7
          %v1576 = vperm.slane %v1270, 0
          %v1577 = vperm.slane %v1270, 1
          %v1578 = vperm.slane %v1270, 2
          %v1579 = vperm.slane %v1270, 3
          %v1580 = vperm.slane %v1270, 4
          %v1581 = vperm.slane %v1270, 5
          %v1582 = vperm.slane %v1270, 6
          %v1583 = vperm.slane %v1270, 7
          %v1584 = vperm.slane %v1271, 0
          %v1585 = vperm.slane %v1271, 1
          %v1586 = vperm.slane %v1271, 2
          %v1587 = vperm.slane %v1271, 3
          %v1588 = vperm.slane %v1271, 4
          %v1589 = vperm.slane %v1271, 5
          %v1590 = vperm.slane %v1271, 6
          %v1591 = vperm.slane %v1271, 7
          %v1592 = vperm.slane %v1272, 0
          %v1593 = vperm.slane %v1272, 1
          %v1594 = vperm.slane %v1272, 2
          %v1595 = vperm.slane %v1272, 3
          %v1596 = vperm.slane %v1272, 4
          %v1597 = vperm.slane %v1272, 5
          %v1598 = vperm.slane %v1272, 6
          %v1599 = vperm.slane %v1272, 7
          %v1600 = vperm.slane %v1273, 0
          %v1601 = vperm.slane %v1273, 1
          %v1602 = vperm.slane %v1273, 2
          %v1603 = vperm.slane %v1273, 3
          %v1604 = vperm.slane %v1273, 4
          %v1605 = vperm.slane %v1273, 5
          %v1606 = vperm.slane %v1273, 6
          %v1607 = vperm.slane %v1273, 7
          %v1608 = vperm.slane %v1274, 0
          %v1609 = vperm.slane %v1274, 1
          %v1610 = vperm.slane %v1274, 2
          %v1611 = vperm.slane %v1274, 3
          %v1612 = vperm.slane %v1274, 4
          %v1613 = vperm.slane %v1274, 5
          %v1614 = vperm.slane %v1274, 6
          %v1615 = vperm.slane %v1274, 7
          %v1616 = vperm.slane %v1275, 0
          %v1617 = vperm.slane %v1275, 1
          %v1618 = vperm.slane %v1275, 2
          %v1619 = vperm.slane %v1275, 3
          %v1620 = vperm.slane %v1275, 4
          %v1621 = vperm.slane %v1275, 5
          %v1622 = vperm.slane %v1275, 6
          %v1623 = vperm.slane %v1275, 7
          %v1624 = vperm.slane %v1276, 0
          %v1625 = vperm.slane %v1276, 1
          %v1626 = vperm.slane %v1276, 2
          %v1627 = vperm.slane %v1276, 3
          %v1628 = vperm.slane %v1276, 4
          %v1629 = vperm.slane %v1276, 5
          %v1630 = vperm.slane %v1276, 6
          %v1631 = vperm.slane %v1276, 7
          %v1632 = vperm.slane %v1277, 0
          %v1633 = vperm.slane %v1277, 1
          %v1634 = vperm.slane %v1277, 2
          %v1635 = vperm.slane %v1277, 3
          %v1636 = vperm.slane %v1277, 4
          %v1637 = vperm.slane %v1277, 5
          %v1638 = vperm.slane %v1277, 6
          %v1639 = vperm.slane %v1277, 7
          %v1640 = vperm.slane %v1278, 0
          %v1641 = vperm.slane %v1278, 1
          %v1642 = vperm.slane %v1278, 2
          %v1643 = vperm.slane %v1278, 3
          %v1644 = vperm.slane %v1278, 4
          %v1645 = vperm.slane %v1278, 5
          %v1646 = vperm.slane %v1278, 6
          %v1647 = vperm.slane %v1278, 7
          %v1648 = vperm.slane %v1279, 0
          %v1649 = vperm.slane %v1279, 1
          %v1650 = vperm.slane %v1279, 2
          %v1651 = vperm.slane %v1279, 3
          %v1652 = vperm.slane %v1279, 4
          %v1653 = vperm.slane %v1279, 5
          %v1654 = vperm.slane %v1279, 6
          %v1655 = vperm.slane %v1279, 7
          %v1656 = vperm.slane %v1280, 0
          %v1657 = vperm.slane %v1280, 1
          %v1658 = vperm.slane %v1280, 2
          %v1659 = vperm.slane %v1280, 3
          %v1660 = vperm.slane %v1280, 4
          %v1661 = vperm.slane %v1280, 5
          %v1662 = vperm.slane %v1280, 6
          %v1663 = vperm.slane %v1280, 7
          %v1664 = vperm.slane %v1281, 0
          %v1665 = vperm.slane %v1281, 1
          %v1666 = vperm.slane %v1281, 2
          %v1667 = vperm.slane %v1281, 3
          %v1668 = vperm.slane %v1281, 4
          %v1669 = vperm.slane %v1281, 5
          %v1670 = vperm.slane %v1281, 6
          %v1671 = vperm.slane %v1281, 7
          %v1672 = vperm.slane %v1282, 0
          %v1673 = vperm.slane %v1282, 1
          %v1674 = vperm.slane %v1282, 2
          %v1675 = vperm.slane %v1282, 3
          %v1676 = vperm.slane %v1282, 4
          %v1677 = vperm.slane %v1282, 5
          %v1678 = vperm.slane %v1282, 6
          %v1679 = vperm.slane %v1282, 7
          %v1680 = vperm.slane %v1283, 0
          %v1681 = vperm.slane %v1283, 1
          %v1682 = vperm.slane %v1283, 2
          %v1683 = vperm.slane %v1283, 3
          %v1684 = vperm.slane %v1283, 4
          %v1685 = vperm.slane %v1283, 5
          %v1686 = vperm.slane %v1283, 6
          %v1687 = vperm.slane %v1283, 7
          %v1688 = vperm.slane %v1284, 0
          %v1689 = vperm.slane %v1284, 1
          %v1690 = vperm.slane %v1284, 2
          %v1691 = vperm.slane %v1284, 3
          %v1692 = vperm.slane %v1284, 4
          %v1693 = vperm.slane %v1284, 5
          %v1694 = vperm.slane %v1284, 6
          %v1695 = vperm.slane %v1284, 7
          %v1696 = vperm.slane %v1285, 0
          %v1697 = vperm.slane %v1285, 1
          %v1698 = vperm.slane %v1285, 2
          %v1699 = vperm.slane %v1285, 3
          %v1700 = vperm.slane %v1285, 4
          %v1701 = vperm.slane %v1285, 5
          %v1702 = vperm.slane %v1285, 6
          %v1703 = vperm.slane %v1285, 7
          %v1704 = vperm.slane %v1286, 0
          %v1705 = vperm.slane %v1286, 1
          %v1706 = vperm.slane %v1286, 2
          %v1707 = vperm.slane %v1286, 3
          %v1708 = vperm.slane %v1286, 4
          %v1709 = vperm.slane %v1286, 5
          %v1710 = vperm.slane %v1286, 6
          %v1711 = vperm.slane %v1286, 7
          %v1712 = vperm.slane %v1287, 0
          %v1713 = vperm.slane %v1287, 1
          %v1714 = vperm.slane %v1287, 2
          %v1715 = vperm.slane %v1287, 3
          %v1716 = vperm.slane %v1287, 4
          %v1717 = vperm.slane %v1287, 5
          %v1718 = vperm.slane %v1287, 6
          %v1719 = vperm.slane %v1287, 7
          %v1720 = vperm.slane %v1288, 0
          %v1721 = vperm.slane %v1288, 1
          %v1722 = vperm.slane %v1288, 2
          %v1723 = vperm.slane %v1288, 3
          %v1724 = vperm.slane %v1288, 4
          %v1725 = vperm.slane %v1288, 5
          %v1726 = vperm.slane %v1288, 6
          %v1727 = vperm.slane %v1288, 7
          %v1728 = vperm.slane %v1289, 0
          %v1729 = vperm.slane %v1289, 1
          %v1730 = vperm.slane %v1289, 2
          %v1731 = vperm.slane %v1289, 3
          %v1732 = vperm.slane %v1289, 4
          %v1733 = vperm.slane %v1289, 5
          %v1734 = vperm.slane %v1289, 6
          %v1735 = vperm.slane %v1289, 7
          %v1736 = vperm.slane %v1290, 0
          %v1737 = vperm.slane %v1290, 1
          %v1738 = vperm.slane %v1290, 2
          %v1739 = vperm.slane %v1290, 3
          %v1740 = vperm.slane %v1290, 4
          %v1741 = vperm.slane %v1290, 5
          %v1742 = vperm.slane %v1290, 6
          %v1743 = vperm.slane %v1290, 7
          %v1744 = vperm.slane %v1291, 0
          %v1745 = vperm.slane %v1291, 1
          %v1746 = vperm.slane %v1291, 2
          %v1747 = vperm.slane %v1291, 3
          %v1748 = vperm.slane %v1291, 4
          %v1749 = vperm.slane %v1291, 5
          %v1750 = vperm.slane %v1291, 6
          %v1751 = vperm.slane %v1291, 7
          %v1752 = vperm.slane %v1292, 0
          %v1753 = vperm.slane %v1292, 1
          %v1754 = vperm.slane %v1292, 2
          %v1755 = vperm.slane %v1292, 3
          %v1756 = vperm.slane %v1292, 4
          %v1757 = vperm.slane %v1292, 5
          %v1758 = vperm.slane %v1292, 6
          %v1759 = vperm.slane %v1292, 7
          %v1760 = vperm.slane %v1293, 0
          %v1761 = vperm.slane %v1293, 1
          %v1762 = vperm.slane %v1293, 2
          %v1763 = vperm.slane %v1293, 3
          %v1764 = vperm.slane %v1293, 4
          %v1765 = vperm.slane %v1293, 5
          %v1766 = vperm.slane %v1293, 6
          %v1767 = vperm.slane %v1293, 7
          %v1768 = vperm.slane %v1294, 0
          %v1769 = vperm.slane %v1294, 1
          %v1770 = vperm.slane %v1294, 2
          %v1771 = vperm.slane %v1294, 3
          %v1772 = vperm.slane %v1294, 4
          %v1773 = vperm.slane %v1294, 5
          %v1774 = vperm.slane %v1294, 6
          %v1775 = vperm.slane %v1294, 7
          %v1776 = vperm.slane %v1295, 0
          %v1777 = vperm.slane %v1295, 1
          %v1778 = vperm.slane %v1295, 2
          %v1779 = vperm.slane %v1295, 3
          %v1780 = vperm.slane %v1295, 4
          %v1781 = vperm.slane %v1295, 5
          %v1782 = vperm.slane %v1295, 6
          %v1783 = vperm.slane %v1295, 7
          %v1784 = vperm.slane %v1296, 0
          %v1785 = vperm.slane %v1296, 1
          %v1786 = vperm.slane %v1296, 2
          %v1787 = vperm.slane %v1296, 3
          %v1788 = vperm.slane %v1296, 4
          %v1789 = vperm.slane %v1296, 5
          %v1790 = vperm.slane %v1296, 6
          %v1791 = vperm.slane %v1296, 7
          %v1792 = vperm.slane %v1297, 0
          %v1793 = vperm.slane %v1297, 1
          %v1794 = vperm.slane %v1297, 2
          %v1795 = vperm.slane %v1297, 3
          %v1796 = vperm.slane %v1297, 4
          %v1797 = vperm.slane %v1297, 5
          %v1798 = vperm.slane %v1297, 6
          %v1799 = vperm.slane %v1297, 7
          %v1800 = vperm.slane %v1298, 0
          %v1801 = vperm.slane %v1298, 1
          %v1802 = vperm.slane %v1298, 2
          %v1803 = vperm.slane %v1298, 3
          %v1804 = vperm.slane %v1298, 4
          %v1805 = vperm.slane %v1298, 5
          %v1806 = vperm.slane %v1298, 6
          %v1807 = vperm.slane %v1298, 7
          %v1808 = vperm.slane %v1299, 0
          %v1809 = vperm.slane %v1299, 1
          %v1810 = vperm.slane %v1299, 2
          %v1811 = vperm.slane %v1299, 3
          %v1812 = vperm.slane %v1299, 4
          %v1813 = vperm.slane %v1299, 5
          %v1814 = vperm.slane %v1299, 6
          %v1815 = vperm.slane %v1299, 7
          %v1816 = vperm.slane %v1300, 0
          %v1817 = vperm.slane %v1300, 1
          %v1818 = vperm.slane %v1300, 2
          %v1819 = vperm.slane %v1300, 3
          %v1820 = vperm.slane %v1300, 4
          %v1821 = vperm.slane %v1300, 5
          %v1822 = vperm.slane %v1300, 6
          %v1823 = vperm.slane %v1300, 7
          %v1824 = vperm.slane %v1301, 0
          %v1825 = vperm.slane %v1301, 1
          %v1826 = vperm.slane %v1301, 2
          %v1827 = vperm.slane %v1301, 3
          %v1828 = vperm.slane %v1301, 4
          %v1829 = vperm.slane %v1301, 5
          %v1830 = vperm.slane %v1301, 6
          %v1831 = vperm.slane %v1301, 7
          %v1832 = vperm.slane %v1302, 0
          %v1833 = vperm.slane %v1302, 1
          %v1834 = vperm.slane %v1302, 2
          %v1835 = vperm.slane %v1302, 3
          %v1836 = vperm.slane %v1302, 4
          %v1837 = vperm.slane %v1302, 5
          %v1838 = vperm.slane %v1302, 6
          %v1839 = vperm.slane %v1302, 7
          %v1840 = vperm.slane %v1303, 0
          %v1841 = vperm.slane %v1303, 1
          %v1842 = vperm.slane %v1303, 2
          %v1843 = vperm.slane %v1303, 3
          %v1844 = vperm.slane %v1303, 4
          %v1845 = vperm.slane %v1303, 5
          %v1846 = vperm.slane %v1303, 6
          %v1847 = vperm.slane %v1303, 7
          %v1848 = vperm.slane %v1304, 0
          %v1849 = vperm.slane %v1304, 1
          %v1850 = vperm.slane %v1304, 2
          %v1851 = vperm.slane %v1304, 3
          %v1852 = vperm.slane %v1304, 4
          %v1853 = vperm.slane %v1304, 5
          %v1854 = vperm.slane %v1304, 6
          %v1855 = vperm.slane %v1304, 7
          %v1856 = vperm.slane %v1305, 0
          %v1857 = vperm.slane %v1305, 1
          %v1858 = vperm.slane %v1305, 2
          %v1859 = vperm.slane %v1305, 3
          %v1860 = vperm.slane %v1305, 4
          %v1861 = vperm.slane %v1305, 5
          %v1862 = vperm.slane %v1305, 6
          %v1863 = vperm.slane %v1305, 7
          %v1864 = vperm.slane %v1306, 0
          %v1865 = vperm.slane %v1306, 1
          %v1866 = vperm.slane %v1306, 2
          %v1867 = vperm.slane %v1306, 3
          %v1868 = vperm.slane %v1306, 4
          %v1869 = vperm.slane %v1306, 5
          %v1870 = vperm.slane %v1306, 6
          %v1871 = vperm.slane %v1306, 7
          %v1872 = vperm.slane %v1307, 0
          %v1873 = vperm.slane %v1307, 1
          %v1874 = vperm.slane %v1307, 2
          %v1875 = vperm.slane %v1307, 3
          %v1876 = vperm.slane %v1307, 4
          %v1877 = vperm.slane %v1307, 5
          %v1878 = vperm.slane %v1307, 6
          %v1879 = vperm.slane %v1307, 7
          %v1880 = vperm.slane %v1308, 0
          %v1881 = vperm.slane %v1308, 1
          %v1882 = vperm.slane %v1308, 2
          %v1883 = vperm.slane %v1308, 3
          %v1884 = vperm.slane %v1308, 4
          %v1885 = vperm.slane %v1308, 5
          %v1886 = vperm.slane %v1308, 6
          %v1887 = vperm.slane %v1308, 7
          %v1888 = vperm.slane %v1309, 0
          %v1889 = vperm.slane %v1309, 1
          %v1890 = vperm.slane %v1309, 2
          %v1891 = vperm.slane %v1309, 3
          %v1892 = vperm.slane %v1309, 4
          %v1893 = vperm.slane %v1309, 5
          %v1894 = vperm.slane %v1309, 6
          %v1895 = vperm.slane %v1309, 7
          %v1896 = vperm.slane %v1310, 0
          %v1897 = vperm.slane %v1310, 1
          %v1898 = vperm.slane %v1310, 2
          %v1899 = vperm.slane %v1310, 3
          %v1900 = vperm.slane %v1310, 4
          %v1901 = vperm.slane %v1310, 5
          %v1902 = vperm.slane %v1310, 6
          %v1903 = vperm.slane %v1310, 7
          %v1904 = vperm.slane %v1311, 0
          %v1905 = vperm.slane %v1311, 1
          %v1906 = vperm.slane %v1311, 2
          %v1907 = vperm.slane %v1311, 3
          %v1908 = vperm.slane %v1311, 4
          %v1909 = vperm.slane %v1311, 5
          %v1910 = vperm.slane %v1311, 6
          %v1911 = vperm.slane %v1311, 7
          %v1912 = vperm.slane %v1312, 0
          %v1913 = vperm.slane %v1312, 1
          %v1914 = vperm.slane %v1312, 2
          %v1915 = vperm.slane %v1312, 3
          %v1916 = vperm.slane %v1312, 4
          %v1917 = vperm.slane %v1312, 5
          %v1918 = vperm.slane %v1312, 6
          %v1919 = vperm.slane %v1312, 7
          %v1920 = vperm.slane %v1313, 0
          %v1921 = vperm.slane %v1313, 1
          %v1922 = vperm.slane %v1313, 2
          %v1923 = vperm.slane %v1313, 3
          %v1924 = vperm.slane %v1313, 4
          %v1925 = vperm.slane %v1313, 5
          %v1926 = vperm.slane %v1313, 6
          %v1927 = vperm.slane %v1313, 7
          %v1928 = vperm.slane %v1314, 0
          %v1929 = vperm.slane %v1314, 1
          %v1930 = vperm.slane %v1314, 2
          %v1931 = vperm.slane %v1314, 3
          %v1932 = vperm.slane %v1314, 4
          %v1933 = vperm.slane %v1314, 5
          %v1934 = vperm.slane %v1314, 6
          %v1935 = vperm.slane %v1314, 7
          %v1936 = vperm.slane %v1315, 0
          %v1937 = vperm.slane %v1315, 1
          %v1938 = vperm.slane %v1315, 2
          %v1939 = vperm.slane %v1315, 3
          %v1940 = vperm.slane %v1315, 4
          %v1941 = vperm.slane %v1315, 5
          %v1942 = vperm.slane %v1315, 6
          %v1943 = vperm.slane %v1315, 7
          %v1944 = vperm.slane %v1316, 0
          %v1945 = vperm.slane %v1316, 1
          %v1946 = vperm.slane %v1316, 2
          %v1947 = vperm.slane %v1316, 3
          %v1948 = vperm.slane %v1316, 4
          %v1949 = vperm.slane %v1316, 5
          %v1950 = vperm.slane %v1316, 6
          %v1951 = vperm.slane %v1316, 7
          %v1952 = vperm.slane %v1317, 0
          %v1953 = vperm.slane %v1317, 1
          %v1954 = vperm.slane %v1317, 2
          %v1955 = vperm.slane %v1317, 3
          %v1956 = vperm.slane %v1317, 4
          %v1957 = vperm.slane %v1317, 5
          %v1958 = vperm.slane %v1317, 6
          %v1959 = vperm.slane %v1317, 7
          %v1960 = vperm.slane %v1318, 0
          %v1961 = vperm.slane %v1318, 1
          %v1962 = vperm.slane %v1318, 2
          %v1963 = vperm.slane %v1318, 3
          %v1964 = vperm.slane %v1318, 4
          %v1965 = vperm.slane %v1318, 5
          %v1966 = vperm.slane %v1318, 6
          %v1967 = vperm.slane %v1318, 7
          %v1968 = vperm.slane %v1319, 0
          %v1969 = vperm.slane %v1319, 1
          %v1970 = vperm.slane %v1319, 2
          %v1971 = vperm.slane %v1319, 3
          %v1972 = vperm.slane %v1319, 4
          %v1973 = vperm.slane %v1319, 5
          %v1974 = vperm.slane %v1319, 6
          %v1975 = vperm.slane %v1319, 7
          %v1976 = vperm.slane %v1320, 0
          %v1977 = vperm.slane %v1320, 1
          %v1978 = vperm.slane %v1320, 2
          %v1979 = vperm.slane %v1320, 3
          %v1980 = vperm.slane %v1320, 4
          %v1981 = vperm.slane %v1320, 5
          %v1982 = vperm.slane %v1320, 6
          %v1983 = vperm.slane %v1320, 7
          %v1984 = vperm.slane %v1321, 0
          %v1985 = vperm.slane %v1321, 1
          %v1986 = vperm.slane %v1321, 2
          %v1987 = vperm.slane %v1321, 3
          %v1988 = vperm.slane %v1321, 4
          %v1989 = vperm.slane %v1321, 5
          %v1990 = vperm.slane %v1321, 6
          %v1991 = vperm.slane %v1321, 7
          %v1992 = vperm.slane %v1322, 0
          %v1993 = vperm.slane %v1322, 1
          %v1994 = vperm.slane %v1322, 2
          %v1995 = vperm.slane %v1322, 3
          %v1996 = vperm.slane %v1322, 4
          %v1997 = vperm.slane %v1322, 5
          %v1998 = vperm.slane %v1322, 6
          %v1999 = vperm.slane %v1322, 7
          %v2000 = vperm.slane %v1323, 0
          %v2001 = vperm.slane %v1323, 1
          %v2002 = vperm.slane %v1323, 2
          %v2003 = vperm.slane %v1323, 3
          %v2004 = vperm.slane %v1323, 4
          %v2005 = vperm.slane %v1323, 5
          %v2006 = vperm.slane %v1323, 6
          %v2007 = vperm.slane %v1323, 7
          %v2008 = vperm.slane %v1324, 0
          %v2009 = vperm.slane %v1324, 1
          %v2010 = vperm.slane %v1324, 2
          %v2011 = vperm.slane %v1324, 3
          %v2012 = vperm.slane %v1324, 4
          %v2013 = vperm.slane %v1324, 5
          %v2014 = vperm.slane %v1324, 6
          %v2015 = vperm.slane %v1324, 7
          %v2016 = vperm.slane %v1325, 0
          %v2017 = vperm.slane %v1325, 1
          %v2018 = vperm.slane %v1325, 2
          %v2019 = vperm.slane %v1325, 3
          %v2020 = vperm.slane %v1325, 4
          %v2021 = vperm.slane %v1325, 5
          %v2022 = vperm.slane %v1325, 6
          %v2023 = vperm.slane %v1325, 7
          %v2024 = vperm.slane %v1326, 0
          %v2025 = vperm.slane %v1326, 1
          %v2026 = vperm.slane %v1326, 2
          %v2027 = vperm.slane %v1326, 3
          %v2028 = vperm.slane %v1326, 4
          %v2029 = vperm.slane %v1326, 5
          %v2030 = vperm.slane %v1326, 6
          %v2031 = vperm.slane %v1326, 7
          %v2032 = vperm.slane %v1327, 0
          %v2033 = vperm.slane %v1327, 1
          %v2034 = vperm.slane %v1327, 2
          %v2035 = vperm.slane %v1327, 3
          %v2036 = vperm.slane %v1327, 4
          %v2037 = vperm.slane %v1327, 5
          %v2038 = vperm.slane %v1327, 6
          %v2039 = vperm.slane %v1327, 7
          %v2040 = vperm.slane %v1328, 0
          %v2041 = vperm.slane %v1328, 1
          %v2042 = vperm.slane %v1328, 2
          %v2043 = vperm.slane %v1328, 3
          %v2044 = vperm.slane %v1328, 4
          %v2045 = vperm.slane %v1328, 5
          %v2046 = vperm.slane %v1328, 6
          %v2047 = vperm.slane %v1328, 7
          %v2048 = vperm.slane %v1329, 0
          %v2049 = vperm.slane %v1329, 1
          %v2050 = vperm.slane %v1329, 2
          %v2051 = vperm.slane %v1329, 3
          %v2052 = vperm.slane %v1329, 4
          %v2053 = vperm.slane %v1329, 5
          %v2054 = vperm.slane %v1329, 6
          %v2055 = vperm.slane %v1329, 7
          %v2056 = vperm.slane %v1330, 0
          %v2057 = vperm.slane %v1330, 1
          %v2058 = vperm.slane %v1330, 2
          %v2059 = vperm.slane %v1330, 3
          %v2060 = vperm.slane %v1330, 4
          %v2061 = vperm.slane %v1330, 5
          %v2062 = vperm.slane %v1330, 6
          %v2063 = vperm.slane %v1330, 7
          %v2064 = vperm.slane %v1331, 0
          %v2065 = vperm.slane %v1331, 1
          %v2066 = vperm.slane %v1331, 2
          %v2067 = vperm.slane %v1331, 3
          %v2068 = vperm.slane %v1331, 4
          %v2069 = vperm.slane %v1331, 5
          %v2070 = vperm.slane %v1331, 6
          %v2071 = vperm.slane %v1331, 7
          %v2072 = vperm.slane %v1332, 0
          %v2073 = vperm.slane %v1332, 1
          %v2074 = vperm.slane %v1332, 2
          %v2075 = vperm.slane %v1332, 3
          %v2076 = vperm.slane %v1332, 4
          %v2077 = vperm.slane %v1332, 5
          %v2078 = vperm.slane %v1332, 6
          %v2079 = vperm.slane %v1332, 7
          %v2080 = vperm.slane %v1333, 0
          %v2081 = vperm.slane %v1333, 1
          %v2082 = vperm.slane %v1333, 2
          %v2083 = vperm.slane %v1333, 3
          %v2084 = vperm.slane %v1333, 4
          %v2085 = vperm.slane %v1333, 5
          %v2086 = vperm.slane %v1333, 6
          %v2087 = vperm.slane %v1333, 7
          %v2088 = vperm.slane %v1334, 0
          %v2089 = vperm.slane %v1334, 1
          %v2090 = vperm.slane %v1334, 2
          %v2091 = vperm.slane %v1334, 3
          %v2092 = vperm.slane %v1334, 4
          %v2093 = vperm.slane %v1334, 5
          %v2094 = vperm.slane %v1334, 6
          %v2095 = vperm.slane %v1334, 7
          %v2096 = vperm.slane %v1335, 0
          %v2097 = vperm.slane %v1335, 1
          %v2098 = vperm.slane %v1335, 2
          %v2099 = vperm.slane %v1335, 3
          %v2100 = vperm.slane %v1335, 4
          %v2101 = vperm.slane %v1335, 5
          %v2102 = vperm.slane %v1335, 6
          %v2103 = vperm.slane %v1335, 7
          %v2104 = vperm.slane %v1336, 0
          %v2105 = vperm.slane %v1336, 1
          %v2106 = vperm.slane %v1336, 2
          %v2107 = vperm.slane %v1336, 3
          %v2108 = vperm.slane %v1336, 4
          %v2109 = vperm.slane %v1336, 5
          %v2110 = vperm.slane %v1336, 6
          %v2111 = vperm.slane %v1336, 7
          %v2112 = vperm.slane %v1337, 0
          %v2113 = vperm.slane %v1337, 1
          %v2114 = vperm.slane %v1337, 2
          %v2115 = vperm.slane %v1337, 3
          %v2116 = vperm.slane %v1337, 4
          %v2117 = vperm.slane %v1337, 5
          %v2118 = vperm.slane %v1337, 6
          %v2119 = vperm.slane %v1337, 7
          %v2120 = vperm.slane %v1338, 0
          %v2121 = vperm.slane %v1338, 1
          %v2122 = vperm.slane %v1338, 2
          %v2123 = vperm.slane %v1338, 3
          %v2124 = vperm.slane %v1338, 4
          %v2125 = vperm.slane %v1338, 5
          %v2126 = vperm.slane %v1338, 6
          %v2127 = vperm.slane %v1338, 7
          %v2128 = vperm.slane %v1339, 0
          %v2129 = vperm.slane %v1339, 1
          %v2130 = vperm.slane %v1339, 2
          %v2131 = vperm.slane %v1339, 3
          %v2132 = vperm.slane %v1339, 4
          %v2133 = vperm.slane %v1339, 5
          %v2134 = vperm.slane %v1339, 6
          %v2135 = vperm.slane %v1339, 7
          %v2136 = vperm.slane %v1340, 0
          %v2137 = vperm.slane %v1340, 1
          %v2138 = vperm.slane %v1340, 2
          %v2139 = vperm.slane %v1340, 3
          %v2140 = vperm.slane %v1340, 4
          %v2141 = vperm.slane %v1340, 5
          %v2142 = vperm.slane %v1340, 6
          %v2143 = vperm.slane %v1340, 7
          %v2144 = vperm.slane %v1341, 0
          %v2145 = vperm.slane %v1341, 1
          %v2146 = vperm.slane %v1341, 2
          %v2147 = vperm.slane %v1341, 3
          %v2148 = vperm.slane %v1341, 4
          %v2149 = vperm.slane %v1341, 5
          %v2150 = vperm.slane %v1341, 6
          %v2151 = vperm.slane %v1341, 7
          %2152 = vst [vmem:[#allocation1] ss:$9 sm:$0xff] %v1432
          %s2153 = scalar_lea.vmem [#allocation1], 1
          %2154 = vst [vmem:[%s2153] ss:$9 sm:$0xff] %v1433
          %s2155 = scalar_lea.vmem [#allocation1], 2
          %2156 = vst [vmem:[%s2155] ss:$9 sm:$0xff] %v1434
          %s2157 = scalar_lea.vmem [#allocation1], 3
          %2158 = vst [vmem:[%s2157] ss:$9 sm:$0xff] %v1435
          %s2159 = scalar_lea.vmem [#allocation1], 4
          %2160 = vst [vmem:[%s2159] ss:$9 sm:$0xff] %v1436
          %s2161 = scalar_lea.vmem [#allocation1], 5
          %2162 = vst [vmem:[%s2161] ss:$9 sm:$0xff] %v1437
          %s2163 = scalar_lea.vmem [#allocation1], 6
          %2164 = vst [vmem:[%s2163] ss:$9 sm:$0xff] %v1438
          %s2165 = scalar_lea.vmem [#allocation1], 7
          %2166 = vst [vmem:[%s2165] ss:$9 sm:$0xff] %v1439
          %v2167 = vld [vmem:[#allocation1] sm:$0xff]
          %2168 = vst [vmem:[#allocation1] ss:$9 sm:$0xff] %v1440
          %2169 = vst [vmem:[%s2153] ss:$9 sm:$0xff] %v1441
          %2170 = vst [vmem:[%s2155] ss:$9 sm:$0xff] %v1442
          %2171 = vst [vmem:[%s2157] ss:$9 sm:$0xff] %v1443
          %2172 = vst [vmem:[%s2159] ss:$9 sm:$0xff] %v1444
          %2173 = vst [vmem:[%s2161] ss:$9 sm:$0xff] %v1445
          %2174 = vst [vmem:[%s2163] ss:$9 sm:$0xff] %v1446
          %2175 = vst [vmem:[%s2165] ss:$9 sm:$0xff] %v1447
          %v2176 = vld [vmem:[#allocation1] sm:$0xff]
          %2177 = vst [vmem:[#allocation1] ss:$9 sm:$0xff] %v1448
          %2178 = vst [vmem:[%s2153] ss:$9 sm:$0xff] %v1449
          %2179 = vst [vmem:[%s2155] ss:$9 sm:$0xff] %v1450
          %2180 = vst [vmem:[%s2157] ss:$9 sm:$0xff] %v1451
          %2181 = vst [vmem:[%s2159] ss:$9 sm:$0xff] %v1452
          %2182 = vst [vmem:[%s2161] ss:$9 sm:$0xff] %v1453
          %2183 = vst [vmem:[%s2163] ss:$9 sm:$0xff] %v1454
          %2184 = vst [vmem:[%s2165] ss:$9 sm:$0xff] %v1455
          %v2185 = vld [vmem:[#allocation1] sm:$0xff]
          %2186 = vst [vmem:[#allocation1] ss:$9 sm:$0xff] %v1456
          %2187 = vst [vmem:[%s2153] ss:$9 sm:$0xff] %v1457
          %2188 = vst [vmem:[%s2155] ss:$9 sm:$0xff] %v1458
          %2189 = vst [vmem:[%s2157] ss:$9 sm:$0xff] %v1459
          %2190 = vst [vmem:[%s2159] ss:$9 sm:$0xff] %v1460
          %2191 = vst [vmem:[%s2161] ss:$9 sm:$0xff] %v1461
          %2192 = vst [vmem:[%s2163] ss:$9 sm:$0xff] %v1462
          %2193 = vst [vmem:[%s2165] ss:$9 sm:$0xff] %v1463
          %v2194 = vld [vmem:[#allocation1] sm:$0xff]
          %2195 = vst [vmem:[#allocation1] ss:$9 sm:$0xff] %v1464
          %2196 = vst [vmem:[%s2153] ss:$9 sm:$0xff] %v1465
          %2197 = vst [vmem:[%s2155] ss:$9 sm:$0xff] %v1466
          %2198 = vst [vmem:[%s2157] ss:$9 sm:$0xff] %v1467
          %2199 = vst [vmem:[%s2159] ss:$9 sm:$0xff] %v1468
          %2200 = vst [vmem:[%s2161] ss:$9 sm:$0xff] %v1469
          %2201 = vst [vmem:[%s2163] ss:$9 sm:$0xff] %v1470
          %2202 = vst [vmem:[%s2165] ss:$9 sm:$0xff] %v1471
          %v2203 = vld [vmem:[#allocation1] sm:$0xff]
          %2204 = vst [vmem:[#allocation1] ss:$9 sm:$0xff] %v1472
          %2205 = vst [vmem:[%s2153] ss:$9 sm:$0xff] %v1473
          %2206 = vst [vmem:[%s2155] ss:$9 sm:$0xff] %v1474
          %2207 = vst [vmem:[%s2157] ss:$9 sm:$0xff] %v1475
          %2208 = vst [vmem:[%s2159] ss:$9 sm:$0xff] %v1476
          %2209 = vst [vmem:[%s2161] ss:$9 sm:$0xff] %v1477
          %2210 = vst [vmem:[%s2163] ss:$9 sm:$0xff] %v1478
          %2211 = vst [vmem:[%s2165] ss:$9 sm:$0xff] %v1479
          %v2212 = vld [vmem:[#allocation1] sm:$0xff]
          %2213 = vst [vmem:[#allocation1] ss:$9 sm:$0xff] %v1480
          %2214 = vst [vmem:[%s2153] ss:$9 sm:$0xff] %v1481
          %2215 = vst [vmem:[%s2155] ss:$9 sm:$0xff] %v1482
          %2216 = vst [vmem:[%s2157] ss:$9 sm:$0xff] %v1483
          %2217 = vst [vmem:[%s2159] ss:$9 sm:$0xff] %v1484
          %2218 = vst [vmem:[%s2161] ss:$9 sm:$0xff] %v1485
          %2219 = vst [vmem:[%s2163] ss:$9 sm:$0xff] %v1486
          %2220 = vst [vmem:[%s2165] ss:$9 sm:$0xff] %v1487
          %v2221 = vld [vmem:[#allocation1] sm:$0xff]
          %2222 = vst [vmem:[#allocation1] ss:$9 sm:$0xff] %v1488
          %2223 = vst [vmem:[%s2153] ss:$9 sm:$0xff] %v1489
          %2224 = vst [vmem:[%s2155] ss:$9 sm:$0xff] %v1490
          %2225 = vst [vmem:[%s2157] ss:$9 sm:$0xff] %v1491
          %2226 = vst [vmem:[%s2159] ss:$9 sm:$0xff] %v1492
          %2227 = vst [vmem:[%s2161] ss:$9 sm:$0xff] %v1493
          %2228 = vst [vmem:[%s2163] ss:$9 sm:$0xff] %v1494
          %2229 = vst [vmem:[%s2165] ss:$9 sm:$0xff] %v1495
          %v2230 = vld [vmem:[#allocation1] sm:$0xff]
          %2231 = vst [vmem:[#allocation1] ss:$9 sm:$0xff] %v1496
          %2232 = vst [vmem:[%s2153] ss:$9 sm:$0xff] %v1497
          %2233 = vst [vmem:[%s2155] ss:$9 sm:$0xff] %v1498
          %2234 = vst [vmem:[%s2157] ss:$9 sm:$0xff] %v1499
          %2235 = vst [vmem:[%s2159] ss:$9 sm:$0xff] %v1500
          %2236 = vst [vmem:[%s2161] ss:$9 sm:$0xff] %v1501
          %2237 = vst [vmem:[%s2163] ss:$9 sm:$0xff] %v1502
          %2238 = vst [vmem:[%s2165] ss:$9 sm:$0xff] %v1503
          %v2239 = vld [vmem:[#allocation1] sm:$0xff]
          %2240 = vst [vmem:[#allocation1] ss:$9 sm:$0xff] %v1504
          %2241 = vst [vmem:[%s2153] ss:$9 sm:$0xff] %v1505
          %2242 = vst [vmem:[%s2155] ss:$9 sm:$0xff] %v1506
          %2243 = vst [vmem:[%s2157] ss:$9 sm:$0xff] %v1507
          %2244 = vst [vmem:[%s2159] ss:$9 sm:$0xff] %v1508
          %2245 = vst [vmem:[%s2161] ss:$9 sm:$0xff] %v1509
          %2246 = vst [vmem:[%s2163] ss:$9 sm:$0xff] %v1510
          %2247 = vst [vmem:[%s2165] ss:$9 sm:$0xff] %v1511
          %v2248 = vld [vmem:[#allocation1] sm:$0xff]
          %2249 = vst [vmem:[#allocation1] ss:$9 sm:$0xff] %v1512
          %2250 = vst [vmem:[%s2153] ss:$9 sm:$0xff] %v1513
          %2251 = vst [vmem:[%s2155] ss:$9 sm:$0xff] %v1514
          %2252 = vst [vmem:[%s2157] ss:$9 sm:$0xff] %v1515
          %2253 = vst [vmem:[%s2159] ss:$9 sm:$0xff] %v1516
          %2254 = vst [vmem:[%s2161] ss:$9 sm:$0xff] %v1517
          %2255 = vst [vmem:[%s2163] ss:$9 sm:$0xff] %v1518
          %2256 = vst [vmem:[%s2165] ss:$9 sm:$0xff] %v1519
          %v2257 = vld [vmem:[#allocation1] sm:$0xff]
          %2258 = vst [vmem:[#allocation1] ss:$9 sm:$0xff] %v1520
          %2259 = vst [vmem:[%s2153] ss:$9 sm:$0xff] %v1521
          %2260 = vst [vmem:[%s2155] ss:$9 sm:$0xff] %v1522
          %2261 = vst [vmem:[%s2157] ss:$9 sm:$0xff] %v1523
          %2262 = vst [vmem:[%s2159] ss:$9 sm:$0xff] %v1524
          %2263 = vst [vmem:[%s2161] ss:$9 sm:$0xff] %v1525
          %2264 = vst [vmem:[%s2163] ss:$9 sm:$0xff] %v1526
          %2265 = vst [vmem:[%s2165] ss:$9 sm:$0xff] %v1527
          %v2266 = vld [vmem:[#allocation1] sm:$0xff]
          %2267 = vst [vmem:[#allocation1] ss:$9 sm:$0xff] %v1528
          %2268 = vst [vmem:[%s2153] ss:$9 sm:$0xff] %v1529
          %2269 = vst [vmem:[%s2155] ss:$9 sm:$0xff] %v1530
          %2270 = vst [vmem:[%s2157] ss:$9 sm:$0xff] %v1531
          %2271 = vst [vmem:[%s2159] ss:$9 sm:$0xff] %v1532
          %2272 = vst [vmem:[%s2161] ss:$9 sm:$0xff] %v1533
          %2273 = vst [vmem:[%s2163] ss:$9 sm:$0xff] %v1534
          %2274 = vst [vmem:[%s2165] ss:$9 sm:$0xff] %v1535
          %v2275 = vld [vmem:[#allocation1] sm:$0xff]
          %2276 = vst [vmem:[#allocation1] ss:$9 sm:$0xff] %v1536
          %2277 = vst [vmem:[%s2153] ss:$9 sm:$0xff] %v1537
          %2278 = vst [vmem:[%s2155] ss:$9 sm:$0xff] %v1538
          %2279 = vst [vmem:[%s2157] ss:$9 sm:$0xff] %v1539
          %2280 = vst [vmem:[%s2159] ss:$9 sm:$0xff] %v1540
          %2281 = vst [vmem:[%s2161] ss:$9 sm:$0xff] %v1541
          %2282 = vst [vmem:[%s2163] ss:$9 sm:$0xff] %v1542
          %2283 = vst [vmem:[%s2165] ss:$9 sm:$0xff] %v1543
          %v2284 = vld [vmem:[#allocation1] sm:$0xff]
          %2285 = vst [vmem:[#allocation1] ss:$9 sm:$0xff] %v1544
          %2286 = vst [vmem:[%s2153] ss:$9 sm:$0xff] %v1545
          %2287 = vst [vmem:[%s2155] ss:$9 sm:$0xff] %v1546
          %2288 = vst [vmem:[%s2157] ss:$9 sm:$0xff] %v1547
          %2289 = vst [vmem:[%s2159] ss:$9 sm:$0xff] %v1548
          %2290 = vst [vmem:[%s2161] ss:$9 sm:$0xff] %v1549
          %2291 = vst [vmem:[%s2163] ss:$9 sm:$0xff] %v1550
          %2292 = vst [vmem:[%s2165] ss:$9 sm:$0xff] %v1551
          %v2293 = vld [vmem:[#allocation1] sm:$0xff]
          %2294 = vst [vmem:[#allocation1] ss:$9 sm:$0xff] %v1552
          %2295 = vst [vmem:[%s2153] ss:$9 sm:$0xff] %v1553
          %2296 = vst [vmem:[%s2155] ss:$9 sm:$0xff] %v1554
          %2297 = vst [vmem:[%s2157] ss:$9 sm:$0xff] %v1555
          %2298 = vst [vmem:[%s2159] ss:$9 sm:$0xff] %v1556
          %2299 = vst [vmem:[%s2161] ss:$9 sm:$0xff] %v1557
          %2300 = vst [vmem:[%s2163] ss:$9 sm:$0xff] %v1558
          %2301 = vst [vmem:[%s2165] ss:$9 sm:$0xff] %v1559
          %v2302 = vld [vmem:[#allocation1] sm:$0xff]
          %2303 = vst [vmem:[#allocation1] ss:$9 sm:$0xff] %v1560
          %2304 = vst [vmem:[%s2153] ss:$9 sm:$0xff] %v1561
          %2305 = vst [vmem:[%s2155] ss:$9 sm:$0xff] %v1562
          %2306 = vst [vmem:[%s2157] ss:$9 sm:$0xff] %v1563
          %2307 = vst [vmem:[%s2159] ss:$9 sm:$0xff] %v1564
          %2308 = vst [vmem:[%s2161] ss:$9 sm:$0xff] %v1565
          %2309 = vst [vmem:[%s2163] ss:$9 sm:$0xff] %v1566
          %2310 = vst [vmem:[%s2165] ss:$9 sm:$0xff] %v1567
          %v2311 = vld [vmem:[#allocation1] sm:$0xff]
          %2312 = vst [vmem:[#allocation1] ss:$9 sm:$0xff] %v1568
          %2313 = vst [vmem:[%s2153] ss:$9 sm:$0xff] %v1569
          %2314 = vst [vmem:[%s2155] ss:$9 sm:$0xff] %v1570
          %2315 = vst [vmem:[%s2157] ss:$9 sm:$0xff] %v1571
          %2316 = vst [vmem:[%s2159] ss:$9 sm:$0xff] %v1572
          %2317 = vst [vmem:[%s2161] ss:$9 sm:$0xff] %v1573
          %2318 = vst [vmem:[%s2163] ss:$9 sm:$0xff] %v1574
          %2319 = vst [vmem:[%s2165] ss:$9 sm:$0xff] %v1575
          %v2320 = vld [vmem:[#allocation1] sm:$0xff]
          %2321 = vst [vmem:[#allocation1] ss:$9 sm:$0xff] %v1576
          %2322 = vst [vmem:[%s2153] ss:$9 sm:$0xff] %v1577
          %2323 = vst [vmem:[%s2155] ss:$9 sm:$0xff] %v1578
          %2324 = vst [vmem:[%s2157] ss:$9 sm:$0xff] %v1579
          %2325 = vst [vmem:[%s2159] ss:$9 sm:$0xff] %v1580
          %2326 = vst [vmem:[%s2161] ss:$9 sm:$0xff] %v1581
          %2327 = vst [vmem:[%s2163] ss:$9 sm:$0xff] %v1582
          %2328 = vst [vmem:[%s2165] ss:$9 sm:$0xff] %v1583
          %v2329 = vld [vmem:[#allocation1] sm:$0xff]
          %2330 = vst [vmem:[#allocation1] ss:$9 sm:$0xff] %v1584
          %2331 = vst [vmem:[%s2153] ss:$9 sm:$0xff] %v1585
          %2332 = vst [vmem:[%s2155] ss:$9 sm:$0xff] %v1586
          %2333 = vst [vmem:[%s2157] ss:$9 sm:$0xff] %v1587
          %2334 = vst [vmem:[%s2159] ss:$9 sm:$0xff] %v1588
          %2335 = vst [vmem:[%s2161] ss:$9 sm:$0xff] %v1589
          %2336 = vst [vmem:[%s2163] ss:$9 sm:$0xff] %v1590
          %2337 = vst [vmem:[%s2165] ss:$9 sm:$0xff] %v1591
          %v2338 = vld [vmem:[#allocation1] sm:$0xff]
          %2339 = vst [vmem:[#allocation1] ss:$9 sm:$0xff] %v1592
          %2340 = vst [vmem:[%s2153] ss:$9 sm:$0xff] %v1593
          %2341 = vst [vmem:[%s2155] ss:$9 sm:$0xff] %v1594
          %2342 = vst [vmem:[%s2157] ss:$9 sm:$0xff] %v1595
          %2343 = vst [vmem:[%s2159] ss:$9 sm:$0xff] %v1596
          %2344 = vst [vmem:[%s2161] ss:$9 sm:$0xff] %v1597
          %2345 = vst [vmem:[%s2163] ss:$9 sm:$0xff] %v1598
          %2346 = vst [vmem:[%s2165] ss:$9 sm:$0xff] %v1599
          %v2347 = vld [vmem:[#allocation1] sm:$0xff]
          %2348 = vst [vmem:[#allocation1] ss:$9 sm:$0xff] %v1600
          %2349 = vst [vmem:[%s2153] ss:$9 sm:$0xff] %v1601
          %2350 = vst [vmem:[%s2155] ss:$9 sm:$0xff] %v1602
          %2351 = vst [vmem:[%s2157] ss:$9 sm:$0xff] %v1603
          %2352 = vst [vmem:[%s2159] ss:$9 sm:$0xff] %v1604
          %2353 = vst [vmem:[%s2161] ss:$9 sm:$0xff] %v1605
          %2354 = vst [vmem:[%s2163] ss:$9 sm:$0xff] %v1606
          %2355 = vst [vmem:[%s2165] ss:$9 sm:$0xff] %v1607
          %v2356 = vld [vmem:[#allocation1] sm:$0xff]
          %2357 = vst [vmem:[#allocation1] ss:$9 sm:$0xff] %v1608
          %2358 = vst [vmem:[%s2153] ss:$9 sm:$0xff] %v1609
          %2359 = vst [vmem:[%s2155] ss:$9 sm:$0xff] %v1610
          %2360 = vst [vmem:[%s2157] ss:$9 sm:$0xff] %v1611
          %2361 = vst [vmem:[%s2159] ss:$9 sm:$0xff] %v1612
          %2362 = vst [vmem:[%s2161] ss:$9 sm:$0xff] %v1613
          %2363 = vst [vmem:[%s2163] ss:$9 sm:$0xff] %v1614
          %2364 = vst [vmem:[%s2165] ss:$9 sm:$0xff] %v1615
          %v2365 = vld [vmem:[#allocation1] sm:$0xff]
          %2366 = vst [vmem:[#allocation1] ss:$9 sm:$0xff] %v1616
          %2367 = vst [vmem:[%s2153] ss:$9 sm:$0xff] %v1617
          %2368 = vst [vmem:[%s2155] ss:$9 sm:$0xff] %v1618
          %2369 = vst [vmem:[%s2157] ss:$9 sm:$0xff] %v1619
          %2370 = vst [vmem:[%s2159] ss:$9 sm:$0xff] %v1620
          %2371 = vst [vmem:[%s2161] ss:$9 sm:$0xff] %v1621
          %2372 = vst [vmem:[%s2163] ss:$9 sm:$0xff] %v1622
          %2373 = vst [vmem:[%s2165] ss:$9 sm:$0xff] %v1623
          %v2374 = vld [vmem:[#allocation1] sm:$0xff]
          %2375 = vst [vmem:[#allocation1] ss:$9 sm:$0xff] %v1624
          %2376 = vst [vmem:[%s2153] ss:$9 sm:$0xff] %v1625
          %2377 = vst [vmem:[%s2155] ss:$9 sm:$0xff] %v1626
          %2378 = vst [vmem:[%s2157] ss:$9 sm:$0xff] %v1627
          %2379 = vst [vmem:[%s2159] ss:$9 sm:$0xff] %v1628
          %2380 = vst [vmem:[%s2161] ss:$9 sm:$0xff] %v1629
          %2381 = vst [vmem:[%s2163] ss:$9 sm:$0xff] %v1630
          %2382 = vst [vmem:[%s2165] ss:$9 sm:$0xff] %v1631
          %v2383 = vld [vmem:[#allocation1] sm:$0xff]
          %2384 = vst [vmem:[#allocation1] ss:$9 sm:$0xff] %v1632
          %2385 = vst [vmem:[%s2153] ss:$9 sm:$0xff] %v1633
          %2386 = vst [vmem:[%s2155] ss:$9 sm:$0xff] %v1634
          %2387 = vst [vmem:[%s2157] ss:$9 sm:$0xff] %v1635
          %2388 = vst [vmem:[%s2159] ss:$9 sm:$0xff] %v1636
          %2389 = vst [vmem:[%s2161] ss:$9 sm:$0xff] %v1637
          %2390 = vst [vmem:[%s2163] ss:$9 sm:$0xff] %v1638
          %2391 = vst [vmem:[%s2165] ss:$9 sm:$0xff] %v1639
          %v2392 = vld [vmem:[#allocation1] sm:$0xff]
          %2393 = vst [vmem:[#allocation1] ss:$9 sm:$0xff] %v1640
          %2394 = vst [vmem:[%s2153] ss:$9 sm:$0xff] %v1641
          %2395 = vst [vmem:[%s2155] ss:$9 sm:$0xff] %v1642
          %2396 = vst [vmem:[%s2157] ss:$9 sm:$0xff] %v1643
          %2397 = vst [vmem:[%s2159] ss:$9 sm:$0xff] %v1644
          %2398 = vst [vmem:[%s2161] ss:$9 sm:$0xff] %v1645
          %2399 = vst [vmem:[%s2163] ss:$9 sm:$0xff] %v1646
          %2400 = vst [vmem:[%s2165] ss:$9 sm:$0xff] %v1647
          %v2401 = vld [vmem:[#allocation1] sm:$0xff]
          %2402 = vst [vmem:[#allocation1] ss:$9 sm:$0xff] %v1648
          %2403 = vst [vmem:[%s2153] ss:$9 sm:$0xff] %v1649
          %2404 = vst [vmem:[%s2155] ss:$9 sm:$0xff] %v1650
          %2405 = vst [vmem:[%s2157] ss:$9 sm:$0xff] %v1651
          %2406 = vst [vmem:[%s2159] ss:$9 sm:$0xff] %v1652
          %2407 = vst [vmem:[%s2161] ss:$9 sm:$0xff] %v1653
          %2408 = vst [vmem:[%s2163] ss:$9 sm:$0xff] %v1654
          %2409 = vst [vmem:[%s2165] ss:$9 sm:$0xff] %v1655
          %v2410 = vld [vmem:[#allocation1] sm:$0xff]
          %2411 = vst [vmem:[#allocation1] ss:$9 sm:$0xff] %v1656
          %2412 = vst [vmem:[%s2153] ss:$9 sm:$0xff] %v1657
          %2413 = vst [vmem:[%s2155] ss:$9 sm:$0xff] %v1658
          %2414 = vst [vmem:[%s2157] ss:$9 sm:$0xff] %v1659
          %2415 = vst [vmem:[%s2159] ss:$9 sm:$0xff] %v1660
          %2416 = vst [vmem:[%s2161] ss:$9 sm:$0xff] %v1661
          %2417 = vst [vmem:[%s2163] ss:$9 sm:$0xff] %v1662
          %2418 = vst [vmem:[%s2165] ss:$9 sm:$0xff] %v1663
          %v2419 = vld [vmem:[#allocation1] sm:$0xff]
          %2420 = vst [vmem:[#allocation1] ss:$9 sm:$0xff] %v1664
          %2421 = vst [vmem:[%s2153] ss:$9 sm:$0xff] %v1665
          %2422 = vst [vmem:[%s2155] ss:$9 sm:$0xff] %v1666
          %2423 = vst [vmem:[%s2157] ss:$9 sm:$0xff] %v1667
          %2424 = vst [vmem:[%s2159] ss:$9 sm:$0xff] %v1668
          %2425 = vst [vmem:[%s2161] ss:$9 sm:$0xff] %v1669
          %2426 = vst [vmem:[%s2163] ss:$9 sm:$0xff] %v1670
          %2427 = vst [vmem:[%s2165] ss:$9 sm:$0xff] %v1671
          %v2428 = vld [vmem:[#allocation1] sm:$0xff]
          %2429 = vst [vmem:[#allocation1] ss:$9 sm:$0xff] %v1672
          %2430 = vst [vmem:[%s2153] ss:$9 sm:$0xff] %v1673
          %2431 = vst [vmem:[%s2155] ss:$9 sm:$0xff] %v1674
          %2432 = vst [vmem:[%s2157] ss:$9 sm:$0xff] %v1675
          %2433 = vst [vmem:[%s2159] ss:$9 sm:$0xff] %v1676
          %2434 = vst [vmem:[%s2161] ss:$9 sm:$0xff] %v1677
          %2435 = vst [vmem:[%s2163] ss:$9 sm:$0xff] %v1678
          %2436 = vst [vmem:[%s2165] ss:$9 sm:$0xff] %v1679
          %v2437 = vld [vmem:[#allocation1] sm:$0xff]
          %2438 = vst [vmem:[#allocation1] ss:$9 sm:$0xff] %v1680
          %2439 = vst [vmem:[%s2153] ss:$9 sm:$0xff] %v1681
          %2440 = vst [vmem:[%s2155] ss:$9 sm:$0xff] %v1682
          %2441 = vst [vmem:[%s2157] ss:$9 sm:$0xff] %v1683
          %2442 = vst [vmem:[%s2159] ss:$9 sm:$0xff] %v1684
          %2443 = vst [vmem:[%s2161] ss:$9 sm:$0xff] %v1685
          %2444 = vst [vmem:[%s2163] ss:$9 sm:$0xff] %v1686
          %2445 = vst [vmem:[%s2165] ss:$9 sm:$0xff] %v1687
          %v2446 = vld [vmem:[#allocation1] sm:$0xff]
          %2447 = vst [vmem:[#allocation1] ss:$9 sm:$0xff] %v1688
          %2448 = vst [vmem:[%s2153] ss:$9 sm:$0xff] %v1689
          %2449 = vst [vmem:[%s2155] ss:$9 sm:$0xff] %v1690
          %2450 = vst [vmem:[%s2157] ss:$9 sm:$0xff] %v1691
          %2451 = vst [vmem:[%s2159] ss:$9 sm:$0xff] %v1692
          %2452 = vst [vmem:[%s2161] ss:$9 sm:$0xff] %v1693
          %2453 = vst [vmem:[%s2163] ss:$9 sm:$0xff] %v1694
          %2454 = vst [vmem:[%s2165] ss:$9 sm:$0xff] %v1695
          %v2455 = vld [vmem:[#allocation1] sm:$0xff]
          %2456 = vst [vmem:[#allocation1] ss:$9 sm:$0xff] %v1696
          %2457 = vst [vmem:[%s2153] ss:$9 sm:$0xff] %v1697
          %2458 = vst [vmem:[%s2155] ss:$9 sm:$0xff] %v1698
          %2459 = vst [vmem:[%s2157] ss:$9 sm:$0xff] %v1699
          %2460 = vst [vmem:[%s2159] ss:$9 sm:$0xff] %v1700
          %2461 = vst [vmem:[%s2161] ss:$9 sm:$0xff] %v1701
          %2462 = vst [vmem:[%s2163] ss:$9 sm:$0xff] %v1702
          %2463 = vst [vmem:[%s2165] ss:$9 sm:$0xff] %v1703
          %v2464 = vld [vmem:[#allocation1] sm:$0xff]
          %2465 = vst [vmem:[#allocation1] ss:$9 sm:$0xff] %v1704
          %2466 = vst [vmem:[%s2153] ss:$9 sm:$0xff] %v1705
          %2467 = vst [vmem:[%s2155] ss:$9 sm:$0xff] %v1706
          %2468 = vst [vmem:[%s2157] ss:$9 sm:$0xff] %v1707
          %2469 = vst [vmem:[%s2159] ss:$9 sm:$0xff] %v1708
          %2470 = vst [vmem:[%s2161] ss:$9 sm:$0xff] %v1709
          %2471 = vst [vmem:[%s2163] ss:$9 sm:$0xff] %v1710
          %2472 = vst [vmem:[%s2165] ss:$9 sm:$0xff] %v1711
          %v2473 = vld [vmem:[#allocation1] sm:$0xff]
          %2474 = vst [vmem:[#allocation1] ss:$9 sm:$0xff] %v1712
          %2475 = vst [vmem:[%s2153] ss:$9 sm:$0xff] %v1713
          %2476 = vst [vmem:[%s2155] ss:$9 sm:$0xff] %v1714
          %2477 = vst [vmem:[%s2157] ss:$9 sm:$0xff] %v1715
          %2478 = vst [vmem:[%s2159] ss:$9 sm:$0xff] %v1716
          %2479 = vst [vmem:[%s2161] ss:$9 sm:$0xff] %v1717
          %2480 = vst [vmem:[%s2163] ss:$9 sm:$0xff] %v1718
          %2481 = vst [vmem:[%s2165] ss:$9 sm:$0xff] %v1719
          %v2482 = vld [vmem:[#allocation1] sm:$0xff]
          %2483 = vst [vmem:[#allocation1] ss:$9 sm:$0xff] %v1720
          %2484 = vst [vmem:[%s2153] ss:$9 sm:$0xff] %v1721
          %2485 = vst [vmem:[%s2155] ss:$9 sm:$0xff] %v1722
          %2486 = vst [vmem:[%s2157] ss:$9 sm:$0xff] %v1723
          %2487 = vst [vmem:[%s2159] ss:$9 sm:$0xff] %v1724
          %2488 = vst [vmem:[%s2161] ss:$9 sm:$0xff] %v1725
          %2489 = vst [vmem:[%s2163] ss:$9 sm:$0xff] %v1726
          %2490 = vst [vmem:[%s2165] ss:$9 sm:$0xff] %v1727
          %v2491 = vld [vmem:[#allocation1] sm:$0xff]
          %2492 = vst [vmem:[#allocation1] ss:$9 sm:$0xff] %v1728
          %2493 = vst [vmem:[%s2153] ss:$9 sm:$0xff] %v1729
          %2494 = vst [vmem:[%s2155] ss:$9 sm:$0xff] %v1730
          %2495 = vst [vmem:[%s2157] ss:$9 sm:$0xff] %v1731
          %2496 = vst [vmem:[%s2159] ss:$9 sm:$0xff] %v1732
          %2497 = vst [vmem:[%s2161] ss:$9 sm:$0xff] %v1733
          %2498 = vst [vmem:[%s2163] ss:$9 sm:$0xff] %v1734
          %2499 = vst [vmem:[%s2165] ss:$9 sm:$0xff] %v1735
          %v2500 = vld [vmem:[#allocation1] sm:$0xff]
          %2501 = vst [vmem:[#allocation1] ss:$9 sm:$0xff] %v1736
          %2502 = vst [vmem:[%s2153] ss:$9 sm:$0xff] %v1737
          %2503 = vst [vmem:[%s2155] ss:$9 sm:$0xff] %v1738
          %2504 = vst [vmem:[%s2157] ss:$9 sm:$0xff] %v1739
          %2505 = vst [vmem:[%s2159] ss:$9 sm:$0xff] %v1740
          %2506 = vst [vmem:[%s2161] ss:$9 sm:$0xff] %v1741
          %2507 = vst [vmem:[%s2163] ss:$9 sm:$0xff] %v1742
          %2508 = vst [vmem:[%s2165] ss:$9 sm:$0xff] %v1743
          %v2509 = vld [vmem:[#allocation1] sm:$0xff]
          %2510 = vst [vmem:[#allocation1] ss:$9 sm:$0xff] %v1744
          %2511 = vst [vmem:[%s2153] ss:$9 sm:$0xff] %v1745
          %2512 = vst [vmem:[%s2155] ss:$9 sm:$0xff] %v1746
          %2513 = vst [vmem:[%s2157] ss:$9 sm:$0xff] %v1747
          %2514 = vst [vmem:[%s2159] ss:$9 sm:$0xff] %v1748
          %2515 = vst [vmem:[%s2161] ss:$9 sm:$0xff] %v1749
          %2516 = vst [vmem:[%s2163] ss:$9 sm:$0xff] %v1750
          %2517 = vst [vmem:[%s2165] ss:$9 sm:$0xff] %v1751
          %v2518 = vld [vmem:[#allocation1] sm:$0xff]
          %2519 = vst [vmem:[#allocation1] ss:$9 sm:$0xff] %v1752
          %2520 = vst [vmem:[%s2153] ss:$9 sm:$0xff] %v1753
          %2521 = vst [vmem:[%s2155] ss:$9 sm:$0xff] %v1754
          %2522 = vst [vmem:[%s2157] ss:$9 sm:$0xff] %v1755
          %2523 = vst [vmem:[%s2159] ss:$9 sm:$0xff] %v1756
          %2524 = vst [vmem:[%s2161] ss:$9 sm:$0xff] %v1757
          %2525 = vst [vmem:[%s2163] ss:$9 sm:$0xff] %v1758
          %2526 = vst [vmem:[%s2165] ss:$9 sm:$0xff] %v1759
          %v2527 = vld [vmem:[#allocation1] sm:$0xff]
          %2528 = vst [vmem:[#allocation1] ss:$9 sm:$0xff] %v1760
          %2529 = vst [vmem:[%s2153] ss:$9 sm:$0xff] %v1761
          %2530 = vst [vmem:[%s2155] ss:$9 sm:$0xff] %v1762
          %2531 = vst [vmem:[%s2157] ss:$9 sm:$0xff] %v1763
          %2532 = vst [vmem:[%s2159] ss:$9 sm:$0xff] %v1764
          %2533 = vst [vmem:[%s2161] ss:$9 sm:$0xff] %v1765
          %2534 = vst [vmem:[%s2163] ss:$9 sm:$0xff] %v1766
          %2535 = vst [vmem:[%s2165] ss:$9 sm:$0xff] %v1767
          %v2536 = vld [vmem:[#allocation1] sm:$0xff]
          %2537 = vst [vmem:[#allocation1] ss:$9 sm:$0xff] %v1768
          %2538 = vst [vmem:[%s2153] ss:$9 sm:$0xff] %v1769
          %2539 = vst [vmem:[%s2155] ss:$9 sm:$0xff] %v1770
          %2540 = vst [vmem:[%s2157] ss:$9 sm:$0xff] %v1771
          %2541 = vst [vmem:[%s2159] ss:$9 sm:$0xff] %v1772
          %2542 = vst [vmem:[%s2161] ss:$9 sm:$0xff] %v1773
          %2543 = vst [vmem:[%s2163] ss:$9 sm:$0xff] %v1774
          %2544 = vst [vmem:[%s2165] ss:$9 sm:$0xff] %v1775
          %v2545 = vld [vmem:[#allocation1] sm:$0xff]
          %2546 = vst [vmem:[#allocation1] ss:$9 sm:$0xff] %v1776
          %2547 = vst [vmem:[%s2153] ss:$9 sm:$0xff] %v1777
          %2548 = vst [vmem:[%s2155] ss:$9 sm:$0xff] %v1778
          %2549 = vst [vmem:[%s2157] ss:$9 sm:$0xff] %v1779
          %2550 = vst [vmem:[%s2159] ss:$9 sm:$0xff] %v1780
          %2551 = vst [vmem:[%s2161] ss:$9 sm:$0xff] %v1781
          %2552 = vst [vmem:[%s2163] ss:$9 sm:$0xff] %v1782
          %2553 = vst [vmem:[%s2165] ss:$9 sm:$0xff] %v1783
          %v2554 = vld [vmem:[#allocation1] sm:$0xff]
          %2555 = vst [vmem:[#allocation1] ss:$9 sm:$0xff] %v1784
          %2556 = vst [vmem:[%s2153] ss:$9 sm:$0xff] %v1785
          %2557 = vst [vmem:[%s2155] ss:$9 sm:$0xff] %v1786
          %2558 = vst [vmem:[%s2157] ss:$9 sm:$0xff] %v1787
          %2559 = vst [vmem:[%s2159] ss:$9 sm:$0xff] %v1788
          %2560 = vst [vmem:[%s2161] ss:$9 sm:$0xff] %v1789
          %2561 = vst [vmem:[%s2163] ss:$9 sm:$0xff] %v1790
          %2562 = vst [vmem:[%s2165] ss:$9 sm:$0xff] %v1791
          %v2563 = vld [vmem:[#allocation1] sm:$0xff]
          %2564 = vst [vmem:[#allocation1] ss:$9 sm:$0xff] %v1792
          %2565 = vst [vmem:[%s2153] ss:$9 sm:$0xff] %v1793
          %2566 = vst [vmem:[%s2155] ss:$9 sm:$0xff] %v1794
          %2567 = vst [vmem:[%s2157] ss:$9 sm:$0xff] %v1795
          %2568 = vst [vmem:[%s2159] ss:$9 sm:$0xff] %v1796
          %2569 = vst [vmem:[%s2161] ss:$9 sm:$0xff] %v1797
          %2570 = vst [vmem:[%s2163] ss:$9 sm:$0xff] %v1798
          %2571 = vst [vmem:[%s2165] ss:$9 sm:$0xff] %v1799
          %v2572 = vld [vmem:[#allocation1] sm:$0xff]
          %2573 = vst [vmem:[#allocation1] ss:$9 sm:$0xff] %v1800
          %2574 = vst [vmem:[%s2153] ss:$9 sm:$0xff] %v1801
          %2575 = vst [vmem:[%s2155] ss:$9 sm:$0xff] %v1802
          %2576 = vst [vmem:[%s2157] ss:$9 sm:$0xff] %v1803
          %2577 = vst [vmem:[%s2159] ss:$9 sm:$0xff] %v1804
          %2578 = vst [vmem:[%s2161] ss:$9 sm:$0xff] %v1805
          %2579 = vst [vmem:[%s2163] ss:$9 sm:$0xff] %v1806
          %2580 = vst [vmem:[%s2165] ss:$9 sm:$0xff] %v1807
          %v2581 = vld [vmem:[#allocation1] sm:$0xff]
          %2582 = vst [vmem:[#allocation1] ss:$9 sm:$0xff] %v1808
          %2583 = vst [vmem:[%s2153] ss:$9 sm:$0xff] %v1809
          %2584 = vst [vmem:[%s2155] ss:$9 sm:$0xff] %v1810
          %2585 = vst [vmem:[%s2157] ss:$9 sm:$0xff] %v1811
          %2586 = vst [vmem:[%s2159] ss:$9 sm:$0xff] %v1812
          %2587 = vst [vmem:[%s2161] ss:$9 sm:$0xff] %v1813
          %2588 = vst [vmem:[%s2163] ss:$9 sm:$0xff] %v1814
          %2589 = vst [vmem:[%s2165] ss:$9 sm:$0xff] %v1815
          %v2590 = vld [vmem:[#allocation1] sm:$0xff]
          %2591 = vst [vmem:[#allocation1] ss:$9 sm:$0xff] %v1816
          %2592 = vst [vmem:[%s2153] ss:$9 sm:$0xff] %v1817
          %2593 = vst [vmem:[%s2155] ss:$9 sm:$0xff] %v1818
          %2594 = vst [vmem:[%s2157] ss:$9 sm:$0xff] %v1819
          %2595 = vst [vmem:[%s2159] ss:$9 sm:$0xff] %v1820
          %2596 = vst [vmem:[%s2161] ss:$9 sm:$0xff] %v1821
          %2597 = vst [vmem:[%s2163] ss:$9 sm:$0xff] %v1822
          %2598 = vst [vmem:[%s2165] ss:$9 sm:$0xff] %v1823
          %v2599 = vld [vmem:[#allocation1] sm:$0xff]
          %2600 = vst [vmem:[#allocation1] ss:$9 sm:$0xff] %v1824
          %2601 = vst [vmem:[%s2153] ss:$9 sm:$0xff] %v1825
          %2602 = vst [vmem:[%s2155] ss:$9 sm:$0xff] %v1826
          %2603 = vst [vmem:[%s2157] ss:$9 sm:$0xff] %v1827
          %2604 = vst [vmem:[%s2159] ss:$9 sm:$0xff] %v1828
          %2605 = vst [vmem:[%s2161] ss:$9 sm:$0xff] %v1829
          %2606 = vst [vmem:[%s2163] ss:$9 sm:$0xff] %v1830
          %2607 = vst [vmem:[%s2165] ss:$9 sm:$0xff] %v1831
          %v2608 = vld [vmem:[#allocation1] sm:$0xff]
          %2609 = vst [vmem:[#allocation1] ss:$9 sm:$0xff] %v1832
          %2610 = vst [vmem:[%s2153] ss:$9 sm:$0xff] %v1833
          %2611 = vst [vmem:[%s2155] ss:$9 sm:$0xff] %v1834
          %2612 = vst [vmem:[%s2157] ss:$9 sm:$0xff] %v1835
          %2613 = vst [vmem:[%s2159] ss:$9 sm:$0xff] %v1836
          %2614 = vst [vmem:[%s2161] ss:$9 sm:$0xff] %v1837
          %2615 = vst [vmem:[%s2163] ss:$9 sm:$0xff] %v1838
          %2616 = vst [vmem:[%s2165] ss:$9 sm:$0xff] %v1839
          %v2617 = vld [vmem:[#allocation1] sm:$0xff]
          %2618 = vst [vmem:[#allocation1] ss:$9 sm:$0xff] %v1840
          %2619 = vst [vmem:[%s2153] ss:$9 sm:$0xff] %v1841
          %2620 = vst [vmem:[%s2155] ss:$9 sm:$0xff] %v1842
          %2621 = vst [vmem:[%s2157] ss:$9 sm:$0xff] %v1843
          %2622 = vst [vmem:[%s2159] ss:$9 sm:$0xff] %v1844
          %2623 = vst [vmem:[%s2161] ss:$9 sm:$0xff] %v1845
          %2624 = vst [vmem:[%s2163] ss:$9 sm:$0xff] %v1846
          %2625 = vst [vmem:[%s2165] ss:$9 sm:$0xff] %v1847
          %v2626 = vld [vmem:[#allocation1] sm:$0xff]
          %2627 = vst [vmem:[#allocation1] ss:$9 sm:$0xff] %v1848
          %2628 = vst [vmem:[%s2153] ss:$9 sm:$0xff] %v1849
          %2629 = vst [vmem:[%s2155] ss:$9 sm:$0xff] %v1850
          %2630 = vst [vmem:[%s2157] ss:$9 sm:$0xff] %v1851
          %2631 = vst [vmem:[%s2159] ss:$9 sm:$0xff] %v1852
          %2632 = vst [vmem:[%s2161] ss:$9 sm:$0xff] %v1853
          %2633 = vst [vmem:[%s2163] ss:$9 sm:$0xff] %v1854
          %2634 = vst [vmem:[%s2165] ss:$9 sm:$0xff] %v1855
          %v2635 = vld [vmem:[#allocation1] sm:$0xff]
          %2636 = vst [vmem:[#allocation1] ss:$9 sm:$0xff] %v1856
          %2637 = vst [vmem:[%s2153] ss:$9 sm:$0xff] %v1857
          %2638 = vst [vmem:[%s2155] ss:$9 sm:$0xff] %v1858
          %2639 = vst [vmem:[%s2157] ss:$9 sm:$0xff] %v1859
          %2640 = vst [vmem:[%s2159] ss:$9 sm:$0xff] %v1860
          %2641 = vst [vmem:[%s2161] ss:$9 sm:$0xff] %v1861
          %2642 = vst [vmem:[%s2163] ss:$9 sm:$0xff] %v1862
          %2643 = vst [vmem:[%s2165] ss:$9 sm:$0xff] %v1863
          %v2644 = vld [vmem:[#allocation1] sm:$0xff]
          %2645 = vst [vmem:[#allocation1] ss:$9 sm:$0xff] %v1864
          %2646 = vst [vmem:[%s2153] ss:$9 sm:$0xff] %v1865
          %2647 = vst [vmem:[%s2155] ss:$9 sm:$0xff] %v1866
          %2648 = vst [vmem:[%s2157] ss:$9 sm:$0xff] %v1867
          %2649 = vst [vmem:[%s2159] ss:$9 sm:$0xff] %v1868
          %2650 = vst [vmem:[%s2161] ss:$9 sm:$0xff] %v1869
          %2651 = vst [vmem:[%s2163] ss:$9 sm:$0xff] %v1870
          %2652 = vst [vmem:[%s2165] ss:$9 sm:$0xff] %v1871
          %v2653 = vld [vmem:[#allocation1] sm:$0xff]
          %2654 = vst [vmem:[#allocation1] ss:$9 sm:$0xff] %v1872
          %2655 = vst [vmem:[%s2153] ss:$9 sm:$0xff] %v1873
          %2656 = vst [vmem:[%s2155] ss:$9 sm:$0xff] %v1874
          %2657 = vst [vmem:[%s2157] ss:$9 sm:$0xff] %v1875
          %2658 = vst [vmem:[%s2159] ss:$9 sm:$0xff] %v1876
          %2659 = vst [vmem:[%s2161] ss:$9 sm:$0xff] %v1877
          %2660 = vst [vmem:[%s2163] ss:$9 sm:$0xff] %v1878
          %2661 = vst [vmem:[%s2165] ss:$9 sm:$0xff] %v1879
          %v2662 = vld [vmem:[#allocation1] sm:$0xff]
          %2663 = vst [vmem:[#allocation1] ss:$9 sm:$0xff] %v1880
          %2664 = vst [vmem:[%s2153] ss:$9 sm:$0xff] %v1881
          %2665 = vst [vmem:[%s2155] ss:$9 sm:$0xff] %v1882
          %2666 = vst [vmem:[%s2157] ss:$9 sm:$0xff] %v1883
          %2667 = vst [vmem:[%s2159] ss:$9 sm:$0xff] %v1884
          %2668 = vst [vmem:[%s2161] ss:$9 sm:$0xff] %v1885
          %2669 = vst [vmem:[%s2163] ss:$9 sm:$0xff] %v1886
          %2670 = vst [vmem:[%s2165] ss:$9 sm:$0xff] %v1887
          %v2671 = vld [vmem:[#allocation1] sm:$0xff]
          %2672 = vst [vmem:[#allocation1] ss:$9 sm:$0xff] %v1888
          %2673 = vst [vmem:[%s2153] ss:$9 sm:$0xff] %v1889
          %2674 = vst [vmem:[%s2155] ss:$9 sm:$0xff] %v1890
          %2675 = vst [vmem:[%s2157] ss:$9 sm:$0xff] %v1891
          %2676 = vst [vmem:[%s2159] ss:$9 sm:$0xff] %v1892
          %2677 = vst [vmem:[%s2161] ss:$9 sm:$0xff] %v1893
          %2678 = vst [vmem:[%s2163] ss:$9 sm:$0xff] %v1894
          %2679 = vst [vmem:[%s2165] ss:$9 sm:$0xff] %v1895
          %v2680 = vld [vmem:[#allocation1] sm:$0xff]
          %2681 = vst [vmem:[#allocation1] ss:$9 sm:$0xff] %v1896
          %2682 = vst [vmem:[%s2153] ss:$9 sm:$0xff] %v1897
          %2683 = vst [vmem:[%s2155] ss:$9 sm:$0xff] %v1898
          %2684 = vst [vmem:[%s2157] ss:$9 sm:$0xff] %v1899
          %2685 = vst [vmem:[%s2159] ss:$9 sm:$0xff] %v1900
          %2686 = vst [vmem:[%s2161] ss:$9 sm:$0xff] %v1901
          %2687 = vst [vmem:[%s2163] ss:$9 sm:$0xff] %v1902
          %2688 = vst [vmem:[%s2165] ss:$9 sm:$0xff] %v1903
          %v2689 = vld [vmem:[#allocation1] sm:$0xff]
          %2690 = vst [vmem:[#allocation1] ss:$9 sm:$0xff] %v1904
          %2691 = vst [vmem:[%s2153] ss:$9 sm:$0xff] %v1905
          %2692 = vst [vmem:[%s2155] ss:$9 sm:$0xff] %v1906
          %2693 = vst [vmem:[%s2157] ss:$9 sm:$0xff] %v1907
          %2694 = vst [vmem:[%s2159] ss:$9 sm:$0xff] %v1908
          %2695 = vst [vmem:[%s2161] ss:$9 sm:$0xff] %v1909
          %2696 = vst [vmem:[%s2163] ss:$9 sm:$0xff] %v1910
          %2697 = vst [vmem:[%s2165] ss:$9 sm:$0xff] %v1911
          %v2698 = vld [vmem:[#allocation1] sm:$0xff]
          %2699 = vst [vmem:[#allocation1] ss:$9 sm:$0xff] %v1912
          %2700 = vst [vmem:[%s2153] ss:$9 sm:$0xff] %v1913
          %2701 = vst [vmem:[%s2155] ss:$9 sm:$0xff] %v1914
          %2702 = vst [vmem:[%s2157] ss:$9 sm:$0xff] %v1915
          %2703 = vst [vmem:[%s2159] ss:$9 sm:$0xff] %v1916
          %2704 = vst [vmem:[%s2161] ss:$9 sm:$0xff] %v1917
          %2705 = vst [vmem:[%s2163] ss:$9 sm:$0xff] %v1918
          %2706 = vst [vmem:[%s2165] ss:$9 sm:$0xff] %v1919
          %v2707 = vld [vmem:[#allocation1] sm:$0xff]
          %2708 = vst [vmem:[#allocation1] ss:$9 sm:$0xff] %v1920
          %2709 = vst [vmem:[%s2153] ss:$9 sm:$0xff] %v1921
          %2710 = vst [vmem:[%s2155] ss:$9 sm:$0xff] %v1922
          %2711 = vst [vmem:[%s2157] ss:$9 sm:$0xff] %v1923
          %2712 = vst [vmem:[%s2159] ss:$9 sm:$0xff] %v1924
          %2713 = vst [vmem:[%s2161] ss:$9 sm:$0xff] %v1925
          %2714 = vst [vmem:[%s2163] ss:$9 sm:$0xff] %v1926
          %2715 = vst [vmem:[%s2165] ss:$9 sm:$0xff] %v1927
          %v2716 = vld [vmem:[#allocation1] sm:$0xff]
          %2717 = vst [vmem:[#allocation1] ss:$9 sm:$0xff] %v1928
          %2718 = vst [vmem:[%s2153] ss:$9 sm:$0xff] %v1929
          %2719 = vst [vmem:[%s2155] ss:$9 sm:$0xff] %v1930
          %2720 = vst [vmem:[%s2157] ss:$9 sm:$0xff] %v1931
          %2721 = vst [vmem:[%s2159] ss:$9 sm:$0xff] %v1932
          %2722 = vst [vmem:[%s2161] ss:$9 sm:$0xff] %v1933
          %2723 = vst [vmem:[%s2163] ss:$9 sm:$0xff] %v1934
          %2724 = vst [vmem:[%s2165] ss:$9 sm:$0xff] %v1935
          %v2725 = vld [vmem:[#allocation1] sm:$0xff]
          %2726 = vst [vmem:[#allocation1] ss:$9 sm:$0xff] %v1936
          %2727 = vst [vmem:[%s2153] ss:$9 sm:$0xff] %v1937
          %2728 = vst [vmem:[%s2155] ss:$9 sm:$0xff] %v1938
          %2729 = vst [vmem:[%s2157] ss:$9 sm:$0xff] %v1939
          %2730 = vst [vmem:[%s2159] ss:$9 sm:$0xff] %v1940
          %2731 = vst [vmem:[%s2161] ss:$9 sm:$0xff] %v1941
          %2732 = vst [vmem:[%s2163] ss:$9 sm:$0xff] %v1942
          %2733 = vst [vmem:[%s2165] ss:$9 sm:$0xff] %v1943
          %v2734 = vld [vmem:[#allocation1] sm:$0xff]
          %2735 = vst [vmem:[#allocation1] ss:$9 sm:$0xff] %v1944
          %2736 = vst [vmem:[%s2153] ss:$9 sm:$0xff] %v1945
          %2737 = vst [vmem:[%s2155] ss:$9 sm:$0xff] %v1946
          %2738 = vst [vmem:[%s2157] ss:$9 sm:$0xff] %v1947
          %2739 = vst [vmem:[%s2159] ss:$9 sm:$0xff] %v1948
          %2740 = vst [vmem:[%s2161] ss:$9 sm:$0xff] %v1949
          %2741 = vst [vmem:[%s2163] ss:$9 sm:$0xff] %v1950
          %2742 = vst [vmem:[%s2165] ss:$9 sm:$0xff] %v1951
          %v2743 = vld [vmem:[#allocation1] sm:$0xff]
          %2744 = vst [vmem:[#allocation1] ss:$9 sm:$0xff] %v1952
          %2745 = vst [vmem:[%s2153] ss:$9 sm:$0xff] %v1953
          %2746 = vst [vmem:[%s2155] ss:$9 sm:$0xff] %v1954
          %2747 = vst [vmem:[%s2157] ss:$9 sm:$0xff] %v1955
          %2748 = vst [vmem:[%s2159] ss:$9 sm:$0xff] %v1956
          %2749 = vst [vmem:[%s2161] ss:$9 sm:$0xff] %v1957
          %2750 = vst [vmem:[%s2163] ss:$9 sm:$0xff] %v1958
          %2751 = vst [vmem:[%s2165] ss:$9 sm:$0xff] %v1959
          %v2752 = vld [vmem:[#allocation1] sm:$0xff]
          %2753 = vst [vmem:[#allocation1] ss:$9 sm:$0xff] %v1960
          %2754 = vst [vmem:[%s2153] ss:$9 sm:$0xff] %v1961
          %2755 = vst [vmem:[%s2155] ss:$9 sm:$0xff] %v1962
          %2756 = vst [vmem:[%s2157] ss:$9 sm:$0xff] %v1963
          %2757 = vst [vmem:[%s2159] ss:$9 sm:$0xff] %v1964
          %2758 = vst [vmem:[%s2161] ss:$9 sm:$0xff] %v1965
          %2759 = vst [vmem:[%s2163] ss:$9 sm:$0xff] %v1966
          %2760 = vst [vmem:[%s2165] ss:$9 sm:$0xff] %v1967
          %v2761 = vld [vmem:[#allocation1] sm:$0xff]
          %2762 = vst [vmem:[#allocation1] ss:$9 sm:$0xff] %v1968
          %2763 = vst [vmem:[%s2153] ss:$9 sm:$0xff] %v1969
          %2764 = vst [vmem:[%s2155] ss:$9 sm:$0xff] %v1970
          %2765 = vst [vmem:[%s2157] ss:$9 sm:$0xff] %v1971
          %2766 = vst [vmem:[%s2159] ss:$9 sm:$0xff] %v1972
          %2767 = vst [vmem:[%s2161] ss:$9 sm:$0xff] %v1973
          %2768 = vst [vmem:[%s2163] ss:$9 sm:$0xff] %v1974
          %2769 = vst [vmem:[%s2165] ss:$9 sm:$0xff] %v1975
          %v2770 = vld [vmem:[#allocation1] sm:$0xff]
          %2771 = vst [vmem:[#allocation1] ss:$9 sm:$0xff] %v1976
          %2772 = vst [vmem:[%s2153] ss:$9 sm:$0xff] %v1977
          %2773 = vst [vmem:[%s2155] ss:$9 sm:$0xff] %v1978
          %2774 = vst [vmem:[%s2157] ss:$9 sm:$0xff] %v1979
          %2775 = vst [vmem:[%s2159] ss:$9 sm:$0xff] %v1980
          %2776 = vst [vmem:[%s2161] ss:$9 sm:$0xff] %v1981
          %2777 = vst [vmem:[%s2163] ss:$9 sm:$0xff] %v1982
          %2778 = vst [vmem:[%s2165] ss:$9 sm:$0xff] %v1983
          %v2779 = vld [vmem:[#allocation1] sm:$0xff]
          %2780 = vst [vmem:[#allocation1] ss:$9 sm:$0xff] %v1984
          %2781 = vst [vmem:[%s2153] ss:$9 sm:$0xff] %v1985
          %2782 = vst [vmem:[%s2155] ss:$9 sm:$0xff] %v1986
          %2783 = vst [vmem:[%s2157] ss:$9 sm:$0xff] %v1987
          %2784 = vst [vmem:[%s2159] ss:$9 sm:$0xff] %v1988
          %2785 = vst [vmem:[%s2161] ss:$9 sm:$0xff] %v1989
          %2786 = vst [vmem:[%s2163] ss:$9 sm:$0xff] %v1990
          %2787 = vst [vmem:[%s2165] ss:$9 sm:$0xff] %v1991
          %v2788 = vld [vmem:[#allocation1] sm:$0xff]
          %2789 = vst [vmem:[#allocation1] ss:$9 sm:$0xff] %v1992
          %2790 = vst [vmem:[%s2153] ss:$9 sm:$0xff] %v1993
          %2791 = vst [vmem:[%s2155] ss:$9 sm:$0xff] %v1994
          %2792 = vst [vmem:[%s2157] ss:$9 sm:$0xff] %v1995
          %2793 = vst [vmem:[%s2159] ss:$9 sm:$0xff] %v1996
          %2794 = vst [vmem:[%s2161] ss:$9 sm:$0xff] %v1997
          %2795 = vst [vmem:[%s2163] ss:$9 sm:$0xff] %v1998
          %2796 = vst [vmem:[%s2165] ss:$9 sm:$0xff] %v1999
          %v2797 = vld [vmem:[#allocation1] sm:$0xff]
          %2798 = vst [vmem:[#allocation1] ss:$9 sm:$0xff] %v2000
          %2799 = vst [vmem:[%s2153] ss:$9 sm:$0xff] %v2001
          %2800 = vst [vmem:[%s2155] ss:$9 sm:$0xff] %v2002
          %2801 = vst [vmem:[%s2157] ss:$9 sm:$0xff] %v2003
          %2802 = vst [vmem:[%s2159] ss:$9 sm:$0xff] %v2004
          %2803 = vst [vmem:[%s2161] ss:$9 sm:$0xff] %v2005
          %2804 = vst [vmem:[%s2163] ss:$9 sm:$0xff] %v2006
          %2805 = vst [vmem:[%s2165] ss:$9 sm:$0xff] %v2007
          %v2806 = vld [vmem:[#allocation1] sm:$0xff]
          %2807 = vst [vmem:[#allocation1] ss:$9 sm:$0xff] %v2008
          %2808 = vst [vmem:[%s2153] ss:$9 sm:$0xff] %v2009
          %2809 = vst [vmem:[%s2155] ss:$9 sm:$0xff] %v2010
          %2810 = vst [vmem:[%s2157] ss:$9 sm:$0xff] %v2011
          %2811 = vst [vmem:[%s2159] ss:$9 sm:$0xff] %v2012
          %2812 = vst [vmem:[%s2161] ss:$9 sm:$0xff] %v2013
          %2813 = vst [vmem:[%s2163] ss:$9 sm:$0xff] %v2014
          %2814 = vst [vmem:[%s2165] ss:$9 sm:$0xff] %v2015
          %v2815 = vld [vmem:[#allocation1] sm:$0xff]
          %2816 = vst [vmem:[#allocation1] ss:$9 sm:$0xff] %v2016
          %2817 = vst [vmem:[%s2153] ss:$9 sm:$0xff] %v2017
          %2818 = vst [vmem:[%s2155] ss:$9 sm:$0xff] %v2018
          %2819 = vst [vmem:[%s2157] ss:$9 sm:$0xff] %v2019
          %2820 = vst [vmem:[%s2159] ss:$9 sm:$0xff] %v2020
          %2821 = vst [vmem:[%s2161] ss:$9 sm:$0xff] %v2021
          %2822 = vst [vmem:[%s2163] ss:$9 sm:$0xff] %v2022
          %2823 = vst [vmem:[%s2165] ss:$9 sm:$0xff] %v2023
          %v2824 = vld [vmem:[#allocation1] sm:$0xff]
          %2825 = vst [vmem:[#allocation1] ss:$9 sm:$0xff] %v2024
          %2826 = vst [vmem:[%s2153] ss:$9 sm:$0xff] %v2025
          %2827 = vst [vmem:[%s2155] ss:$9 sm:$0xff] %v2026
          %2828 = vst [vmem:[%s2157] ss:$9 sm:$0xff] %v2027
          %2829 = vst [vmem:[%s2159] ss:$9 sm:$0xff] %v2028
          %2830 = vst [vmem:[%s2161] ss:$9 sm:$0xff] %v2029
          %2831 = vst [vmem:[%s2163] ss:$9 sm:$0xff] %v2030
          %2832 = vst [vmem:[%s2165] ss:$9 sm:$0xff] %v2031
          %v2833 = vld [vmem:[#allocation1] sm:$0xff]
          %2834 = vst [vmem:[#allocation1] ss:$9 sm:$0xff] %v2032
          %2835 = vst [vmem:[%s2153] ss:$9 sm:$0xff] %v2033
          %2836 = vst [vmem:[%s2155] ss:$9 sm:$0xff] %v2034
          %2837 = vst [vmem:[%s2157] ss:$9 sm:$0xff] %v2035
          %2838 = vst [vmem:[%s2159] ss:$9 sm:$0xff] %v2036
          %2839 = vst [vmem:[%s2161] ss:$9 sm:$0xff] %v2037
          %2840 = vst [vmem:[%s2163] ss:$9 sm:$0xff] %v2038
          %2841 = vst [vmem:[%s2165] ss:$9 sm:$0xff] %v2039
          %v2842 = vld [vmem:[#allocation1] sm:$0xff]
          %2843 = vst [vmem:[#allocation1] ss:$9 sm:$0xff] %v2040
          %2844 = vst [vmem:[%s2153] ss:$9 sm:$0xff] %v2041
          %2845 = vst [vmem:[%s2155] ss:$9 sm:$0xff] %v2042
          %2846 = vst [vmem:[%s2157] ss:$9 sm:$0xff] %v2043
          %2847 = vst [vmem:[%s2159] ss:$9 sm:$0xff] %v2044
          %2848 = vst [vmem:[%s2161] ss:$9 sm:$0xff] %v2045
          %2849 = vst [vmem:[%s2163] ss:$9 sm:$0xff] %v2046
          %2850 = vst [vmem:[%s2165] ss:$9 sm:$0xff] %v2047
          %v2851 = vld [vmem:[#allocation1] sm:$0xff]
          %2852 = vst [vmem:[#allocation1] ss:$9 sm:$0xff] %v2048
          %2853 = vst [vmem:[%s2153] ss:$9 sm:$0xff] %v2049
          %2854 = vst [vmem:[%s2155] ss:$9 sm:$0xff] %v2050
          %2855 = vst [vmem:[%s2157] ss:$9 sm:$0xff] %v2051
          %2856 = vst [vmem:[%s2159] ss:$9 sm:$0xff] %v2052
          %2857 = vst [vmem:[%s2161] ss:$9 sm:$0xff] %v2053
          %2858 = vst [vmem:[%s2163] ss:$9 sm:$0xff] %v2054
          %2859 = vst [vmem:[%s2165] ss:$9 sm:$0xff] %v2055
          %v2860 = vld [vmem:[#allocation1] sm:$0xff]
          %2861 = vst [vmem:[#allocation1] ss:$9 sm:$0xff] %v2056
          %2862 = vst [vmem:[%s2153] ss:$9 sm:$0xff] %v2057
          %2863 = vst [vmem:[%s2155] ss:$9 sm:$0xff] %v2058
          %2864 = vst [vmem:[%s2157] ss:$9 sm:$0xff] %v2059
          %2865 = vst [vmem:[%s2159] ss:$9 sm:$0xff] %v2060
          %2866 = vst [vmem:[%s2161] ss:$9 sm:$0xff] %v2061
          %2867 = vst [vmem:[%s2163] ss:$9 sm:$0xff] %v2062
          %2868 = vst [vmem:[%s2165] ss:$9 sm:$0xff] %v2063
          %v2869 = vld [vmem:[#allocation1] sm:$0xff]
          %2870 = vst [vmem:[#allocation1] ss:$9 sm:$0xff] %v2064
          %2871 = vst [vmem:[%s2153] ss:$9 sm:$0xff] %v2065
          %2872 = vst [vmem:[%s2155] ss:$9 sm:$0xff] %v2066
          %2873 = vst [vmem:[%s2157] ss:$9 sm:$0xff] %v2067
          %2874 = vst [vmem:[%s2159] ss:$9 sm:$0xff] %v2068
          %2875 = vst [vmem:[%s2161] ss:$9 sm:$0xff] %v2069
          %2876 = vst [vmem:[%s2163] ss:$9 sm:$0xff] %v2070
          %2877 = vst [vmem:[%s2165] ss:$9 sm:$0xff] %v2071
          %v2878 = vld [vmem:[#allocation1] sm:$0xff]
          %2879 = vst [vmem:[#allocation1] ss:$9 sm:$0xff] %v2072
          %2880 = vst [vmem:[%s2153] ss:$9 sm:$0xff] %v2073
          %2881 = vst [vmem:[%s2155] ss:$9 sm:$0xff] %v2074
          %2882 = vst [vmem:[%s2157] ss:$9 sm:$0xff] %v2075
          %2883 = vst [vmem:[%s2159] ss:$9 sm:$0xff] %v2076
          %2884 = vst [vmem:[%s2161] ss:$9 sm:$0xff] %v2077
          %2885 = vst [vmem:[%s2163] ss:$9 sm:$0xff] %v2078
          %2886 = vst [vmem:[%s2165] ss:$9 sm:$0xff] %v2079
          %v2887 = vld [vmem:[#allocation1] sm:$0xff]
          %2888 = vst [vmem:[#allocation1] ss:$9 sm:$0xff] %v2080
          %2889 = vst [vmem:[%s2153] ss:$9 sm:$0xff] %v2081
          %2890 = vst [vmem:[%s2155] ss:$9 sm:$0xff] %v2082
          %2891 = vst [vmem:[%s2157] ss:$9 sm:$0xff] %v2083
          %2892 = vst [vmem:[%s2159] ss:$9 sm:$0xff] %v2084
          %2893 = vst [vmem:[%s2161] ss:$9 sm:$0xff] %v2085
          %2894 = vst [vmem:[%s2163] ss:$9 sm:$0xff] %v2086
          %2895 = vst [vmem:[%s2165] ss:$9 sm:$0xff] %v2087
          %v2896 = vld [vmem:[#allocation1] sm:$0xff]
          %2897 = vst [vmem:[#allocation1] ss:$9 sm:$0xff] %v2088
          %2898 = vst [vmem:[%s2153] ss:$9 sm:$0xff] %v2089
          %2899 = vst [vmem:[%s2155] ss:$9 sm:$0xff] %v2090
          %2900 = vst [vmem:[%s2157] ss:$9 sm:$0xff] %v2091
          %2901 = vst [vmem:[%s2159] ss:$9 sm:$0xff] %v2092
          %2902 = vst [vmem:[%s2161] ss:$9 sm:$0xff] %v2093
          %2903 = vst [vmem:[%s2163] ss:$9 sm:$0xff] %v2094
          %2904 = vst [vmem:[%s2165] ss:$9 sm:$0xff] %v2095
          %v2905 = vld [vmem:[#allocation1] sm:$0xff]
          %2906 = vst [vmem:[#allocation1] ss:$9 sm:$0xff] %v2096
          %2907 = vst [vmem:[%s2153] ss:$9 sm:$0xff] %v2097
          %2908 = vst [vmem:[%s2155] ss:$9 sm:$0xff] %v2098
          %2909 = vst [vmem:[%s2157] ss:$9 sm:$0xff] %v2099
          %2910 = vst [vmem:[%s2159] ss:$9 sm:$0xff] %v2100
          %2911 = vst [vmem:[%s2161] ss:$9 sm:$0xff] %v2101
          %2912 = vst [vmem:[%s2163] ss:$9 sm:$0xff] %v2102
          %2913 = vst [vmem:[%s2165] ss:$9 sm:$0xff] %v2103
          %v2914 = vld [vmem:[#allocation1] sm:$0xff]
          %2915 = vst [vmem:[#allocation1] ss:$9 sm:$0xff] %v2104
          %2916 = vst [vmem:[%s2153] ss:$9 sm:$0xff] %v2105
          %2917 = vst [vmem:[%s2155] ss:$9 sm:$0xff] %v2106
          %2918 = vst [vmem:[%s2157] ss:$9 sm:$0xff] %v2107
          %2919 = vst [vmem:[%s2159] ss:$9 sm:$0xff] %v2108
          %2920 = vst [vmem:[%s2161] ss:$9 sm:$0xff] %v2109
          %2921 = vst [vmem:[%s2163] ss:$9 sm:$0xff] %v2110
          %2922 = vst [vmem:[%s2165] ss:$9 sm:$0xff] %v2111
          %v2923 = vld [vmem:[#allocation1] sm:$0xff]
          %2924 = vst [vmem:[#allocation1] ss:$9 sm:$0xff] %v2112
          %2925 = vst [vmem:[%s2153] ss:$9 sm:$0xff] %v2113
          %2926 = vst [vmem:[%s2155] ss:$9 sm:$0xff] %v2114
          %2927 = vst [vmem:[%s2157] ss:$9 sm:$0xff] %v2115
          %2928 = vst [vmem:[%s2159] ss:$9 sm:$0xff] %v2116
          %2929 = vst [vmem:[%s2161] ss:$9 sm:$0xff] %v2117
          %2930 = vst [vmem:[%s2163] ss:$9 sm:$0xff] %v2118
          %2931 = vst [vmem:[%s2165] ss:$9 sm:$0xff] %v2119
          %v2932 = vld [vmem:[#allocation1] sm:$0xff]
          %2933 = vst [vmem:[#allocation1] ss:$9 sm:$0xff] %v2120
          %2934 = vst [vmem:[%s2153] ss:$9 sm:$0xff] %v2121
          %2935 = vst [vmem:[%s2155] ss:$9 sm:$0xff] %v2122
          %2936 = vst [vmem:[%s2157] ss:$9 sm:$0xff] %v2123
          %2937 = vst [vmem:[%s2159] ss:$9 sm:$0xff] %v2124
          %2938 = vst [vmem:[%s2161] ss:$9 sm:$0xff] %v2125
          %2939 = vst [vmem:[%s2163] ss:$9 sm:$0xff] %v2126
          %2940 = vst [vmem:[%s2165] ss:$9 sm:$0xff] %v2127
          %v2941 = vld [vmem:[#allocation1] sm:$0xff]
          %2942 = vst [vmem:[#allocation1] ss:$9 sm:$0xff] %v2128
          %2943 = vst [vmem:[%s2153] ss:$9 sm:$0xff] %v2129
          %2944 = vst [vmem:[%s2155] ss:$9 sm:$0xff] %v2130
          %2945 = vst [vmem:[%s2157] ss:$9 sm:$0xff] %v2131
          %2946 = vst [vmem:[%s2159] ss:$9 sm:$0xff] %v2132
          %2947 = vst [vmem:[%s2161] ss:$9 sm:$0xff] %v2133
          %2948 = vst [vmem:[%s2163] ss:$9 sm:$0xff] %v2134
          %2949 = vst [vmem:[%s2165] ss:$9 sm:$0xff] %v2135
          %v2950 = vld [vmem:[#allocation1] sm:$0xff]
          %2951 = vst [vmem:[#allocation1] ss:$9 sm:$0xff] %v2136
          %2952 = vst [vmem:[%s2153] ss:$9 sm:$0xff] %v2137
          %2953 = vst [vmem:[%s2155] ss:$9 sm:$0xff] %v2138
          %2954 = vst [vmem:[%s2157] ss:$9 sm:$0xff] %v2139
          %2955 = vst [vmem:[%s2159] ss:$9 sm:$0xff] %v2140
          %2956 = vst [vmem:[%s2161] ss:$9 sm:$0xff] %v2141
          %2957 = vst [vmem:[%s2163] ss:$9 sm:$0xff] %v2142
          %2958 = vst [vmem:[%s2165] ss:$9 sm:$0xff] %v2143
          %v2959 = vld [vmem:[#allocation1] sm:$0xff]
          %2960 = vst [vmem:[#allocation1] ss:$9 sm:$0xff] %v2144
          %2961 = vst [vmem:[%s2153] ss:$9 sm:$0xff] %v2145
          %2962 = vst [vmem:[%s2155] ss:$9 sm:$0xff] %v2146
          %2963 = vst [vmem:[%s2157] ss:$9 sm:$0xff] %v2147
          %2964 = vst [vmem:[%s2159] ss:$9 sm:$0xff] %v2148
          %2965 = vst [vmem:[%s2161] ss:$9 sm:$0xff] %v2149
          %2966 = vst [vmem:[%s2163] ss:$9 sm:$0xff] %v2150
          %2967 = vst [vmem:[%s2165] ss:$9 sm:$0xff] %v2151
          %v2968 = vld [vmem:[#allocation1] sm:$0xff]
          %2969 = vset.pattern.permute.xlu0 0
          %2970 = vperm.xlu0 %2969, %v2167
          %v2971 = vpop.permute.xlu0 %2970
          %2972 = vset.pattern.permute.xlu0 0
          %2973 = vperm.xlu0 %2972, %v2176
          %v2974 = vpop.permute.xlu0 %2973
          %2975 = vset.pattern.permute.xlu0 0
          %2976 = vperm.xlu0 %2975, %v2185
          %v2977 = vpop.permute.xlu0 %2976
          %2978 = vset.pattern.permute.xlu0 0
          %2979 = vperm.xlu0 %2978, %v2194
          %v2980 = vpop.permute.xlu0 %2979
          %2981 = vset.pattern.permute.xlu0 0
          %2982 = vperm.xlu0 %2981, %v2203
          %v2983 = vpop.permute.xlu0 %2982
          %2984 = vset.pattern.permute.xlu0 0
          %2985 = vperm.xlu0 %2984, %v2212
          %v2986 = vpop.permute.xlu0 %2985
          %2987 = vset.pattern.permute.xlu0 0
          %2988 = vperm.xlu0 %2987, %v2221
          %v2989 = vpop.permute.xlu0 %2988
          %2990 = vset.pattern.permute.xlu0 0
          %2991 = vperm.xlu0 %2990, %v2230
          %v2992 = vpop.permute.xlu0 %2991
          %2993 = vset.pattern.permute.xlu0 0
          %2994 = vperm.xlu0 %2993, %v2239
          %v2995 = vpop.permute.xlu0 %2994
          %2996 = vset.pattern.permute.xlu0 0
          %2997 = vperm.xlu0 %2996, %v2248
          %v2998 = vpop.permute.xlu0 %2997
          %2999 = vset.pattern.permute.xlu0 0
          %3000 = vperm.xlu0 %2999, %v2257
          %v3001 = vpop.permute.xlu0 %3000
          %3002 = vset.pattern.permute.xlu0 0
          %3003 = vperm.xlu0 %3002, %v2266
          %v3004 = vpop.permute.xlu0 %3003
          %3005 = vset.pattern.permute.xlu0 0
          %3006 = vperm.xlu0 %3005, %v2275
          %v3007 = vpop.permute.xlu0 %3006
          %3008 = vset.pattern.permute.xlu0 0
          %3009 = vperm.xlu0 %3008, %v2284
          %v3010 = vpop.permute.xlu0 %3009
          %3011 = vset.pattern.permute.xlu0 0
          %3012 = vperm.xlu0 %3011, %v2293
          %v3013 = vpop.permute.xlu0 %3012
          %3014 = vset.pattern.permute.xlu0 0
          %3015 = vperm.xlu0 %3014, %v2302
          %v3016 = vpop.permute.xlu0 %3015
          %3017 = vset.pattern.permute.xlu0 0
          %3018 = vperm.xlu0 %3017, %v2311
          %v3019 = vpop.permute.xlu0 %3018
          %3020 = vset.pattern.permute.xlu0 0
          %3021 = vperm.xlu0 %3020, %v2320
          %v3022 = vpop.permute.xlu0 %3021
          %3023 = vset.pattern.permute.xlu0 0
          %3024 = vperm.xlu0 %3023, %v2329
          %v3025 = vpop.permute.xlu0 %3024
          %3026 = vset.pattern.permute.xlu0 0
          %3027 = vperm.xlu0 %3026, %v2338
          %v3028 = vpop.permute.xlu0 %3027
          %3029 = vset.pattern.permute.xlu0 0
          %3030 = vperm.xlu0 %3029, %v2347
          %v3031 = vpop.permute.xlu0 %3030
          %3032 = vset.pattern.permute.xlu0 0
          %3033 = vperm.xlu0 %3032, %v2356
          %v3034 = vpop.permute.xlu0 %3033
          %3035 = vset.pattern.permute.xlu0 0
          %3036 = vperm.xlu0 %3035, %v2365
          %v3037 = vpop.permute.xlu0 %3036
          %3038 = vset.pattern.permute.xlu0 0
          %3039 = vperm.xlu0 %3038, %v2374
          %v3040 = vpop.permute.xlu0 %3039
          %3041 = vset.pattern.permute.xlu0 0
          %3042 = vperm.xlu0 %3041, %v2383
          %v3043 = vpop.permute.xlu0 %3042
          %3044 = vset.pattern.permute.xlu0 0
          %3045 = vperm.xlu0 %3044, %v2392
          %v3046 = vpop.permute.xlu0 %3045
          %3047 = vset.pattern.permute.xlu0 0
          %3048 = vperm.xlu0 %3047, %v2401
          %v3049 = vpop.permute.xlu0 %3048
          %3050 = vset.pattern.permute.xlu0 0
          %3051 = vperm.xlu0 %3050, %v2410
          %v3052 = vpop.permute.xlu0 %3051
          %3053 = vset.pattern.permute.xlu0 0
          %3054 = vperm.xlu0 %3053, %v2419
          %v3055 = vpop.permute.xlu0 %3054
          %3056 = vset.pattern.permute.xlu0 0
          %3057 = vperm.xlu0 %3056, %v2428
          %v3058 = vpop.permute.xlu0 %3057
          %3059 = vset.pattern.permute.xlu0 0
          %3060 = vperm.xlu0 %3059, %v2437
          %v3061 = vpop.permute.xlu0 %3060
          %3062 = vset.pattern.permute.xlu0 0
          %3063 = vperm.xlu0 %3062, %v2446
          %v3064 = vpop.permute.xlu0 %3063
          %3065 = vset.pattern.permute.xlu0 0
          %3066 = vperm.xlu0 %3065, %v2455
          %v3067 = vpop.permute.xlu0 %3066
          %3068 = vset.pattern.permute.xlu0 0
          %3069 = vperm.xlu0 %3068, %v2464
          %v3070 = vpop.permute.xlu0 %3069
          %3071 = vset.pattern.permute.xlu0 0
          %3072 = vperm.xlu0 %3071, %v2473
          %v3073 = vpop.permute.xlu0 %3072
          %3074 = vset.pattern.permute.xlu0 0
          %3075 = vperm.xlu0 %3074, %v2482
          %v3076 = vpop.permute.xlu0 %3075
          %3077 = vset.pattern.permute.xlu0 0
          %3078 = vperm.xlu0 %3077, %v2491
          %v3079 = vpop.permute.xlu0 %3078
          %3080 = vset.pattern.permute.xlu0 0
          %3081 = vperm.xlu0 %3080, %v2500
          %v3082 = vpop.permute.xlu0 %3081
          %3083 = vset.pattern.permute.xlu0 0
          %3084 = vperm.xlu0 %3083, %v2509
          %v3085 = vpop.permute.xlu0 %3084
          %3086 = vset.pattern.permute.xlu0 0
          %3087 = vperm.xlu0 %3086, %v2518
          %v3088 = vpop.permute.xlu0 %3087
          %3089 = vset.pattern.permute.xlu0 0
          %3090 = vperm.xlu0 %3089, %v2527
          %v3091 = vpop.permute.xlu0 %3090
          %3092 = vset.pattern.permute.xlu0 0
          %3093 = vperm.xlu0 %3092, %v2536
          %v3094 = vpop.permute.xlu0 %3093
          %3095 = vset.pattern.permute.xlu0 0
          %3096 = vperm.xlu0 %3095, %v2545
          %v3097 = vpop.permute.xlu0 %3096
          %3098 = vset.pattern.permute.xlu0 0
          %3099 = vperm.xlu0 %3098, %v2554
          %v3100 = vpop.permute.xlu0 %3099
          %3101 = vset.pattern.permute.xlu0 0
          %3102 = vperm.xlu0 %3101, %v2563
          %v3103 = vpop.permute.xlu0 %3102
          %3104 = vset.pattern.permute.xlu0 0
          %3105 = vperm.xlu0 %3104, %v2572
          %v3106 = vpop.permute.xlu0 %3105
          %3107 = vset.pattern.permute.xlu0 0
          %3108 = vperm.xlu0 %3107, %v2581
          %v3109 = vpop.permute.xlu0 %3108
          %3110 = vset.pattern.permute.xlu0 0
          %3111 = vperm.xlu0 %3110, %v2590
          %v3112 = vpop.permute.xlu0 %3111
          %3113 = vset.pattern.permute.xlu0 0
          %3114 = vperm.xlu0 %3113, %v2599
          %v3115 = vpop.permute.xlu0 %3114
          %3116 = vset.pattern.permute.xlu0 0
          %3117 = vperm.xlu0 %3116, %v2608
          %v3118 = vpop.permute.xlu0 %3117
          %3119 = vset.pattern.permute.xlu0 0
          %3120 = vperm.xlu0 %3119, %v2617
          %v3121 = vpop.permute.xlu0 %3120
          %3122 = vset.pattern.permute.xlu0 0
          %3123 = vperm.xlu0 %3122, %v2626
          %v3124 = vpop.permute.xlu0 %3123
          %3125 = vset.pattern.permute.xlu0 0
          %3126 = vperm.xlu0 %3125, %v2635
          %v3127 = vpop.permute.xlu0 %3126
          %3128 = vset.pattern.permute.xlu0 0
          %3129 = vperm.xlu0 %3128, %v2644
          %v3130 = vpop.permute.xlu0 %3129
          %3131 = vset.pattern.permute.xlu0 0
          %3132 = vperm.xlu0 %3131, %v2653
          %v3133 = vpop.permute.xlu0 %3132
          %3134 = vset.pattern.permute.xlu0 0
          %3135 = vperm.xlu0 %3134, %v2662
          %v3136 = vpop.permute.xlu0 %3135
          %3137 = vset.pattern.permute.xlu0 0
          %3138 = vperm.xlu0 %3137, %v2671
          %v3139 = vpop.permute.xlu0 %3138
          %3140 = vset.pattern.permute.xlu0 0
          %3141 = vperm.xlu0 %3140, %v2680
          %v3142 = vpop.permute.xlu0 %3141
          %3143 = vset.pattern.permute.xlu0 0
          %3144 = vperm.xlu0 %3143, %v2689
          %v3145 = vpop.permute.xlu0 %3144
          %3146 = vset.pattern.permute.xlu0 0
          %3147 = vperm.xlu0 %3146, %v2698
          %v3148 = vpop.permute.xlu0 %3147
          %3149 = vset.pattern.permute.xlu0 0
          %3150 = vperm.xlu0 %3149, %v2707
          %v3151 = vpop.permute.xlu0 %3150
          %3152 = vset.pattern.permute.xlu0 0
          %3153 = vperm.xlu0 %3152, %v2716
          %v3154 = vpop.permute.xlu0 %3153
          %3155 = vset.pattern.permute.xlu0 0
          %3156 = vperm.xlu0 %3155, %v2725
          %v3157 = vpop.permute.xlu0 %3156
          %3158 = vset.pattern.permute.xlu0 0
          %3159 = vperm.xlu0 %3158, %v2734
          %v3160 = vpop.permute.xlu0 %3159
          %3161 = vset.pattern.permute.xlu0 0
          %3162 = vperm.xlu0 %3161, %v2743
          %v3163 = vpop.permute.xlu0 %3162
          %3164 = vset.pattern.permute.xlu0 0
          %3165 = vperm.xlu0 %3164, %v2752
          %v3166 = vpop.permute.xlu0 %3165
          %3167 = vset.pattern.permute.xlu0 0
          %3168 = vperm.xlu0 %3167, %v2761
          %v3169 = vpop.permute.xlu0 %3168
          %3170 = vset.pattern.permute.xlu0 0
          %3171 = vperm.xlu0 %3170, %v2770
          %v3172 = vpop.permute.xlu0 %3171
          %3173 = vset.pattern.permute.xlu0 0
          %3174 = vperm.xlu0 %3173, %v2779
          %v3175 = vpop.permute.xlu0 %3174
          %3176 = vset.pattern.permute.xlu0 0
          %3177 = vperm.xlu0 %3176, %v2788
          %v3178 = vpop.permute.xlu0 %3177
          %3179 = vset.pattern.permute.xlu0 0
          %3180 = vperm.xlu0 %3179, %v2797
          %v3181 = vpop.permute.xlu0 %3180
          %3182 = vset.pattern.permute.xlu0 0
          %3183 = vperm.xlu0 %3182, %v2806
          %v3184 = vpop.permute.xlu0 %3183
          %3185 = vset.pattern.permute.xlu0 0
          %3186 = vperm.xlu0 %3185, %v2815
          %v3187 = vpop.permute.xlu0 %3186
          %3188 = vset.pattern.permute.xlu0 0
          %3189 = vperm.xlu0 %3188, %v2824
          %v3190 = vpop.permute.xlu0 %3189
          %3191 = vset.pattern.permute.xlu0 0
          %3192 = vperm.xlu0 %3191, %v2833
          %v3193 = vpop.permute.xlu0 %3192
          %3194 = vset.pattern.permute.xlu0 0
          %3195 = vperm.xlu0 %3194, %v2842
          %v3196 = vpop.permute.xlu0 %3195
          %3197 = vset.pattern.permute.xlu0 0
          %3198 = vperm.xlu0 %3197, %v2851
          %v3199 = vpop.permute.xlu0 %3198
          %3200 = vset.pattern.permute.xlu0 0
          %3201 = vperm.xlu0 %3200, %v2860
          %v3202 = vpop.permute.xlu0 %3201
          %3203 = vset.pattern.permute.xlu0 0
          %3204 = vperm.xlu0 %3203, %v2869
          %v3205 = vpop.permute.xlu0 %3204
          %3206 = vset.pattern.permute.xlu0 0
          %3207 = vperm.xlu0 %3206, %v2878
          %v3208 = vpop.permute.xlu0 %3207
          %3209 = vset.pattern.permute.xlu0 0
          %3210 = vperm.xlu0 %3209, %v2887
          %v3211 = vpop.permute.xlu0 %3210
          %3212 = vset.pattern.permute.xlu0 0
          %3213 = vperm.xlu0 %3212, %v2896
          %v3214 = vpop.permute.xlu0 %3213
          %3215 = vset.pattern.permute.xlu0 0
          %3216 = vperm.xlu0 %3215, %v2905
          %v3217 = vpop.permute.xlu0 %3216
          %3218 = vset.pattern.permute.xlu0 0
          %3219 = vperm.xlu0 %3218, %v2914
          %v3220 = vpop.permute.xlu0 %3219
          %3221 = vset.pattern.permute.xlu0 0
          %3222 = vperm.xlu0 %3221, %v2923
          %v3223 = vpop.permute.xlu0 %3222
          %3224 = vset.pattern.permute.xlu0 0
          %3225 = vperm.xlu0 %3224, %v2932
          %v3226 = vpop.permute.xlu0 %3225
          %3227 = vset.pattern.permute.xlu0 0
          %3228 = vperm.xlu0 %3227, %v2941
          %v3229 = vpop.permute.xlu0 %3228
          %3230 = vset.pattern.permute.xlu0 0
          %3231 = vperm.xlu0 %3230, %v2950
          %v3232 = vpop.permute.xlu0 %3231
          %3233 = vset.pattern.permute.xlu0 0
          %3234 = vperm.xlu0 %3233, %v2959
          %v3235 = vpop.permute.xlu0 %3234
          %3236 = vset.pattern.permute.xlu0 0
          %3237 = vperm.xlu0 %3236, %v2968
          %v3238 = vpop.permute.xlu0 %3237
          %v3239 = vlaneseq
          %v3240 = vand.u32 %v3239, 127
          %v3241 = vperm.slane %v2971, %v3240
          %v3242 = vadd.s32 %v3240, 4294967288
          %v3243 = vperm.slane %v2974, %v3242
          %vm3244 = vcmask 130112
          %v3245 = vsel %vm3244, %v3243, %v3241
          %v3246 = vadd.s32 %v3240, 4294967280
          %v3247 = vperm.slane %v2977, %v3246
          %vm3248 = vcmask 195712
          %v3249 = vsel %vm3248, %v3247, %v3245
          %v3250 = vadd.s32 %v3240, 4294967272
          %v3251 = vperm.slane %v2980, %v3250
          %vm3252 = vcmask 261312
          %v3253 = vsel %vm3252, %v3251, %v3249
          %v3254 = vadd.s32 %v3240, 4294967264
          %v3255 = vperm.slane %v2983, %v3254
          %vm3256 = vcmask 326912
          %v3257 = vsel %vm3256, %v3255, %v3253
          %v3258 = vadd.s32 %v3240, 4294967256
          %v3259 = vperm.slane %v2986, %v3258
          %vm3260 = vcmask 392512
          %v3261 = vsel %vm3260, %v3259, %v3257
          %v3262 = vadd.s32 %v3240, 4294967248
          %v3263 = vperm.slane %v2989, %v3262
          %vm3264 = vcmask 458112
          %v3265 = vsel %vm3264, %v3263, %v3261
          %v3266 = vadd.s32 %v3240, 4294967240
          %v3267 = vperm.slane %v2992, %v3266
          %vm3268 = vcmask 523712
          %v3269 = vsel %vm3268, %v3267, %v3265
          %v3270 = vadd.s32 %v3240, 4294967232
          %v3271 = vperm.slane %v2995, %v3270
          %vm3272 = vcmask 589312
          %v3273 = vsel %vm3272, %v3271, %v3269
          %v3274 = vadd.s32 %v3240, 4294967224
          %v3275 = vperm.slane %v2998, %v3274
          %vm3276 = vcmask 654912
          %v3277 = vsel %vm3276, %v3275, %v3273
          %v3278 = vadd.s32 %v3240, 4294967216
          %v3279 = vperm.slane %v3001, %v3278
          %vm3280 = vcmask 720512
          %v3281 = vsel %vm3280, %v3279, %v3277
          %v3282 = vadd.s32 %v3240, 4294967208
          %v3283 = vperm.slane %v3004, %v3282
          %vm3284 = vcmask 786112
          %v3285 = vsel %vm3284, %v3283, %v3281
          %v3286 = vadd.s32 %v3240, 4294967200
          %v3287 = vperm.slane %v3007, %v3286
          %vm3288 = vcmask 851712
          %v3289 = vsel %vm3288, %v3287, %v3285
          %v3290 = vadd.s32 %v3240, 4294967192
          %v3291 = vperm.slane %v3010, %v3290
          %vm3292 = vcmask 917312
          %v3293 = vsel %vm3292, %v3291, %v3289
          %v3294 = vadd.s32 %v3240, 4294967184
          %v3295 = vperm.slane %v3013, %v3294
          %vm3296 = vcmask 982912
          %v3297 = vsel %vm3296, %v3295, %v3293
          %v3298 = vadd.s32 %v3240, 4294967176
          %v3299 = vperm.slane %v3016, %v3298
          %vm3300 = vcmask 1048512
          %v3301 = vsel %vm3300, %v3299, %v3297
          %v3302 = vperm.slane %v3019, %v3240
          %v3303 = vperm.slane %v3022, %v3242
          %v3304 = vsel %vm3244, %v3303, %v3302
          %v3305 = vperm.slane %v3025, %v3246
          %v3306 = vsel %vm3248, %v3305, %v3304
          %v3307 = vperm.slane %v3028, %v3250
          %v3308 = vsel %vm3252, %v3307, %v3306
          %v3309 = vperm.slane %v3031, %v3254
          %v3310 = vsel %vm3256, %v3309, %v3308
          %v3311 = vperm.slane %v3034, %v3258
          %v3312 = vsel %vm3260, %v3311, %v3310
          %v3313 = vperm.slane %v3037, %v3262
          %v3314 = vsel %vm3264, %v3313, %v3312
          %v3315 = vperm.slane %v3040, %v3266
          %v3316 = vsel %vm3268, %v3315, %v3314
          %v3317 = vperm.slane %v3043, %v3270
          %v3318 = vsel %vm3272, %v3317, %v3316
          %v3319 = vperm.slane %v3046, %v3274
          %v3320 = vsel %vm3276, %v3319, %v3318
          %v3321 = vperm.slane %v3049, %v3278
          %v3322 = vsel %vm3280, %v3321, %v3320
          %v3323 = vperm.slane %v3052, %v3282
          %v3324 = vsel %vm3284, %v3323, %v3322
          %v3325 = vperm.slane %v3055, %v3286
          %v3326 = vsel %vm3288, %v3325, %v3324
          %v3327 = vperm.slane %v3058, %v3290
          %v3328 = vsel %vm3292, %v3327, %v3326
          %v3329 = vperm.slane %v3061, %v3294
          %v3330 = vsel %vm3296, %v3329, %v3328
          %v3331 = vperm.slane %v3064, %v3298
          %v3332 = vsel %vm3300, %v3331, %v3330
          %v3333 = vperm.slane %v3067, %v3240
          %v3334 = vperm.slane %v3070, %v3242
          %v3335 = vsel %vm3244, %v3334, %v3333
          %v3336 = vperm.slane %v3073, %v3246
          %v3337 = vsel %vm3248, %v3336, %v3335
          %v3338 = vperm.slane %v3076, %v3250
          %v3339 = vsel %vm3252, %v3338, %v3337
          %v3340 = vperm.slane %v3079, %v3254
          %v3341 = vsel %vm3256, %v3340, %v3339
          %v3342 = vperm.slane %v3082, %v3258
          %v3343 = vsel %vm3260, %v3342, %v3341
          %v3344 = vperm.slane %v3085, %v3262
          %v3345 = vsel %vm3264, %v3344, %v3343
          %v3346 = vperm.slane %v3088, %v3266
          %v3347 = vsel %vm3268, %v3346, %v3345
          %v3348 = vperm.slane %v3091, %v3270
          %v3349 = vsel %vm3272, %v3348, %v3347
          %v3350 = vperm.slane %v3094, %v3274
          %v3351 = vsel %vm3276, %v3350, %v3349
          %v3352 = vperm.slane %v3097, %v3278
          %v3353 = vsel %vm3280, %v3352, %v3351
          %v3354 = vperm.slane %v3100, %v3282
          %v3355 = vsel %vm3284, %v3354, %v3353
          %v3356 = vperm.slane %v3103, %v3286
          %v3357 = vsel %vm3288, %v3356, %v3355
          %v3358 = vperm.slane %v3106, %v3290
          %v3359 = vsel %vm3292, %v3358, %v3357
          %v3360 = vperm.slane %v3109, %v3294
          %v3361 = vsel %vm3296, %v3360, %v3359
          %v3362 = vperm.slane %v3112, %v3298
          %v3363 = vsel %vm3300, %v3362, %v3361
          %v3364 = vperm.slane %v3115, %v3240
          %v3365 = vperm.slane %v3118, %v3242
          %v3366 = vsel %vm3244, %v3365, %v3364
          %v3367 = vperm.slane %v3121, %v3246
          %v3368 = vsel %vm3248, %v3367, %v3366
          %v3369 = vperm.slane %v3124, %v3250
          %v3370 = vsel %vm3252, %v3369, %v3368
          %v3371 = vperm.slane %v3127, %v3254
          %v3372 = vsel %vm3256, %v3371, %v3370
          %v3373 = vperm.slane %v3130, %v3258
          %v3374 = vsel %vm3260, %v3373, %v3372
          %v3375 = vperm.slane %v3133, %v3262
          %v3376 = vsel %vm3264, %v3375, %v3374
          %v3377 = vperm.slane %v3136, %v3266
          %v3378 = vsel %vm3268, %v3377, %v3376
          %v3379 = vperm.slane %v3139, %v3270
          %v3380 = vsel %vm3272, %v3379, %v3378
          %v3381 = vperm.slane %v3142, %v3274
          %v3382 = vsel %vm3276, %v3381, %v3380
          %v3383 = vperm.slane %v3145, %v3278
          %v3384 = vsel %vm3280, %v3383, %v3382
          %v3385 = vperm.slane %v3148, %v3282
          %v3386 = vsel %vm3284, %v3385, %v3384
          %v3387 = vperm.slane %v3151, %v3286
          %v3388 = vsel %vm3288, %v3387, %v3386
          %v3389 = vperm.slane %v3154, %v3290
          %v3390 = vsel %vm3292, %v3389, %v3388
          %v3391 = vperm.slane %v3157, %v3294
          %v3392 = vsel %vm3296, %v3391, %v3390
          %v3393 = vperm.slane %v3160, %v3298
          %v3394 = vsel %vm3300, %v3393, %v3392
          %v3395 = vperm.slane %v3163, %v3240
          %v3396 = vperm.slane %v3166, %v3242
          %v3397 = vsel %vm3244, %v3396, %v3395
          %v3398 = vperm.slane %v3169, %v3246
          %v3399 = vsel %vm3248, %v3398, %v3397
          %v3400 = vperm.slane %v3172, %v3250
          %v3401 = vsel %vm3252, %v3400, %v3399
          %v3402 = vperm.slane %v3175, %v3254
          %v3403 = vsel %vm3256, %v3402, %v3401
          %v3404 = vperm.slane %v3178, %v3258
          %v3405 = vsel %vm3260, %v3404, %v3403
          %v3406 = vperm.slane %v3181, %v3262
          %v3407 = vsel %vm3264, %v3406, %v3405
          %v3408 = vperm.slane %v3184, %v3266
          %v3409 = vsel %vm3268, %v3408, %v3407
          %v3410 = vperm.slane %v3187, %v3270
          %v3411 = vsel %vm3272, %v3410, %v3409
          %v3412 = vperm.slane %v3190, %v3274
          %v3413 = vsel %vm3276, %v3412, %v3411
          %v3414 = vperm.slane %v3193, %v3278
          %v3415 = vsel %vm3280, %v3414, %v3413
          %v3416 = vperm.slane %v3196, %v3282
          %v3417 = vsel %vm3284, %v3416, %v3415
          %v3418 = vperm.slane %v3199, %v3286
          %v3419 = vsel %vm3288, %v3418, %v3417
          %v3420 = vperm.slane %v3202, %v3290
          %v3421 = vsel %vm3292, %v3420, %v3419
          %v3422 = vperm.slane %v3205, %v3294
          %v3423 = vsel %vm3296, %v3422, %v3421
          %v3424 = vperm.slane %v3208, %v3298
          %v3425 = vsel %vm3300, %v3424, %v3423
          %v3426 = vperm.slane %v3211, %v3240
          %v3427 = vperm.slane %v3214, %v3242
          %v3428 = vsel %vm3244, %v3427, %v3426
          %v3429 = vperm.slane %v3217, %v3246
          %v3430 = vsel %vm3248, %v3429, %v3428
          %v3431 = vperm.slane %v3220, %v3250
          %v3432 = vsel %vm3252, %v3431, %v3430
          %v3433 = vperm.slane %v3223, %v3254
          %v3434 = vsel %vm3256, %v3433, %v3432
          %v3435 = vperm.slane %v3226, %v3258
          %v3436 = vsel %vm3260, %v3435, %v3434
          %v3437 = vperm.slane %v3229, %v3262
          %v3438 = vsel %vm3264, %v3437, %v3436
          %v3439 = vperm.slane %v3232, %v3266
          %v3440 = vsel %vm3268, %v3439, %v3438
          %v3441 = vperm.slane %v3235, %v3270
          %v3442 = vsel %vm3272, %v3441, %v3440
          %v3443 = vperm.slane %v3238, %v3274
          %v3444 = vsel %vm3276, %v3443, %v3442
          %v3445 = vrot.slane %v3332, 7
          %v3446 = vrot.slane %v3363, 6
          %v3447 = vrot.slane %v3394, 5
          %v3448 = vrot.slane %v3425, 4
          %v3449 = vrot.slane %v3444, 3
          %vm3450 = vcmask 1040384
          %v3451 = vsel %vm3450, %v3301, %v3445
          %vm3452 = vcmask 1041408
          %v3453 = vsel %vm3452, %v3451, %v3446
          %vm3454 = vcmask 1043459
          %v3455 = vsel %vm3454, %v3447, %v3448
          %vm3456 = vcmask 1044483
          %v3457 = vsel %vm3456, %v3455, %v3449
          %vm3458 = vcmask 1042432
          %v3459 = vsel %vm3458, %v3453, %v3457
          %v3461 = vlaneseq
          %vm3462 = vcmp.ge.s32.totalorder %v3461, 0
          %vm3463 = vcmp.lt.s32.totalorder %v3461, 720
          %vm3464 = vmand %vm3462, %vm3463
          %3465 = vst.msk [vmem:[%s343] sm:$0x3f] %vm3464, %v3459
          %v3466 = vld [vmem:[#allocation6] sm:$0xff]
          %v3467 = vld [vmem:[#allocation6 + $0x8] sm:$0xff]
          %v3468 = vld [vmem:[#allocation6 + $0x10] sm:$0xff]
          %v3469 = vld [vmem:[#allocation6 + $0x18] sm:$0xff]
          %v3470 = vld [vmem:[#allocation6 + $0x20] sm:$0xff]
          %v3471 = vld [vmem:[#allocation6 + $0x28] sm:$0xff]
          %v3472 = vld [vmem:[#allocation6 + $0x30] sm:$0xff]
          %v3473 = vld [vmem:[#allocation6 + $0x38] sm:$0xff]
          %v3474 = vld [vmem:[#allocation6 + $0x40] sm:$0xff]
          %v3475 = vld [vmem:[#allocation6 + $0x48] sm:$0xff]
          %v3476 = vld [vmem:[#allocation6 + $0x50] sm:$0xff]
          %v3477 = vld [vmem:[#allocation6 + $0x58] sm:$0xff]
          %v3478 = vld [vmem:[#allocation6 + $0x60] sm:$0xff]
          %v3479 = vld [vmem:[#allocation6 + $0x68] sm:$0xff]
          %v3480 = vld [vmem:[#allocation6 + $0x70] sm:$0xff]
          %v3481 = vld [vmem:[#allocation6 + $0x78] sm:$0xff]
          %v3482 = vld [vmem:[#allocation6 + $0x80] sm:$0xff]
          %v3483 = vld [vmem:[#allocation6 + $0x88] sm:$0xff]
          %v3484 = vld [vmem:[#allocation6 + $0x90] sm:$0xff]
          %v3485 = vld [vmem:[#allocation6 + $0x98] sm:$0xff]
          %v3486 = vld [vmem:[#allocation6 + $0xa0] sm:$0xff]
          %v3487 = vld [vmem:[#allocation6 + $0xa8] sm:$0xff]
          %v3488 = vld [vmem:[#allocation6 + $0xb0] sm:$0xff]
          %v3489 = vld [vmem:[#allocation6 + $0xb8] sm:$0xff]
          %v3490 = vld [vmem:[#allocation6 + $0xc0] sm:$0xff]
          %v3491 = vld [vmem:[#allocation6 + $0xc8] sm:$0xff]
          %v3492 = vld [vmem:[#allocation6 + $0xd0] sm:$0xff]
          %v3493 = vld [vmem:[#allocation6 + $0xd8] sm:$0xff]
          %v3494 = vld [vmem:[#allocation6 + $0xe0] sm:$0xff]
          %v3495 = vld [vmem:[#allocation6 + $0xe8] sm:$0xff]
          %v3496 = vld [vmem:[#allocation6 + $0xf0] sm:$0xff]
          %v3497 = vld [vmem:[#allocation6 + $0xf8] sm:$0xff]
          %v3498 = vld [vmem:[#allocation6 + $0x100] sm:$0xff]
          %v3499 = vld [vmem:[#allocation6 + $0x108] sm:$0xff]
          %v3500 = vld [vmem:[#allocation6 + $0x110] sm:$0xff]
          %v3501 = vld [vmem:[#allocation6 + $0x118] sm:$0xff]
          %v3502 = vld [vmem:[#allocation6 + $0x120] sm:$0xff]
          %v3503 = vld [vmem:[#allocation6 + $0x128] sm:$0xff]
          %v3504 = vld [vmem:[#allocation6 + $0x130] sm:$0xff]
          %v3505 = vld [vmem:[#allocation6 + $0x138] sm:$0xff]
          %v3506 = vld [vmem:[#allocation6 + $0x140] sm:$0xff]
          %v3507 = vld [vmem:[#allocation6 + $0x148] sm:$0xff]
          %v3508 = vld [vmem:[#allocation6 + $0x150] sm:$0xff]
          %v3509 = vld [vmem:[#allocation6 + $0x158] sm:$0xff]
          %v3510 = vld [vmem:[#allocation6 + $0x160] sm:$0xff]
          %v3511 = vld [vmem:[#allocation6 + $0x168] sm:$0xff]
          %v3512 = vld [vmem:[#allocation6 + $0x170] sm:$0xff]
          %v3513 = vld [vmem:[#allocation6 + $0x178] sm:$0xff]
          %v3514 = vld [vmem:[#allocation6 + $0x180] sm:$0xff]
          %v3515 = vld [vmem:[#allocation6 + $0x188] sm:$0xff]
          %v3516 = vld [vmem:[#allocation6 + $0x190] sm:$0xff]
          %v3517 = vld [vmem:[#allocation6 + $0x198] sm:$0xff]
          %v3518 = vld [vmem:[#allocation6 + $0x1a0] sm:$0xff]
          %v3519 = vld [vmem:[#allocation6 + $0x1a8] sm:$0xff]
          %v3520 = vld [vmem:[#allocation6 + $0x1b0] sm:$0xff]
          %v3521 = vld [vmem:[#allocation6 + $0x1b8] sm:$0xff]
          %v3522 = vld [vmem:[#allocation6 + $0x1c0] sm:$0xff]
          %v3523 = vld [vmem:[#allocation6 + $0x1c8] sm:$0xff]
          %v3524 = vld [vmem:[#allocation6 + $0x1d0] sm:$0xff]
          %v3525 = vld [vmem:[#allocation6 + $0x1d8] sm:$0xff]
          %v3526 = vld [vmem:[#allocation6 + $0x1e0] sm:$0xff]
          %v3527 = vld [vmem:[#allocation6 + $0x1e8] sm:$0xff]
          %v3528 = vld [vmem:[#allocation6 + $0x1f0] sm:$0xff]
          %v3529 = vld [vmem:[#allocation6 + $0x1f8] sm:$0xff]
          %v3530 = vld [vmem:[#allocation6 + $0x200] sm:$0xff]
          %v3531 = vld [vmem:[#allocation6 + $0x208] sm:$0xff]
          %v3532 = vld [vmem:[#allocation6 + $0x210] sm:$0xff]
          %v3533 = vld [vmem:[#allocation6 + $0x218] sm:$0xff]
          %v3534 = vld [vmem:[#allocation6 + $0x220] sm:$0xff]
          %v3535 = vld [vmem:[#allocation6 + $0x228] sm:$0xff]
          %v3536 = vld [vmem:[#allocation6 + $0x230] sm:$0xff]
          %v3537 = vld [vmem:[#allocation6 + $0x238] sm:$0xff]
          %v3538 = vld [vmem:[#allocation6 + $0x240] sm:$0xff]
          %v3539 = vld [vmem:[#allocation6 + $0x248] sm:$0xff]
          %v3540 = vld [vmem:[#allocation6 + $0x250] sm:$0xff]
          %v3541 = vld [vmem:[#allocation6 + $0x258] sm:$0xff]
          %v3542 = vld [vmem:[#allocation6 + $0x260] sm:$0xff]
          %v3543 = vld [vmem:[#allocation6 + $0x268] sm:$0xff]
          %v3544 = vld [vmem:[#allocation6 + $0x270] sm:$0xff]
          %v3545 = vld [vmem:[#allocation6 + $0x278] sm:$0xff]
          %v3546 = vld [vmem:[#allocation6 + $0x280] sm:$0xff]
          %v3547 = vld [vmem:[#allocation6 + $0x288] sm:$0xff]
          %v3548 = vld [vmem:[#allocation6 + $0x290] sm:$0xff]
          %v3549 = vld [vmem:[#allocation6 + $0x298] sm:$0xff]
          %v3550 = vld [vmem:[#allocation6 + $0x2a0] sm:$0xff]
          %v3551 = vld [vmem:[#allocation6 + $0x2a8] sm:$0xff]
          %v3552 = vld [vmem:[#allocation6 + $0x2b0] sm:$0xff]
          %v3553 = vld [vmem:[#allocation6 + $0x2b8] sm:$0xff]
          %v3554 = vld [vmem:[#allocation6 + $0x2c0] sm:$0xff]
          %v3555 = vld [vmem:[#allocation6 + $0x2c8] sm:$0xff]
          %v3556 = vld [vmem:[#allocation6 + $0x2d0] sm:$0xff]
          %v3557 = vld [vmem:[#allocation6 + $0x2d8] sm:$0xff]
          %v3558 = vld [vmem:[#allocation6 + $0x2e0] sm:$0xff]
          %v3559 = vld [vmem:[#allocation6 + $0x2e8] sm:$0xff]
          %v3560 = vld [vmem:[#allocation6 + $0x2f0] sm:$0xff]
          %v3561 = vld [vmem:[#allocation6 + $0x2f8] sm:$0xff]
          %v3562 = vld [vmem:[#allocation6 + $0x300] sm:$0xff]
          %v3563 = vld [vmem:[#allocation6 + $0x308] sm:$0xff]
          %v3564 = vld [vmem:[#allocation6 + $0x310] sm:$0xff]
          %v3565 = vld [vmem:[#allocation6 + $0x318] sm:$0xff]
          %v3566 = vld [vmem:[#allocation6 + $0x320] sm:$0xff]
          %v3567 = vld [vmem:[#allocation6 + $0x328] sm:$0xff]
          %v3568 = vld [vmem:[#allocation6 + $0x330] sm:$0xff]
          %v3569 = vld [vmem:[#allocation6 + $0x338] sm:$0xff]
          %v3570 = vld [vmem:[#allocation6 + $0x340] sm:$0xff]
          %v3571 = vld [vmem:[#allocation6 + $0x348] sm:$0xff]
          %v3572 = vld [vmem:[#allocation6 + $0x350] sm:$0xff]
          %v3573 = vld [vmem:[#allocation6 + $0x358] sm:$0xff]
          %v3574 = vld [vmem:[#allocation6 + $0x360] sm:$0xff]
          %v3575 = vld [vmem:[#allocation6 + $0x368] sm:$0xff]
          %v3576 = vld [vmem:[#allocation6 + $0x370] sm:$0xff]
          %v3577 = vld [vmem:[#allocation6 + $0x378] sm:$0xff]
          %v3578 = vld [vmem:[#allocation6 + $0x380] sm:$0xff]
          %v3579 = vld [vmem:[#allocation6 + $0x388] sm:$0xff]
          %v3580 = vld [vmem:[#allocation6 + $0x390] sm:$0xff]
          %v3581 = vld [vmem:[#allocation6 + $0x398] sm:$0xff]
          %v3582 = vld [vmem:[#allocation6 + $0x3a0] sm:$0xff]
          %v3583 = vld [vmem:[#allocation6 + $0x3a8] sm:$0xff]
          %v3584 = vld [vmem:[#allocation6 + $0x3b0] sm:$0xff]
          %v3585 = vld [vmem:[#allocation6 + $0x3b8] sm:$0xff]
          %v3586 = vld [vmem:[#allocation6 + $0x3c0] sm:$0xff]
          %v3587 = vld [vmem:[#allocation6 + $0x3c8] sm:$0xff]
          %v3588 = vld [vmem:[#allocation6 + $0x3d0] sm:$0xff]
          %v3589 = vld [vmem:[#allocation6 + $0x3d8] sm:$0xff]
          %v3590 = vld [vmem:[#allocation6 + $0x3e0] sm:$0xff]
          %v3591 = vld [vmem:[#allocation6 + $0x3e8] sm:$0xff]
          %v3592 = vld [vmem:[#allocation6 + $0x3f0] sm:$0xff]
          %v3593 = vld [vmem:[#allocation6 + $0x3f8] sm:$0xff]
          %v3594 = vld [vmem:[#allocation6 + $0x400] sm:$0xff]
          %v3595 = vld [vmem:[#allocation6 + $0x408] sm:$0xff]
          %v3596 = vld [vmem:[#allocation6 + $0x410] sm:$0xff]
          %v3597 = vld [vmem:[#allocation6 + $0x418] sm:$0xff]
          %v3598 = vld [vmem:[#allocation6 + $0x420] sm:$0xff]
          %v3599 = vld [vmem:[#allocation6 + $0x428] sm:$0xff]
          %v3600 = vld [vmem:[#allocation6 + $0x430] sm:$0xff]
          %v3601 = vld [vmem:[#allocation6 + $0x438] sm:$0xff]
          %v3602 = vld [vmem:[#allocation6 + $0x440] sm:$0xff]
          %v3603 = vld [vmem:[#allocation6 + $0x448] sm:$0xff]
          %v3604 = vld [vmem:[#allocation6 + $0x450] sm:$0xff]
          %v3605 = vld [vmem:[#allocation6 + $0x458] sm:$0xff]
          %v3606 = vld [vmem:[#allocation6 + $0x460] sm:$0xff]
          %v3607 = vld [vmem:[#allocation6 + $0x468] sm:$0xff]
          %v3608 = vld [vmem:[#allocation6 + $0x470] sm:$0xff]
          %v3609 = vld [vmem:[#allocation6 + $0x478] sm:$0xff]
          %v3610 = vld [vmem:[#allocation6 + $0x480] sm:$0xff]
          %v3611 = vld [vmem:[#allocation6 + $0x488] sm:$0xff]
          %v3612 = vld [vmem:[#allocation6 + $0x490] sm:$0xff]
          %v3613 = vld [vmem:[#allocation6 + $0x498] sm:$0xff]
          %v3614 = vld [vmem:[#allocation6 + $0x4a0] sm:$0xff]
          %v3615 = vld [vmem:[#allocation6 + $0x4a8] sm:$0xff]
          %v3616 = vld [vmem:[#allocation6 + $0x4b0] sm:$0xff]
          %v3617 = vld [vmem:[#allocation6 + $0x4b8] sm:$0xff]
          %v3618 = vld [vmem:[#allocation6 + $0x4c0] sm:$0xff]
          %v3619 = vld [vmem:[#allocation6 + $0x4c8] sm:$0xff]
          %v3620 = vld [vmem:[#allocation6 + $0x4d0] sm:$0xff]
          %v3621 = vld [vmem:[#allocation6 + $0x4d8] sm:$0xff]
          %v3622 = vld [vmem:[#allocation6 + $0x4e0] sm:$0xff]
          %v3623 = vld [vmem:[#allocation6 + $0x4e8] sm:$0xff]
          %v3624 = vld [vmem:[#allocation6 + $0x4f0] sm:$0xff]
          %v3625 = vld [vmem:[#allocation6 + $0x4f8] sm:$0xff]
          %v3626 = vld [vmem:[#allocation6 + $0x500] sm:$0xff]
          %v3627 = vld [vmem:[#allocation6 + $0x508] sm:$0xff]
          %v3628 = vld [vmem:[#allocation6 + $0x510] sm:$0xff]
          %v3629 = vld [vmem:[#allocation6 + $0x518] sm:$0xff]
          %v3630 = vld [vmem:[#allocation6 + $0x520] sm:$0xff]
          %v3631 = vld [vmem:[#allocation6 + $0x528] sm:$0xff]
          %v3632 = vld [vmem:[#allocation6 + $0x530] sm:$0xff]
          %v3633 = vld [vmem:[#allocation6 + $0x538] sm:$0xff]
          %v3634 = vld [vmem:[#allocation6 + $0x540] sm:$0xff]
          %v3635 = vld [vmem:[#allocation6 + $0x548] sm:$0xff]
          %v3636 = vld [vmem:[#allocation6 + $0x550] sm:$0xff]
          %v3637 = vld [vmem:[#allocation6 + $0x558] sm:$0xff]
          %v3638 = vld [vmem:[#allocation6 + $0x560] sm:$0xff]
          %v3639 = vld [vmem:[#allocation6 + $0x568] sm:$0xff]
          %v3640 = vld [vmem:[#allocation6 + $0x570] sm:$0xff]
          %v3641 = vld [vmem:[#allocation6 + $0x578] sm:$0xff]
          %v3642 = vld [vmem:[#allocation6 + $0x580] sm:$0xff]
          %v3643 = vld [vmem:[#allocation6 + $0x588] sm:$0xff]
          %v3644 = vld [vmem:[#allocation6 + $0x590] sm:$0xff]
          %v3645 = vld [vmem:[#allocation6 + $0x598] sm:$0xff]
          %v3646 = vld [vmem:[#allocation6 + $0x5a0] sm:$0xff]
          %v3647 = vld [vmem:[#allocation6 + $0x5a8] sm:$0xff]
          %v3648 = vld [vmem:[#allocation6 + $0x5b0] sm:$0xff]
          %v3649 = vld [vmem:[#allocation6 + $0x5b8] sm:$0xff]
          %v3650 = vld [vmem:[#allocation6 + $0x5c0] sm:$0xff]
          %v3651 = vld [vmem:[#allocation6 + $0x5c8] sm:$0xff]
          %v3652 = vld [vmem:[#allocation6 + $0x5d0] sm:$0xff]
          %v3653 = vld [vmem:[#allocation6 + $0x5d8] sm:$0xff]
          %v3654 = vld [vmem:[#allocation6 + $0x5e0] sm:$0xff]
          %v3655 = vld [vmem:[#allocation6 + $0x5e8] sm:$0xff]
          %v3656 = vld [vmem:[#allocation6 + $0x5f0] sm:$0xff]
          %v3657 = vld [vmem:[#allocation6 + $0x5f8] sm:$0xff]
          %v3658 = vld [vmem:[#allocation6 + $0x600] sm:$0xff]
          %v3659 = vld [vmem:[#allocation6 + $0x608] sm:$0xff]
          %v3660 = vld [vmem:[#allocation6 + $0x610] sm:$0xff]
          %v3661 = vld [vmem:[#allocation6 + $0x618] sm:$0xff]
          %v3662 = vld [vmem:[#allocation6 + $0x620] sm:$0xff]
          %v3663 = vld [vmem:[#allocation6 + $0x628] sm:$0xff]
          %v3664 = vld [vmem:[#allocation6 + $0x630] sm:$0xff]
          %v3665 = vld [vmem:[#allocation6 + $0x638] sm:$0xff]
          %v3666 = vld [vmem:[#allocation6 + $0x640] sm:$0xff]
          %v3667 = vld [vmem:[#allocation6 + $0x648] sm:$0xff]
          %v3668 = vld [vmem:[#allocation6 + $0x650] sm:$0xff]
          %v3669 = vld [vmem:[#allocation6 + $0x658] sm:$0xff]
          %v3670 = vld [vmem:[#allocation6 + $0x660] sm:$0xff]
          %v3671 = vld [vmem:[#allocation6 + $0x668] sm:$0xff]
          %v3672 = vld [vmem:[#allocation6 + $0x670] sm:$0xff]
          %v3673 = vld [vmem:[#allocation6 + $0x678] sm:$0xff]
          %v3674 = vld [vmem:[#allocation6 + $0x680] sm:$0xff]
          %v3675 = vld [vmem:[#allocation6 + $0x688] sm:$0xff]
          %v3676 = vld [vmem:[#allocation6 + $0x690] sm:$0xff]
          %v3677 = vld [vmem:[#allocation6 + $0x698] sm:$0xff]
          %v3678 = vld [vmem:[#allocation6 + $0x6a0] sm:$0xff]
          %v3679 = vld [vmem:[#allocation6 + $0x6a8] sm:$0xff]
          %v3680 = vld [vmem:[#allocation6 + $0x6b0] sm:$0xff]
          %v3681 = vld [vmem:[#allocation6 + $0x6b8] sm:$0xff]
          %v3682 = vld [vmem:[#allocation6 + $0x6c0] sm:$0xff]
          %v3683 = vld [vmem:[#allocation6 + $0x6c8] sm:$0xff]
          %v3684 = vld [vmem:[#allocation6 + $0x6d0] sm:$0xff]
          %v3685 = vld [vmem:[#allocation6 + $0x6d8] sm:$0xff]
          %v3686 = vld [vmem:[#allocation6 + $0x6e0] sm:$0xff]
          %v3687 = vld [vmem:[#allocation6 + $0x6e8] sm:$0xff]
          %v3688 = vld [vmem:[#allocation6 + $0x6f0] sm:$0xff]
          %v3689 = vld [vmem:[#allocation6 + $0x6f8] sm:$0xff]
          %v3690 = vld [vmem:[#allocation6 + $0x700] sm:$0xff]
          %v3691 = vld [vmem:[#allocation6 + $0x708] sm:$0xff]
          %v3692 = vld [vmem:[#allocation6 + $0x710] sm:$0xff]
          %v3693 = vld [vmem:[#allocation6 + $0x718] sm:$0xff]
          %v3694 = vld [vmem:[#allocation6 + $0x720] sm:$0xff]
          %v3695 = vld [vmem:[#allocation6 + $0x728] sm:$0xff]
          %v3696 = vld [vmem:[#allocation6 + $0x730] sm:$0xff]
          %v3697 = vld [vmem:[#allocation6 + $0x738] sm:$0xff]
          %v3698 = vld [vmem:[#allocation6 + $0x740] sm:$0xff]
          %v3699 = vld [vmem:[#allocation6 + $0x748] sm:$0xff]
          %v3700 = vld [vmem:[#allocation6 + $0x750] sm:$0xff]
          %v3701 = vld [vmem:[#allocation6 + $0x758] sm:$0xff]
          %v3702 = vld [vmem:[#allocation6 + $0x760] sm:$0xff]
          %v3703 = vld [vmem:[#allocation6 + $0x768] sm:$0xff]
          %v3704 = vld [vmem:[#allocation6 + $0x770] sm:$0xff]
          %v3705 = vld [vmem:[#allocation6 + $0x778] sm:$0xff]
          %v3706 = vld [vmem:[#allocation6 + $0x780] sm:$0xff]
          %v3707 = vld [vmem:[#allocation6 + $0x788] sm:$0xff]
          %v3708 = vld [vmem:[#allocation6 + $0x790] sm:$0xff]
          %v3709 = vld [vmem:[#allocation6 + $0x798] sm:$0xff]
          %v3710 = vld [vmem:[#allocation6 + $0x7a0] sm:$0xff]
          %v3711 = vld [vmem:[#allocation6 + $0x7a8] sm:$0xff]
          %v3712 = vld [vmem:[#allocation6 + $0x7b0] sm:$0xff]
          %v3713 = vld [vmem:[#allocation6 + $0x7b8] sm:$0xff]
          %v3714 = vld [vmem:[#allocation6 + $0x7c0] sm:$0xff]
          %v3715 = vld [vmem:[#allocation6 + $0x7c8] sm:$0xff]
          %v3716 = vld [vmem:[#allocation6 + $0x7d0] sm:$0xff]
          %v3717 = vld [vmem:[#allocation6 + $0x7d8] sm:$0xff]
          %v3718 = vld [vmem:[#allocation6 + $0x7e0] sm:$0xff]
          %v3719 = vld [vmem:[#allocation6 + $0x7e8] sm:$0xff]
          %v3720 = vld [vmem:[#allocation6 + $0x7f0] sm:$0xff]
          %v3721 = vld [vmem:[#allocation6 + $0x7f8] sm:$0xff]
          %v3722 = vld [vmem:[#allocation6 + $0x800] sm:$0xff]
          %v3723 = vld [vmem:[#allocation6 + $0x808] sm:$0xff]
          %v3724 = vld [vmem:[#allocation6 + $0x810] sm:$0xff]
          %v3725 = vld [vmem:[#allocation6 + $0x818] sm:$0xff]
          %v3726 = vld [vmem:[#allocation6 + $0x820] sm:$0xff]
          %v3727 = vld [vmem:[#allocation6 + $0x828] sm:$0xff]
          %v3728 = vld [vmem:[#allocation6 + $0x830] sm:$0xff]
          %v3729 = vld [vmem:[#allocation6 + $0x838] sm:$0xff]
          %v3730 = vld [vmem:[#allocation6 + $0x840] sm:$0xff]
          %v3731 = vld [vmem:[#allocation6 + $0x848] sm:$0xff]
          %v3732 = vld [vmem:[#allocation6 + $0x850] sm:$0xff]
          %v3733 = vld [vmem:[#allocation6 + $0x858] sm:$0xff]
          %v3734 = vld [vmem:[#allocation6 + $0x860] sm:$0xff]
          %v3735 = vld [vmem:[#allocation6 + $0x868] sm:$0xff]
          %v3736 = vld [vmem:[#allocation6 + $0x870] sm:$0xff]
          %v3737 = vld [vmem:[#allocation6 + $0x878] sm:$0xff]
          %v3738 = vld [vmem:[#allocation6 + $0x880] sm:$0xff]
          %v3739 = vld [vmem:[#allocation6 + $0x888] sm:$0xff]
          %v3740 = vld [vmem:[#allocation6 + $0x890] sm:$0xff]
          %v3741 = vld [vmem:[#allocation6 + $0x898] sm:$0xff]
          %v3742 = vld [vmem:[#allocation6 + $0x8a0] sm:$0xff]
          %v3743 = vld [vmem:[#allocation6 + $0x8a8] sm:$0xff]
          %v3744 = vld [vmem:[#allocation6 + $0x8b0] sm:$0xff]
          %v3745 = vld [vmem:[#allocation6 + $0x8b8] sm:$0xff]
          %v3746 = vld [vmem:[#allocation6 + $0x8c0] sm:$0xff]
          %v3747 = vld [vmem:[#allocation6 + $0x8c8] sm:$0xff]
          %v3748 = vld [vmem:[#allocation6 + $0x8d0] sm:$0xff]
          %v3749 = vld [vmem:[#allocation6 + $0x8d8] sm:$0xff]
          %v3750 = vld [vmem:[#allocation6 + $0x8e0] sm:$0xff]
          %v3751 = vld [vmem:[#allocation6 + $0x8e8] sm:$0xff]
          %v3752 = vld [vmem:[#allocation6 + $0x8f0] sm:$0xff]
          %v3753 = vld [vmem:[#allocation6 + $0x8f8] sm:$0xff]
          %v3754 = vld [vmem:[#allocation6 + $0x900] sm:$0xff]
          %v3755 = vld [vmem:[#allocation6 + $0x908] sm:$0xff]
          %v3756 = vld [vmem:[#allocation6 + $0x910] sm:$0xff]
          %v3757 = vld [vmem:[#allocation6 + $0x918] sm:$0xff]
          %v3758 = vld [vmem:[#allocation6 + $0x920] sm:$0xff]
          %v3759 = vld [vmem:[#allocation6 + $0x928] sm:$0xff]
          %v3760 = vld [vmem:[#allocation6 + $0x930] sm:$0xff]
          %v3761 = vld [vmem:[#allocation6 + $0x938] sm:$0xff]
          %v3762 = vld [vmem:[#allocation6 + $0x940] sm:$0xff]
          %v3763 = vld [vmem:[#allocation6 + $0x948] sm:$0xff]
          %v3764 = vld [vmem:[#allocation6 + $0x950] sm:$0xff]
          %v3765 = vld [vmem:[#allocation6 + $0x958] sm:$0xff]
          %v3766 = vld [vmem:[#allocation6 + $0x960] sm:$0xff]
          %v3767 = vld [vmem:[#allocation6 + $0x968] sm:$0xff]
          %v3768 = vld [vmem:[#allocation6 + $0x970] sm:$0xff]
          %v3769 = vld [vmem:[#allocation6 + $0x978] sm:$0xff]
          %v3770 = vld [vmem:[#allocation6 + $0x980] sm:$0xff]
          %v3771 = vld [vmem:[#allocation6 + $0x988] sm:$0xff]
          %v3772 = vld [vmem:[#allocation6 + $0x990] sm:$0xff]
          %v3773 = vld [vmem:[#allocation6 + $0x998] sm:$0xff]
          %v3774 = vld [vmem:[#allocation6 + $0x9a0] sm:$0xff]
          %v3775 = vld [vmem:[#allocation6 + $0x9a8] sm:$0xff]
          %v3776 = vld [vmem:[#allocation6 + $0x9b0] sm:$0xff]
          %v3777 = vld [vmem:[#allocation6 + $0x9b8] sm:$0xff]
          %v3778 = vld [vmem:[#allocation6 + $0x9c0] sm:$0xff]
          %v3779 = vld [vmem:[#allocation6 + $0x9c8] sm:$0xff]
          %v3780 = vld [vmem:[#allocation6 + $0x9d0] sm:$0xff]
          %v3781 = vld [vmem:[#allocation6 + $0x9d8] sm:$0xff]
          %v3782 = vld [vmem:[#allocation6 + $0x9e0] sm:$0xff]
          %v3783 = vld [vmem:[#allocation6 + $0x9e8] sm:$0xff]
          %v3784 = vld [vmem:[#allocation6 + $0x9f0] sm:$0xff]
          %v3785 = vld [vmem:[#allocation6 + $0x9f8] sm:$0xff]
          %v3786 = vld [vmem:[#allocation6 + $0xa00] sm:$0xff]
          %v3787 = vld [vmem:[#allocation6 + $0xa08] sm:$0xff]
          %v3788 = vld [vmem:[#allocation6 + $0xa10] sm:$0xff]
          %v3789 = vld [vmem:[#allocation6 + $0xa18] sm:$0xff]
          %v3790 = vld [vmem:[#allocation6 + $0xa20] sm:$0xff]
          %v3791 = vld [vmem:[#allocation6 + $0xa28] sm:$0xff]
          %v3792 = vld [vmem:[#allocation6 + $0xa30] sm:$0xff]
          %v3793 = vld [vmem:[#allocation6 + $0xa38] sm:$0xff]
          %v3794 = vld [vmem:[#allocation6 + $0xa40] sm:$0xff]
          %v3795 = vld [vmem:[#allocation6 + $0xa48] sm:$0xff]
          %v3796 = vld [vmem:[#allocation6 + $0xa50] sm:$0xff]
          %v3797 = vld [vmem:[#allocation6 + $0xa58] sm:$0xff]
          %v3798 = vld [vmem:[#allocation6 + $0xa60] sm:$0xff]
          %v3799 = vld [vmem:[#allocation6 + $0xa68] sm:$0xff]
          %v3800 = vld [vmem:[#allocation6 + $0xa70] sm:$0xff]
          %v3801 = vld [vmem:[#allocation6 + $0xa78] sm:$0xff]
          %v3802 = vld [vmem:[#allocation6 + $0xa80] sm:$0xff]
          %v3803 = vld [vmem:[#allocation6 + $0xa88] sm:$0xff]
          %v3804 = vld [vmem:[#allocation6 + $0xa90] sm:$0xff]
          %v3805 = vld [vmem:[#allocation6 + $0xa98] sm:$0xff]
          %v3806 = vld [vmem:[#allocation6 + $0xaa0] sm:$0xff]
          %v3807 = vld [vmem:[#allocation6 + $0xaa8] sm:$0xff]
          %v3808 = vld [vmem:[#allocation6 + $0xab0] sm:$0xff]
          %v3809 = vld [vmem:[#allocation6 + $0xab8] sm:$0xff]
          %v3810 = vld [vmem:[#allocation6 + $0xac0] sm:$0xff]
          %v3811 = vld [vmem:[#allocation6 + $0xac8] sm:$0xff]
          %v3812 = vld [vmem:[#allocation6 + $0xad0] sm:$0xff]
          %v3813 = vld [vmem:[#allocation6 + $0xad8] sm:$0xff]
          %v3814 = vld [vmem:[#allocation6 + $0xae0] sm:$0xff]
          %v3815 = vld [vmem:[#allocation6 + $0xae8] sm:$0xff]
          %v3816 = vld [vmem:[#allocation6 + $0xaf0] sm:$0xff]
          %v3817 = vld [vmem:[#allocation6 + $0xaf8] sm:$0xff]
          %v3818 = vld [vmem:[#allocation6 + $0xb00] sm:$0xff]
          %v3819 = vld [vmem:[#allocation6 + $0xb08] sm:$0xff]
          %v3820 = vld [vmem:[#allocation6 + $0xb10] sm:$0xff]
          %v3821 = vld [vmem:[#allocation6 + $0xb18] sm:$0xff]
          %v3822 = vld [vmem:[#allocation6 + $0xb20] sm:$0xff]
          %v3823 = vld [vmem:[#allocation6 + $0xb28] sm:$0xff]
          %v3824 = vld [vmem:[#allocation6 + $0xb30] sm:$0xff]
          %v3825 = vld [vmem:[#allocation6 + $0xb38] sm:$0xff]
          %v3826 = vld [vmem:[#allocation6 + $0xb40] sm:$0xff]
          %v3827 = vld [vmem:[#allocation6 + $0xb48] sm:$0xff]
          %v3828 = vld [vmem:[#allocation6 + $0xb50] sm:$0xff]
          %v3829 = vld [vmem:[#allocation6 + $0xb58] sm:$0xff]
          %v3830 = vld [vmem:[#allocation6 + $0xb60] sm:$0xff]
          %v3831 = vld [vmem:[#allocation6 + $0xb68] sm:$0xff]
          %v3832 = vld [vmem:[#allocation6 + $0xb70] sm:$0xff]
          %v3833 = vld [vmem:[#allocation6 + $0xb78] sm:$0xff]
          %v3834 = vld [vmem:[#allocation6 + $0xb80] sm:$0xff]
          %v3835 = vld [vmem:[#allocation6 + $0xb88] sm:$0xff]
          %v3836 = vld [vmem:[#allocation6 + $0xb90] sm:$0xff]
          %v3837 = vld [vmem:[#allocation6 + $0xb98] sm:$0xff]
          %v3838 = vld [vmem:[#allocation6 + $0xba0] sm:$0xff]
          %v3839 = vld [vmem:[#allocation6 + $0xba8] sm:$0xff]
          %v3840 = vld [vmem:[#allocation6 + $0xbb0] sm:$0xff]
          %v3841 = vld [vmem:[#allocation6 + $0xbb8] sm:$0xff]
          %v3842 = vld [vmem:[#allocation6 + $0xbc0] sm:$0xff]
          %v3843 = vld [vmem:[#allocation6 + $0xbc8] sm:$0xff]
          %v3844 = vld [vmem:[#allocation6 + $0xbd0] sm:$0xff]
          %v3845 = vld [vmem:[#allocation6 + $0xbd8] sm:$0xff]
          %v3846 = vld [vmem:[#allocation6 + $0xbe0] sm:$0xff]
          %v3847 = vld [vmem:[#allocation6 + $0xbe8] sm:$0xff]
          %v3848 = vld [vmem:[#allocation6 + $0xbf0] sm:$0xff]
          %v3849 = vld [vmem:[#allocation6 + $0xbf8] sm:$0xff]
          %v3850 = vld [vmem:[#allocation6 + $0xc00] sm:$0xff]
          %v3851 = vld [vmem:[#allocation6 + $0xc08] sm:$0xff]
          %v3852 = vld [vmem:[#allocation6 + $0xc10] sm:$0xff]
          %v3853 = vld [vmem:[#allocation6 + $0xc18] sm:$0xff]
          %v3854 = vld [vmem:[#allocation6 + $0xc20] sm:$0xff]
          %v3855 = vld [vmem:[#allocation6 + $0xc28] sm:$0xff]
          %v3856 = vld [vmem:[#allocation6 + $0xc30] sm:$0xff]
          %v3857 = vld [vmem:[#allocation6 + $0xc38] sm:$0xff]
          %v3858 = vld [vmem:[#allocation6 + $0xc40] sm:$0xff]
          %v3859 = vld [vmem:[#allocation6 + $0xc48] sm:$0xff]
          %v3860 = vld [vmem:[#allocation6 + $0xc50] sm:$0xff]
          %v3861 = vld [vmem:[#allocation6 + $0xc58] sm:$0xff]
          %v3862 = vld [vmem:[#allocation6 + $0xc60] sm:$0xff]
          %v3863 = vld [vmem:[#allocation6 + $0xc68] sm:$0xff]
          %v3864 = vld [vmem:[#allocation6 + $0xc70] sm:$0xff]
          %v3865 = vld [vmem:[#allocation6 + $0xc78] sm:$0xff]
          %v3866 = vld [vmem:[#allocation6 + $0xc80] sm:$0xff]
          %v3867 = vld [vmem:[#allocation6 + $0xc88] sm:$0xff]
          %v3868 = vld [vmem:[#allocation6 + $0xc90] sm:$0xff]
          %v3869 = vld [vmem:[#allocation6 + $0xc98] sm:$0xff]
          %v3870 = vld [vmem:[#allocation6 + $0xca0] sm:$0xff]
          %v3871 = vld [vmem:[#allocation6 + $0xca8] sm:$0xff]
          %v3872 = vld [vmem:[#allocation6 + $0xcb0] sm:$0xff]
          %v3873 = vld [vmem:[#allocation6 + $0xcb8] sm:$0xff]
          %v3874 = vld [vmem:[#allocation6 + $0xcc0] sm:$0xff]
          %v3875 = vld [vmem:[#allocation6 + $0xcc8] sm:$0xff]
          %v3876 = vld [vmem:[#allocation6 + $0xcd0] sm:$0xff]
          %v3877 = vld [vmem:[#allocation6 + $0xcd8] sm:$0xff]
          %v3878 = vld [vmem:[#allocation6 + $0xce0] sm:$0xff]
          %v3879 = vld [vmem:[#allocation6 + $0xce8] sm:$0xff]
          %v3880 = vld [vmem:[#allocation6 + $0xcf0] sm:$0xff]
          %v3881 = vld [vmem:[#allocation6 + $0xcf8] sm:$0xff]
          %v3882 = vld [vmem:[#allocation6 + $0xd00] sm:$0xff]
          %v3883 = vld [vmem:[#allocation6 + $0xd08] sm:$0xff]
          %v3884 = vld [vmem:[#allocation6 + $0xd10] sm:$0xff]
          %v3885 = vld [vmem:[#allocation6 + $0xd18] sm:$0xff]
          %v3886 = vld [vmem:[#allocation6 + $0xd20] sm:$0xff]
          %v3887 = vld [vmem:[#allocation6 + $0xd28] sm:$0xff]
          %v3888 = vld [vmem:[#allocation6 + $0xd30] sm:$0xff]
          %v3889 = vld [vmem:[#allocation6 + $0xd38] sm:$0xff]
          %v3890 = vld [vmem:[#allocation6 + $0xd40] sm:$0xff]
          %v3891 = vld [vmem:[#allocation6 + $0xd48] sm:$0xff]
          %v3892 = vld [vmem:[#allocation6 + $0xd50] sm:$0xff]
          %v3893 = vld [vmem:[#allocation6 + $0xd58] sm:$0xff]
          %v3894 = vld [vmem:[#allocation6 + $0xd60] sm:$0xff]
          %v3895 = vld [vmem:[#allocation6 + $0xd68] sm:$0xff]
          %v3896 = vld [vmem:[#allocation6 + $0xd70] sm:$0xff]
          %v3897 = vld [vmem:[#allocation6 + $0xd78] sm:$0xff]
          %v3898 = vld [vmem:[#allocation6 + $0xd80] sm:$0xff]
          %v3899 = vld [vmem:[#allocation6 + $0xd88] sm:$0xff]
          %v3900 = vld [vmem:[#allocation6 + $0xd90] sm:$0xff]
          %v3901 = vld [vmem:[#allocation6 + $0xd98] sm:$0xff]
          %v3902 = vld [vmem:[#allocation6 + $0xda0] sm:$0xff]
          %v3903 = vld [vmem:[#allocation6 + $0xda8] sm:$0xff]
          %v3904 = vld [vmem:[#allocation6 + $0xdb0] sm:$0xff]
          %v3905 = vld [vmem:[#allocation6 + $0xdb8] sm:$0xff]
          %v3906 = vld [vmem:[#allocation6 + $0xdc0] sm:$0xff]
          %v3907 = vld [vmem:[#allocation6 + $0xdc8] sm:$0xff]
          %v3908 = vld [vmem:[#allocation6 + $0xdd0] sm:$0xff]
          %v3909 = vld [vmem:[#allocation6 + $0xdd8] sm:$0xff]
          %v3910 = vld [vmem:[#allocation6 + $0xde0] sm:$0xff]
          %v3911 = vld [vmem:[#allocation6 + $0xde8] sm:$0xff]
          %v3912 = vld [vmem:[#allocation6 + $0xdf0] sm:$0xff]
          %v3913 = vld [vmem:[#allocation6 + $0xdf8] sm:$0xff]
          %v3914 = vld [vmem:[#allocation6 + $0xe00] sm:$0xff]
          %v3915 = vld [vmem:[#allocation6 + $0xe08] sm:$0xff]
          %v3916 = vld [vmem:[#allocation6 + $0xe10] sm:$0xff]
          %v3917 = vld [vmem:[#allocation6 + $0xe18] sm:$0xff]
          %v3918 = vld [vmem:[#allocation6 + $0xe20] sm:$0xff]
          %v3919 = vld [vmem:[#allocation6 + $0xe28] sm:$0xff]
          %v3920 = vld [vmem:[#allocation6 + $0xe30] sm:$0xff]
          %v3921 = vld [vmem:[#allocation6 + $0xe38] sm:$0xff]
          %v3922 = vld [vmem:[#allocation6 + $0xe40] sm:$0xff]
          %v3923 = vld [vmem:[#allocation6 + $0xe48] sm:$0xff]
          %v3924 = vld [vmem:[#allocation6 + $0xe50] sm:$0xff]
          %v3925 = vld [vmem:[#allocation6 + $0xe58] sm:$0xff]
          %v3926 = vld [vmem:[#allocation6 + $0xe60] sm:$0xff]
          %v3927 = vld [vmem:[#allocation6 + $0xe68] sm:$0xff]
          %v3928 = vld [vmem:[#allocation6 + $0xe70] sm:$0xff]
          %v3929 = vld [vmem:[#allocation6 + $0xe78] sm:$0xff]
          %v3930 = vld [vmem:[#allocation6 + $0xe80] sm:$0xff]
          %v3931 = vld [vmem:[#allocation6 + $0xe88] sm:$0xff]
          %v3932 = vld [vmem:[#allocation6 + $0xe90] sm:$0xff]
          %v3933 = vld [vmem:[#allocation6 + $0xe98] sm:$0xff]
          %v3934 = vld [vmem:[#allocation6 + $0xea0] sm:$0xff]
          %v3935 = vld [vmem:[#allocation6 + $0xea8] sm:$0xff]
          %v3936 = vld [vmem:[#allocation6 + $0xeb0] sm:$0xff]
          %v3937 = vld [vmem:[#allocation6 + $0xeb8] sm:$0xff]
          %v3938 = vld [vmem:[#allocation6 + $0xec0] sm:$0xff]
          %v3939 = vld [vmem:[#allocation6 + $0xec8] sm:$0xff]
          %v3940 = vld [vmem:[#allocation6 + $0xed0] sm:$0xff]
          %v3941 = vld [vmem:[#allocation6 + $0xed8] sm:$0xff]
          %v3942 = vld [vmem:[#allocation6 + $0xee0] sm:$0xff]
          %v3943 = vld [vmem:[#allocation6 + $0xee8] sm:$0xff]
          %v3944 = vld [vmem:[#allocation6 + $0xef0] sm:$0xff]
          %v3945 = vld [vmem:[#allocation6 + $0xef8] sm:$0xff]
          %v3946 = vld [vmem:[#allocation6 + $0xf00] sm:$0xff]
          %v3947 = vld [vmem:[#allocation6 + $0xf08] sm:$0xff]
          %v3948 = vld [vmem:[#allocation6 + $0xf10] sm:$0xff]
          %v3949 = vld [vmem:[#allocation6 + $0xf18] sm:$0xff]
          %v3950 = vld [vmem:[#allocation6 + $0xf20] sm:$0xff]
          %v3951 = vld [vmem:[#allocation6 + $0xf28] sm:$0xff]
          %v3952 = vld [vmem:[#allocation6 + $0xf30] sm:$0xff]
          %v3953 = vld [vmem:[#allocation6 + $0xf38] sm:$0xff]
          %v3954 = vld [vmem:[#allocation6 + $0xf40] sm:$0xff]
          %v3955 = vld [vmem:[#allocation6 + $0xf48] sm:$0xff]
          %v3956 = vld [vmem:[#allocation6 + $0xf50] sm:$0xff]
          %v3957 = vld [vmem:[#allocation6 + $0xf58] sm:$0xff]
          %v3958 = vld [vmem:[#allocation6 + $0xf60] sm:$0xff]
          %v3959 = vld [vmem:[#allocation6 + $0xf68] sm:$0xff]
          %v3960 = vld [vmem:[#allocation6 + $0xf70] sm:$0xff]
          %v3961 = vld [vmem:[#allocation6 + $0xf78] sm:$0xff]
          %v3962 = vld [vmem:[#allocation6 + $0xf80] sm:$0xff]
          %v3963 = vld [vmem:[#allocation6 + $0xf88] sm:$0xff]
          %v3964 = vld [vmem:[#allocation6 + $0xf90] sm:$0xff]
          %v3965 = vld [vmem:[#allocation6 + $0xf98] sm:$0xff]
          %v3966 = vld [vmem:[#allocation6 + $0xfa0] sm:$0xff]
          %v3967 = vld [vmem:[#allocation6 + $0xfa8] sm:$0xff]
          %v3968 = vld [vmem:[#allocation6 + $0xfb0] sm:$0xff]
          %v3969 = vld [vmem:[#allocation6 + $0xfb8] sm:$0xff]
          %v3970 = vld [vmem:[#allocation6 + $0xfc0] sm:$0xff]
          %v3971 = vld [vmem:[#allocation6 + $0xfc8] sm:$0xff]
          %v3972 = vld [vmem:[#allocation6 + $0xfd0] sm:$0xff]
          %v3973 = vld [vmem:[#allocation6 + $0xfd8] sm:$0xff]
          %v3974 = vld [vmem:[#allocation6 + $0xfe0] sm:$0xff]
          %v3975 = vld [vmem:[#allocation6 + $0xfe8] sm:$0xff]
          %v3976 = vld [vmem:[#allocation6 + $0xff0] sm:$0xff]
          %v3977 = vld [vmem:[#allocation6 + $0xff8] sm:$0xff]
          %v3978 = vld [vmem:[#allocation6 + $0x1000] sm:$0xff]
          %v3979 = vld [vmem:[#allocation6 + $0x1008] sm:$0xff]
          %v3980 = vld [vmem:[#allocation6 + $0x1010] sm:$0xff]
          %v3981 = vld [vmem:[#allocation6 + $0x1018] sm:$0xff]
          %v3982 = vld [vmem:[#allocation6 + $0x1020] sm:$0xff]
          %v3983 = vld [vmem:[#allocation6 + $0x1028] sm:$0xff]
          %v3984 = vld [vmem:[#allocation6 + $0x1030] sm:$0xff]
          %v3985 = vld [vmem:[#allocation6 + $0x1038] sm:$0xff]
          %v3986 = vld [vmem:[#allocation6 + $0x1040] sm:$0xff]
          %v3987 = vld [vmem:[#allocation6 + $0x1048] sm:$0xff]
          %v3988 = vld [vmem:[#allocation6 + $0x1050] sm:$0xff]
          %v3989 = vld [vmem:[#allocation6 + $0x1058] sm:$0xff]
          %v3990 = vld [vmem:[#allocation6 + $0x1060] sm:$0xff]
          %v3991 = vld [vmem:[#allocation6 + $0x1068] sm:$0xff]
          %v3992 = vld [vmem:[#allocation6 + $0x1070] sm:$0xff]
          %v3993 = vld [vmem:[#allocation6 + $0x1078] sm:$0xff]
          %v3994 = vld [vmem:[#allocation6 + $0x1080] sm:$0xff]
          %v3995 = vld [vmem:[#allocation6 + $0x1088] sm:$0xff]
          %v3996 = vld [vmem:[#allocation6 + $0x1090] sm:$0xff]
          %v3997 = vld [vmem:[#allocation6 + $0x1098] sm:$0xff]
          %v3998 = vld [vmem:[#allocation6 + $0x10a0] sm:$0xff]
          %v3999 = vld [vmem:[#allocation6 + $0x10a8] sm:$0xff]
          %v4000 = vld [vmem:[#allocation6 + $0x10b0] sm:$0xff]
          %v4001 = vld [vmem:[#allocation6 + $0x10b8] sm:$0xff]
          %v4002 = vld [vmem:[#allocation6 + $0x10c0] sm:$0xff]
          %v4003 = vld [vmem:[#allocation6 + $0x10c8] sm:$0xff]
          %v4004 = vld [vmem:[#allocation6 + $0x10d0] sm:$0xff]
          %v4005 = vld [vmem:[#allocation6 + $0x10d8] sm:$0xff]
          %v4006 = vld [vmem:[#allocation6 + $0x10e0] sm:$0xff]
          %v4007 = vld [vmem:[#allocation6 + $0x10e8] sm:$0xff]
          %v4008 = vld [vmem:[#allocation6 + $0x10f0] sm:$0xff]
          %v4009 = vld [vmem:[#allocation6 + $0x10f8] sm:$0xff]
          %v4010 = vld [vmem:[#allocation6 + $0x1100] sm:$0xff]
          %v4011 = vld [vmem:[#allocation6 + $0x1108] sm:$0xff]
          %v4012 = vld [vmem:[#allocation6 + $0x1110] sm:$0xff]
          %v4013 = vld [vmem:[#allocation6 + $0x1118] sm:$0xff]
          %v4014 = vld [vmem:[#allocation6 + $0x1120] sm:$0xff]
          %v4015 = vld [vmem:[#allocation6 + $0x1128] sm:$0xff]
          %v4016 = vld [vmem:[#allocation6 + $0x1130] sm:$0xff]
          %v4017 = vld [vmem:[#allocation6 + $0x1138] sm:$0xff]
          %v4018 = vld [vmem:[#allocation6 + $0x1140] sm:$0xff]
          %v4019 = vld [vmem:[#allocation6 + $0x1148] sm:$0xff]
          %v4020 = vld [vmem:[#allocation6 + $0x1150] sm:$0xff]
          %v4021 = vld [vmem:[#allocation6 + $0x1158] sm:$0xff]
          %v4022 = vld [vmem:[#allocation6 + $0x1160] sm:$0xff]
          %v4023 = vld [vmem:[#allocation6 + $0x1168] sm:$0xff]
          %v4024 = vld [vmem:[#allocation6 + $0x1170] sm:$0xff]
          %v4025 = vld [vmem:[#allocation6 + $0x1178] sm:$0xff]
          %v4026 = vld [vmem:[#allocation6 + $0x1180] sm:$0xff]
          %v4027 = vld [vmem:[#allocation6 + $0x1188] sm:$0xff]
          %v4028 = vld [vmem:[#allocation6 + $0x1190] sm:$0xff]
          %v4029 = vld [vmem:[#allocation6 + $0x1198] sm:$0xff]
          %v4030 = vld [vmem:[#allocation6 + $0x11a0] sm:$0xff]
          %v4031 = vld [vmem:[#allocation6 + $0x11a8] sm:$0xff]
          %v4032 = vld [vmem:[#allocation6 + $0x11b0] sm:$0xff]
          %v4033 = vld [vmem:[#allocation6 + $0x11b8] sm:$0xff]
          %v4034 = vld [vmem:[#allocation6 + $0x11c0] sm:$0xff]
          %v4035 = vld [vmem:[#allocation6 + $0x11c8] sm:$0xff]
          %v4036 = vld [vmem:[#allocation6 + $0x11d0] sm:$0xff]
          %v4037 = vld [vmem:[#allocation6 + $0x11d8] sm:$0xff]
          %v4038 = vld [vmem:[#allocation6 + $0x11e0] sm:$0xff]
          %v4039 = vld [vmem:[#allocation6 + $0x11e8] sm:$0xff]
          %v4040 = vld [vmem:[#allocation6 + $0x11f0] sm:$0xff]
          %v4041 = vld [vmem:[#allocation6 + $0x11f8] sm:$0xff]
          %v4042 = vld [vmem:[#allocation6 + $0x1200] sm:$0xff]
          %v4043 = vld [vmem:[#allocation6 + $0x1208] sm:$0xff]
          %v4044 = vld [vmem:[#allocation6 + $0x1210] sm:$0xff]
          %v4045 = vld [vmem:[#allocation6 + $0x1218] sm:$0xff]
          %v4046 = vld [vmem:[#allocation6 + $0x1220] sm:$0xff]
          %v4047 = vld [vmem:[#allocation6 + $0x1228] sm:$0xff]
          %v4048 = vld [vmem:[#allocation6 + $0x1230] sm:$0xff]
          %v4049 = vld [vmem:[#allocation6 + $0x1238] sm:$0xff]
          %v4050 = vld [vmem:[#allocation6 + $0x1240] sm:$0xff]
          %v4051 = vld [vmem:[#allocation6 + $0x1248] sm:$0xff]
          %v4052 = vld [vmem:[#allocation6 + $0x1250] sm:$0xff]
          %v4053 = vld [vmem:[#allocation6 + $0x1258] sm:$0xff]
          %v4054 = vld [vmem:[#allocation6 + $0x1260] sm:$0xff]
          %v4055 = vld [vmem:[#allocation6 + $0x1268] sm:$0xff]
          %v4056 = vld [vmem:[#allocation6 + $0x1270] sm:$0xff]
          %v4057 = vld [vmem:[#allocation6 + $0x1278] sm:$0xff]
          %v4058 = vld [vmem:[#allocation6 + $0x1280] sm:$0xff]
          %v4059 = vld [vmem:[#allocation6 + $0x1288] sm:$0xff]
          %v4060 = vld [vmem:[#allocation6 + $0x1290] sm:$0xff]
          %v4061 = vld [vmem:[#allocation6 + $0x1298] sm:$0xff]
          %v4062 = vld [vmem:[#allocation6 + $0x12a0] sm:$0xff]
          %v4063 = vld [vmem:[#allocation6 + $0x12a8] sm:$0xff]
          %v4064 = vld [vmem:[#allocation6 + $0x12b0] sm:$0xff]
          %v4065 = vld [vmem:[#allocation6 + $0x12b8] sm:$0xff]
          %v4066 = vld [vmem:[#allocation6 + $0x12c0] sm:$0xff]
          %v4067 = vld [vmem:[#allocation6 + $0x12c8] sm:$0xff]
          %v4068 = vld [vmem:[#allocation6 + $0x12d0] sm:$0xff]
          %v4069 = vld [vmem:[#allocation6 + $0x12d8] sm:$0xff]
          %v4070 = vld [vmem:[#allocation6 + $0x12e0] sm:$0xff]
          %v4071 = vld [vmem:[#allocation6 + $0x12e8] sm:$0xff]
          %v4072 = vld [vmem:[#allocation6 + $0x12f0] sm:$0xff]
          %v4073 = vld [vmem:[#allocation6 + $0x12f8] sm:$0xff]
          %v4074 = vld [vmem:[#allocation6 + $0x1300] sm:$0xff]
          %v4075 = vld [vmem:[#allocation6 + $0x1308] sm:$0xff]
          %v4076 = vld [vmem:[#allocation6 + $0x1310] sm:$0xff]
          %v4077 = vld [vmem:[#allocation6 + $0x1318] sm:$0xff]
          %v4078 = vld [vmem:[#allocation6 + $0x1320] sm:$0xff]
          %v4079 = vld [vmem:[#allocation6 + $0x1328] sm:$0xff]
          %v4080 = vld [vmem:[#allocation6 + $0x1330] sm:$0xff]
          %v4081 = vld [vmem:[#allocation6 + $0x1338] sm:$0xff]
          %v4082 = vld [vmem:[#allocation6 + $0x1340] sm:$0xff]
          %v4083 = vld [vmem:[#allocation6 + $0x1348] sm:$0xff]
          %v4084 = vld [vmem:[#allocation6 + $0x1350] sm:$0xff]
          %v4085 = vld [vmem:[#allocation6 + $0x1358] sm:$0xff]
          %v4086 = vld [vmem:[#allocation6 + $0x1360] sm:$0xff]
          %v4087 = vld [vmem:[#allocation6 + $0x1368] sm:$0xff]
          %v4088 = vld [vmem:[#allocation6 + $0x1370] sm:$0xff]
          %v4089 = vld [vmem:[#allocation6 + $0x1378] sm:$0xff]
          %v4090 = vld [vmem:[#allocation6 + $0x1380] sm:$0xff]
          %v4091 = vld [vmem:[#allocation6 + $0x1388] sm:$0xff]
          %v4092 = vld [vmem:[#allocation6 + $0x1390] sm:$0xff]
          %v4093 = vld [vmem:[#allocation6 + $0x1398] sm:$0xff]
          %v4094 = vld [vmem:[#allocation6 + $0x13a0] sm:$0xff]
          %v4095 = vld [vmem:[#allocation6 + $0x13a8] sm:$0xff]
          %v4096 = vld [vmem:[#allocation6 + $0x13b0] sm:$0xff]
          %v4097 = vld [vmem:[#allocation6 + $0x13b8] sm:$0xff]
          %v4098 = vld [vmem:[#allocation6 + $0x13c0] sm:$0xff]
          %v4099 = vld [vmem:[#allocation6 + $0x13c8] sm:$0xff]
          %v4100 = vld [vmem:[#allocation6 + $0x13d0] sm:$0xff]
          %v4101 = vld [vmem:[#allocation6 + $0x13d8] sm:$0xff]
          %v4102 = vld [vmem:[#allocation6 + $0x13e0] sm:$0xff]
          %v4103 = vld [vmem:[#allocation6 + $0x13e8] sm:$0xff]
          %v4104 = vld [vmem:[#allocation6 + $0x13f0] sm:$0xff]
          %v4105 = vld [vmem:[#allocation6 + $0x13f8] sm:$0xff]
          %v4106 = vld [vmem:[#allocation6 + $0x1400] sm:$0xff]
          %v4107 = vld [vmem:[#allocation6 + $0x1408] sm:$0xff]
          %v4108 = vld [vmem:[#allocation6 + $0x1410] sm:$0xff]
          %v4109 = vld [vmem:[#allocation6 + $0x1418] sm:$0xff]
          %v4110 = vld [vmem:[#allocation6 + $0x1420] sm:$0xff]
          %v4111 = vld [vmem:[#allocation6 + $0x1428] sm:$0xff]
          %v4112 = vld [vmem:[#allocation6 + $0x1430] sm:$0xff]
          %v4113 = vld [vmem:[#allocation6 + $0x1438] sm:$0xff]
          %v4114 = vld [vmem:[#allocation6 + $0x1440] sm:$0xff]
          %v4115 = vld [vmem:[#allocation6 + $0x1448] sm:$0xff]
          %v4116 = vld [vmem:[#allocation6 + $0x1450] sm:$0xff]
          %v4117 = vld [vmem:[#allocation6 + $0x1458] sm:$0xff]
          %v4118 = vld [vmem:[#allocation6 + $0x1460] sm:$0xff]
          %v4119 = vld [vmem:[#allocation6 + $0x1468] sm:$0xff]
          %v4120 = vld [vmem:[#allocation6 + $0x1470] sm:$0xff]
          %v4121 = vld [vmem:[#allocation6 + $0x1478] sm:$0xff]
          %v4122 = vld [vmem:[#allocation6 + $0x1480] sm:$0xff]
          %v4123 = vld [vmem:[#allocation6 + $0x1488] sm:$0xff]
          %v4124 = vld [vmem:[#allocation6 + $0x1490] sm:$0xff]
          %v4125 = vld [vmem:[#allocation6 + $0x1498] sm:$0xff]
          %v4126 = vld [vmem:[#allocation6 + $0x14a0] sm:$0xff]
          %v4127 = vld [vmem:[#allocation6 + $0x14a8] sm:$0xff]
          %v4128 = vld [vmem:[#allocation6 + $0x14b0] sm:$0xff]
          %v4129 = vld [vmem:[#allocation6 + $0x14b8] sm:$0xff]
          %v4130 = vld [vmem:[#allocation6 + $0x14c0] sm:$0xff]
          %v4131 = vld [vmem:[#allocation6 + $0x14c8] sm:$0xff]
          %v4132 = vld [vmem:[#allocation6 + $0x14d0] sm:$0xff]
          %v4133 = vld [vmem:[#allocation6 + $0x14d8] sm:$0xff]
          %v4134 = vld [vmem:[#allocation6 + $0x14e0] sm:$0xff]
          %v4135 = vld [vmem:[#allocation6 + $0x14e8] sm:$0xff]
          %v4136 = vld [vmem:[#allocation6 + $0x14f0] sm:$0xff]
          %v4137 = vld [vmem:[#allocation6 + $0x14f8] sm:$0xff]
          %v4138 = vld [vmem:[#allocation6 + $0x1500] sm:$0xff]
          %v4139 = vld [vmem:[#allocation6 + $0x1508] sm:$0xff]
          %v4140 = vld [vmem:[#allocation6 + $0x1510] sm:$0xff]
          %v4141 = vld [vmem:[#allocation6 + $0x1518] sm:$0xff]
          %v4142 = vld [vmem:[#allocation6 + $0x1520] sm:$0xff]
          %v4143 = vld [vmem:[#allocation6 + $0x1528] sm:$0xff]
          %v4144 = vld [vmem:[#allocation6 + $0x1530] sm:$0xff]
          %v4145 = vld [vmem:[#allocation6 + $0x1538] sm:$0xff]
          %v4146 = vld [vmem:[#allocation6 + $0x1540] sm:$0xff]
          %v4147 = vld [vmem:[#allocation6 + $0x1548] sm:$0xff]
          %v4148 = vld [vmem:[#allocation6 + $0x1550] sm:$0xff]
          %v4149 = vld [vmem:[#allocation6 + $0x1558] sm:$0xff]
          %v4150 = vld [vmem:[#allocation6 + $0x1560] sm:$0xff]
          %v4151 = vld [vmem:[#allocation6 + $0x1568] sm:$0xff]
          %v4152 = vld [vmem:[#allocation6 + $0x1570] sm:$0xff]
          %v4153 = vld [vmem:[#allocation6 + $0x1578] sm:$0xff]
          %v4154 = vld [vmem:[#allocation6 + $0x1580] sm:$0xff]
          %v4155 = vld [vmem:[#allocation6 + $0x1588] sm:$0xff]
          %v4156 = vld [vmem:[#allocation6 + $0x1590] sm:$0xff]
          %v4157 = vld [vmem:[#allocation6 + $0x1598] sm:$0xff]
          %v4158 = vld [vmem:[#allocation6 + $0x15a0] sm:$0xff]
          %v4159 = vld [vmem:[#allocation6 + $0x15a8] sm:$0xff]
          %v4160 = vld [vmem:[#allocation6 + $0x15b0] sm:$0xff]
          %v4161 = vld [vmem:[#allocation6 + $0x15b8] sm:$0xff]
          %v4162 = vld [vmem:[#allocation6 + $0x15c0] sm:$0xff]
          %v4163 = vld [vmem:[#allocation6 + $0x15c8] sm:$0xff]
          %v4164 = vld [vmem:[#allocation6 + $0x15d0] sm:$0xff]
          %v4165 = vld [vmem:[#allocation6 + $0x15d8] sm:$0xff]
          %v4166 = vld [vmem:[#allocation6 + $0x15e0] sm:$0xff]
          %v4167 = vld [vmem:[#allocation6 + $0x15e8] sm:$0xff]
          %v4168 = vld [vmem:[#allocation6 + $0x15f0] sm:$0xff]
          %v4169 = vld [vmem:[#allocation6 + $0x15f8] sm:$0xff]
          %v4170 = vld [vmem:[#allocation6 + $0x1600] sm:$0xff]
          %v4171 = vld [vmem:[#allocation6 + $0x1608] sm:$0xff]
          %v4172 = vld [vmem:[#allocation6 + $0x1610] sm:$0xff]
          %v4173 = vld [vmem:[#allocation6 + $0x1618] sm:$0xff]
          %v4174 = vld [vmem:[#allocation6 + $0x1620] sm:$0xff]
          %v4175 = vld [vmem:[#allocation6 + $0x1628] sm:$0xff]
          %v4176 = vld [vmem:[#allocation6 + $0x1630] sm:$0xff]
          %v4177 = vld [vmem:[#allocation6 + $0x1638] sm:$0xff]
          %v4178 = vld [vmem:[#allocation6 + $0x1640] sm:$0xff]
          %v4179 = vld [vmem:[#allocation6 + $0x1648] sm:$0xff]
          %v4180 = vld [vmem:[#allocation6 + $0x1650] sm:$0xff]
          %v4181 = vld [vmem:[#allocation6 + $0x1658] sm:$0xff]
          %v4182 = vld [vmem:[#allocation6 + $0x1660] sm:$0xff]
          %v4183 = vld [vmem:[#allocation6 + $0x1668] sm:$0xff]
          %v4184 = vld [vmem:[#allocation6 + $0x1670] sm:$0xff]
          %v4185 = vld [vmem:[#allocation6 + $0x1678] sm:$0xff]
          %v4186 = vld [vmem:[#allocation8] sm:$0xff]
          %v4187 = vperm.slane %v1252, %v3240
          %v4188 = vperm.slane %v1253, %v3242
          %v4189 = vsel %vm3244, %v4188, %v4187
          %v4190 = vperm.slane %v1254, %v3246
          %v4191 = vsel %vm3248, %v4190, %v4189
          %v4192 = vperm.slane %v1255, %v3250
          %v4193 = vsel %vm3252, %v4192, %v4191
          %v4194 = vperm.slane %v1256, %v3254
          %v4195 = vsel %vm3256, %v4194, %v4193
          %v4196 = vperm.slane %v1257, %v3258
          %v4197 = vsel %vm3260, %v4196, %v4195
          %v4198 = vperm.slane %v1258, %v3262
          %v4199 = vsel %vm3264, %v4198, %v4197
          %v4200 = vperm.slane %v1259, %v3266
          %v4201 = vsel %vm3268, %v4200, %v4199
          %v4202 = vperm.slane %v1260, %v3270
          %v4203 = vsel %vm3272, %v4202, %v4201
          %v4204 = vperm.slane %v1261, %v3274
          %v4205 = vsel %vm3276, %v4204, %v4203
          %v4206 = vperm.slane %v1262, %v3278
          %v4207 = vsel %vm3280, %v4206, %v4205
          %v4208 = vperm.slane %v1263, %v3282
          %v4209 = vsel %vm3284, %v4208, %v4207
          %v4210 = vperm.slane %v1264, %v3286
          %v4211 = vsel %vm3288, %v4210, %v4209
          %v4212 = vperm.slane %v1265, %v3290
          %v4213 = vsel %vm3292, %v4212, %v4211
          %v4214 = vperm.slane %v1266, %v3294
          %v4215 = vsel %vm3296, %v4214, %v4213
          %v4216 = vperm.slane %v1267, %v3298
          %v4217 = vsel %vm3300, %v4216, %v4215
          %v4218 = vperm.slane %v1268, %v3240
          %v4219 = vperm.slane %v1269, %v3242
          %v4220 = vsel %vm3244, %v4219, %v4218
          %v4221 = vperm.slane %v1270, %v3246
          %v4222 = vsel %vm3248, %v4221, %v4220
          %v4223 = vperm.slane %v1271, %v3250
          %v4224 = vsel %vm3252, %v4223, %v4222
          %v4225 = vperm.slane %v1272, %v3254
          %v4226 = vsel %vm3256, %v4225, %v4224
          %v4227 = vperm.slane %v1273, %v3258
          %v4228 = vsel %vm3260, %v4227, %v4226
          %v4229 = vperm.slane %v1274, %v3262
          %v4230 = vsel %vm3264, %v4229, %v4228
          %v4231 = vperm.slane %v1275, %v3266
          %v4232 = vsel %vm3268, %v4231, %v4230
          %v4233 = vperm.slane %v1276, %v3270
          %v4234 = vsel %vm3272, %v4233, %v4232
          %v4235 = vperm.slane %v1277, %v3274
          %v4236 = vsel %vm3276, %v4235, %v4234
          %v4237 = vperm.slane %v1278, %v3278
          %v4238 = vsel %vm3280, %v4237, %v4236
          %v4239 = vperm.slane %v1279, %v3282
          %v4240 = vsel %vm3284, %v4239, %v4238
          %v4241 = vperm.slane %v1280, %v3286
          %v4242 = vsel %vm3288, %v4241, %v4240
          %v4243 = vperm.slane %v1281, %v3290
          %v4244 = vsel %vm3292, %v4243, %v4242
          %v4245 = vperm.slane %v1282, %v3294
          %v4246 = vsel %vm3296, %v4245, %v4244
          %v4247 = vperm.slane %v1283, %v3298
          %v4248 = vsel %vm3300, %v4247, %v4246
          %v4249 = vperm.slane %v1284, %v3240
          %v4250 = vperm.slane %v1285, %v3242
          %v4251 = vsel %vm3244, %v4250, %v4249
          %v4252 = vperm.slane %v1286, %v3246
          %v4253 = vsel %vm3248, %v4252, %v4251
          %v4254 = vperm.slane %v1287, %v3250
          %v4255 = vsel %vm3252, %v4254, %v4253
          %v4256 = vperm.slane %v1288, %v3254
          %v4257 = vsel %vm3256, %v4256, %v4255
          %v4258 = vperm.slane %v1289, %v3258
          %v4259 = vsel %vm3260, %v4258, %v4257
          %v4260 = vperm.slane %v1290, %v3262
          %v4261 = vsel %vm3264, %v4260, %v4259
          %v4262 = vperm.slane %v1291, %v3266
          %v4263 = vsel %vm3268, %v4262, %v4261
          %v4264 = vperm.slane %v1292, %v3270
          %v4265 = vsel %vm3272, %v4264, %v4263
          %v4266 = vperm.slane %v1293, %v3274
          %v4267 = vsel %vm3276, %v4266, %v4265
          %v4268 = vperm.slane %v1294, %v3278
          %v4269 = vsel %vm3280, %v4268, %v4267
          %v4270 = vperm.slane %v1295, %v3282
          %v4271 = vsel %vm3284, %v4270, %v4269
          %v4272 = vperm.slane %v1296, %v3286
          %v4273 = vsel %vm3288, %v4272, %v4271
          %v4274 = vperm.slane %v1297, %v3290
          %v4275 = vsel %vm3292, %v4274, %v4273
          %v4276 = vperm.slane %v1298, %v3294
          %v4277 = vsel %vm3296, %v4276, %v4275
          %v4278 = vperm.slane %v1299, %v3298
          %v4279 = vsel %vm3300, %v4278, %v4277
          %v4280 = vperm.slane %v1300, %v3240
          %v4281 = vperm.slane %v1301, %v3242
          %v4282 = vsel %vm3244, %v4281, %v4280
          %v4283 = vperm.slane %v1302, %v3246
          %v4284 = vsel %vm3248, %v4283, %v4282
          %v4285 = vperm.slane %v1303, %v3250
          %v4286 = vsel %vm3252, %v4285, %v4284
          %v4287 = vperm.slane %v1304, %v3254
          %v4288 = vsel %vm3256, %v4287, %v4286
          %v4289 = vperm.slane %v1305, %v3258
          %v4290 = vsel %vm3260, %v4289, %v4288
          %v4291 = vperm.slane %v1306, %v3262
          %v4292 = vsel %vm3264, %v4291, %v4290
          %v4293 = vperm.slane %v1307, %v3266
          %v4294 = vsel %vm3268, %v4293, %v4292
          %v4295 = vperm.slane %v1308, %v3270
          %v4296 = vsel %vm3272, %v4295, %v4294
          %v4297 = vperm.slane %v1309, %v3274
          %v4298 = vsel %vm3276, %v4297, %v4296
          %v4299 = vperm.slane %v1310, %v3278
          %v4300 = vsel %vm3280, %v4299, %v4298
          %v4301 = vperm.slane %v1311, %v3282
          %v4302 = vsel %vm3284, %v4301, %v4300
          %v4303 = vperm.slane %v1312, %v3286
          %v4304 = vsel %vm3288, %v4303, %v4302
          %v4305 = vperm.slane %v1313, %v3290
          %v4306 = vsel %vm3292, %v4305, %v4304
          %v4307 = vperm.slane %v1314, %v3294
          %v4308 = vsel %vm3296, %v4307, %v4306
          %v4309 = vperm.slane %v1315, %v3298
          %v4310 = vsel %vm3300, %v4309, %v4308
          %v4311 = vperm.slane %v1316, %v3240
          %v4312 = vperm.slane %v1317, %v3242
          %v4313 = vsel %vm3244, %v4312, %v4311
          %v4314 = vperm.slane %v1318, %v3246
          %v4315 = vsel %vm3248, %v4314, %v4313
          %v4316 = vperm.slane %v1319, %v3250
          %v4317 = vsel %vm3252, %v4316, %v4315
          %v4318 = vperm.slane %v1320, %v3254
          %v4319 = vsel %vm3256, %v4318, %v4317
          %v4320 = vperm.slane %v1321, %v3258
          %v4321 = vsel %vm3260, %v4320, %v4319
          %v4322 = vperm.slane %v1322, %v3262
          %v4323 = vsel %vm3264, %v4322, %v4321
          %v4324 = vperm.slane %v1323, %v3266
          %v4325 = vsel %vm3268, %v4324, %v4323
          %v4326 = vperm.slane %v1324, %v3270
          %v4327 = vsel %vm3272, %v4326, %v4325
          %v4328 = vperm.slane %v1325, %v3274
          %v4329 = vsel %vm3276, %v4328, %v4327
          %v4330 = vperm.slane %v1326, %v3278
          %v4331 = vsel %vm3280, %v4330, %v4329
          %v4332 = vperm.slane %v1327, %v3282
          %v4333 = vsel %vm3284, %v4332, %v4331
          %v4334 = vperm.slane %v1328, %v3286
          %v4335 = vsel %vm3288, %v4334, %v4333
          %v4336 = vperm.slane %v1329, %v3290
          %v4337 = vsel %vm3292, %v4336, %v4335
          %v4338 = vperm.slane %v1330, %v3294
          %v4339 = vsel %vm3296, %v4338, %v4337
          %v4340 = vperm.slane %v1331, %v3298
          %v4341 = vsel %vm3300, %v4340, %v4339
          %v4342 = vperm.slane %v1332, %v3240
          %v4343 = vperm.slane %v1333, %v3242
          %v4344 = vsel %vm3244, %v4343, %v4342
          %v4345 = vperm.slane %v1334, %v3246
          %v4346 = vsel %vm3248, %v4345, %v4344
          %v4347 = vperm.slane %v1335, %v3250
          %v4348 = vsel %vm3252, %v4347, %v4346
          %v4349 = vperm.slane %v1336, %v3254
          %v4350 = vsel %vm3256, %v4349, %v4348
          %v4351 = vperm.slane %v1337, %v3258
          %v4352 = vsel %vm3260, %v4351, %v4350
          %v4353 = vperm.slane %v1338, %v3262
          %v4354 = vsel %vm3264, %v4353, %v4352
          %v4355 = vperm.slane %v1339, %v3266
          %v4356 = vsel %vm3268, %v4355, %v4354
          %v4357 = vperm.slane %v1340, %v3270
          %v4358 = vsel %vm3272, %v4357, %v4356
          %v4359 = vperm.slane %v1341, %v3274
          %v4360 = vsel %vm3276, %v4359, %v4358
          %v4367 = vperm.slane %v4186, 0
          %v4368 = vperm.slane %v4186, 1
          %v4369 = vperm.slane %v4186, 2
          %v4370 = vperm.slane %v4186, 3
          %v4371 = vperm.slane %v4186, 4
          %v4372 = vperm.slane %v4186, 5
          %v4373 = vperm.slane %v4186, 6
          %v4374 = vperm.slane %v4186, 7
          %vm4383 = vcmask 654336
          %v4384 = vsel %vm4383, %v4360, 0
          %4386 = vmatpush.msra.mxu0 %v3586
          %4387 = vmatpush.msra.mxu0 %v3578
          %4388 = vmatpush.msra.mxu0 %v3570
          %4389 = vmatpush.msra.mxu0 %v3562
          %4390 = vmatpush.msra.mxu0 %v3554
          %4391 = vmatpush.msra.mxu0 %v3546
          %4392 = vmatpush.msra.mxu0 %v3538
          %4393 = vmatpush.msra.mxu0 %v3530
          %4394 = vmatpush.msra.mxu0 %v3522
          %4395 = vmatpush.msra.mxu0 %v3514
          %4396 = vmatpush.msra.mxu0 %v3506
          %4397 = vmatpush.msra.mxu0 %v3498
          %4398 = vmatpush.msra.mxu0 %v3490
          %4399 = vmatpush.msra.mxu0 %v3482
          %4400 = vmatpush.msra.mxu0 %v3474
          %4401 = vmatpush.msra.mxu0 %v3466
          %4402 = vmatmul.f32.gmra.mxu0 %v4217
          %v4403 = vpop.f32.mrf.mxu0
          %v4404 = vadd.f32 %v4367, %v4403
          %4405 = vdwg.mxu0
          %4406 = vmatpush.msra.mxu0 %v3714
          %4407 = vmatpush.msra.mxu0 %v3706
          %4408 = vmatpush.msra.mxu0 %v3698
          %4409 = vmatpush.msra.mxu0 %v3690
          %4410 = vmatpush.msra.mxu0 %v3682
          %4411 = vmatpush.msra.mxu0 %v3674
          %4412 = vmatpush.msra.mxu0 %v3666
          %4413 = vmatpush.msra.mxu0 %v3658
          %4414 = vmatpush.msra.mxu0 %v3650
          %4415 = vmatpush.msra.mxu0 %v3642
          %4416 = vmatpush.msra.mxu0 %v3634
          %4417 = vmatpush.msra.mxu0 %v3626
          %4418 = vmatpush.msra.mxu0 %v3618
          %4419 = vmatpush.msra.mxu0 %v3610
          %4420 = vmatpush.msra.mxu0 %v3602
          %4421 = vmatpush.msra.mxu0 %v3594
          %4422 = vmatmul.f32.gmra.mxu0 %v4248
          %v4423 = vpop.f32.mrf.mxu0
          %v4424 = vadd.f32 %v4404, %v4423
          %4425 = vdwg.mxu0
          %4426 = vmatpush.msra.mxu0 %v3842
          %4427 = vmatpush.msra.mxu0 %v3834
          %4428 = vmatpush.msra.mxu0 %v3826
          %4429 = vmatpush.msra.mxu0 %v3818
          %4430 = vmatpush.msra.mxu0 %v3810
          %4431 = vmatpush.msra.mxu0 %v3802
          %4432 = vmatpush.msra.mxu0 %v3794
          %4433 = vmatpush.msra.mxu0 %v3786
          %4434 = vmatpush.msra.mxu0 %v3778
          %4435 = vmatpush.msra.mxu0 %v3770
          %4436 = vmatpush.msra.mxu0 %v3762
          %4437 = vmatpush.msra.mxu0 %v3754
          %4438 = vmatpush.msra.mxu0 %v3746
          %4439 = vmatpush.msra.mxu0 %v3738
          %4440 = vmatpush.msra.mxu0 %v3730
          %4441 = vmatpush.msra.mxu0 %v3722
          %4442 = vmatmul.f32.gmra.mxu0 %v4279
          %v4443 = vpop.f32.mrf.mxu0
          %v4444 = vadd.f32 %v4424, %v4443
          %4445 = vdwg.mxu0
          %4446 = vmatpush.msra.mxu0 %v3970
          %4447 = vmatpush.msra.mxu0 %v3962
          %4448 = vmatpush.msra.mxu0 %v3954
          %4449 = vmatpush.msra.mxu0 %v3946
          %4450 = vmatpush.msra.mxu0 %v3938
          %4451 = vmatpush.msra.mxu0 %v3930
          %4452 = vmatpush.msra.mxu0 %v3922
          %4453 = vmatpush.msra.mxu0 %v3914
          %4454 = vmatpush.msra.mxu0 %v3906
          %4455 = vmatpush.msra.mxu0 %v3898
          %4456 = vmatpush.msra.mxu0 %v3890
          %4457 = vmatpush.msra.mxu0 %v3882
          %4458 = vmatpush.msra.mxu0 %v3874
          %4459 = vmatpush.msra.mxu0 %v3866
          %4460 = vmatpush.msra.mxu0 %v3858
          %4461 = vmatpush.msra.mxu0 %v3850
          %4462 = vmatmul.f32.gmra.mxu0 %v4310
          %v4463 = vpop.f32.mrf.mxu0
          %v4464 = vadd.f32 %v4444, %v4463
          %4465 = vdwg.mxu0
          %4466 = vmatpush.msra.mxu0 %v4098
          %4467 = vmatpush.msra.mxu0 %v4090
          %4468 = vmatpush.msra.mxu0 %v4082
          %4469 = vmatpush.msra.mxu0 %v4074
          %4470 = vmatpush.msra.mxu0 %v4066
          %4471 = vmatpush.msra.mxu0 %v4058
          %4472 = vmatpush.msra.mxu0 %v4050
          %4473 = vmatpush.msra.mxu0 %v4042
          %4474 = vmatpush.msra.mxu0 %v4034
          %4475 = vmatpush.msra.mxu0 %v4026
          %4476 = vmatpush.msra.mxu0 %v4018
          %4477 = vmatpush.msra.mxu0 %v4010
          %4478 = vmatpush.msra.mxu0 %v4002
          %4479 = vmatpush.msra.mxu0 %v3994
          %4480 = vmatpush.msra.mxu0 %v3986
          %4481 = vmatpush.msra.mxu0 %v3978
          %4482 = vmatmul.f32.gmra.mxu0 %v4341
          %v4483 = vpop.f32.mrf.mxu0
          %v4484 = vadd.f32 %v4464, %v4483
          %4485 = vdwg.mxu0
          %4486 = vmatpush.msra.mxu0 0.0
          %4487 = vmatpush.msra.mxu0 0.0
          %4488 = vmatpush.msra.mxu0 0.0
          %4489 = vmatpush.msra.mxu0 0.0
          %4490 = vmatpush.msra.mxu0 0.0
          %4491 = vmatpush.msra.mxu0 0.0
          %4492 = vmatpush.msra.mxu0 %v4178
          %4493 = vmatpush.msra.mxu0 %v4170
          %4494 = vmatpush.msra.mxu0 %v4162
          %4495 = vmatpush.msra.mxu0 %v4154
          %4496 = vmatpush.msra.mxu0 %v4146
          %4497 = vmatpush.msra.mxu0 %v4138
          %4498 = vmatpush.msra.mxu0 %v4130
          %4499 = vmatpush.msra.mxu0 %v4122
          %4500 = vmatpush.msra.mxu0 %v4114
          %4501 = vmatpush.msra.mxu0 %v4106
          %4502 = vmatmul.f32.gmra.mxu0 %v4384
          %v4503 = vpop.f32.mrf.mxu0
          %v4504 = vadd.f32 %v4484, %v4503
          %4505 = vdwg.mxu0
          %4506 = vmatpush.msra.mxu0 %v3587
          %4507 = vmatpush.msra.mxu0 %v3579
          %4508 = vmatpush.msra.mxu0 %v3571
          %4509 = vmatpush.msra.mxu0 %v3563
          %4510 = vmatpush.msra.mxu0 %v3555
          %4511 = vmatpush.msra.mxu0 %v3547
          %4512 = vmatpush.msra.mxu0 %v3539
          %4513 = vmatpush.msra.mxu0 %v3531
          %4514 = vmatpush.msra.mxu0 %v3523
          %4515 = vmatpush.msra.mxu0 %v3515
          %4516 = vmatpush.msra.mxu0 %v3507
          %4517 = vmatpush.msra.mxu0 %v3499
          %4518 = vmatpush.msra.mxu0 %v3491
          %4519 = vmatpush.msra.mxu0 %v3483
          %4520 = vmatpush.msra.mxu0 %v3475
          %4521 = vmatpush.msra.mxu0 %v3467
          %4522 = vmatmul.f32.gmra.mxu0 %v4217
          %v4523 = vpop.f32.mrf.mxu0
          %v4524 = vadd.f32 %v4368, %v4523
          %4525 = vdwg.mxu0
          %4526 = vmatpush.msra.mxu0 %v3715
          %4527 = vmatpush.msra.mxu0 %v3707
          %4528 = vmatpush.msra.mxu0 %v3699
          %4529 = vmatpush.msra.mxu0 %v3691
          %4530 = vmatpush.msra.mxu0 %v3683
          %4531 = vmatpush.msra.mxu0 %v3675
          %4532 = vmatpush.msra.mxu0 %v3667
          %4533 = vmatpush.msra.mxu0 %v3659
          %4534 = vmatpush.msra.mxu0 %v3651
          %4535 = vmatpush.msra.mxu0 %v3643
          %4536 = vmatpush.msra.mxu0 %v3635
          %4537 = vmatpush.msra.mxu0 %v3627
          %4538 = vmatpush.msra.mxu0 %v3619
          %4539 = vmatpush.msra.mxu0 %v3611
          %4540 = vmatpush.msra.mxu0 %v3603
          %4541 = vmatpush.msra.mxu0 %v3595
          %4542 = vmatmul.f32.gmra.mxu0 %v4248
          %v4543 = vpop.f32.mrf.mxu0
          %v4544 = vadd.f32 %v4524, %v4543
          %4545 = vdwg.mxu0
          %4546 = vmatpush.msra.mxu0 %v3843
          %4547 = vmatpush.msra.mxu0 %v3835
          %4548 = vmatpush.msra.mxu0 %v3827
          %4549 = vmatpush.msra.mxu0 %v3819
          %4550 = vmatpush.msra.mxu0 %v3811
          %4551 = vmatpush.msra.mxu0 %v3803
          %4552 = vmatpush.msra.mxu0 %v3795
          %4553 = vmatpush.msra.mxu0 %v3787
          %4554 = vmatpush.msra.mxu0 %v3779
          %4555 = vmatpush.msra.mxu0 %v3771
          %4556 = vmatpush.msra.mxu0 %v3763
          %4557 = vmatpush.msra.mxu0 %v3755
          %4558 = vmatpush.msra.mxu0 %v3747
          %4559 = vmatpush.msra.mxu0 %v3739
          %4560 = vmatpush.msra.mxu0 %v3731
          %4561 = vmatpush.msra.mxu0 %v3723
          %4562 = vmatmul.f32.gmra.mxu0 %v4279
          %v4563 = vpop.f32.mrf.mxu0
          %v4564 = vadd.f32 %v4544, %v4563
          %4565 = vdwg.mxu0
          %4566 = vmatpush.msra.mxu0 %v3971
          %4567 = vmatpush.msra.mxu0 %v3963
          %4568 = vmatpush.msra.mxu0 %v3955
          %4569 = vmatpush.msra.mxu0 %v3947
          %4570 = vmatpush.msra.mxu0 %v3939
          %4571 = vmatpush.msra.mxu0 %v3931
          %4572 = vmatpush.msra.mxu0 %v3923
          %4573 = vmatpush.msra.mxu0 %v3915
          %4574 = vmatpush.msra.mxu0 %v3907
          %4575 = vmatpush.msra.mxu0 %v3899
          %4576 = vmatpush.msra.mxu0 %v3891
          %4577 = vmatpush.msra.mxu0 %v3883
          %4578 = vmatpush.msra.mxu0 %v3875
          %4579 = vmatpush.msra.mxu0 %v3867
          %4580 = vmatpush.msra.mxu0 %v3859
          %4581 = vmatpush.msra.mxu0 %v3851
          %4582 = vmatmul.f32.gmra.mxu0 %v4310
          %v4583 = vpop.f32.mrf.mxu0
          %v4584 = vadd.f32 %v4564, %v4583
          %4585 = vdwg.mxu0
          %4586 = vmatpush.msra.mxu0 %v4099
          %4587 = vmatpush.msra.mxu0 %v4091
          %4588 = vmatpush.msra.mxu0 %v4083
          %4589 = vmatpush.msra.mxu0 %v4075
          %4590 = vmatpush.msra.mxu0 %v4067
          %4591 = vmatpush.msra.mxu0 %v4059
          %4592 = vmatpush.msra.mxu0 %v4051
          %4593 = vmatpush.msra.mxu0 %v4043
          %4594 = vmatpush.msra.mxu0 %v4035
          %4595 = vmatpush.msra.mxu0 %v4027
          %4596 = vmatpush.msra.mxu0 %v4019
          %4597 = vmatpush.msra.mxu0 %v4011
          %4598 = vmatpush.msra.mxu0 %v4003
          %4599 = vmatpush.msra.mxu0 %v3995
          %4600 = vmatpush.msra.mxu0 %v3987
          %4601 = vmatpush.msra.mxu0 %v3979
          %4602 = vmatmul.f32.gmra.mxu0 %v4341
          %v4603 = vpop.f32.mrf.mxu0
          %v4604 = vadd.f32 %v4584, %v4603
          %4605 = vdwg.mxu0
          %4606 = vmatpush.msra.mxu0 0.0
          %4607 = vmatpush.msra.mxu0 0.0
          %4608 = vmatpush.msra.mxu0 0.0
          %4609 = vmatpush.msra.mxu0 0.0
          %4610 = vmatpush.msra.mxu0 0.0
          %4611 = vmatpush.msra.mxu0 0.0
          %4612 = vmatpush.msra.mxu0 %v4179
          %4613 = vmatpush.msra.mxu0 %v4171
          %4614 = vmatpush.msra.mxu0 %v4163
          %4615 = vmatpush.msra.mxu0 %v4155
          %4616 = vmatpush.msra.mxu0 %v4147
          %4617 = vmatpush.msra.mxu0 %v4139
          %4618 = vmatpush.msra.mxu0 %v4131
          %4619 = vmatpush.msra.mxu0 %v4123
          %4620 = vmatpush.msra.mxu0 %v4115
          %4621 = vmatpush.msra.mxu0 %v4107
          %4622 = vmatmul.f32.gmra.mxu0 %v4384
          %v4623 = vpop.f32.mrf.mxu0
          %v4624 = vadd.f32 %v4604, %v4623
          %4625 = vdwg.mxu0
          %4626 = vmatpush.msra.mxu0 %v3588
          %4627 = vmatpush.msra.mxu0 %v3580
          %4628 = vmatpush.msra.mxu0 %v3572
          %4629 = vmatpush.msra.mxu0 %v3564
          %4630 = vmatpush.msra.mxu0 %v3556
          %4631 = vmatpush.msra.mxu0 %v3548
          %4632 = vmatpush.msra.mxu0 %v3540
          %4633 = vmatpush.msra.mxu0 %v3532
          %4634 = vmatpush.msra.mxu0 %v3524
          %4635 = vmatpush.msra.mxu0 %v3516
          %4636 = vmatpush.msra.mxu0 %v3508
          %4637 = vmatpush.msra.mxu0 %v3500
          %4638 = vmatpush.msra.mxu0 %v3492
          %4639 = vmatpush.msra.mxu0 %v3484
          %4640 = vmatpush.msra.mxu0 %v3476
          %4641 = vmatpush.msra.mxu0 %v3468
          %4642 = vmatmul.f32.gmra.mxu0 %v4217
          %v4643 = vpop.f32.mrf.mxu0
          %v4644 = vadd.f32 %v4369, %v4643
          %4645 = vdwg.mxu0
          %4646 = vmatpush.msra.mxu0 %v3716
          %4647 = vmatpush.msra.mxu0 %v3708
          %4648 = vmatpush.msra.mxu0 %v3700
          %4649 = vmatpush.msra.mxu0 %v3692
          %4650 = vmatpush.msra.mxu0 %v3684
          %4651 = vmatpush.msra.mxu0 %v3676
          %4652 = vmatpush.msra.mxu0 %v3668
          %4653 = vmatpush.msra.mxu0 %v3660
          %4654 = vmatpush.msra.mxu0 %v3652
          %4655 = vmatpush.msra.mxu0 %v3644
          %4656 = vmatpush.msra.mxu0 %v3636
          %4657 = vmatpush.msra.mxu0 %v3628
          %4658 = vmatpush.msra.mxu0 %v3620
          %4659 = vmatpush.msra.mxu0 %v3612
          %4660 = vmatpush.msra.mxu0 %v3604
          %4661 = vmatpush.msra.mxu0 %v3596
          %4662 = vmatmul.f32.gmra.mxu0 %v4248
          %v4663 = vpop.f32.mrf.mxu0
          %v4664 = vadd.f32 %v4644, %v4663
          %4665 = vdwg.mxu0
          %4666 = vmatpush.msra.mxu0 %v3844
          %4667 = vmatpush.msra.mxu0 %v3836
          %4668 = vmatpush.msra.mxu0 %v3828
          %4669 = vmatpush.msra.mxu0 %v3820
          %4670 = vmatpush.msra.mxu0 %v3812
          %4671 = vmatpush.msra.mxu0 %v3804
          %4672 = vmatpush.msra.mxu0 %v3796
          %4673 = vmatpush.msra.mxu0 %v3788
          %4674 = vmatpush.msra.mxu0 %v3780
          %4675 = vmatpush.msra.mxu0 %v3772
          %4676 = vmatpush.msra.mxu0 %v3764
          %4677 = vmatpush.msra.mxu0 %v3756
          %4678 = vmatpush.msra.mxu0 %v3748
          %4679 = vmatpush.msra.mxu0 %v3740
          %4680 = vmatpush.msra.mxu0 %v3732
          %4681 = vmatpush.msra.mxu0 %v3724
          %4682 = vmatmul.f32.gmra.mxu0 %v4279
          %v4683 = vpop.f32.mrf.mxu0
          %v4684 = vadd.f32 %v4664, %v4683
          %4685 = vdwg.mxu0
          %4686 = vmatpush.msra.mxu0 %v3972
          %4687 = vmatpush.msra.mxu0 %v3964
          %4688 = vmatpush.msra.mxu0 %v3956
          %4689 = vmatpush.msra.mxu0 %v3948
          %4690 = vmatpush.msra.mxu0 %v3940
          %4691 = vmatpush.msra.mxu0 %v3932
          %4692 = vmatpush.msra.mxu0 %v3924
          %4693 = vmatpush.msra.mxu0 %v3916
          %4694 = vmatpush.msra.mxu0 %v3908
          %4695 = vmatpush.msra.mxu0 %v3900
          %4696 = vmatpush.msra.mxu0 %v3892
          %4697 = vmatpush.msra.mxu0 %v3884
          %4698 = vmatpush.msra.mxu0 %v3876
          %4699 = vmatpush.msra.mxu0 %v3868
          %4700 = vmatpush.msra.mxu0 %v3860
          %4701 = vmatpush.msra.mxu0 %v3852
          %4702 = vmatmul.f32.gmra.mxu0 %v4310
          %v4703 = vpop.f32.mrf.mxu0
          %v4704 = vadd.f32 %v4684, %v4703
          %4705 = vdwg.mxu0
          %4706 = vmatpush.msra.mxu0 %v4100
          %4707 = vmatpush.msra.mxu0 %v4092
          %4708 = vmatpush.msra.mxu0 %v4084
          %4709 = vmatpush.msra.mxu0 %v4076
          %4710 = vmatpush.msra.mxu0 %v4068
          %4711 = vmatpush.msra.mxu0 %v4060
          %4712 = vmatpush.msra.mxu0 %v4052
          %4713 = vmatpush.msra.mxu0 %v4044
          %4714 = vmatpush.msra.mxu0 %v4036
          %4715 = vmatpush.msra.mxu0 %v4028
          %4716 = vmatpush.msra.mxu0 %v4020
          %4717 = vmatpush.msra.mxu0 %v4012
          %4718 = vmatpush.msra.mxu0 %v4004
          %4719 = vmatpush.msra.mxu0 %v3996
          %4720 = vmatpush.msra.mxu0 %v3988
          %4721 = vmatpush.msra.mxu0 %v3980
          %4722 = vmatmul.f32.gmra.mxu0 %v4341
          %v4723 = vpop.f32.mrf.mxu0
          %v4724 = vadd.f32 %v4704, %v4723
          %4725 = vdwg.mxu0
          %4726 = vmatpush.msra.mxu0 0.0
          %4727 = vmatpush.msra.mxu0 0.0
          %4728 = vmatpush.msra.mxu0 0.0
          %4729 = vmatpush.msra.mxu0 0.0
          %4730 = vmatpush.msra.mxu0 0.0
          %4731 = vmatpush.msra.mxu0 0.0
          %4732 = vmatpush.msra.mxu0 %v4180
          %4733 = vmatpush.msra.mxu0 %v4172
          %4734 = vmatpush.msra.mxu0 %v4164
          %4735 = vmatpush.msra.mxu0 %v4156
          %4736 = vmatpush.msra.mxu0 %v4148
          %4737 = vmatpush.msra.mxu0 %v4140
          %4738 = vmatpush.msra.mxu0 %v4132
          %4739 = vmatpush.msra.mxu0 %v4124
          %4740 = vmatpush.msra.mxu0 %v4116
          %4741 = vmatpush.msra.mxu0 %v4108
          %4742 = vmatmul.f32.gmra.mxu0 %v4384
          %v4743 = vpop.f32.mrf.mxu0
          %v4744 = vadd.f32 %v4724, %v4743
          %4745 = vdwg.mxu0
          %4746 = vmatpush.msra.mxu0 %v3589
          %4747 = vmatpush.msra.mxu0 %v3581
          %4748 = vmatpush.msra.mxu0 %v3573
          %4749 = vmatpush.msra.mxu0 %v3565
          %4750 = vmatpush.msra.mxu0 %v3557
          %4751 = vmatpush.msra.mxu0 %v3549
          %4752 = vmatpush.msra.mxu0 %v3541
          %4753 = vmatpush.msra.mxu0 %v3533
          %4754 = vmatpush.msra.mxu0 %v3525
          %4755 = vmatpush.msra.mxu0 %v3517
          %4756 = vmatpush.msra.mxu0 %v3509
          %4757 = vmatpush.msra.mxu0 %v3501
          %4758 = vmatpush.msra.mxu0 %v3493
          %4759 = vmatpush.msra.mxu0 %v3485
          %4760 = vmatpush.msra.mxu0 %v3477
          %4761 = vmatpush.msra.mxu0 %v3469
          %4762 = vmatmul.f32.gmra.mxu0 %v4217
          %v4763 = vpop.f32.mrf.mxu0
          %v4764 = vadd.f32 %v4370, %v4763
          %4765 = vdwg.mxu0
          %4766 = vmatpush.msra.mxu0 %v3717
          %4767 = vmatpush.msra.mxu0 %v3709
          %4768 = vmatpush.msra.mxu0 %v3701
          %4769 = vmatpush.msra.mxu0 %v3693
          %4770 = vmatpush.msra.mxu0 %v3685
          %4771 = vmatpush.msra.mxu0 %v3677
          %4772 = vmatpush.msra.mxu0 %v3669
          %4773 = vmatpush.msra.mxu0 %v3661
          %4774 = vmatpush.msra.mxu0 %v3653
          %4775 = vmatpush.msra.mxu0 %v3645
          %4776 = vmatpush.msra.mxu0 %v3637
          %4777 = vmatpush.msra.mxu0 %v3629
          %4778 = vmatpush.msra.mxu0 %v3621
          %4779 = vmatpush.msra.mxu0 %v3613
          %4780 = vmatpush.msra.mxu0 %v3605
          %4781 = vmatpush.msra.mxu0 %v3597
          %4782 = vmatmul.f32.gmra.mxu0 %v4248
          %v4783 = vpop.f32.mrf.mxu0
          %v4784 = vadd.f32 %v4764, %v4783
          %4785 = vdwg.mxu0
          %4786 = vmatpush.msra.mxu0 %v3845
          %4787 = vmatpush.msra.mxu0 %v3837
          %4788 = vmatpush.msra.mxu0 %v3829
          %4789 = vmatpush.msra.mxu0 %v3821
          %4790 = vmatpush.msra.mxu0 %v3813
          %4791 = vmatpush.msra.mxu0 %v3805
          %4792 = vmatpush.msra.mxu0 %v3797
          %4793 = vmatpush.msra.mxu0 %v3789
          %4794 = vmatpush.msra.mxu0 %v3781
          %4795 = vmatpush.msra.mxu0 %v3773
          %4796 = vmatpush.msra.mxu0 %v3765
          %4797 = vmatpush.msra.mxu0 %v3757
          %4798 = vmatpush.msra.mxu0 %v3749
          %4799 = vmatpush.msra.mxu0 %v3741
          %4800 = vmatpush.msra.mxu0 %v3733
          %4801 = vmatpush.msra.mxu0 %v3725
          %4802 = vmatmul.f32.gmra.mxu0 %v4279
          %v4803 = vpop.f32.mrf.mxu0
          %v4804 = vadd.f32 %v4784, %v4803
          %4805 = vdwg.mxu0
          %4806 = vmatpush.msra.mxu0 %v3973
          %4807 = vmatpush.msra.mxu0 %v3965
          %4808 = vmatpush.msra.mxu0 %v3957
          %4809 = vmatpush.msra.mxu0 %v3949
          %4810 = vmatpush.msra.mxu0 %v3941
          %4811 = vmatpush.msra.mxu0 %v3933
          %4812 = vmatpush.msra.mxu0 %v3925
          %4813 = vmatpush.msra.mxu0 %v3917
          %4814 = vmatpush.msra.mxu0 %v3909
          %4815 = vmatpush.msra.mxu0 %v3901
          %4816 = vmatpush.msra.mxu0 %v3893
          %4817 = vmatpush.msra.mxu0 %v3885
          %4818 = vmatpush.msra.mxu0 %v3877
          %4819 = vmatpush.msra.mxu0 %v3869
          %4820 = vmatpush.msra.mxu0 %v3861
          %4821 = vmatpush.msra.mxu0 %v3853
          %4822 = vmatmul.f32.gmra.mxu0 %v4310
          %v4823 = vpop.f32.mrf.mxu0
          %v4824 = vadd.f32 %v4804, %v4823
          %4825 = vdwg.mxu0
          %4826 = vmatpush.msra.mxu0 %v4101
          %4827 = vmatpush.msra.mxu0 %v4093
          %4828 = vmatpush.msra.mxu0 %v4085
          %4829 = vmatpush.msra.mxu0 %v4077
          %4830 = vmatpush.msra.mxu0 %v4069
          %4831 = vmatpush.msra.mxu0 %v4061
          %4832 = vmatpush.msra.mxu0 %v4053
          %4833 = vmatpush.msra.mxu0 %v4045
          %4834 = vmatpush.msra.mxu0 %v4037
          %4835 = vmatpush.msra.mxu0 %v4029
          %4836 = vmatpush.msra.mxu0 %v4021
          %4837 = vmatpush.msra.mxu0 %v4013
          %4838 = vmatpush.msra.mxu0 %v4005
          %4839 = vmatpush.msra.mxu0 %v3997
          %4840 = vmatpush.msra.mxu0 %v3989
          %4841 = vmatpush.msra.mxu0 %v3981
          %4842 = vmatmul.f32.gmra.mxu0 %v4341
          %v4843 = vpop.f32.mrf.mxu0
          %v4844 = vadd.f32 %v4824, %v4843
          %4845 = vdwg.mxu0
          %4846 = vmatpush.msra.mxu0 0.0
          %4847 = vmatpush.msra.mxu0 0.0
          %4848 = vmatpush.msra.mxu0 0.0
          %4849 = vmatpush.msra.mxu0 0.0
          %4850 = vmatpush.msra.mxu0 0.0
          %4851 = vmatpush.msra.mxu0 0.0
          %4852 = vmatpush.msra.mxu0 %v4181
          %4853 = vmatpush.msra.mxu0 %v4173
          %4854 = vmatpush.msra.mxu0 %v4165
          %4855 = vmatpush.msra.mxu0 %v4157
          %4856 = vmatpush.msra.mxu0 %v4149
          %4857 = vmatpush.msra.mxu0 %v4141
          %4858 = vmatpush.msra.mxu0 %v4133
          %4859 = vmatpush.msra.mxu0 %v4125
          %4860 = vmatpush.msra.mxu0 %v4117
          %4861 = vmatpush.msra.mxu0 %v4109
          %4862 = vmatmul.f32.gmra.mxu0 %v4384
          %v4863 = vpop.f32.mrf.mxu0
          %v4864 = vadd.f32 %v4844, %v4863
          %4865 = vdwg.mxu0
          %4866 = vmatpush.msra.mxu0 %v3590
          %4867 = vmatpush.msra.mxu0 %v3582
          %4868 = vmatpush.msra.mxu0 %v3574
          %4869 = vmatpush.msra.mxu0 %v3566
          %4870 = vmatpush.msra.mxu0 %v3558
          %4871 = vmatpush.msra.mxu0 %v3550
          %4872 = vmatpush.msra.mxu0 %v3542
          %4873 = vmatpush.msra.mxu0 %v3534
          %4874 = vmatpush.msra.mxu0 %v3526
          %4875 = vmatpush.msra.mxu0 %v3518
          %4876 = vmatpush.msra.mxu0 %v3510
          %4877 = vmatpush.msra.mxu0 %v3502
          %4878 = vmatpush.msra.mxu0 %v3494
          %4879 = vmatpush.msra.mxu0 %v3486
          %4880 = vmatpush.msra.mxu0 %v3478
          %4881 = vmatpush.msra.mxu0 %v3470
          %4882 = vmatmul.f32.gmra.mxu0 %v4217
          %v4883 = vpop.f32.mrf.mxu0
          %v4884 = vadd.f32 %v4371, %v4883
          %4885 = vdwg.mxu0
          %4886 = vmatpush.msra.mxu0 %v3718
          %4887 = vmatpush.msra.mxu0 %v3710
          %4888 = vmatpush.msra.mxu0 %v3702
          %4889 = vmatpush.msra.mxu0 %v3694
          %4890 = vmatpush.msra.mxu0 %v3686
          %4891 = vmatpush.msra.mxu0 %v3678
          %4892 = vmatpush.msra.mxu0 %v3670
          %4893 = vmatpush.msra.mxu0 %v3662
          %4894 = vmatpush.msra.mxu0 %v3654
          %4895 = vmatpush.msra.mxu0 %v3646
          %4896 = vmatpush.msra.mxu0 %v3638
          %4897 = vmatpush.msra.mxu0 %v3630
          %4898 = vmatpush.msra.mxu0 %v3622
          %4899 = vmatpush.msra.mxu0 %v3614
          %4900 = vmatpush.msra.mxu0 %v3606
          %4901 = vmatpush.msra.mxu0 %v3598
          %4902 = vmatmul.f32.gmra.mxu0 %v4248
          %v4903 = vpop.f32.mrf.mxu0
          %v4904 = vadd.f32 %v4884, %v4903
          %4905 = vdwg.mxu0
          %4906 = vmatpush.msra.mxu0 %v3846
          %4907 = vmatpush.msra.mxu0 %v3838
          %4908 = vmatpush.msra.mxu0 %v3830
          %4909 = vmatpush.msra.mxu0 %v3822
          %4910 = vmatpush.msra.mxu0 %v3814
          %4911 = vmatpush.msra.mxu0 %v3806
          %4912 = vmatpush.msra.mxu0 %v3798
          %4913 = vmatpush.msra.mxu0 %v3790
          %4914 = vmatpush.msra.mxu0 %v3782
          %4915 = vmatpush.msra.mxu0 %v3774
          %4916 = vmatpush.msra.mxu0 %v3766
          %4917 = vmatpush.msra.mxu0 %v3758
          %4918 = vmatpush.msra.mxu0 %v3750
          %4919 = vmatpush.msra.mxu0 %v3742
          %4920 = vmatpush.msra.mxu0 %v3734
          %4921 = vmatpush.msra.mxu0 %v3726
          %4922 = vmatmul.f32.gmra.mxu0 %v4279
          %v4923 = vpop.f32.mrf.mxu0
          %v4924 = vadd.f32 %v4904, %v4923
          %4925 = vdwg.mxu0
          %4926 = vmatpush.msra.mxu0 %v3974
          %4927 = vmatpush.msra.mxu0 %v3966
          %4928 = vmatpush.msra.mxu0 %v3958
          %4929 = vmatpush.msra.mxu0 %v3950
          %4930 = vmatpush.msra.mxu0 %v3942
          %4931 = vmatpush.msra.mxu0 %v3934
          %4932 = vmatpush.msra.mxu0 %v3926
          %4933 = vmatpush.msra.mxu0 %v3918
          %4934 = vmatpush.msra.mxu0 %v3910
          %4935 = vmatpush.msra.mxu0 %v3902
          %4936 = vmatpush.msra.mxu0 %v3894
          %4937 = vmatpush.msra.mxu0 %v3886
          %4938 = vmatpush.msra.mxu0 %v3878
          %4939 = vmatpush.msra.mxu0 %v3870
          %4940 = vmatpush.msra.mxu0 %v3862
          %4941 = vmatpush.msra.mxu0 %v3854
          %4942 = vmatmul.f32.gmra.mxu0 %v4310
          %v4943 = vpop.f32.mrf.mxu0
          %v4944 = vadd.f32 %v4924, %v4943
          %4945 = vdwg.mxu0
          %4946 = vmatpush.msra.mxu0 %v4102
          %4947 = vmatpush.msra.mxu0 %v4094
          %4948 = vmatpush.msra.mxu0 %v4086
          %4949 = vmatpush.msra.mxu0 %v4078
          %4950 = vmatpush.msra.mxu0 %v4070
          %4951 = vmatpush.msra.mxu0 %v4062
          %4952 = vmatpush.msra.mxu0 %v4054
          %4953 = vmatpush.msra.mxu0 %v4046
          %4954 = vmatpush.msra.mxu0 %v4038
          %4955 = vmatpush.msra.mxu0 %v4030
          %4956 = vmatpush.msra.mxu0 %v4022
          %4957 = vmatpush.msra.mxu0 %v4014
          %4958 = vmatpush.msra.mxu0 %v4006
          %4959 = vmatpush.msra.mxu0 %v3998
          %4960 = vmatpush.msra.mxu0 %v3990
          %4961 = vmatpush.msra.mxu0 %v3982
          %4962 = vmatmul.f32.gmra.mxu0 %v4341
          %v4963 = vpop.f32.mrf.mxu0
          %v4964 = vadd.f32 %v4944, %v4963
          %4965 = vdwg.mxu0
          %4966 = vmatpush.msra.mxu0 0.0
          %4967 = vmatpush.msra.mxu0 0.0
          %4968 = vmatpush.msra.mxu0 0.0
          %4969 = vmatpush.msra.mxu0 0.0
          %4970 = vmatpush.msra.mxu0 0.0
          %4971 = vmatpush.msra.mxu0 0.0
          %4972 = vmatpush.msra.mxu0 %v4182
          %4973 = vmatpush.msra.mxu0 %v4174
          %4974 = vmatpush.msra.mxu0 %v4166
          %4975 = vmatpush.msra.mxu0 %v4158
          %4976 = vmatpush.msra.mxu0 %v4150
          %4977 = vmatpush.msra.mxu0 %v4142
          %4978 = vmatpush.msra.mxu0 %v4134
          %4979 = vmatpush.msra.mxu0 %v4126
          %4980 = vmatpush.msra.mxu0 %v4118
          %4981 = vmatpush.msra.mxu0 %v4110
          %4982 = vmatmul.f32.gmra.mxu0 %v4384
          %v4983 = vpop.f32.mrf.mxu0
          %v4984 = vadd.f32 %v4964, %v4983
          %4985 = vdwg.mxu0
          %4986 = vmatpush.msra.mxu0 %v3591
          %4987 = vmatpush.msra.mxu0 %v3583
          %4988 = vmatpush.msra.mxu0 %v3575
          %4989 = vmatpush.msra.mxu0 %v3567
          %4990 = vmatpush.msra.mxu0 %v3559
          %4991 = vmatpush.msra.mxu0 %v3551
          %4992 = vmatpush.msra.mxu0 %v3543
          %4993 = vmatpush.msra.mxu0 %v3535
          %4994 = vmatpush.msra.mxu0 %v3527
          %4995 = vmatpush.msra.mxu0 %v3519
          %4996 = vmatpush.msra.mxu0 %v3511
          %4997 = vmatpush.msra.mxu0 %v3503
          %4998 = vmatpush.msra.mxu0 %v3495
          %4999 = vmatpush.msra.mxu0 %v3487
          %5000 = vmatpush.msra.mxu0 %v3479
          %5001 = vmatpush.msra.mxu0 %v3471
          %5002 = vmatmul.f32.gmra.mxu0 %v4217
          %v5003 = vpop.f32.mrf.mxu0
          %v5004 = vadd.f32 %v4372, %v5003
          %5005 = vdwg.mxu0
          %5006 = vmatpush.msra.mxu0 %v3719
          %5007 = vmatpush.msra.mxu0 %v3711
          %5008 = vmatpush.msra.mxu0 %v3703
          %5009 = vmatpush.msra.mxu0 %v3695
          %5010 = vmatpush.msra.mxu0 %v3687
          %5011 = vmatpush.msra.mxu0 %v3679
          %5012 = vmatpush.msra.mxu0 %v3671
          %5013 = vmatpush.msra.mxu0 %v3663
          %5014 = vmatpush.msra.mxu0 %v3655
          %5015 = vmatpush.msra.mxu0 %v3647
          %5016 = vmatpush.msra.mxu0 %v3639
          %5017 = vmatpush.msra.mxu0 %v3631
          %5018 = vmatpush.msra.mxu0 %v3623
          %5019 = vmatpush.msra.mxu0 %v3615
          %5020 = vmatpush.msra.mxu0 %v3607
          %5021 = vmatpush.msra.mxu0 %v3599
          %5022 = vmatmul.f32.gmra.mxu0 %v4248
          %v5023 = vpop.f32.mrf.mxu0
          %v5024 = vadd.f32 %v5004, %v5023
          %5025 = vdwg.mxu0
          %5026 = vmatpush.msra.mxu0 %v3847
          %5027 = vmatpush.msra.mxu0 %v3839
          %5028 = vmatpush.msra.mxu0 %v3831
          %5029 = vmatpush.msra.mxu0 %v3823
          %5030 = vmatpush.msra.mxu0 %v3815
          %5031 = vmatpush.msra.mxu0 %v3807
          %5032 = vmatpush.msra.mxu0 %v3799
          %5033 = vmatpush.msra.mxu0 %v3791
          %5034 = vmatpush.msra.mxu0 %v3783
          %5035 = vmatpush.msra.mxu0 %v3775
          %5036 = vmatpush.msra.mxu0 %v3767
          %5037 = vmatpush.msra.mxu0 %v3759
          %5038 = vmatpush.msra.mxu0 %v3751
          %5039 = vmatpush.msra.mxu0 %v3743
          %5040 = vmatpush.msra.mxu0 %v3735
          %5041 = vmatpush.msra.mxu0 %v3727
          %5042 = vmatmul.f32.gmra.mxu0 %v4279
          %v5043 = vpop.f32.mrf.mxu0
          %v5044 = vadd.f32 %v5024, %v5043
          %5045 = vdwg.mxu0
          %5046 = vmatpush.msra.mxu0 %v3975
          %5047 = vmatpush.msra.mxu0 %v3967
          %5048 = vmatpush.msra.mxu0 %v3959
          %5049 = vmatpush.msra.mxu0 %v3951
          %5050 = vmatpush.msra.mxu0 %v3943
          %5051 = vmatpush.msra.mxu0 %v3935
          %5052 = vmatpush.msra.mxu0 %v3927
          %5053 = vmatpush.msra.mxu0 %v3919
          %5054 = vmatpush.msra.mxu0 %v3911
          %5055 = vmatpush.msra.mxu0 %v3903
          %5056 = vmatpush.msra.mxu0 %v3895
          %5057 = vmatpush.msra.mxu0 %v3887
          %5058 = vmatpush.msra.mxu0 %v3879
          %5059 = vmatpush.msra.mxu0 %v3871
          %5060 = vmatpush.msra.mxu0 %v3863
          %5061 = vmatpush.msra.mxu0 %v3855
          %5062 = vmatmul.f32.gmra.mxu0 %v4310
          %v5063 = vpop.f32.mrf.mxu0
          %v5064 = vadd.f32 %v5044, %v5063
          %5065 = vdwg.mxu0
          %5066 = vmatpush.msra.mxu0 %v4103
          %5067 = vmatpush.msra.mxu0 %v4095
          %5068 = vmatpush.msra.mxu0 %v4087
          %5069 = vmatpush.msra.mxu0 %v4079
          %5070 = vmatpush.msra.mxu0 %v4071
          %5071 = vmatpush.msra.mxu0 %v4063
          %5072 = vmatpush.msra.mxu0 %v4055
          %5073 = vmatpush.msra.mxu0 %v4047
          %5074 = vmatpush.msra.mxu0 %v4039
          %5075 = vmatpush.msra.mxu0 %v4031
          %5076 = vmatpush.msra.mxu0 %v4023
          %5077 = vmatpush.msra.mxu0 %v4015
          %5078 = vmatpush.msra.mxu0 %v4007
          %5079 = vmatpush.msra.mxu0 %v3999
          %5080 = vmatpush.msra.mxu0 %v3991
          %5081 = vmatpush.msra.mxu0 %v3983
          %5082 = vmatmul.f32.gmra.mxu0 %v4341
          %v5083 = vpop.f32.mrf.mxu0
          %v5084 = vadd.f32 %v5064, %v5083
          %5085 = vdwg.mxu0
          %5086 = vmatpush.msra.mxu0 0.0
          %5087 = vmatpush.msra.mxu0 0.0
          %5088 = vmatpush.msra.mxu0 0.0
          %5089 = vmatpush.msra.mxu0 0.0
          %5090 = vmatpush.msra.mxu0 0.0
          %5091 = vmatpush.msra.mxu0 0.0
          %5092 = vmatpush.msra.mxu0 %v4183
          %5093 = vmatpush.msra.mxu0 %v4175
          %5094 = vmatpush.msra.mxu0 %v4167
          %5095 = vmatpush.msra.mxu0 %v4159
          %5096 = vmatpush.msra.mxu0 %v4151
          %5097 = vmatpush.msra.mxu0 %v4143
          %5098 = vmatpush.msra.mxu0 %v4135
          %5099 = vmatpush.msra.mxu0 %v4127
          %5100 = vmatpush.msra.mxu0 %v4119
          %5101 = vmatpush.msra.mxu0 %v4111
          %5102 = vmatmul.f32.gmra.mxu0 %v4384
          %v5103 = vpop.f32.mrf.mxu0
          %v5104 = vadd.f32 %v5084, %v5103
          %5105 = vdwg.mxu0
          %5106 = vmatpush.msra.mxu0 %v3592
          %5107 = vmatpush.msra.mxu0 %v3584
          %5108 = vmatpush.msra.mxu0 %v3576
          %5109 = vmatpush.msra.mxu0 %v3568
          %5110 = vmatpush.msra.mxu0 %v3560
          %5111 = vmatpush.msra.mxu0 %v3552
          %5112 = vmatpush.msra.mxu0 %v3544
          %5113 = vmatpush.msra.mxu0 %v3536
          %5114 = vmatpush.msra.mxu0 %v3528
          %5115 = vmatpush.msra.mxu0 %v3520
          %5116 = vmatpush.msra.mxu0 %v3512
          %5117 = vmatpush.msra.mxu0 %v3504
          %5118 = vmatpush.msra.mxu0 %v3496
          %5119 = vmatpush.msra.mxu0 %v3488
          %5120 = vmatpush.msra.mxu0 %v3480
          %5121 = vmatpush.msra.mxu0 %v3472
          %5122 = vmatmul.f32.gmra.mxu0 %v4217
          %v5123 = vpop.f32.mrf.mxu0
          %v5124 = vadd.f32 %v4373, %v5123
          %5125 = vdwg.mxu0
          %5126 = vmatpush.msra.mxu0 %v3720
          %5127 = vmatpush.msra.mxu0 %v3712
          %5128 = vmatpush.msra.mxu0 %v3704
          %5129 = vmatpush.msra.mxu0 %v3696
          %5130 = vmatpush.msra.mxu0 %v3688
          %5131 = vmatpush.msra.mxu0 %v3680
          %5132 = vmatpush.msra.mxu0 %v3672
          %5133 = vmatpush.msra.mxu0 %v3664
          %5134 = vmatpush.msra.mxu0 %v3656
          %5135 = vmatpush.msra.mxu0 %v3648
          %5136 = vmatpush.msra.mxu0 %v3640
          %5137 = vmatpush.msra.mxu0 %v3632
          %5138 = vmatpush.msra.mxu0 %v3624
          %5139 = vmatpush.msra.mxu0 %v3616
          %5140 = vmatpush.msra.mxu0 %v3608
          %5141 = vmatpush.msra.mxu0 %v3600
          %5142 = vmatmul.f32.gmra.mxu0 %v4248
          %v5143 = vpop.f32.mrf.mxu0
          %v5144 = vadd.f32 %v5124, %v5143
          %5145 = vdwg.mxu0
          %5146 = vmatpush.msra.mxu0 %v3848
          %5147 = vmatpush.msra.mxu0 %v3840
          %5148 = vmatpush.msra.mxu0 %v3832
          %5149 = vmatpush.msra.mxu0 %v3824
          %5150 = vmatpush.msra.mxu0 %v3816
          %5151 = vmatpush.msra.mxu0 %v3808
          %5152 = vmatpush.msra.mxu0 %v3800
          %5153 = vmatpush.msra.mxu0 %v3792
          %5154 = vmatpush.msra.mxu0 %v3784
          %5155 = vmatpush.msra.mxu0 %v3776
          %5156 = vmatpush.msra.mxu0 %v3768
          %5157 = vmatpush.msra.mxu0 %v3760
          %5158 = vmatpush.msra.mxu0 %v3752
          %5159 = vmatpush.msra.mxu0 %v3744
          %5160 = vmatpush.msra.mxu0 %v3736
          %5161 = vmatpush.msra.mxu0 %v3728
          %5162 = vmatmul.f32.gmra.mxu0 %v4279
          %v5163 = vpop.f32.mrf.mxu0
          %v5164 = vadd.f32 %v5144, %v5163
          %5165 = vdwg.mxu0
          %5166 = vmatpush.msra.mxu0 %v3976
          %5167 = vmatpush.msra.mxu0 %v3968
          %5168 = vmatpush.msra.mxu0 %v3960
          %5169 = vmatpush.msra.mxu0 %v3952
          %5170 = vmatpush.msra.mxu0 %v3944
          %5171 = vmatpush.msra.mxu0 %v3936
          %5172 = vmatpush.msra.mxu0 %v3928
          %5173 = vmatpush.msra.mxu0 %v3920
          %5174 = vmatpush.msra.mxu0 %v3912
          %5175 = vmatpush.msra.mxu0 %v3904
          %5176 = vmatpush.msra.mxu0 %v3896
          %5177 = vmatpush.msra.mxu0 %v3888
          %5178 = vmatpush.msra.mxu0 %v3880
          %5179 = vmatpush.msra.mxu0 %v3872
          %5180 = vmatpush.msra.mxu0 %v3864
          %5181 = vmatpush.msra.mxu0 %v3856
          %5182 = vmatmul.f32.gmra.mxu0 %v4310
          %v5183 = vpop.f32.mrf.mxu0
          %v5184 = vadd.f32 %v5164, %v5183
          %5185 = vdwg.mxu0
          %5186 = vmatpush.msra.mxu0 %v4104
          %5187 = vmatpush.msra.mxu0 %v4096
          %5188 = vmatpush.msra.mxu0 %v4088
          %5189 = vmatpush.msra.mxu0 %v4080
          %5190 = vmatpush.msra.mxu0 %v4072
          %5191 = vmatpush.msra.mxu0 %v4064
          %5192 = vmatpush.msra.mxu0 %v4056
          %5193 = vmatpush.msra.mxu0 %v4048
          %5194 = vmatpush.msra.mxu0 %v4040
          %5195 = vmatpush.msra.mxu0 %v4032
          %5196 = vmatpush.msra.mxu0 %v4024
          %5197 = vmatpush.msra.mxu0 %v4016
          %5198 = vmatpush.msra.mxu0 %v4008
          %5199 = vmatpush.msra.mxu0 %v4000
          %5200 = vmatpush.msra.mxu0 %v3992
          %5201 = vmatpush.msra.mxu0 %v3984
          %5202 = vmatmul.f32.gmra.mxu0 %v4341
          %v5203 = vpop.f32.mrf.mxu0
          %v5204 = vadd.f32 %v5184, %v5203
          %5205 = vdwg.mxu0
          %5206 = vmatpush.msra.mxu0 0.0
          %5207 = vmatpush.msra.mxu0 0.0
          %5208 = vmatpush.msra.mxu0 0.0
          %5209 = vmatpush.msra.mxu0 0.0
          %5210 = vmatpush.msra.mxu0 0.0
          %5211 = vmatpush.msra.mxu0 0.0
          %5212 = vmatpush.msra.mxu0 %v4184
          %5213 = vmatpush.msra.mxu0 %v4176
          %5214 = vmatpush.msra.mxu0 %v4168
          %5215 = vmatpush.msra.mxu0 %v4160
          %5216 = vmatpush.msra.mxu0 %v4152
          %5217 = vmatpush.msra.mxu0 %v4144
          %5218 = vmatpush.msra.mxu0 %v4136
          %5219 = vmatpush.msra.mxu0 %v4128
          %5220 = vmatpush.msra.mxu0 %v4120
          %5221 = vmatpush.msra.mxu0 %v4112
          %5222 = vmatmul.f32.gmra.mxu0 %v4384
          %v5223 = vpop.f32.mrf.mxu0
          %v5224 = vadd.f32 %v5204, %v5223
          %5225 = vdwg.mxu0
          %5226 = vmatpush.msra.mxu0 %v3593
          %5227 = vmatpush.msra.mxu0 %v3585
          %5228 = vmatpush.msra.mxu0 %v3577
          %5229 = vmatpush.msra.mxu0 %v3569
          %5230 = vmatpush.msra.mxu0 %v3561
          %5231 = vmatpush.msra.mxu0 %v3553
          %5232 = vmatpush.msra.mxu0 %v3545
          %5233 = vmatpush.msra.mxu0 %v3537
          %5234 = vmatpush.msra.mxu0 %v3529
          %5235 = vmatpush.msra.mxu0 %v3521
          %5236 = vmatpush.msra.mxu0 %v3513
          %5237 = vmatpush.msra.mxu0 %v3505
          %5238 = vmatpush.msra.mxu0 %v3497
          %5239 = vmatpush.msra.mxu0 %v3489
          %5240 = vmatpush.msra.mxu0 %v3481
          %5241 = vmatpush.msra.mxu0 %v3473
          %5242 = vmatmul.f32.gmra.mxu0 %v4217
          %v5243 = vpop.f32.mrf.mxu0
          %v5244 = vadd.f32 %v4374, %v5243
          %5245 = vdwg.mxu0
          %5246 = vmatpush.msra.mxu0 %v3721
          %5247 = vmatpush.msra.mxu0 %v3713
          %5248 = vmatpush.msra.mxu0 %v3705
          %5249 = vmatpush.msra.mxu0 %v3697
          %5250 = vmatpush.msra.mxu0 %v3689
          %5251 = vmatpush.msra.mxu0 %v3681
          %5252 = vmatpush.msra.mxu0 %v3673
          %5253 = vmatpush.msra.mxu0 %v3665
          %5254 = vmatpush.msra.mxu0 %v3657
          %5255 = vmatpush.msra.mxu0 %v3649
          %5256 = vmatpush.msra.mxu0 %v3641
          %5257 = vmatpush.msra.mxu0 %v3633
          %5258 = vmatpush.msra.mxu0 %v3625
          %5259 = vmatpush.msra.mxu0 %v3617
          %5260 = vmatpush.msra.mxu0 %v3609
          %5261 = vmatpush.msra.mxu0 %v3601
          %5262 = vmatmul.f32.gmra.mxu0 %v4248
          %v5263 = vpop.f32.mrf.mxu0
          %v5264 = vadd.f32 %v5244, %v5263
          %5265 = vdwg.mxu0
          %5266 = vmatpush.msra.mxu0 %v3849
          %5267 = vmatpush.msra.mxu0 %v3841
          %5268 = vmatpush.msra.mxu0 %v3833
          %5269 = vmatpush.msra.mxu0 %v3825
          %5270 = vmatpush.msra.mxu0 %v3817
          %5271 = vmatpush.msra.mxu0 %v3809
          %5272 = vmatpush.msra.mxu0 %v3801
          %5273 = vmatpush.msra.mxu0 %v3793
          %5274 = vmatpush.msra.mxu0 %v3785
          %5275 = vmatpush.msra.mxu0 %v3777
          %5276 = vmatpush.msra.mxu0 %v3769
          %5277 = vmatpush.msra.mxu0 %v3761
          %5278 = vmatpush.msra.mxu0 %v3753
          %5279 = vmatpush.msra.mxu0 %v3745
          %5280 = vmatpush.msra.mxu0 %v3737
          %5281 = vmatpush.msra.mxu0 %v3729
          %5282 = vmatmul.f32.gmra.mxu0 %v4279
          %v5283 = vpop.f32.mrf.mxu0
          %v5284 = vadd.f32 %v5264, %v5283
          %5285 = vdwg.mxu0
          %5286 = vmatpush.msra.mxu0 %v3977
          %5287 = vmatpush.msra.mxu0 %v3969
          %5288 = vmatpush.msra.mxu0 %v3961
          %5289 = vmatpush.msra.mxu0 %v3953
          %5290 = vmatpush.msra.mxu0 %v3945
          %5291 = vmatpush.msra.mxu0 %v3937
          %5292 = vmatpush.msra.mxu0 %v3929
          %5293 = vmatpush.msra.mxu0 %v3921
          %5294 = vmatpush.msra.mxu0 %v3913
          %5295 = vmatpush.msra.mxu0 %v3905
          %5296 = vmatpush.msra.mxu0 %v3897
          %5297 = vmatpush.msra.mxu0 %v3889
          %5298 = vmatpush.msra.mxu0 %v3881
          %5299 = vmatpush.msra.mxu0 %v3873
          %5300 = vmatpush.msra.mxu0 %v3865
          %5301 = vmatpush.msra.mxu0 %v3857
          %5302 = vmatmul.f32.gmra.mxu0 %v4310
          %v5303 = vpop.f32.mrf.mxu0
          %v5304 = vadd.f32 %v5284, %v5303
          %5305 = vdwg.mxu0
          %5306 = vmatpush.msra.mxu0 %v4105
          %5307 = vmatpush.msra.mxu0 %v4097
          %5308 = vmatpush.msra.mxu0 %v4089
          %5309 = vmatpush.msra.mxu0 %v4081
          %5310 = vmatpush.msra.mxu0 %v4073
          %5311 = vmatpush.msra.mxu0 %v4065
          %5312 = vmatpush.msra.mxu0 %v4057
          %5313 = vmatpush.msra.mxu0 %v4049
          %5314 = vmatpush.msra.mxu0 %v4041
          %5315 = vmatpush.msra.mxu0 %v4033
          %5316 = vmatpush.msra.mxu0 %v4025
          %5317 = vmatpush.msra.mxu0 %v4017
          %5318 = vmatpush.msra.mxu0 %v4009
          %5319 = vmatpush.msra.mxu0 %v4001
          %5320 = vmatpush.msra.mxu0 %v3993
          %5321 = vmatpush.msra.mxu0 %v3985
          %5322 = vmatmul.f32.gmra.mxu0 %v4341
          %v5323 = vpop.f32.mrf.mxu0
          %v5324 = vadd.f32 %v5304, %v5323
          %5325 = vdwg.mxu0
          %5326 = vmatpush.msra.mxu0 0.0
          %5327 = vmatpush.msra.mxu0 0.0
          %5328 = vmatpush.msra.mxu0 0.0
          %5329 = vmatpush.msra.mxu0 0.0
          %5330 = vmatpush.msra.mxu0 0.0
          %5331 = vmatpush.msra.mxu0 0.0
          %5332 = vmatpush.msra.mxu0 %v4185
          %5333 = vmatpush.msra.mxu0 %v4177
          %5334 = vmatpush.msra.mxu0 %v4169
          %5335 = vmatpush.msra.mxu0 %v4161
          %5336 = vmatpush.msra.mxu0 %v4153
          %5337 = vmatpush.msra.mxu0 %v4145
          %5338 = vmatpush.msra.mxu0 %v4137
          %5339 = vmatpush.msra.mxu0 %v4129
          %5340 = vmatpush.msra.mxu0 %v4121
          %5341 = vmatpush.msra.mxu0 %v4113
          %5342 = vmatmul.f32.gmra.mxu0 %v4384
          %v5343 = vpop.f32.mrf.mxu0
          %v5344 = vadd.f32 %v5324, %v5343
          %5345 = vdwg.mxu0
          %v5346 = vld [vmem:[%s3] sm:$0xff]
          %v5347 = vld [vmem:[%s3 + $0x8] sm:$0xff]
          %v5348 = vld [vmem:[%s3 + $0x10] sm:$0xff]
          %v5349 = vld [vmem:[%s3 + $0x18] sm:$0xff]
          %v5350 = vld [vmem:[%s3 + $0x20] sm:$0xff]
          %v5351 = vld [vmem:[%s3 + $0x28] sm:$0xff]
          %v5352 = vld [vmem:[%s3 + $0x30] sm:$0xff]
          %v5353 = vld [vmem:[%s3 + $0x38] sm:$0xff]
          %v5354 = vld [vmem:[%s3 + $0x40] sm:$0xff]
          %v5355 = vld [vmem:[%s3 + $0x48] sm:$0xff]
          %v5356 = vld [vmem:[%s3 + $0x50] sm:$0xff]
          %v5357 = vld [vmem:[%s3 + $0x58] sm:$0xff]
          %v5358 = vld [vmem:[%s3 + $0x60] sm:$0xff]
          %v5359 = vld [vmem:[%s3 + $0x68] sm:$0xff]
          %v5360 = vld [vmem:[%s3 + $0x70] sm:$0xff]
          %v5361 = vld [vmem:[%s3 + $0x78] sm:$0xff]
          %v5362 = vld [vmem:[%s3 + $0x80] sm:$0xff]
          %v5363 = vld [vmem:[%s3 + $0x88] sm:$0xff]
          %v5364 = vld [vmem:[%s3 + $0x90] sm:$0xff]
          %v5365 = vld [vmem:[%s3 + $0x98] sm:$0xff]
          %v5366 = vld [vmem:[%s3 + $0xa0] sm:$0xff]
          %v5367 = vld [vmem:[%s3 + $0xa8] sm:$0xff]
          %v5368 = vld [vmem:[%s3 + $0xb0] sm:$0xff]
          %v5369 = vld [vmem:[%s3 + $0xb8] sm:$0xff]
          %v5370 = vld [vmem:[%s3 + $0xc0] sm:$0xff]
          %v5371 = vld [vmem:[%s3 + $0xc8] sm:$0xff]
          %v5372 = vld [vmem:[%s3 + $0xd0] sm:$0xff]
          %v5373 = vld [vmem:[%s3 + $0xd8] sm:$0xff]
          %v5374 = vld [vmem:[%s3 + $0xe0] sm:$0xff]
          %v5375 = vld [vmem:[%s3 + $0xe8] sm:$0xff]
          %v5376 = vld [vmem:[%s3 + $0xf0] sm:$0xff]
          %v5377 = vld [vmem:[%s3 + $0xf8] sm:$0xff]
          %v5378 = vld [vmem:[%s3 + $0x100] sm:$0xff]
          %v5379 = vld [vmem:[%s3 + $0x108] sm:$0xff]
          %v5380 = vld [vmem:[%s3 + $0x110] sm:$0xff]
          %v5381 = vld [vmem:[%s3 + $0x118] sm:$0xff]
          %v5382 = vld [vmem:[%s3 + $0x120] sm:$0xff]
          %v5383 = vld [vmem:[%s3 + $0x128] sm:$0xff]
          %v5384 = vld [vmem:[%s3 + $0x130] sm:$0xff]
          %v5385 = vld [vmem:[%s3 + $0x138] sm:$0xff]
          %v5386 = vld [vmem:[%s3 + $0x140] sm:$0xff]
          %v5387 = vld [vmem:[%s3 + $0x148] sm:$0xff]
          %v5388 = vld [vmem:[%s3 + $0x150] sm:$0xff]
          %v5389 = vld [vmem:[%s3 + $0x158] sm:$0xff]
          %v5390 = vld [vmem:[%s3 + $0x160] sm:$0xff]
          %v5391 = vld [vmem:[%s3 + $0x168] sm:$0xff]
          %v5392 = vld [vmem:[%s3 + $0x170] sm:$0xff]
          %v5393 = vld [vmem:[%s3 + $0x178] sm:$0xff]
          %v5394 = vld [vmem:[%s3 + $0x180] sm:$0xff]
          %v5395 = vld [vmem:[%s3 + $0x188] sm:$0xff]
          %v5396 = vld [vmem:[%s3 + $0x190] sm:$0xff]
          %v5397 = vld [vmem:[%s3 + $0x198] sm:$0xff]
          %v5398 = vld [vmem:[%s3 + $0x1a0] sm:$0xff]
          %v5399 = vld [vmem:[%s3 + $0x1a8] sm:$0xff]
          %v5400 = vld [vmem:[%s3 + $0x1b0] sm:$0xff]
          %v5401 = vld [vmem:[%s3 + $0x1b8] sm:$0xff]
          %v5402 = vld [vmem:[%s3 + $0x1c0] sm:$0xff]
          %v5403 = vld [vmem:[%s3 + $0x1c8] sm:$0xff]
          %v5404 = vld [vmem:[%s3 + $0x1d0] sm:$0xff]
          %v5405 = vld [vmem:[%s3 + $0x1d8] sm:$0xff]
          %v5406 = vld [vmem:[%s3 + $0x1e0] sm:$0xff]
          %v5407 = vld [vmem:[%s3 + $0x1e8] sm:$0xff]
          %v5408 = vld [vmem:[%s3 + $0x1f0] sm:$0xff]
          %v5409 = vld [vmem:[%s3 + $0x1f8] sm:$0xff]
          %v5410 = vld [vmem:[%s3 + $0x200] sm:$0xff]
          %v5411 = vld [vmem:[%s3 + $0x208] sm:$0xff]
          %v5412 = vld [vmem:[%s3 + $0x210] sm:$0xff]
          %v5413 = vld [vmem:[%s3 + $0x218] sm:$0xff]
          %v5414 = vld [vmem:[%s3 + $0x220] sm:$0xff]
          %v5415 = vld [vmem:[%s3 + $0x228] sm:$0xff]
          %v5416 = vld [vmem:[%s3 + $0x230] sm:$0xff]
          %v5417 = vld [vmem:[%s3 + $0x238] sm:$0xff]
          %v5418 = vld [vmem:[%s3 + $0x240] sm:$0xff]
          %v5419 = vld [vmem:[%s3 + $0x248] sm:$0xff]
          %v5420 = vld [vmem:[%s3 + $0x250] sm:$0xff]
          %v5421 = vld [vmem:[%s3 + $0x258] sm:$0xff]
          %v5422 = vld [vmem:[%s3 + $0x260] sm:$0xff]
          %v5423 = vld [vmem:[%s3 + $0x268] sm:$0xff]
          %v5424 = vld [vmem:[%s3 + $0x270] sm:$0xff]
          %v5425 = vld [vmem:[%s3 + $0x278] sm:$0xff]
          %v5426 = vld [vmem:[%s3 + $0x280] sm:$0xff]
          %v5427 = vld [vmem:[%s3 + $0x288] sm:$0xff]
          %v5428 = vld [vmem:[%s3 + $0x290] sm:$0xff]
          %v5429 = vld [vmem:[%s3 + $0x298] sm:$0xff]
          %v5430 = vld [vmem:[%s3 + $0x2a0] sm:$0xff]
          %v5431 = vld [vmem:[%s3 + $0x2a8] sm:$0xff]
          %v5432 = vld [vmem:[%s3 + $0x2b0] sm:$0xff]
          %v5433 = vld [vmem:[%s3 + $0x2b8] sm:$0xff]
          %v5434 = vld [vmem:[%s3 + $0x2c0] sm:$0xff]
          %v5435 = vld [vmem:[%s3 + $0x2c8] sm:$0xff]
          %v5436 = vld [vmem:[%s3 + $0x2d0] sm:$0xff]
          %v5437 = vld [vmem:[%s3 + $0x2d8] sm:$0xff]
          %v5438 = vld [vmem:[%s3 + $0x2e0] sm:$0xff]
          %v5439 = vld [vmem:[%s3 + $0x2e8] sm:$0xff]
          %v5440 = vld [vmem:[%s3 + $0x2f0] sm:$0xff]
          %v5441 = vld [vmem:[%s3 + $0x2f8] sm:$0xff]
          %v5442 = vld [vmem:[%s3 + $0x300] sm:$0xff]
          %v5443 = vld [vmem:[%s3 + $0x308] sm:$0xff]
          %v5444 = vld [vmem:[%s3 + $0x310] sm:$0xff]
          %v5445 = vld [vmem:[%s3 + $0x318] sm:$0xff]
          %v5446 = vld [vmem:[%s3 + $0x320] sm:$0xff]
          %v5447 = vld [vmem:[%s3 + $0x328] sm:$0xff]
          %v5448 = vld [vmem:[%s3 + $0x330] sm:$0xff]
          %v5449 = vld [vmem:[%s3 + $0x338] sm:$0xff]
          %v5450 = vld [vmem:[%s3 + $0x340] sm:$0xff]
          %v5451 = vld [vmem:[%s3 + $0x348] sm:$0xff]
          %v5452 = vld [vmem:[%s3 + $0x350] sm:$0xff]
          %v5453 = vld [vmem:[%s3 + $0x358] sm:$0xff]
          %v5454 = vld [vmem:[%s3 + $0x360] sm:$0xff]
          %v5455 = vld [vmem:[%s3 + $0x368] sm:$0xff]
          %v5456 = vld [vmem:[%s3 + $0x370] sm:$0xff]
          %v5457 = vld [vmem:[%s3 + $0x378] sm:$0xff]
          %v5458 = vld [vmem:[%s3 + $0x380] sm:$0xff]
          %v5459 = vld [vmem:[%s3 + $0x388] sm:$0xff]
          %v5460 = vld [vmem:[%s3 + $0x390] sm:$0xff]
          %v5461 = vld [vmem:[%s3 + $0x398] sm:$0xff]
          %v5462 = vld [vmem:[%s3 + $0x3a0] sm:$0xff]
          %v5463 = vld [vmem:[%s3 + $0x3a8] sm:$0xff]
          %v5464 = vld [vmem:[%s3 + $0x3b0] sm:$0xff]
          %v5465 = vld [vmem:[%s3 + $0x3b8] sm:$0xff]
          %v5466 = vld [vmem:[%s3 + $0x3c0] sm:$0xff]
          %v5467 = vld [vmem:[%s3 + $0x3c8] sm:$0xff]
          %v5468 = vld [vmem:[%s3 + $0x3d0] sm:$0xff]
          %v5469 = vld [vmem:[%s3 + $0x3d8] sm:$0xff]
          %v5470 = vld [vmem:[%s3 + $0x3e0] sm:$0xff]
          %v5471 = vld [vmem:[%s3 + $0x3e8] sm:$0xff]
          %v5472 = vld [vmem:[%s3 + $0x3f0] sm:$0xff]
          %v5473 = vld [vmem:[%s3 + $0x3f8] sm:$0xff]
          %v5474 = vld [vmem:[#allocation9] sm:$0x1]
          %5475 = vmatpush.msra.mxu0 %v5361
          %5476 = vmatpush.msra.mxu0 %v5360
          %5477 = vmatpush.msra.mxu0 %v5359
          %5478 = vmatpush.msra.mxu0 %v5358
          %5479 = vmatpush.msra.mxu0 %v5357
          %5480 = vmatpush.msra.mxu0 %v5356
          %5481 = vmatpush.msra.mxu0 %v5355
          %5482 = vmatpush.msra.mxu0 %v5354
          %5483 = vmatpush.msra.mxu0 %v5353
          %5484 = vmatpush.msra.mxu0 %v5352
          %5485 = vmatpush.msra.mxu0 %v5351
          %5486 = vmatpush.msra.mxu0 %v5350
          %5487 = vmatpush.msra.mxu0 %v5349
          %5488 = vmatpush.msra.mxu0 %v5348
          %5489 = vmatpush.msra.mxu0 %v5347
          %5490 = vmatpush.msra.mxu0 %v5346
          %5491 = vmatmul.f32.gmra.mxu0 %v4504
          %v5492 = vpop.f32.mrf.mxu0
          %v5493 = vadd.f32 %v5474, %v5492
          %5494 = vdwg.mxu0
          %5495 = vmatpush.msra.mxu0 %v5377
          %5496 = vmatpush.msra.mxu0 %v5376
          %5497 = vmatpush.msra.mxu0 %v5375
          %5498 = vmatpush.msra.mxu0 %v5374
          %5499 = vmatpush.msra.mxu0 %v5373
          %5500 = vmatpush.msra.mxu0 %v5372
          %5501 = vmatpush.msra.mxu0 %v5371
          %5502 = vmatpush.msra.mxu0 %v5370
          %5503 = vmatpush.msra.mxu0 %v5369
          %5504 = vmatpush.msra.mxu0 %v5368
          %5505 = vmatpush.msra.mxu0 %v5367
          %5506 = vmatpush.msra.mxu0 %v5366
          %5507 = vmatpush.msra.mxu0 %v5365
          %5508 = vmatpush.msra.mxu0 %v5364
          %5509 = vmatpush.msra.mxu0 %v5363
          %5510 = vmatpush.msra.mxu0 %v5362
          %5511 = vmatmul.f32.gmra.mxu0 %v4624
          %v5512 = vpop.f32.mrf.mxu0
          %v5513 = vadd.f32 %v5493, %v5512
          %5514 = vdwg.mxu0
          %5515 = vmatpush.msra.mxu0 %v5393
          %5516 = vmatpush.msra.mxu0 %v5392
          %5517 = vmatpush.msra.mxu0 %v5391
          %5518 = vmatpush.msra.mxu0 %v5390
          %5519 = vmatpush.msra.mxu0 %v5389
          %5520 = vmatpush.msra.mxu0 %v5388
          %5521 = vmatpush.msra.mxu0 %v5387
          %5522 = vmatpush.msra.mxu0 %v5386
          %5523 = vmatpush.msra.mxu0 %v5385
          %5524 = vmatpush.msra.mxu0 %v5384
          %5525 = vmatpush.msra.mxu0 %v5383
          %5526 = vmatpush.msra.mxu0 %v5382
          %5527 = vmatpush.msra.mxu0 %v5381
          %5528 = vmatpush.msra.mxu0 %v5380
          %5529 = vmatpush.msra.mxu0 %v5379
          %5530 = vmatpush.msra.mxu0 %v5378
          %5531 = vmatmul.f32.gmra.mxu0 %v4744
          %v5532 = vpop.f32.mrf.mxu0
          %v5533 = vadd.f32 %v5513, %v5532
          %5534 = vdwg.mxu0
          %5535 = vmatpush.msra.mxu0 %v5409
          %5536 = vmatpush.msra.mxu0 %v5408
          %5537 = vmatpush.msra.mxu0 %v5407
          %5538 = vmatpush.msra.mxu0 %v5406
          %5539 = vmatpush.msra.mxu0 %v5405
          %5540 = vmatpush.msra.mxu0 %v5404
          %5541 = vmatpush.msra.mxu0 %v5403
          %5542 = vmatpush.msra.mxu0 %v5402
          %5543 = vmatpush.msra.mxu0 %v5401
          %5544 = vmatpush.msra.mxu0 %v5400
          %5545 = vmatpush.msra.mxu0 %v5399
          %5546 = vmatpush.msra.mxu0 %v5398
          %5547 = vmatpush.msra.mxu0 %v5397
          %5548 = vmatpush.msra.mxu0 %v5396
          %5549 = vmatpush.msra.mxu0 %v5395
          %5550 = vmatpush.msra.mxu0 %v5394
          %5551 = vmatmul.f32.gmra.mxu0 %v4864
          %v5552 = vpop.f32.mrf.mxu0
          %v5553 = vadd.f32 %v5533, %v5552
          %5554 = vdwg.mxu0
          %5555 = vmatpush.msra.mxu0 %v5425
          %5556 = vmatpush.msra.mxu0 %v5424
          %5557 = vmatpush.msra.mxu0 %v5423
          %5558 = vmatpush.msra.mxu0 %v5422
          %5559 = vmatpush.msra.mxu0 %v5421
          %5560 = vmatpush.msra.mxu0 %v5420
          %5561 = vmatpush.msra.mxu0 %v5419
          %5562 = vmatpush.msra.mxu0 %v5418
          %5563 = vmatpush.msra.mxu0 %v5417
          %5564 = vmatpush.msra.mxu0 %v5416
          %5565 = vmatpush.msra.mxu0 %v5415
          %5566 = vmatpush.msra.mxu0 %v5414
          %5567 = vmatpush.msra.mxu0 %v5413
          %5568 = vmatpush.msra.mxu0 %v5412
          %5569 = vmatpush.msra.mxu0 %v5411
          %5570 = vmatpush.msra.mxu0 %v5410
          %5571 = vmatmul.f32.gmra.mxu0 %v4984
          %v5572 = vpop.f32.mrf.mxu0
          %v5573 = vadd.f32 %v5553, %v5572
          %5574 = vdwg.mxu0
          %5575 = vmatpush.msra.mxu0 %v5441
          %5576 = vmatpush.msra.mxu0 %v5440
          %5577 = vmatpush.msra.mxu0 %v5439
          %5578 = vmatpush.msra.mxu0 %v5438
          %5579 = vmatpush.msra.mxu0 %v5437
          %5580 = vmatpush.msra.mxu0 %v5436
          %5581 = vmatpush.msra.mxu0 %v5435
          %5582 = vmatpush.msra.mxu0 %v5434
          %5583 = vmatpush.msra.mxu0 %v5433
          %5584 = vmatpush.msra.mxu0 %v5432
          %5585 = vmatpush.msra.mxu0 %v5431
          %5586 = vmatpush.msra.mxu0 %v5430
          %5587 = vmatpush.msra.mxu0 %v5429
          %5588 = vmatpush.msra.mxu0 %v5428
          %5589 = vmatpush.msra.mxu0 %v5427
          %5590 = vmatpush.msra.mxu0 %v5426
          %5591 = vmatmul.f32.gmra.mxu0 %v5104
          %v5592 = vpop.f32.mrf.mxu0
          %v5593 = vadd.f32 %v5573, %v5592
          %5594 = vdwg.mxu0
          %5595 = vmatpush.msra.mxu0 %v5457
          %5596 = vmatpush.msra.mxu0 %v5456
          %5597 = vmatpush.msra.mxu0 %v5455
          %5598 = vmatpush.msra.mxu0 %v5454
          %5599 = vmatpush.msra.mxu0 %v5453
          %5600 = vmatpush.msra.mxu0 %v5452
          %5601 = vmatpush.msra.mxu0 %v5451
          %5602 = vmatpush.msra.mxu0 %v5450
          %5603 = vmatpush.msra.mxu0 %v5449
          %5604 = vmatpush.msra.mxu0 %v5448
          %5605 = vmatpush.msra.mxu0 %v5447
          %5606 = vmatpush.msra.mxu0 %v5446
          %5607 = vmatpush.msra.mxu0 %v5445
          %5608 = vmatpush.msra.mxu0 %v5444
          %5609 = vmatpush.msra.mxu0 %v5443
          %5610 = vmatpush.msra.mxu0 %v5442
          %5611 = vmatmul.f32.gmra.mxu0 %v5224
          %v5612 = vpop.f32.mrf.mxu0
          %v5613 = vadd.f32 %v5593, %v5612
          %5614 = vdwg.mxu0
          %5615 = vmatpush.msra.mxu0 %v5473
          %5616 = vmatpush.msra.mxu0 %v5472
          %5617 = vmatpush.msra.mxu0 %v5471
          %5618 = vmatpush.msra.mxu0 %v5470
          %5619 = vmatpush.msra.mxu0 %v5469
          %5620 = vmatpush.msra.mxu0 %v5468
          %5621 = vmatpush.msra.mxu0 %v5467
          %5622 = vmatpush.msra.mxu0 %v5466
          %5623 = vmatpush.msra.mxu0 %v5465
          %5624 = vmatpush.msra.mxu0 %v5464
          %5625 = vmatpush.msra.mxu0 %v5463
          %5626 = vmatpush.msra.mxu0 %v5462
          %5627 = vmatpush.msra.mxu0 %v5461
          %5628 = vmatpush.msra.mxu0 %v5460
          %5629 = vmatpush.msra.mxu0 %v5459
          %5630 = vmatpush.msra.mxu0 %v5458
          %5631 = vmatmul.f32.gmra.mxu0 %v5344
          %v5632 = vpop.f32.mrf.mxu0
          %v5633 = vadd.f32 %v5613, %v5632
          %5634 = vdwg.mxu0
          %vm5635 = vcmask 8192
          %5636 = vst.msk [vmem:[%s336] sm:$0x1] %vm5635, %v5633
        $region64: #{tpu_custom_call.1} parent=39 // pred_fallthru
          _
        %s5637 = sand.u32 %s161, 1
        %s5638 = scalar_lea.sflag [#allocation5], %s5637
        %s5639 = sand.u32 %s161, 1
        %s5640 = scalar_lea.vmem [#allocation11], %s5639
        %s5641 = sand.u32 %s187, 1
        %s5642 = scalar_lea.sflag [#allocation13], %s5641
        %s5643 = sand.u32 %s187, 1
        %s5644 = smul.addr %s5643, 6
        %s5645 = scalar_lea.vmem [#allocation12], %s5644
        // Predicated region
        $region65: #{tpu_custom_call.1} parent=39 // pred_check
          %p5646 = pneg %p171
        $region66: #{tpu_custom_call.1} parent=39 // pred_check_branch
          %5648 = sbr.rel (%p5646) target = $region68
        $region67: #{tpu_custom_call.1} parent=39 // pred_region
          %5650 = vsyncadd %s5638, 0
          %s5651 = scalar_lea.hbm %s5, %s33
          %s5653 = sshll.u32 %s5640, 4
          %s5654 = int_to_ptr.vmem [resolvable:$true] %s5653
          %s5655 = sshll.u32 %s5651, 4
          %s5656 = int_to_ptr.hbm [resolvable:$true] %s5655
          %5658 = dma.vmem_to_hbm [thread:$0]  %s5654, 16, %s5656, %s5638
        $region68: #{tpu_custom_call.1} parent=39 // pred_fallthru
          _
        // Predicated region
        $region69: #{tpu_custom_call.1} parent=39 // pred_check
          %p5659 = pneg %p197
        $region70: #{tpu_custom_call.1} parent=39 // pred_check_branch
          %5661 = sbr.rel (%p5659) target = $region72
        $region71: #{tpu_custom_call.1} parent=39 // pred_region
          %5663 = vsyncadd %s5642, 0
          %s5664 = smul.addr %s33, 6
          %s5665 = scalar_lea.hbm %s6, %s5664
          %s5667 = sshll.u32 %s5645, 4
          %s5668 = int_to_ptr.vmem [resolvable:$true] %s5667
          %s5669 = sshll.u32 %s5665, 4
          %s5670 = int_to_ptr.hbm [resolvable:$true] %s5669
          %5672 = dma.vmem_to_hbm [thread:$0]  %s5668, 96, %s5670, %s5642
        $region72: #{tpu_custom_call.1} parent=39 // pred_fallthru
          _
      $region40: #{tpu_custom_call.1} parent=5 // pred_fallthru
        _
      %p5673 = scmp.le.s32.totalorder 2, %s24
      // Predicated region
      $region73: #{tpu_custom_call.1} parent=5 // pred_check
        %p5674 = pneg %p5673
      $region74: #{tpu_custom_call.1} parent=5 // pred_check_branch
        %5676 = sbr.rel (%p5674) target = $region76
      $region75: #{tpu_custom_call.1} parent=5 // pred_region
        %s5677 = ssub.s32 %s24, 2
        // Predicated region
        $region77: #{tpu_custom_call.1} parent=75 // pred_check
          %p5678 = pneg %p177
        $region78: #{tpu_custom_call.1} parent=75 // pred_check_branch
          %5680 = sbr.rel (%p5678) target = $region80
        $region79: #{tpu_custom_call.1} parent=75 // pred_region
          %s5681 = sand.u32 %s162, 1
          %s5682 = scalar_lea.sflag [#allocation5], %s5681
          %s5683 = sand.u32 %s162, 1
          %s5684 = scalar_lea.vmem [#allocation11], %s5683
          %5686 = dma.done %s5682, 16
        $region80: #{tpu_custom_call.1} parent=75 // pred_fallthru
          _
        // Predicated region
        $region81: #{tpu_custom_call.1} parent=75 // pred_check
          %p5687 = pneg %p203
        $region82: #{tpu_custom_call.1} parent=75 // pred_check_branch
          %5689 = sbr.rel (%p5687) target = $region84
        $region83: #{tpu_custom_call.1} parent=75 // pred_region
          %s5690 = sand.u32 %s188, 1
          %s5691 = scalar_lea.sflag [#allocation13], %s5690
          %s5692 = sand.u32 %s188, 1
          %s5693 = smul.addr %s5692, 6
          %s5694 = scalar_lea.vmem [#allocation12], %s5693
          %5696 = dma.done %s5691, 96
        $region84: #{tpu_custom_call.1} parent=75 // pred_fallthru
          _
      $region76: #{tpu_custom_call.1} parent=5 // pred_fallthru
        _
    $region6: #{tpu_custom_call.1} parent=1 // loop_footer
      %s28 = sadd.s32 1, %s24
    $region7: #{tpu_custom_call.1} parent=1 // loop_footer_branch
      %23 = sbr.rel target = $region3
    $region8: #{tpu_custom_call.1} parent=1 // loop_exit
      _
    %5697 = vsyncpa [#allocation4], 1
    %s5698 = scalar_lea.sflag [#allocation4], 1
    %5699 = vsyncpa %s5698, 1
    %5700 = vsyncpa [#allocation7], 1
    %5701 = vsyncpa [#allocation10], 1
    %5702 = vsyncpa [#allocation5], 1
    %s5703 = scalar_lea.sflag [#allocation5], 1
    %5704 = vsyncpa %s5703, 1
    %5705 = vsyncpa [#allocation13], 1
    %s5706 = scalar_lea.sflag [#allocation13], 1
    %5707 = vsyncpa %s5706, 1

</llo_original>
